<compile_context>
chip_gen: v7x
topology: tpu7x:2x2x1
jax: 0.10.0
libtpu: 0.0.40
codegen_flags: <defaults>
</compile_context>

<pallas_src>
import jax
import jax.numpy as jnp
from jax.experimental import pallas as pl
from jax.experimental.pallas import tpu as pltpu

# ---- model dimensions from the PyTorch spec -------------------------------------
EMG_FEATURES = 88            # 8 EMG sensors x 11 features
EMG_EMBEDDING_DIM = 128      # emg_embedding_dim == encoder output dim
LSTM_HIDDEN = 128
LSTM_INPUT = 256             # conv trunk output channels
BN_EPS = 1e-5
COMPUTE_DTYPE = jnp.bfloat16  # MXU storage/compute dtype; accumulation is f32


def _round_up(x, m):
    return (x + m - 1) // m * m


def _const_spec(arr):
    """Whole-array block, same block for every grid step (grid-invariant parameter)."""
    nd = arr.ndim
    return pl.BlockSpec(arr.shape, lambda i, _nd=nd: (0,) * _nd)


# =================================================================================
# Raw (PyTorch-layout, f32, un-folded BN) parameters.  Values stand in for a trained
# checkpoint; the references use exactly the same raw values.
# =================================================================================
def init_raw_params(key, *, num_imu_sensors, num_gestures):
    k = iter(jax.random.split(key, 64))

    def nrm(shape, std):
        return std * jax.random.normal(next(k), shape, jnp.float32)

    def uni(shape, lo, hi):
        return jax.random.uniform(next(k), shape, jnp.float32, lo, hi)

    def bn_stats(dim):  # non-trivial running stats, as if loaded from a checkpoint
        return dict(gamma=uni((dim,), 0.8, 1.2), beta=nrm((dim,), 0.1),
                    mean=nrm((dim,), 0.1), var=uni((dim,), 0.5, 1.5))

    p = {}
    # EMG fatigue encoder: Linear->BN->ReLU->Drop->Linear->BN->ReLU->Drop->Linear->BN
    p["emg"] = []
    for fi, fo in [(EMG_FEATURES, 256), (256, 512), (512, EMG_EMBEDDING_DIM)]:
        p["emg"].append(dict(w=nrm((fo, fi), (2.0 / fi) ** 0.5),
                             b=nrm((fo,), 0.05), bn=bn_stats(fo)))
    # IMU conv trunk: Conv1d(k=3, pad=1, bias=False) + BN
    p["conv"] = []
    for ci, co in [(num_imu_sensors, 64), (64, 128), (128, 256)]:
        p["conv"].append(dict(w=nrm((co, ci, 3), (2.0 / (co * 3)) ** 0.5), bn=bn_stats(co)))
    # 2-layer bidirectional LSTM, hidden 128, PyTorch gate order i|f|g|o; b = b_ih + b_hh.
    p["lstm"] = []
    for layer_in in (LSTM_INPUT, 2 * LSTM_HIDDEN):
        for _direction in range(2):
            bound = (6.0 / (4 * LSTM_HIDDEN + layer_in)) ** 0.5
            p["lstm"].append(dict(
                w_ih=uni((4 * LSTM_HIDDEN, layer_in), -bound, bound),
                w_hh=nrm((4 * LSTM_HIDDEN, LSTM_HIDDEN), LSTM_HIDDEN ** -0.5),
                b=nrm((4 * LSTM_HIDDEN,), 0.05)))

    def xavier(fo, fi):
        return nrm((fo, fi), (2.0 / (fi + fo)) ** 0.5)
    p["fc1"] = dict(w=xavier(256, 2 * LSTM_HIDDEN + EMG_EMBEDDING_DIM), b=nrm((256,), 0.05))
    p["fc2"] = dict(w=xavier(num_gestures, 256), b=nrm((num_gestures,), 0.05))
    return p


# =================================================================================
# Parameter preparation: fold BN, im2col conv taps, reorder LSTM gates, cast to bf16.
# =================================================================================
def prepare_params(raw, *, num_imu_sensors, num_gestures, compute_dtype=COMPUTE_DTYPE):
    del num_imu_sensors  # implicit in raw conv1 weight shape
    cdt = compute_dtype
    H = LSTM_HIDDEN
    kp = {"compute_dtype": cdt, "num_gestures": num_gestures}

    def fold_linear(w, b, bn):          # y = BN(x @ w.T + b)  ->  x @ w_f + b_f
        scale = bn["gamma"] * jax.lax.rsqrt(bn["var"] + BN_EPS)
        w_f = (w * scale[:, None]).T                                  # [in, out]
        b_f = (b - bn["mean"]) * scale + bn["beta"]
        return w_f, b_f[None, :].astype(jnp.float32)

    def conv_scale_shift(bn):
        scale = bn["gamma"] * jax.lax.rsqrt(bn["var"] + BN_EPS)
        return scale, (bn["beta"] - bn["mean"] * scale)

    # EMG encoder; pad the first contraction 88 -> 128 (full-lane MXU feed).
    emg_in_pad = _round_up(EMG_FEATURES, 128)
    emg = []
    for i, lyr in enumerate(raw["emg"]):
        w_f, b_f = fold_linear(lyr["w"], lyr["b"], lyr["bn"])
        if i == 0:
            w_f = jnp.pad(w_f, ((0, emg_in_pad - w_f.shape[0]), (0, 0)))
        emg.append((w_f.astype(cdt), b_f))
    kp["emg"] = emg
    kp["emg_in_pad"] = emg_in_pad

    # conv1 (computed in the wrapper with plain XLA; negligible FLOPs, avoids 8-lane MXU)
    s1, sh1 = conv_scale_shift(raw["conv"][0]["bn"])
    w1 = raw["conv"][0]["w"] * s1[:, None, None]                       # [64, cin, 3]
    kp["conv1"] = (jnp.transpose(w1, (2, 1, 0)).astype(cdt),           # [3, cin, 64]
                   sh1[None, :].astype(jnp.float32))

    # conv2: taps stacked into the contraction -> [3*64, 128]
    s2s, sh2 = conv_scale_shift(raw["conv"][1]["bn"])
    w2 = raw["conv"][1]["w"] * s2s[:, None, None]                      # [128, 64, 3]
    kp["conv2"] = (jnp.concatenate([w2[:, :, k].T for k in range(3)], axis=0).astype(cdt),
                   sh2[None, :].astype(jnp.float32))

    # conv3: per-tap [3, 128, 256]
    s3s, sh3 = conv_scale_shift(raw["conv"][2]["bn"])
    w3 = raw["conv"][2]["w"] * s3s[:, None, None]                      # [256, 128, 3]
    kp["conv3"] = (jnp.stack([w3[:, :, k].T for k in range(3)]).astype(cdt),
                   sh3[None, :].astype(jnp.float32))

    # LSTM: gate order [i,f,g,o] -> [i,f,o,g]; fwd/bwd w_ih concatenated per layer.
    def reorder(m):      # last dim = 4H in torch gate order
        return jnp.concatenate([m[..., :2 * H], m[..., 3 * H:], m[..., 2 * H:3 * H]], axis=-1)

    cells = raw["lstm"]                                                # [l1f, l1b, l2f, l2b]
    ih = lambda c: reorder(c["w_ih"].T)                                # [in, 4H]
    hh = lambda c: reorder(c["w_hh"].T)                                # [H, 4H]
    bb = lambda c: reorder(c["b"][None, :])                            # [1, 4H]
    kp["lstm"] = (
        jnp.concatenate([ih(cells[0]), ih(cells[1])], axis=1).astype(cdt),          # [256,1024]
        jnp.concatenate([bb(cells[0]), bb(cells[1])], axis=1).astype(jnp.float32),  # [1,1024]
        jnp.concatenate([ih(cells[2]), ih(cells[3])], axis=1).astype(cdt),          # [256,1024]
        jnp.concatenate([bb(cells[2]), bb(cells[3])], axis=1).astype(jnp.float32),  # [1,1024]
        jnp.stack([hh(c) for c in cells]).astype(cdt),                              # [4,128,512]
    )

    # classifier head; logits padded to a lane-dense 128-wide slab
    ng_p = _round_up(max(num_gestures, 128), 128)
    kp["fc"] = (raw["fc1"]["w"].T.astype(cdt),
                raw["fc1"]["b"][None, :].astype(jnp.float32),
                jnp.pad(raw["fc2"]["w"].T, ((0, 0), (0, ng_p - num_gestures))).astype(cdt),
                jnp.pad(raw["fc2"]["b"], (0, ng_p - num_gestures))[None, :].astype(jnp.float32))
    kp["ng_p"] = ng_p
    return kp


# =================================================================================
# Wrapper-side conv1 + pool1 and the conv2 im2col slab (layout plumbing, tiny FLOPs).
# =================================================================================
def _conv1_pool(imu, kp):
    """Conv1d(cin->64,k=3,pad=1,no bias) + folded BN + ReLU + MaxPool1d(2) -> [B, L0//2, 64]."""
    cdt = kp["compute_dtype"]
    w, shift = kp["conv1"]                                     # [3, cin, 64], [1, 64]
    hp = jax.lax.Precision.HIGHEST
    x = jnp.transpose(imu, (0, 2, 1)).astype(cdt)              # [B, L0, cin]
    L0 = x.shape[1]
    xp = jnp.pad(x, ((0, 0), (1, 1), (0, 0)))
    y = sum(jnp.dot(xp[:, k:k + L0, :], w[k], preferred_element_type=jnp.float32,
                    precision=hp) for k in range(3)) + shift
    y = jnp.maximum(y, 0.0)
    return jnp.maximum(y[:, 0::2, :], y[:, 1::2, :]).astype(cdt)


def _conv2_im2col(x1):
    """[B, L1, 64] -> [B, L1, 192] with channel layout [x[t-1] | x[t] | x[t+1]]."""
    L1 = x1.shape[1]
    xp = jnp.pad(x1, ((0, 0), (1, 1), (0, 0)))
    return jnp.concatenate([xp[:, 0:L1], xp[:, 1:L1 + 1], xp[:, 2:L1 + 2]], axis=-1)


# =================================================================================
# Fused kernel: EMG encoder + conv2/conv3 + pools + 2-layer BiLSTM + classifier head.
# One batch tile per grid step; conv activations use a (time*batch, channel) row layout.
# =================================================================================
def _fused_head(slab_g, emg_p, kp, tile, L1, vmem_limit_bytes=None):
    n_tiles, rows1, C2 = slab_g.shape          # rows1 = L1*tile, C2 = 192
    Bp = n_tiles * tile
    L2, T, H, tB = L1 // 2, L1 // 4, LSTM_HIDDEN, tile
    cdt = kp["compute_dtype"]
    (we1, be1), (we2, be2), (we3, be3) = kp["emg"]
    wc2, bc2 = kp["conv2"]
    wc3, bc3 = kp["conv3"]
    wih1, bih1, wih2, bih2, whh = kp["lstm"]
    wfc1, bfc1, wfc2, bfc2 = kp["fc"]
    ng_p = kp["ng_p"]
    f32 = jnp.float32

    def kernel(x2_ref, emg_ref,
               we1_ref, be1_ref, we2_ref, be2_ref, we3_ref, be3_ref,
               wc2_ref, bc2_ref, wc3_ref, bc3_ref,
               wih1_ref, bih1_ref, wih2_ref, bih2_ref, whh_ref,
               wfc1_ref, bfc1_ref, wfc2_ref, bfc2_ref,
               logits_ref, emb_ref, s2_ref):
        # ---- EMG fatigue encoder (get_embedding); BN folded, dropout = identity ----
        e = jnp.dot(emg_ref[...], we1_ref[...], preferred_element_type=f32) + be1_ref[...]
        e = jnp.maximum(e, 0.0).astype(cdt)
        e = jnp.dot(e, we2_ref[...], preferred_element_type=f32) + be2_ref[...]
        e = jnp.maximum(e, 0.0).astype(cdt)
        emb = jnp.dot(e, we3_ref[...], preferred_element_type=f32) + be3_ref[...]
        emb_ref[...] = emb.astype(emb_ref.dtype)

        # ---- conv2 (taps im2col'd into K=192, single dot) + ReLU ----
        y2 = jnp.dot(x2_ref[0], wc2_ref[...], preferred_element_type=f32) + bc2_ref[...]
        y2 = jnp.maximum(y2, 0.0)                                  # [L1*tB, 128] f32

        # ---- MaxPool1d(2) into a halo'ed bf16 scratch (bounds f32 live range) ----
        zero128 = jnp.zeros((tB, 128), s2_ref.dtype)
        s2_ref[pl.ds(0, tB), :] = zero128
        s2_ref[pl.ds((L2 + 1) * tB, tB), :] = zero128
        for i in range(L2):
            a = y2[2 * i * tB:(2 * i + 1) * tB, :]
            b = y2[(2 * i + 1) * tB:(2 * i + 2) * tB, :]
            s2_ref[pl.ds((i + 1) * tB, tB), :] = jnp.maximum(a, b).astype(s2_ref.dtype)

        # ---- conv3 (3 dots, K=128 each, shifted views of the halo'ed scratch) ----
        y3 = (jnp.dot(s2_ref[pl.ds(0, L2 * tB), :], wc3_ref[0], preferred_element_type=f32)
              + jnp.dot(s2_ref[pl.ds(tB, L2 * tB), :], wc3_ref[1], preferred_element_type=f32)
              + jnp.dot(s2_ref[pl.ds(2 * tB, L2 * tB), :], wc3_ref[2], preferred_element_type=f32)
              + bc3_ref[...])
        y3 = jnp.maximum(y3, 0.0)                                  # [L2*tB, 256] f32

        # ---- MaxPool1d(2) -> LSTM inputs stacked row-major over time ----
        xs = [jnp.maximum(y3[2 * t * tB:(2 * t + 1) * tB, :],
                          y3[(2 * t + 1) * tB:(2 * t + 2) * tB, :]).astype(cdt)
              for t in range(T)]
        X1 = jnp.concatenate(xs, axis=0)                           # [T*tB, 256] bf16

        # ---- LSTM input projections hoisted out of the recurrence ----
        P1 = jnp.dot(X1, wih1_ref[...], preferred_element_type=f32) + bih1_ref[...]  # [T*tB,1024]
        whh0, whh1, whh2, whh3 = (whh_ref[k] for k in range(4))

        def step(pre, h, c, whh_k):
            g = pre + jnp.dot(h.astype(cdt), whh_k, preferred_element_type=f32)
            s = 1.0 / (1.0 + jnp.exp(-g[:, :3 * H]))               # gates [i|f|o] contiguous
            gg = jnp.tanh(g[:, 3 * H:])
            c = s[:, H:2 * H] * c + s[:, :H] * gg
            return s[:, 2 * H:3 * H] * jnp.tanh(c), c

        zero_h = jnp.zeros((tB, H), f32)
        h, c = zero_h, zero_h
        h1f = []
        for t in range(T):                                          # layer 1, forward
            h, c = step(P1[t * tB:(t + 1) * tB, 0:4 * H], h, c, whh0)
            h1f.append(h)
        h, c = zero_h, zero_h
        h1b = [None] * T
        for t in range(T - 1, -1, -1):                              # layer 1, backward
            h, c = step(P1[t * tB:(t + 1) * tB, 4 * H:8 * H], h, c, whh1)
            h1b[t] = h

        X2 = jnp.concatenate([jnp.concatenate([h1f[t], h1b[t]], axis=1) for t in range(T)],
                             axis=0).astype(cdt)                    # [T*tB, 256]
        P2 = jnp.dot(X2, wih2_ref[...], preferred_element_type=f32) + bih2_ref[...]

        h, c = zero_h, zero_h
        for t in range(T):                                          # layer 2, forward
            h, c = step(P2[t * tB:(t + 1) * tB, 0:4 * H], h, c, whh2)
        h2f = h
        h, c = zero_h, zero_h
        for t in range(T - 1, -1, -1):                              # layer 2, backward
            h, c = step(P2[t * tB:(t + 1) * tB, 4 * H:8 * H], h, c, whh3)
        h2b = h

        # ---- classifier head on [h_fwd | h_bwd | emg_embedding] (concat as 3 matmuls) ----
        w1v = wfc1_ref[...]
        z = (jnp.dot(h2f.astype(cdt), w1v[0:H, :], preferred_element_type=f32)
             + jnp.dot(h2b.astype(cdt), w1v[H:2 * H, :], preferred_element_type=f32)
             + jnp.dot(emb.astype(cdt), w1v[2 * H:3 * H, :], preferred_element_type=f32)
             + bfc1_ref[...])
        z = jnp.maximum(z, 0.0).astype(cdt)                         # Dropout(0.5) = identity
        logits_ref[...] = (jnp.dot(z, wfc2_ref[...], preferred_element_type=f32)
                           + bfc2_ref[...]).astype(logits_ref.dtype)

    params = [we1, be1, we2, be2, we3, be3, wc2, bc2, wc3, bc3,
              wih1, bih1, wih2, bih2, whh, wfc1, bfc1, wfc2, bfc2]

    flops = 2 * Bp * (128 * 256 + 256 * 512 + 512 * 128              # EMG encoder
                      + L1 * 192 * 128 + L2 * 3 * 128 * 256          # conv2 + conv3
                      + 2 * T * 256 * 1024                           # LSTM input projections
                      + 4 * T * 128 * 512                            # LSTM recurrences
                      + 3 * 128 * 256 + 256 * ng_p)                  # head
    transc = Bp * T * 4 * 5 * H
    bytes_acc = int(slab_g.size * slab_g.dtype.itemsize + emg_p.size * emg_p.dtype.itemsize
                    + Bp * (ng_p + EMG_EMBEDDING_DIM) * 4
                    + sum(a.size * a.dtype.itemsize for a in params))

    return pl.pallas_call(
        kernel,
        out_shape=(jax.ShapeDtypeStruct((Bp, ng_p), jnp.float32),
                   jax.ShapeDtypeStruct((Bp, EMG_EMBEDDING_DIM), jnp.float32)),
        grid_spec=pltpu.PrefetchScalarGridSpec(
            num_scalar_prefetch=0, grid=(n_tiles,),
            in_specs=[pl.BlockSpec((1, rows1, C2), lambda i: (i, 0, 0)),
                      pl.BlockSpec((tile, emg_p.shape[1]), lambda i: (i, 0))]
                     + [_const_spec(p) for p in params],
            out_specs=[pl.BlockSpec((tile, ng_p), lambda i: (i, 0)),
                       pl.BlockSpec((tile, EMG_EMBEDDING_DIM), lambda i: (i, 0))],
            scratch_shapes=[pltpu.VMEM(((L2 + 2) * tile, 128), cdt)]),
        compiler_params=pltpu.CompilerParams(dimension_semantics=("parallel",),
                                             vmem_limit_bytes=vmem_limit_bytes),
        cost_estimate=pl.CostEstimate(flops=int(flops), transcendentals=int(transc),
                                      bytes_accessed=bytes_acc),
    )(slab_g, emg_p, *params)


# =================================================================================
# Public wrapper: full CombinedGestureModel.forward (inference).
# =================================================================================
def combined_gesture_forward(imu_pixel_values, emg_features, kp, *, batch_tile=256,
                             labels=None, vmem_limit_bytes=None):
    """imu_pixel_values: [B, num_imu_sensors, L] (L multiple of 8); emg_features: [B, 88]."""
    B, _, L0 = imu_pixel_values.shape
    assert L0 % 8 == 0, "sequence length must survive three MaxPool1d(2) stages"
    cdt = kp["compute_dtype"]
    L1 = L0 // 2

    # conv1 + pool1 in plain XLA (tiny FLOPs); build the conv2 im2col slab.
    x1 = _conv1_pool(imu_pixel_values, kp)                 # [B, L1, 64] bf16
    slab = _conv2_im2col(x1)                               # [B, L1, 192] bf16

    # batch tile: 16-aligned (bf16 sublanes); ensure >=2 grid steps when batch allows
    # (megacore / v7x dual-TensorCore sharding via dimension_semantics=("parallel",)).
    b16 = _round_up(B, 16)
    tile = min(_round_up(batch_tile, 16), b16)
    if b16 // tile < 2 and b16 >= 32:
        tile = _round_up(b16 // 2, 16)
    Bp = _round_up(B, tile)
    n_tiles = Bp // tile

    slab_p = jnp.pad(slab, ((0, Bp - B), (0, 0), (0, 0)))
    # regroup to [n_tiles, L1*tile, 192] with rows ordered (time, batch-within-tile)
    slab_g = slab_p.reshape(n_tiles, tile, L1, slab.shape[-1]) \
                   .transpose(0, 2, 1, 3).reshape(n_tiles, L1 * tile, slab.shape[-1])

    emg_p = jnp.pad(emg_features,
                    ((0, Bp - B), (0, kp["emg_in_pad"] - emg_features.shape[1]))).astype(cdt)

    logits_p, emb_p = _fused_head(slab_g, emg_p, kp, tile, L1, vmem_limit_bytes)

    logits = logits_p[:B, :kp["num_gestures"]]
    out = {"logits": logits, "emg_embedding": emb_p[:B]}
    if labels is not None:   # scalar cross-entropy done in plain JAX (not a kernel)
        logz = jax.nn.logsumexp(logits, axis=-1)
        picked = jnp.take_along_axis(logits, labels[:, None], axis=-1)[:, 0]
        out["loss"] = jnp.mean(logz - picked)
    return out


# =================================================================================
# Reference 1: pure-JAX forward on the PREPARED params (mirrors wrapper+kernel math).
# =================================================================================
def reference_forward_prepared(imu, emg, kp):
    cdt = kp["compute_dtype"]
    hp = jax.lax.Precision.HIGHEST
    f32 = jnp.float32
    H = LSTM_HIDDEN

    def dot(a, b):
        return jnp.dot(a.astype(cdt), b, preferred_element_type=f32, precision=hp)

    # EMG encoder
    (we1, be1), (we2, be2), (we3, be3) = kp["emg"]
    emg_p = jnp.pad(emg, ((0, 0), (0, kp["emg_in_pad"] - emg.shape[1])))
    e = jnp.maximum(dot(emg_p, we1) + be1, 0.0)
    e = jnp.maximum(dot(e, we2) + be2, 0.0)
    emb = dot(e, we3) + be3

    # conv trunk
    x1 = _conv1_pool(imu, kp)
    slab = _conv2_im2col(x1)
    wc2, bc2 = kp["conv2"]
    y2 = jnp.maximum(dot(slab, wc2) + bc2, 0.0)
    p2 = jnp.maximum(y2[:, 0::2], y2[:, 1::2]).astype(cdt)
    wc3, bc3 = kp["conv3"]
    L2 = p2.shape[1]
    xp3 = jnp.pad(p2, ((0, 0), (1, 1), (0, 0)))
    y3 = jnp.maximum(dot(xp3[:, 0:L2], wc3[0]) + dot(xp3[:, 1:L2 + 1], wc3[1])
                     + dot(xp3[:, 2:L2 + 2], wc3[2]) + bc3, 0.0)
    xl = jnp.maximum(y3[:, 0::2], y3[:, 1::2]).astype(cdt)          # [B, T, 256]

    # 2-layer BiLSTM
    wih1, bih1, wih2, bih2, whh = kp["lstm"]
    B, T, _ = xl.shape

    def step(pre, h, c, whh_k):
        g = pre + dot(h, whh_k)
        s = 1.0 / (1.0 + jnp.exp(-g[:, :3 * H]))
        gg = jnp.tanh(g[:, 3 * H:])
        c = s[:, H:2 * H] * c + s[:, :H] * gg
        return s[:, 2 * H:3 * H] * jnp.tanh(c), c

    P1 = dot(xl, wih1) + bih1
    zero = jnp.zeros((B, H), f32)
    h, c = zero, zero
    h1f = []
    for t in range(T):
        h, c = step(P1[:, t, :4 * H], h, c, whh[0]); h1f.append(h)
    h, c = zero, zero
    h1b = [None] * T
    for t in range(T - 1, -1, -1):
        h, c = step(P1[:, t, 4 * H:], h, c, whh[1]); h1b[t] = h
    X2 = jnp.stack([jnp.concatenate([h1f[t], h1b[t]], axis=1) for t in range(T)], axis=1)
    P2 = dot(X2, wih2) + bih2
    h, c = zero, zero
    for t in range(T):
        h, c = step(P2[:, t, :4 * H], h, c, whh[2])
    h2f = h
    h, c = zero, zero
    for t in range(T - 1, -1, -1):
        h, c = step(P2[:, t, 4 * H:], h, c, whh[3])
    h2b = h

    wfc1, bfc1, wfc2, bfc2 = kp["fc"]
    z = jnp.maximum(dot(h2f, wfc1[:H]) + dot(h2b, wfc1[H:2 * H])
                    + dot(emb, wfc1[2 * H:]) + bfc1, 0.0)
    logits = dot(z, wfc2) + bfc2
    return logits[:, :kp["num_gestures"]], emb


# =================================================================================
# Reference 2: pure-JAX f32 forward on the RAW params (PyTorch graph, un-folded BN).
# =================================================================================
def reference_forward_raw(imu, emg, raw):
    hp = jax.lax.Precision.HIGHEST
    mm = lambda a, b: jnp.dot(a, b, precision=hp)

    def bn(x, s):
        return (x - s["mean"]) * jax.lax.rsqrt(s["var"] + BN_EPS) * s["gamma"] + s["beta"]

    h = emg
    for i, lyr in enumerate(raw["emg"]):
        h = bn(mm(h, lyr["w"].T) + lyr["b"], lyr["bn"])
        if i < 2:
            h = jnp.maximum(h, 0.0)
    emg_emb = h

    x = jnp.transpose(imu, (0, 2, 1))
    for lyr in raw["conv"]:
        w = lyr["w"]
        L = x.shape[1]
        xp = jnp.pad(x, ((0, 0), (1, 1), (0, 0)))
        y = sum(jnp.einsum("blc,cd->bld", xp[:, k:k + L, :], w[:, :, k].T, precision=hp)
                for k in range(3))
        y = jnp.maximum(bn(y, lyr["bn"]), 0.0)
        x = jnp.maximum(y[:, 0::2, :], y[:, 1::2, :])

    B, T, _ = x.shape
    H = LSTM_HIDDEN

    def run_dir(seq, cell):
        h = jnp.zeros((B, H)); c = jnp.zeros((B, H)); outs = []
        for xt in seq:
            g = mm(xt, cell["w_ih"].T) + mm(h, cell["w_hh"].T) + cell["b"]
            i = jax.nn.sigmoid(g[:, :H]); f = jax.nn.sigmoid(g[:, H:2 * H])
            gg = jnp.tanh(g[:, 2 * H:3 * H]); o = jax.nn.sigmoid(g[:, 3 * H:])
            c = f * c + i * gg
            h = o * jnp.tanh(c)
            outs.append(h)
        return outs, h

    seq = [x[:, t, :] for t in range(T)]
    of, _ = run_dir(seq, raw["lstm"][0])
    ob = run_dir(seq[::-1], raw["lstm"][1])[0][::-1]
    seq2 = [jnp.concatenate([of[t], ob[t]], axis=1) for t in range(T)]
    _, h2f = run_dir(seq2, raw["lstm"][2])
    _, h2b = run_dir(seq2[::-1], raw["lstm"][3])

    rep = jnp.concatenate([h2f, h2b, emg_emb], axis=1)
    z = jnp.maximum(mm(rep, raw["fc1"]["w"].T) + raw["fc1"]["b"], 0.0)
    logits = mm(z, raw["fc2"]["w"].T) + raw["fc2"]["b"]
    return logits, emg_emb


if __name__ == "__main__":
    NUM_IMU_SENSORS = 6
    IMU_SEQ_LEN = 32          # -> LSTM sequence length 4 after three MaxPool1d(2)
    NUM_GESTURES = 10
    B = 16

    key = jax.random.PRNGKey(0)
    pkey, dkey = jax.random.split(key)
    raw = init_raw_params(pkey, num_imu_sensors=NUM_IMU_SENSORS, num_gestures=NUM_GESTURES)
    kp = prepare_params(raw, num_imu_sensors=NUM_IMU_SENSORS, num_gestures=NUM_GESTURES)

    k1, k2, k3 = jax.random.split(dkey, 3)
    imu = jax.random.normal(k1, (B, NUM_IMU_SENSORS, IMU_SEQ_LEN), jnp.float32)
    emg = jax.random.normal(k2, (B, EMG_FEATURES), jnp.float32)
    labels = jax.random.randint(k3, (B,), 0, NUM_GESTURES)

    out = combined_gesture_forward(imu, emg, kp, batch_tile=256, labels=labels)
    logits = jax.block_until_ready(out["logits"])
    emb = out["emg_embedding"]
    assert logits.shape == (B, NUM_GESTURES)
    assert emb.shape == (B, EMG_EMBEDDING_DIM)

    # Check A: BN folding / gate reorder / im2col packing are exact algebra (f32 vs f32).
    kp_f32 = prepare_params(raw, num_imu_sensors=NUM_IMU_SENSORS,
                            num_gestures=NUM_GESTURES, compute_dtype=jnp.float32)
    pl_logits32, pl_emb32 = reference_forward_prepared(imu, emg, kp_f32)
    raw_logits, raw_emb = reference_forward_raw(imu, emg, raw)
    assert jnp.allclose(pl_emb32, raw_emb, atol=2e-3, rtol=2e-3), (
        f"folding emb max err {jnp.max(jnp.abs(pl_emb32 - raw_emb))}")
    assert jnp.allclose(pl_logits32, raw_logits, atol=2e-3, rtol=2e-3), (
        f"folding logits max err {jnp.max(jnp.abs(pl_logits32 - raw_logits))}")

    # Check B: Pallas pipeline vs pure-JAX forward on the identical bf16 prepared params.
    ref_logits, ref_emb = reference_forward_prepared(imu, emg, kp)
    assert jnp.allclose(emb, ref_emb, atol=2e-2, rtol=2e-2), (
        f"kernel emb max err {jnp.max(jnp.abs(emb - ref_emb))}")
    assert jnp.allclose(logits, ref_logits, atol=2e-2, rtol=2e-2), (
        f"kernel logits max err {jnp.max(jnp.abs(logits - ref_logits))}")
    assert bool(jnp.isfinite(out["loss"]))
    print("KERNEL_OK")
</pallas_src>

<mosaic_0001>
module attributes {stable_mosaic.version = 11 : i64} {
  func.func @kernel(%arg0: i32, %arg1: memref<1x256x192xbf16, #tpu.memory_space<vmem>>, %arg2: memref<16x128xbf16, #tpu.memory_space<vmem>>, %arg3: memref<128x256xbf16, #tpu.memory_space<vmem>>, %arg4: memref<1x256xf32, #tpu.memory_space<vmem>>, %arg5: memref<256x512xbf16, #tpu.memory_space<vmem>>, %arg6: memref<1x512xf32, #tpu.memory_space<vmem>>, %arg7: memref<512x128xbf16, #tpu.memory_space<vmem>>, %arg8: memref<1x128xf32, #tpu.memory_space<vmem>>, %arg9: memref<192x128xbf16, #tpu.memory_space<vmem>>, %arg10: memref<1x128xf32, #tpu.memory_space<vmem>>, %arg11: memref<3x128x256xbf16, #tpu.memory_space<vmem>>, %arg12: memref<1x256xf32, #tpu.memory_space<vmem>>, %arg13: memref<256x1024xbf16, #tpu.memory_space<vmem>>, %arg14: memref<1x1024xf32, #tpu.memory_space<vmem>>, %arg15: memref<256x1024xbf16, #tpu.memory_space<vmem>>, %arg16: memref<1x1024xf32, #tpu.memory_space<vmem>>, %arg17: memref<4x128x512xbf16, #tpu.memory_space<vmem>>, %arg18: memref<384x256xbf16, #tpu.memory_space<vmem>>, %arg19: memref<1x256xf32, #tpu.memory_space<vmem>>, %arg20: memref<256x128xbf16, #tpu.memory_space<vmem>>, %arg21: memref<1x128xf32, #tpu.memory_space<vmem>>, %arg22: memref<16x128xf32, #tpu.memory_space<vmem>>, %arg23: memref<16x128xf32, #tpu.memory_space<vmem>>, %arg24: memref<160x128xbf16, #tpu.memory_space<vmem>>) attributes {dimension_semantics = [#tpu.dimension_semantics<parallel>], iteration_bounds = array<i64: 1>, scalar_prefetch = 0 : i64, scratch_operands = 1 : i64, tpu.core_type = #tpu.core_type<tc>, window_params = [{transform_indices = @transform_0, window_bounds = array<i64: 1, 256, 192>}, {transform_indices = @transform_1, window_bounds = array<i64: 16, 128>}, {pipeline_mode = #tpu.pipeline_mode<synchronous>, transform_indices = @transform_2, window_bounds = array<i64: 128, 256>}, {pipeline_mode = #tpu.pipeline_mode<synchronous>, transform_indices = @transform_3, window_bounds = array<i64: 1, 256>}, {pipeline_mode = #tpu.pipeline_mode<synchronous>, transform_indices = @transform_4, window_bounds = array<i64: 256, 512>}, {pipeline_mode = #tpu.pipeline_mode<synchronous>, transform_indices = @transform_5, window_bounds = array<i64: 1, 512>}, {pipeline_mode = #tpu.pipeline_mode<synchronous>, transform_indices = @transform_6, window_bounds = array<i64: 512, 128>}, {pipeline_mode = #tpu.pipeline_mode<synchronous>, transform_indices = @transform_7, window_bounds = array<i64: 1, 128>}, {pipeline_mode = #tpu.pipeline_mode<synchronous>, transform_indices = @transform_8, window_bounds = array<i64: 192, 128>}, {pipeline_mode = #tpu.pipeline_mode<synchronous>, transform_indices = @transform_9, window_bounds = array<i64: 1, 128>}, {pipeline_mode = #tpu.pipeline_mode<synchronous>, transform_indices = @transform_10, window_bounds = array<i64: 3, 128, 256>}, {pipeline_mode = #tpu.pipeline_mode<synchronous>, transform_indices = @transform_11, window_bounds = array<i64: 1, 256>}, {pipeline_mode = #tpu.pipeline_mode<synchronous>, transform_indices = @transform_12, window_bounds = array<i64: 256, 1024>}, {pipeline_mode = #tpu.pipeline_mode<synchronous>, transform_indices = @transform_13, window_bounds = array<i64: 1, 1024>}, {pipeline_mode = #tpu.pipeline_mode<synchronous>, transform_indices = @transform_14, window_bounds = array<i64: 256, 1024>}, {pipeline_mode = #tpu.pipeline_mode<synchronous>, transform_indices = @transform_15, window_bounds = array<i64: 1, 1024>}, {pipeline_mode = #tpu.pipeline_mode<synchronous>, transform_indices = @transform_16, window_bounds = array<i64: 4, 128, 512>}, {pipeline_mode = #tpu.pipeline_mode<synchronous>, transform_indices = @transform_17, window_bounds = array<i64: 384, 256>}, {pipeline_mode = #tpu.pipeline_mode<synchronous>, transform_indices = @transform_18, window_bounds = array<i64: 1, 256>}, {pipeline_mode = #tpu.pipeline_mode<synchronous>, transform_indices = @transform_19, window_bounds = array<i64: 256, 128>}, {pipeline_mode = #tpu.pipeline_mode<synchronous>, transform_indices = @transform_20, window_bounds = array<i64: 1, 128>}, {transform_indices = @transform_21, window_bounds = array<i64: 16, 128>}, {transform_indices = @transform_22, window_bounds = array<i64: 16, 128>}]} {
    %c0 = arith.constant 0 : index
    %c0_0 = arith.constant 0 : index
    %0 = vector.load %arg2[%c0, %c0_0] : memref<16x128xbf16, #tpu.memory_space<vmem>>, vector<16x128xbf16>
    %c0_1 = arith.constant 0 : index
    %c0_2 = arith.constant 0 : index
    %1 = vector.load %arg3[%c0_1, %c0_2] : memref<128x256xbf16, #tpu.memory_space<vmem>>, vector<128x256xbf16>
    %cst = arith.constant dense<0.000000e+00> : vector<16x256xf32>
    %2 = tpu.matmul %0, %1, %cst {dimension_numbers = #tpu.dot_dimension_numbers<[1], [0], [0], [1], [0, 0, 1, 1], [], []>} : vector<16x128xbf16>, vector<128x256xbf16>, vector<16x256xf32> -> vector<16x256xf32>
    %c0_3 = arith.constant 0 : index
    %c0_4 = arith.constant 0 : index
    %3 = vector.load %arg4[%c0_3, %c0_4] : memref<1x256xf32, #tpu.memory_space<vmem>>, vector<1x256xf32>
    %4 = vector.broadcast %3 : vector<1x256xf32> to vector<16x256xf32>
    %5 = arith.addf %2, %4 : vector<16x256xf32>
    %cst_5 = arith.constant 0.000000e+00 : f32
    %6 = vector.broadcast %cst_5 : f32 to vector<16x256xf32>
    %7 = arith.maximumf %5, %6 : vector<16x256xf32>
    %8 = arith.truncf %7 : vector<16x256xf32> to vector<16x256xbf16>
    %c0_6 = arith.constant 0 : index
    %c0_7 = arith.constant 0 : index
    %9 = vector.load %arg5[%c0_6, %c0_7] : memref<256x512xbf16, #tpu.memory_space<vmem>>, vector<256x512xbf16>
    %cst_8 = arith.constant dense<0.000000e+00> : vector<16x512xf32>
    %10 = tpu.matmul %8, %9, %cst_8 {dimension_numbers = #tpu.dot_dimension_numbers<[1], [0], [0], [1], [0, 0, 1, 1], [], []>} : vector<16x256xbf16>, vector<256x512xbf16>, vector<16x512xf32> -> vector<16x512xf32>
    %c0_9 = arith.constant 0 : index
    %c0_10 = arith.constant 0 : index
    %11 = vector.load %arg6[%c0_9, %c0_10] : memref<1x512xf32, #tpu.memory_space<vmem>>, vector<1x512xf32>
    %12 = vector.broadcast %11 : vector<1x512xf32> to vector<16x512xf32>
    %13 = arith.addf %10, %12 : vector<16x512xf32>
    %cst_11 = arith.constant 0.000000e+00 : f32
    %14 = vector.broadcast %cst_11 : f32 to vector<16x512xf32>
    %15 = arith.maximumf %13, %14 : vector<16x512xf32>
    %16 = arith.truncf %15 : vector<16x512xf32> to vector<16x512xbf16>
    %c0_12 = arith.constant 0 : index
    %c0_13 = arith.constant 0 : index
    %17 = vector.load %arg7[%c0_12, %c0_13] : memref<512x128xbf16, #tpu.memory_space<vmem>>, vector<512x128xbf16>
    %cst_14 = arith.constant dense<0.000000e+00> : vector<16x128xf32>
    %18 = tpu.matmul %16, %17, %cst_14 {dimension_numbers = #tpu.dot_dimension_numbers<[1], [0], [0], [1], [0, 0, 1, 1], [], []>} : vector<16x512xbf16>, vector<512x128xbf16>, vector<16x128xf32> -> vector<16x128xf32>
    %c0_15 = arith.constant 0 : index
    %c0_16 = arith.constant 0 : index
    %19 = vector.load %arg8[%c0_15, %c0_16] : memref<1x128xf32, #tpu.memory_space<vmem>>, vector<1x128xf32>
    %20 = vector.broadcast %19 : vector<1x128xf32> to vector<16x128xf32>
    %21 = arith.addf %18, %20 : vector<16x128xf32>
    %c0_17 = arith.constant 0 : index
    %c0_18 = arith.constant 0 : index
    %22 = vector.load %arg23[%c0_17, %c0_18] : memref<16x128xf32, #tpu.memory_space<vmem>>, vector<16x128xf32>
    tpu.vector_store %arg23[%c0_17, %c0_18], %21 {strides = array<i32>} : memref<16x128xf32, #tpu.memory_space<vmem>>, vector<16x128xf32>,
    %c0_19 = arith.constant 0 : index
    %c0_20 = arith.constant 0 : index
    %c0_21 = arith.constant 0 : index
    %23 = vector.load %arg1[%c0_19, %c0_20, %c0_21] : memref<1x256x192xbf16, #tpu.memory_space<vmem>>, vector<1x256x192xbf16>
    %24 = vector.shape_cast %23 : vector<1x256x192xbf16> to vector<256x192xbf16>
    %c0_22 = arith.constant 0 : index
    %c0_23 = arith.constant 0 : index
    %25 = vector.load %arg9[%c0_22, %c0_23] : memref<192x128xbf16, #tpu.memory_space<vmem>>, vector<192x128xbf16>
    %cst_24 = arith.constant dense<0.000000e+00> : vector<256x128xf32>
    %26 = tpu.matmul %24, %25, %cst_24 {dimension_numbers = #tpu.dot_dimension_numbers<[1], [0], [0], [1], [0, 0, 1, 1], [], []>} : vector<256x192xbf16>, vector<192x128xbf16>, vector<256x128xf32> -> vector<256x128xf32>
    %c0_25 = arith.constant 0 : index
    %c0_26 = arith.constant 0 : index
    %27 = vector.load %arg10[%c0_25, %c0_26] : memref<1x128xf32, #tpu.memory_space<vmem>>, vector<1x128xf32>
    %28 = vector.broadcast %27 : vector<1x128xf32> to vector<256x128xf32>
    %29 = arith.addf %26, %28 : vector<256x128xf32>
    %cst_27 = arith.constant 0.000000e+00 : f32
    %30 = vector.broadcast %cst_27 : f32 to vector<256x128xf32>
    %31 = arith.maximumf %29, %30 : vector<256x128xf32>
    %cst_28 = arith.constant 0.000000e+00 : bf16
    %32 = vector.broadcast %cst_28 : bf16 to vector<16x128xbf16>
    %c0_29 = arith.constant 0 : index
    %c0_30 = arith.constant 0 : index
    %33 = vector.load %arg24[%c0_29, %c0_30] : memref<160x128xbf16, #tpu.memory_space<vmem>>, vector<16x128xbf16>
    tpu.vector_store %arg24[%c0_29, %c0_30], %32 {strides = array<i32>} : memref<160x128xbf16, #tpu.memory_space<vmem>>, vector<16x128xbf16>,
    %c144 = arith.constant 144 : index
    %c0_31 = arith.constant 0 : index
    %34 = vector.load %arg24[%c144, %c0_31] : memref<160x128xbf16, #tpu.memory_space<vmem>>, vector<16x128xbf16>
    tpu.vector_store %arg24[%c144, %c0_31], %32 {strides = array<i32>} : memref<160x128xbf16, #tpu.memory_space<vmem>>, vector<16x128xbf16>,
    %35 = vector.extract_strided_slice %31 {offsets = [0, 0], sizes = [16, 128], strides = [1, 1]} : vector<256x128xf32> to vector<16x128xf32>
    %36 = vector.extract_strided_slice %31 {offsets = [16, 0], sizes = [16, 128], strides = [1, 1]} : vector<256x128xf32> to vector<16x128xf32>
    %37 = arith.maximumf %35, %36 : vector<16x128xf32>
    %38 = arith.truncf %37 : vector<16x128xf32> to vector<16x128xbf16>
    %c16 = arith.constant 16 : index
    %c0_32 = arith.constant 0 : index
    %39 = vector.load %arg24[%c16, %c0_32] : memref<160x128xbf16, #tpu.memory_space<vmem>>, vector<16x128xbf16>
    tpu.vector_store %arg24[%c16, %c0_32], %38 {strides = array<i32>} : memref<160x128xbf16, #tpu.memory_space<vmem>>, vector<16x128xbf16>,
    %40 = vector.extract_strided_slice %31 {offsets = [32, 0], sizes = [16, 128], strides = [1, 1]} : vector<256x128xf32> to vector<16x128xf32>
    %41 = vector.extract_strided_slice %31 {offsets = [48, 0], sizes = [16, 128], strides = [1, 1]} : vector<256x128xf32> to vector<16x128xf32>
    %42 = arith.maximumf %40, %41 : vector<16x128xf32>
    %43 = arith.truncf %42 : vector<16x128xf32> to vector<16x128xbf16>
    %c32 = arith.constant 32 : index
    %c0_33 = arith.constant 0 : index
    %44 = vector.load %arg24[%c32, %c0_33] : memref<160x128xbf16, #tpu.memory_space<vmem>>, vector<16x128xbf16>
    tpu.vector_store %arg24[%c32, %c0_33], %43 {strides = array<i32>} : memref<160x128xbf16, #tpu.memory_space<vmem>>, vector<16x128xbf16>,
    %45 = vector.extract_strided_slice %31 {offsets = [64, 0], sizes = [16, 128], strides = [1, 1]} : vector<256x128xf32> to vector<16x128xf32>
    %46 = vector.extract_strided_slice %31 {offsets = [80, 0], sizes = [16, 128], strides = [1, 1]} : vector<256x128xf32> to vector<16x128xf32>
    %47 = arith.maximumf %45, %46 : vector<16x128xf32>
    %48 = arith.truncf %47 : vector<16x128xf32> to vector<16x128xbf16>
    %c48 = arith.constant 48 : index
    %c0_34 = arith.constant 0 : index
    %49 = vector.load %arg24[%c48, %c0_34] : memref<160x128xbf16, #tpu.memory_space<vmem>>, vector<16x128xbf16>
    tpu.vector_store %arg24[%c48, %c0_34], %48 {strides = array<i32>} : memref<160x128xbf16, #tpu.memory_space<vmem>>, vector<16x128xbf16>,
    %50 = vector.extract_strided_slice %31 {offsets = [96, 0], sizes = [16, 128], strides = [1, 1]} : vector<256x128xf32> to vector<16x128xf32>
    %51 = vector.extract_strided_slice %31 {offsets = [112, 0], sizes = [16, 128], strides = [1, 1]} : vector<256x128xf32> to vector<16x128xf32>
    %52 = arith.maximumf %50, %51 : vector<16x128xf32>
    %53 = arith.truncf %52 : vector<16x128xf32> to vector<16x128xbf16>
    %c64 = arith.constant 64 : index
    %c0_35 = arith.constant 0 : index
    %54 = vector.load %arg24[%c64, %c0_35] : memref<160x128xbf16, #tpu.memory_space<vmem>>, vector<16x128xbf16>
    tpu.vector_store %arg24[%c64, %c0_35], %53 {strides = array<i32>} : memref<160x128xbf16, #tpu.memory_space<vmem>>, vector<16x128xbf16>,
    %55 = vector.extract_strided_slice %31 {offsets = [128, 0], sizes = [16, 128], strides = [1, 1]} : vector<256x128xf32> to vector<16x128xf32>
    %56 = vector.extract_strided_slice %31 {offsets = [144, 0], sizes = [16, 128], strides = [1, 1]} : vector<256x128xf32> to vector<16x128xf32>
    %57 = arith.maximumf %55, %56 : vector<16x128xf32>
    %58 = arith.truncf %57 : vector<16x128xf32> to vector<16x128xbf16>
    %c80 = arith.constant 80 : index
    %c0_36 = arith.constant 0 : index
    %59 = vector.load %arg24[%c80, %c0_36] : memref<160x128xbf16, #tpu.memory_space<vmem>>, vector<16x128xbf16>
    tpu.vector_store %arg24[%c80, %c0_36], %58 {strides = array<i32>} : memref<160x128xbf16, #tpu.memory_space<vmem>>, vector<16x128xbf16>,
    %60 = vector.extract_strided_slice %31 {offsets = [160, 0], sizes = [16, 128], strides = [1, 1]} : vector<256x128xf32> to vector<16x128xf32>
    %61 = vector.extract_strided_slice %31 {offsets = [176, 0], sizes = [16, 128], strides = [1, 1]} : vector<256x128xf32> to vector<16x128xf32>
    %62 = arith.maximumf %60, %61 : vector<16x128xf32>
    %63 = arith.truncf %62 : vector<16x128xf32> to vector<16x128xbf16>
    %c96 = arith.constant 96 : index
    %c0_37 = arith.constant 0 : index
    %64 = vector.load %arg24[%c96, %c0_37] : memref<160x128xbf16, #tpu.memory_space<vmem>>, vector<16x128xbf16>
    tpu.vector_store %arg24[%c96, %c0_37], %63 {strides = array<i32>} : memref<160x128xbf16, #tpu.memory_space<vmem>>, vector<16x128xbf16>,
    %65 = vector.extract_strided_slice %31 {offsets = [192, 0], sizes = [16, 128], strides = [1, 1]} : vector<256x128xf32> to vector<16x128xf32>
    %66 = vector.extract_strided_slice %31 {offsets = [208, 0], sizes = [16, 128], strides = [1, 1]} : vector<256x128xf32> to vector<16x128xf32>
    %67 = arith.maximumf %65, %66 : vector<16x128xf32>
    %68 = arith.truncf %67 : vector<16x128xf32> to vector<16x128xbf16>
    %c112 = arith.constant 112 : index
    %c0_38 = arith.constant 0 : index
    %69 = vector.load %arg24[%c112, %c0_38] : memref<160x128xbf16, #tpu.memory_space<vmem>>, vector<16x128xbf16>
    tpu.vector_store %arg24[%c112, %c0_38], %68 {strides = array<i32>} : memref<160x128xbf16, #tpu.memory_space<vmem>>, vector<16x128xbf16>,
    %70 = vector.extract_strided_slice %31 {offsets = [224, 0], sizes = [16, 128], strides = [1, 1]} : vector<256x128xf32> to vector<16x128xf32>
    %71 = vector.extract_strided_slice %31 {offsets = [240, 0], sizes = [16, 128], strides = [1, 1]} : vector<256x128xf32> to vector<16x128xf32>
    %72 = arith.maximumf %70, %71 : vector<16x128xf32>
    %73 = arith.truncf %72 : vector<16x128xf32> to vector<16x128xbf16>
    %c128 = arith.constant 128 : index
    %c0_39 = arith.constant 0 : index
    %74 = vector.load %arg24[%c128, %c0_39] : memref<160x128xbf16, #tpu.memory_space<vmem>>, vector<16x128xbf16>
    tpu.vector_store %arg24[%c128, %c0_39], %73 {strides = array<i32>} : memref<160x128xbf16, #tpu.memory_space<vmem>>, vector<16x128xbf16>,
    %c0_40 = arith.constant 0 : index
    %c0_41 = arith.constant 0 : index
    %75 = vector.load %arg24[%c0_40, %c0_41] : memref<160x128xbf16, #tpu.memory_space<vmem>>, vector<128x128xbf16>
    %c0_42 = arith.constant 0 : index
    %c0_43 = arith.constant 0 : index
    %c0_44 = arith.constant 0 : index
    %76 = vector.load %arg11[%c0_42, %c0_43, %c0_44] : memref<3x128x256xbf16, #tpu.memory_space<vmem>>, vector<1x128x256xbf16>
    %77 = vector.shape_cast %76 : vector<1x128x256xbf16> to vector<128x256xbf16>
    %cst_45 = arith.constant dense<0.000000e+00> : vector<128x256xf32>
    %78 = tpu.matmul %75, %77, %cst_45 {dimension_numbers = #tpu.dot_dimension_numbers<[1], [0], [0], [1], [0, 0, 1, 1], [], []>} : vector<128x128xbf16>, vector<128x256xbf16>, vector<128x256xf32> -> vector<128x256xf32>
    %c16_46 = arith.constant 16 : index
    %c0_47 = arith.constant 0 : index
    %79 = vector.load %arg24[%c16_46, %c0_47] : memref<160x128xbf16, #tpu.memory_space<vmem>>, vector<128x128xbf16>
    %c1 = arith.constant 1 : index
    %c0_48 = arith.constant 0 : index
    %c0_49 = arith.constant 0 : index
    %80 = vector.load %arg11[%c1, %c0_48, %c0_49] : memref<3x128x256xbf16, #tpu.memory_space<vmem>>, vector<1x128x256xbf16>
    %81 = vector.shape_cast %80 : vector<1x128x256xbf16> to vector<128x256xbf16>
    %cst_50 = arith.constant dense<0.000000e+00> : vector<128x256xf32>
    %82 = tpu.matmul %79, %81, %cst_50 {dimension_numbers = #tpu.dot_dimension_numbers<[1], [0], [0], [1], [0, 0, 1, 1], [], []>} : vector<128x128xbf16>, vector<128x256xbf16>, vector<128x256xf32> -> vector<128x256xf32>
    %83 = arith.addf %78, %82 : vector<128x256xf32>
    %c32_51 = arith.constant 32 : index
    %c0_52 = arith.constant 0 : index
    %84 = vector.load %arg24[%c32_51, %c0_52] : memref<160x128xbf16, #tpu.memory_space<vmem>>, vector<128x128xbf16>
    %c2 = arith.constant 2 : index
    %c0_53 = arith.constant 0 : index
    %c0_54 = arith.constant 0 : index
    %85 = vector.load %arg11[%c2, %c0_53, %c0_54] : memref<3x128x256xbf16, #tpu.memory_space<vmem>>, vector<1x128x256xbf16>
    %86 = vector.shape_cast %85 : vector<1x128x256xbf16> to vector<128x256xbf16>
    %cst_55 = arith.constant dense<0.000000e+00> : vector<128x256xf32>
    %87 = tpu.matmul %84, %86, %cst_55 {dimension_numbers = #tpu.dot_dimension_numbers<[1], [0], [0], [1], [0, 0, 1, 1], [], []>} : vector<128x128xbf16>, vector<128x256xbf16>, vector<128x256xf32> -> vector<128x256xf32>
    %88 = arith.addf %83, %87 : vector<128x256xf32>
    %c0_56 = arith.constant 0 : index
    %c0_57 = arith.constant 0 : index
    %89 = vector.load %arg12[%c0_56, %c0_57] : memref<1x256xf32, #tpu.memory_space<vmem>>, vector<1x256xf32>
    %90 = vector.broadcast %89 : vector<1x256xf32> to vector<128x256xf32>
    %91 = arith.addf %88, %90 : vector<128x256xf32>
    %cst_58 = arith.constant 0.000000e+00 : f32
    %92 = vector.broadcast %cst_58 : f32 to vector<128x256xf32>
    %93 = arith.maximumf %91, %92 : vector<128x256xf32>
    %94 = vector.extract_strided_slice %93 {offsets = [0, 0], sizes = [16, 256], strides = [1, 1]} : vector<128x256xf32> to vector<16x256xf32>
    %95 = vector.extract_strided_slice %93 {offsets = [16, 0], sizes = [16, 256], strides = [1, 1]} : vector<128x256xf32> to vector<16x256xf32>
    %96 = arith.maximumf %94, %95 : vector<16x256xf32>
    %97 = arith.truncf %96 : vector<16x256xf32> to vector<16x256xbf16>
    %98 = vector.extract_strided_slice %93 {offsets = [32, 0], sizes = [16, 256], strides = [1, 1]} : vector<128x256xf32> to vector<16x256xf32>
    %99 = vector.extract_strided_slice %93 {offsets = [48, 0], sizes = [16, 256], strides = [1, 1]} : vector<128x256xf32> to vector<16x256xf32>
    %100 = arith.maximumf %98, %99 : vector<16x256xf32>
    %101 = arith.truncf %100 : vector<16x256xf32> to vector<16x256xbf16>
    %102 = vector.extract_strided_slice %93 {offsets = [64, 0], sizes = [16, 256], strides = [1, 1]} : vector<128x256xf32> to vector<16x256xf32>
    %103 = vector.extract_strided_slice %93 {offsets = [80, 0], sizes = [16, 256], strides = [1, 1]} : vector<128x256xf32> to vector<16x256xf32>
    %104 = arith.maximumf %102, %103 : vector<16x256xf32>
    %105 = arith.truncf %104 : vector<16x256xf32> to vector<16x256xbf16>
    %106 = vector.extract_strided_slice %93 {offsets = [96, 0], sizes = [16, 256], strides = [1, 1]} : vector<128x256xf32> to vector<16x256xf32>
    %107 = vector.extract_strided_slice %93 {offsets = [112, 0], sizes = [16, 256], strides = [1, 1]} : vector<128x256xf32> to vector<16x256xf32>
    %108 = arith.maximumf %106, %107 : vector<16x256xf32>
    %109 = arith.truncf %108 : vector<16x256xf32> to vector<16x256xbf16>
    %110 = tpu.concatenate %97, %101, %105, %109 in 0 : vector<16x256xbf16>, vector<16x256xbf16>, vector<16x256xbf16>, vector<16x256xbf16> -> vector<64x256xbf16>
    %c0_59 = arith.constant 0 : index
    %c0_60 = arith.constant 0 : index
    %111 = vector.load %arg13[%c0_59, %c0_60] : memref<256x1024xbf16, #tpu.memory_space<vmem>>, vector<256x1024xbf16>
    %cst_61 = arith.constant dense<0.000000e+00> : vector<64x1024xf32>
    %112 = tpu.matmul %110, %111, %cst_61 {dimension_numbers = #tpu.dot_dimension_numbers<[1], [0], [0], [1], [0, 0, 1, 1], [], []>} : vector<64x256xbf16>, vector<256x1024xbf16>, vector<64x1024xf32> -> vector<64x1024xf32>
    %c0_62 = arith.constant 0 : index
    %c0_63 = arith.constant 0 : index
    %113 = vector.load %arg14[%c0_62, %c0_63] : memref<1x1024xf32, #tpu.memory_space<vmem>>, vector<1x1024xf32>
    %114 = vector.broadcast %113 : vector<1x1024xf32> to vector<64x1024xf32>
    %115 = arith.addf %112, %114 : vector<64x1024xf32>
    %c0_64 = arith.constant 0 : index
    %c0_65 = arith.constant 0 : index
    %c0_66 = arith.constant 0 : index
    %116 = vector.load %arg17[%c0_64, %c0_65, %c0_66] : memref<4x128x512xbf16, #tpu.memory_space<vmem>>, vector<1x128x512xbf16>
    %117 = vector.shape_cast %116 : vector<1x128x512xbf16> to vector<128x512xbf16>
    %c1_67 = arith.constant 1 : index
    %c0_68 = arith.constant 0 : index
    %c0_69 = arith.constant 0 : index
    %118 = vector.load %arg17[%c1_67, %c0_68, %c0_69] : memref<4x128x512xbf16, #tpu.memory_space<vmem>>, vector<1x128x512xbf16>
    %119 = vector.shape_cast %118 : vector<1x128x512xbf16> to vector<128x512xbf16>
    %c2_70 = arith.constant 2 : index
    %c0_71 = arith.constant 0 : index
    %c0_72 = arith.constant 0 : index
    %120 = vector.load %arg17[%c2_70, %c0_71, %c0_72] : memref<4x128x512xbf16, #tpu.memory_space<vmem>>, vector<1x128x512xbf16>
    %121 = vector.shape_cast %120 : vector<1x128x512xbf16> to vector<128x512xbf16>
    %c3 = arith.constant 3 : index
    %c0_73 = arith.constant 0 : index
    %c0_74 = arith.constant 0 : index
    %122 = vector.load %arg17[%c3, %c0_73, %c0_74] : memref<4x128x512xbf16, #tpu.memory_space<vmem>>, vector<1x128x512xbf16>
    %123 = vector.shape_cast %122 : vector<1x128x512xbf16> to vector<128x512xbf16>
    %cst_75 = arith.constant 0.000000e+00 : f32
    %124 = vector.broadcast %cst_75 : f32 to vector<16x128xf32>
    %125 = vector.extract_strided_slice %115 {offsets = [0, 0], sizes = [16, 512], strides = [1, 1]} : vector<64x1024xf32> to vector<16x512xf32>
    %126 = arith.truncf %124 : vector<16x128xf32> to vector<16x128xbf16>
    %cst_76 = arith.constant dense<0.000000e+00> : vector<16x512xf32>
    %127 = tpu.matmul %126, %117, %cst_76 {dimension_numbers = #tpu.dot_dimension_numbers<[1], [0], [0], [1], [0, 0, 1, 1], [], []>} : vector<16x128xbf16>, vector<128x512xbf16>, vector<16x512xf32> -> vector<16x512xf32>
    %128 = arith.addf %125, %127 : vector<16x512xf32>
    %129 = vector.extract_strided_slice %128 {offsets = [0, 0], sizes = [16, 384], strides = [1, 1]} : vector<16x512xf32> to vector<16x384xf32>
    %cst_77 = arith.constant 0.000000e+00 : f32
    %130 = vector.broadcast %cst_77 : f32 to vector<16x384xf32>
    %131 = arith.subf %130, %129 : vector<16x384xf32>
    %132 = math.exp %131 : vector<16x384xf32>
    %cst_78 = arith.constant 1.000000e+00 : f32
    %133 = vector.broadcast %cst_78 : f32 to vector<16x384xf32>
    %134 = arith.addf %133, %132 : vector<16x384xf32>
    %cst_79 = arith.constant 1.000000e+00 : f32
    %135 = vector.broadcast %cst_79 : f32 to vector<16x384xf32>
    %136 = arith.divf %135, %134 : vector<16x384xf32>
    %137 = vector.extract_strided_slice %128 {offsets = [0, 384], sizes = [16, 128], strides = [1, 1]} : vector<16x512xf32> to vector<16x128xf32>
    %138 = math.tanh %137 : vector<16x128xf32>
    %139 = vector.extract_strided_slice %136 {offsets = [0, 128], sizes = [16, 128], strides = [1, 1]} : vector<16x384xf32> to vector<16x128xf32>
    %140 = arith.mulf %139, %124 : vector<16x128xf32>
    %141 = vector.extract_strided_slice %136 {offsets = [0, 0], sizes = [16, 128], strides = [1, 1]} : vector<16x384xf32> to vector<16x128xf32>
    %142 = arith.mulf %141, %138 : vector<16x128xf32>
    %143 = arith.addf %140, %142 : vector<16x128xf32>
    %144 = vector.extract_strided_slice %136 {offsets = [0, 256], sizes = [16, 128], strides = [1, 1]} : vector<16x384xf32> to vector<16x128xf32>
    %145 = math.tanh %143 : vector<16x128xf32>
    %146 = arith.mulf %144, %145 : vector<16x128xf32>
    %147 = vector.extract_strided_slice %115 {offsets = [16, 0], sizes = [16, 512], strides = [1, 1]} : vector<64x1024xf32> to vector<16x512xf32>
    %148 = arith.truncf %146 : vector<16x128xf32> to vector<16x128xbf16>
    %cst_80 = arith.constant dense<0.000000e+00> : vector<16x512xf32>
    %149 = tpu.matmul %148, %117, %cst_80 {dimension_numbers = #tpu.dot_dimension_numbers<[1], [0], [0], [1], [0, 0, 1, 1], [], []>} : vector<16x128xbf16>, vector<128x512xbf16>, vector<16x512xf32> -> vector<16x512xf32>
    %150 = arith.addf %147, %149 : vector<16x512xf32>
    %151 = vector.extract_strided_slice %150 {offsets = [0, 0], sizes = [16, 384], strides = [1, 1]} : vector<16x512xf32> to vector<16x384xf32>
    %cst_81 = arith.constant 0.000000e+00 : f32
    %152 = vector.broadcast %cst_81 : f32 to vector<16x384xf32>
    %153 = arith.subf %152, %151 : vector<16x384xf32>
    %154 = math.exp %153 : vector<16x384xf32>
    %cst_82 = arith.constant 1.000000e+00 : f32
    %155 = vector.broadcast %cst_82 : f32 to vector<16x384xf32>
    %156 = arith.addf %155, %154 : vector<16x384xf32>
    %cst_83 = arith.constant 1.000000e+00 : f32
    %157 = vector.broadcast %cst_83 : f32 to vector<16x384xf32>
    %158 = arith.divf %157, %156 : vector<16x384xf32>
    %159 = vector.extract_strided_slice %150 {offsets = [0, 384], sizes = [16, 128], strides = [1, 1]} : vector<16x512xf32> to vector<16x128xf32>
    %160 = math.tanh %159 : vector<16x128xf32>
    %161 = vector.extract_strided_slice %158 {offsets = [0, 128], sizes = [16, 128], strides = [1, 1]} : vector<16x384xf32> to vector<16x128xf32>
    %162 = arith.mulf %161, %143 : vector<16x128xf32>
    %163 = vector.extract_strided_slice %158 {offsets = [0, 0], sizes = [16, 128], strides = [1, 1]} : vector<16x384xf32> to vector<16x128xf32>
    %164 = arith.mulf %163, %160 : vector<16x128xf32>
    %165 = arith.addf %162, %164 : vector<16x128xf32>
    %166 = vector.extract_strided_slice %158 {offsets = [0, 256], sizes = [16, 128], strides = [1, 1]} : vector<16x384xf32> to vector<16x128xf32>
    %167 = math.tanh %165 : vector<16x128xf32>
    %168 = arith.mulf %166, %167 : vector<16x128xf32>
    %169 = vector.extract_strided_slice %115 {offsets = [32, 0], sizes = [16, 512], strides = [1, 1]} : vector<64x1024xf32> to vector<16x512xf32>
    %170 = arith.truncf %168 : vector<16x128xf32> to vector<16x128xbf16>
    %cst_84 = arith.constant dense<0.000000e+00> : vector<16x512xf32>
    %171 = tpu.matmul %170, %117, %cst_84 {dimension_numbers = #tpu.dot_dimension_numbers<[1], [0], [0], [1], [0, 0, 1, 1], [], []>} : vector<16x128xbf16>, vector<128x512xbf16>, vector<16x512xf32> -> vector<16x512xf32>
    %172 = arith.addf %169, %171 : vector<16x512xf32>
    %173 = vector.extract_strided_slice %172 {offsets = [0, 0], sizes = [16, 384], strides = [1, 1]} : vector<16x512xf32> to vector<16x384xf32>
    %cst_85 = arith.constant 0.000000e+00 : f32
    %174 = vector.broadcast %cst_85 : f32 to vector<16x384xf32>
    %175 = arith.subf %174, %173 : vector<16x384xf32>
    %176 = math.exp %175 : vector<16x384xf32>
    %cst_86 = arith.constant 1.000000e+00 : f32
    %177 = vector.broadcast %cst_86 : f32 to vector<16x384xf32>
    %178 = arith.addf %177, %176 : vector<16x384xf32>
    %cst_87 = arith.constant 1.000000e+00 : f32
    %179 = vector.broadcast %cst_87 : f32 to vector<16x384xf32>
    %180 = arith.divf %179, %178 : vector<16x384xf32>
    %181 = vector.extract_strided_slice %172 {offsets = [0, 384], sizes = [16, 128], strides = [1, 1]} : vector<16x512xf32> to vector<16x128xf32>
    %182 = math.tanh %181 : vector<16x128xf32>
    %183 = vector.extract_strided_slice %180 {offsets = [0, 128], sizes = [16, 128], strides = [1, 1]} : vector<16x384xf32> to vector<16x128xf32>
    %184 = arith.mulf %183, %165 : vector<16x128xf32>
    %185 = vector.extract_strided_slice %180 {offsets = [0, 0], sizes = [16, 128], strides = [1, 1]} : vector<16x384xf32> to vector<16x128xf32>
    %186 = arith.mulf %185, %182 : vector<16x128xf32>
    %187 = arith.addf %184, %186 : vector<16x128xf32>
    %188 = vector.extract_strided_slice %180 {offsets = [0, 256], sizes = [16, 128], strides = [1, 1]} : vector<16x384xf32> to vector<16x128xf32>
    %189 = math.tanh %187 : vector<16x128xf32>
    %190 = arith.mulf %188, %189 : vector<16x128xf32>
    %191 = vector.extract_strided_slice %115 {offsets = [48, 0], sizes = [16, 512], strides = [1, 1]} : vector<64x1024xf32> to vector<16x512xf32>
    %192 = arith.truncf %190 : vector<16x128xf32> to vector<16x128xbf16>
    %cst_88 = arith.constant dense<0.000000e+00> : vector<16x512xf32>
    %193 = tpu.matmul %192, %117, %cst_88 {dimension_numbers = #tpu.dot_dimension_numbers<[1], [0], [0], [1], [0, 0, 1, 1], [], []>} : vector<16x128xbf16>, vector<128x512xbf16>, vector<16x512xf32> -> vector<16x512xf32>
    %194 = arith.addf %191, %193 : vector<16x512xf32>
    %195 = vector.extract_strided_slice %194 {offsets = [0, 0], sizes = [16, 384], strides = [1, 1]} : vector<16x512xf32> to vector<16x384xf32>
    %cst_89 = arith.constant 0.000000e+00 : f32
    %196 = vector.broadcast %cst_89 : f32 to vector<16x384xf32>
    %197 = arith.subf %196, %195 : vector<16x384xf32>
    %198 = math.exp %197 : vector<16x384xf32>
    %cst_90 = arith.constant 1.000000e+00 : f32
    %199 = vector.broadcast %cst_90 : f32 to vector<16x384xf32>
    %200 = arith.addf %199, %198 : vector<16x384xf32>
    %cst_91 = arith.constant 1.000000e+00 : f32
    %201 = vector.broadcast %cst_91 : f32 to vector<16x384xf32>
    %202 = arith.divf %201, %200 : vector<16x384xf32>
    %203 = vector.extract_strided_slice %194 {offsets = [0, 384], sizes = [16, 128], strides = [1, 1]} : vector<16x512xf32> to vector<16x128xf32>
    %204 = math.tanh %203 : vector<16x128xf32>
    %205 = vector.extract_strided_slice %202 {offsets = [0, 128], sizes = [16, 128], strides = [1, 1]} : vector<16x384xf32> to vector<16x128xf32>
    %206 = arith.mulf %205, %187 : vector<16x128xf32>
    %207 = vector.extract_strided_slice %202 {offsets = [0, 0], sizes = [16, 128], strides = [1, 1]} : vector<16x384xf32> to vector<16x128xf32>
    %208 = arith.mulf %207, %204 : vector<16x128xf32>
    %209 = arith.addf %206, %208 : vector<16x128xf32>
    %210 = vector.extract_strided_slice %202 {offsets = [0, 256], sizes = [16, 128], strides = [1, 1]} : vector<16x384xf32> to vector<16x128xf32>
    %211 = math.tanh %209 : vector<16x128xf32>
    %212 = arith.mulf %210, %211 : vector<16x128xf32>
    %213 = vector.extract_strided_slice %115 {offsets = [48, 512], sizes = [16, 512], strides = [1, 1]} : vector<64x1024xf32> to vector<16x512xf32>
    %214 = arith.truncf %124 : vector<16x128xf32> to vector<16x128xbf16>
    %cst_92 = arith.constant dense<0.000000e+00> : vector<16x512xf32>
    %215 = tpu.matmul %214, %119, %cst_92 {dimension_numbers = #tpu.dot_dimension_numbers<[1], [0], [0], [1], [0, 0, 1, 1], [], []>} : vector<16x128xbf16>, vector<128x512xbf16>, vector<16x512xf32> -> vector<16x512xf32>
    %216 = arith.addf %213, %215 : vector<16x512xf32>
    %217 = vector.extract_strided_slice %216 {offsets = [0, 0], sizes = [16, 384], strides = [1, 1]} : vector<16x512xf32> to vector<16x384xf32>
    %cst_93 = arith.constant 0.000000e+00 : f32
    %218 = vector.broadcast %cst_93 : f32 to vector<16x384xf32>
    %219 = arith.subf %218, %217 : vector<16x384xf32>
    %220 = math.exp %219 : vector<16x384xf32>
    %cst_94 = arith.constant 1.000000e+00 : f32
    %221 = vector.broadcast %cst_94 : f32 to vector<16x384xf32>
    %222 = arith.addf %221, %220 : vector<16x384xf32>
    %cst_95 = arith.constant 1.000000e+00 : f32
    %223 = vector.broadcast %cst_95 : f32 to vector<16x384xf32>
    %224 = arith.divf %223, %222 : vector<16x384xf32>
    %225 = vector.extract_strided_slice %216 {offsets = [0, 384], sizes = [16, 128], strides = [1, 1]} : vector<16x512xf32> to vector<16x128xf32>
    %226 = math.tanh %225 : vector<16x128xf32>
    %227 = vector.extract_strided_slice %224 {offsets = [0, 128], sizes = [16, 128], strides = [1, 1]} : vector<16x384xf32> to vector<16x128xf32>
    %228 = arith.mulf %227, %124 : vector<16x128xf32>
    %229 = vector.extract_strided_slice %224 {offsets = [0, 0], sizes = [16, 128], strides = [1, 1]} : vector<16x384xf32> to vector<16x128xf32>
    %230 = arith.mulf %229, %226 : vector<16x128xf32>
    %231 = arith.addf %228, %230 : vector<16x128xf32>
    %232 = vector.extract_strided_slice %224 {offsets = [0, 256], sizes = [16, 128], strides = [1, 1]} : vector<16x384xf32> to vector<16x128xf32>
    %233 = math.tanh %231 : vector<16x128xf32>
    %234 = arith.mulf %232, %233 : vector<16x128xf32>
    %235 = vector.extract_strided_slice %115 {offsets = [32, 512], sizes = [16, 512], strides = [1, 1]} : vector<64x1024xf32> to vector<16x512xf32>
    %236 = arith.truncf %234 : vector<16x128xf32> to vector<16x128xbf16>
    %cst_96 = arith.constant dense<0.000000e+00> : vector<16x512xf32>
    %237 = tpu.matmul %236, %119, %cst_96 {dimension_numbers = #tpu.dot_dimension_numbers<[1], [0], [0], [1], [0, 0, 1, 1], [], []>} : vector<16x128xbf16>, vector<128x512xbf16>, vector<16x512xf32> -> vector<16x512xf32>
    %238 = arith.addf %235, %237 : vector<16x512xf32>
    %239 = vector.extract_strided_slice %238 {offsets = [0, 0], sizes = [16, 384], strides = [1, 1]} : vector<16x512xf32> to vector<16x384xf32>
    %cst_97 = arith.constant 0.000000e+00 : f32
    %240 = vector.broadcast %cst_97 : f32 to vector<16x384xf32>
    %241 = arith.subf %240, %239 : vector<16x384xf32>
    %242 = math.exp %241 : vector<16x384xf32>
    %cst_98 = arith.constant 1.000000e+00 : f32
    %243 = vector.broadcast %cst_98 : f32 to vector<16x384xf32>
    %244 = arith.addf %243, %242 : vector<16x384xf32>
    %cst_99 = arith.constant 1.000000e+00 : f32
    %245 = vector.broadcast %cst_99 : f32 to vector<16x384xf32>
    %246 = arith.divf %245, %244 : vector<16x384xf32>
    %247 = vector.extract_strided_slice %238 {offsets = [0, 384], sizes = [16, 128], strides = [1, 1]} : vector<16x512xf32> to vector<16x128xf32>
    %248 = math.tanh %247 : vector<16x128xf32>
    %249 = vector.extract_strided_slice %246 {offsets = [0, 128], sizes = [16, 128], strides = [1, 1]} : vector<16x384xf32> to vector<16x128xf32>
    %250 = arith.mulf %249, %231 : vector<16x128xf32>
    %251 = vector.extract_strided_slice %246 {offsets = [0, 0], sizes = [16, 128], strides = [1, 1]} : vector<16x384xf32> to vector<16x128xf32>
    %252 = arith.mulf %251, %248 : vector<16x128xf32>
    %253 = arith.addf %250, %252 : vector<16x128xf32>
    %254 = vector.extract_strided_slice %246 {offsets = [0, 256], sizes = [16, 128], strides = [1, 1]} : vector<16x384xf32> to vector<16x128xf32>
    %255 = math.tanh %253 : vector<16x128xf32>
    %256 = arith.mulf %254, %255 : vector<16x128xf32>
    %257 = vector.extract_strided_slice %115 {offsets = [16, 512], sizes = [16, 512], strides = [1, 1]} : vector<64x1024xf32> to vector<16x512xf32>
    %258 = arith.truncf %256 : vector<16x128xf32> to vector<16x128xbf16>
    %cst_100 = arith.constant dense<0.000000e+00> : vector<16x512xf32>
    %259 = tpu.matmul %258, %119, %cst_100 {dimension_numbers = #tpu.dot_dimension_numbers<[1], [0], [0], [1], [0, 0, 1, 1], [], []>} : vector<16x128xbf16>, vector<128x512xbf16>, vector<16x512xf32> -> vector<16x512xf32>
    %260 = arith.addf %257, %259 : vector<16x512xf32>
    %261 = vector.extract_strided_slice %260 {offsets = [0, 0], sizes = [16, 384], strides = [1, 1]} : vector<16x512xf32> to vector<16x384xf32>
    %cst_101 = arith.constant 0.000000e+00 : f32
    %262 = vector.broadcast %cst_101 : f32 to vector<16x384xf32>
    %263 = arith.subf %262, %261 : vector<16x384xf32>
    %264 = math.exp %263 : vector<16x384xf32>
    %cst_102 = arith.constant 1.000000e+00 : f32
    %265 = vector.broadcast %cst_102 : f32 to vector<16x384xf32>
    %266 = arith.addf %265, %264 : vector<16x384xf32>
    %cst_103 = arith.constant 1.000000e+00 : f32
    %267 = vector.broadcast %cst_103 : f32 to vector<16x384xf32>
    %268 = arith.divf %267, %266 : vector<16x384xf32>
    %269 = vector.extract_strided_slice %260 {offsets = [0, 384], sizes = [16, 128], strides = [1, 1]} : vector<16x512xf32> to vector<16x128xf32>
    %270 = math.tanh %269 : vector<16x128xf32>
    %271 = vector.extract_strided_slice %268 {offsets = [0, 128], sizes = [16, 128], strides = [1, 1]} : vector<16x384xf32> to vector<16x128xf32>
    %272 = arith.mulf %271, %253 : vector<16x128xf32>
    %273 = vector.extract_strided_slice %268 {offsets = [0, 0], sizes = [16, 128], strides = [1, 1]} : vector<16x384xf32> to vector<16x128xf32>
    %274 = arith.mulf %273, %270 : vector<16x128xf32>
    %275 = arith.addf %272, %274 : vector<16x128xf32>
    %276 = vector.extract_strided_slice %268 {offsets = [0, 256], sizes = [16, 128], strides = [1, 1]} : vector<16x384xf32> to vector<16x128xf32>
    %277 = math.tanh %275 : vector<16x128xf32>
    %278 = arith.mulf %276, %277 : vector<16x128xf32>
    %279 = vector.extract_strided_slice %115 {offsets = [0, 512], sizes = [16, 512], strides = [1, 1]} : vector<64x1024xf32> to vector<16x512xf32>
    %280 = arith.truncf %278 : vector<16x128xf32> to vector<16x128xbf16>
    %cst_104 = arith.constant dense<0.000000e+00> : vector<16x512xf32>
    %281 = tpu.matmul %280, %119, %cst_104 {dimension_numbers = #tpu.dot_dimension_numbers<[1], [0], [0], [1], [0, 0, 1, 1], [], []>} : vector<16x128xbf16>, vector<128x512xbf16>, vector<16x512xf32> -> vector<16x512xf32>
    %282 = arith.addf %279, %281 : vector<16x512xf32>
    %283 = vector.extract_strided_slice %282 {offsets = [0, 0], sizes = [16, 384], strides = [1, 1]} : vector<16x512xf32> to vector<16x384xf32>
    %cst_105 = arith.constant 0.000000e+00 : f32
    %284 = vector.broadcast %cst_105 : f32 to vector<16x384xf32>
    %285 = arith.subf %284, %283 : vector<16x384xf32>
    %286 = math.exp %285 : vector<16x384xf32>
    %cst_106 = arith.constant 1.000000e+00 : f32
    %287 = vector.broadcast %cst_106 : f32 to vector<16x384xf32>
    %288 = arith.addf %287, %286 : vector<16x384xf32>
    %cst_107 = arith.constant 1.000000e+00 : f32
    %289 = vector.broadcast %cst_107 : f32 to vector<16x384xf32>
    %290 = arith.divf %289, %288 : vector<16x384xf32>
    %291 = vector.extract_strided_slice %282 {offsets = [0, 384], sizes = [16, 128], strides = [1, 1]} : vector<16x512xf32> to vector<16x128xf32>
    %292 = math.tanh %291 : vector<16x128xf32>
    %293 = vector.extract_strided_slice %290 {offsets = [0, 128], sizes = [16, 128], strides = [1, 1]} : vector<16x384xf32> to vector<16x128xf32>
    %294 = arith.mulf %293, %275 : vector<16x128xf32>
    %295 = vector.extract_strided_slice %290 {offsets = [0, 0], sizes = [16, 128], strides = [1, 1]} : vector<16x384xf32> to vector<16x128xf32>
    %296 = arith.mulf %295, %292 : vector<16x128xf32>
    %297 = arith.addf %294, %296 : vector<16x128xf32>
    %298 = vector.extract_strided_slice %290 {offsets = [0, 256], sizes = [16, 128], strides = [1, 1]} : vector<16x384xf32> to vector<16x128xf32>
    %299 = math.tanh %297 : vector<16x128xf32>
    %300 = arith.mulf %298, %299 : vector<16x128xf32>
    %301 = tpu.concatenate %146, %300 in 1 : vector<16x128xf32>, vector<16x128xf32> -> vector<16x256xf32>
    %302 = tpu.concatenate %168, %278 in 1 : vector<16x128xf32>, vector<16x128xf32> -> vector<16x256xf32>
    %303 = tpu.concatenate %190, %256 in 1 : vector<16x128xf32>, vector<16x128xf32> -> vector<16x256xf32>
    %304 = tpu.concatenate %212, %234 in 1 : vector<16x128xf32>, vector<16x128xf32> -> vector<16x256xf32>
    %305 = tpu.concatenate %301, %302, %303, %304 in 0 : vector<16x256xf32>, vector<16x256xf32>, vector<16x256xf32>, vector<16x256xf32> -> vector<64x256xf32>
    %306 = arith.truncf %305 : vector<64x256xf32> to vector<64x256xbf16>
    %c0_108 = arith.constant 0 : index
    %c0_109 = arith.constant 0 : index
    %307 = vector.load %arg15[%c0_108, %c0_109] : memref<256x1024xbf16, #tpu.memory_space<vmem>>, vector<256x1024xbf16>
    %cst_110 = arith.constant dense<0.000000e+00> : vector<64x1024xf32>
    %308 = tpu.matmul %306, %307, %cst_110 {dimension_numbers = #tpu.dot_dimension_numbers<[1], [0], [0], [1], [0, 0, 1, 1], [], []>} : vector<64x256xbf16>, vector<256x1024xbf16>, vector<64x1024xf32> -> vector<64x1024xf32>
    %c0_111 = arith.constant 0 : index
    %c0_112 = arith.constant 0 : index
    %309 = vector.load %arg16[%c0_111, %c0_112] : memref<1x1024xf32, #tpu.memory_space<vmem>>, vector<1x1024xf32>
    %310 = vector.broadcast %309 : vector<1x1024xf32> to vector<64x1024xf32>
    %311 = arith.addf %308, %310 : vector<64x1024xf32>
    %312 = vector.extract_strided_slice %311 {offsets = [0, 0], sizes = [16, 512], strides = [1, 1]} : vector<64x1024xf32> to vector<16x512xf32>
    %313 = arith.truncf %124 : vector<16x128xf32> to vector<16x128xbf16>
    %cst_113 = arith.constant dense<0.000000e+00> : vector<16x512xf32>
    %314 = tpu.matmul %313, %121, %cst_113 {dimension_numbers = #tpu.dot_dimension_numbers<[1], [0], [0], [1], [0, 0, 1, 1], [], []>} : vector<16x128xbf16>, vector<128x512xbf16>, vector<16x512xf32> -> vector<16x512xf32>
    %315 = arith.addf %312, %314 : vector<16x512xf32>
    %316 = vector.extract_strided_slice %315 {offsets = [0, 0], sizes = [16, 384], strides = [1, 1]} : vector<16x512xf32> to vector<16x384xf32>
    %cst_114 = arith.constant 0.000000e+00 : f32
    %317 = vector.broadcast %cst_114 : f32 to vector<16x384xf32>
    %318 = arith.subf %317, %316 : vector<16x384xf32>
    %319 = math.exp %318 : vector<16x384xf32>
    %cst_115 = arith.constant 1.000000e+00 : f32
    %320 = vector.broadcast %cst_115 : f32 to vector<16x384xf32>
    %321 = arith.addf %320, %319 : vector<16x384xf32>
    %cst_116 = arith.constant 1.000000e+00 : f32
    %322 = vector.broadcast %cst_116 : f32 to vector<16x384xf32>
    %323 = arith.divf %322, %321 : vector<16x384xf32>
    %324 = vector.extract_strided_slice %315 {offsets = [0, 384], sizes = [16, 128], strides = [1, 1]} : vector<16x512xf32> to vector<16x128xf32>
    %325 = math.tanh %324 : vector<16x128xf32>
    %326 = vector.extract_strided_slice %323 {offsets = [0, 128], sizes = [16, 128], strides = [1, 1]} : vector<16x384xf32> to vector<16x128xf32>
    %327 = arith.mulf %326, %124 : vector<16x128xf32>
    %328 = vector.extract_strided_slice %323 {offsets = [0, 0], sizes = [16, 128], strides = [1, 1]} : vector<16x384xf32> to vector<16x128xf32>
    %329 = arith.mulf %328, %325 : vector<16x128xf32>
    %330 = arith.addf %327, %329 : vector<16x128xf32>
    %331 = vector.extract_strided_slice %323 {offsets = [0, 256], sizes = [16, 128], strides = [1, 1]} : vector<16x384xf32> to vector<16x128xf32>
    %332 = math.tanh %330 : vector<16x128xf32>
    %333 = arith.mulf %331, %332 : vector<16x128xf32>
    %334 = vector.extract_strided_slice %311 {offsets = [16, 0], sizes = [16, 512], strides = [1, 1]} : vector<64x1024xf32> to vector<16x512xf32>
    %335 = arith.truncf %333 : vector<16x128xf32> to vector<16x128xbf16>
    %cst_117 = arith.constant dense<0.000000e+00> : vector<16x512xf32>
    %336 = tpu.matmul %335, %121, %cst_117 {dimension_numbers = #tpu.dot_dimension_numbers<[1], [0], [0], [1], [0, 0, 1, 1], [], []>} : vector<16x128xbf16>, vector<128x512xbf16>, vector<16x512xf32> -> vector<16x512xf32>
    %337 = arith.addf %334, %336 : vector<16x512xf32>
    %338 = vector.extract_strided_slice %337 {offsets = [0, 0], sizes = [16, 384], strides = [1, 1]} : vector<16x512xf32> to vector<16x384xf32>
    %cst_118 = arith.constant 0.000000e+00 : f32
    %339 = vector.broadcast %cst_118 : f32 to vector<16x384xf32>
    %340 = arith.subf %339, %338 : vector<16x384xf32>
    %341 = math.exp %340 : vector<16x384xf32>
    %cst_119 = arith.constant 1.000000e+00 : f32
    %342 = vector.broadcast %cst_119 : f32 to vector<16x384xf32>
    %343 = arith.addf %342, %341 : vector<16x384xf32>
    %cst_120 = arith.constant 1.000000e+00 : f32
    %344 = vector.broadcast %cst_120 : f32 to vector<16x384xf32>
    %345 = arith.divf %344, %343 : vector<16x384xf32>
    %346 = vector.extract_strided_slice %337 {offsets = [0, 384], sizes = [16, 128], strides = [1, 1]} : vector<16x512xf32> to vector<16x128xf32>
    %347 = math.tanh %346 : vector<16x128xf32>
    %348 = vector.extract_strided_slice %345 {offsets = [0, 128], sizes = [16, 128], strides = [1, 1]} : vector<16x384xf32> to vector<16x128xf32>
    %349 = arith.mulf %348, %330 : vector<16x128xf32>
    %350 = vector.extract_strided_slice %345 {offsets = [0, 0], sizes = [16, 128], strides = [1, 1]} : vector<16x384xf32> to vector<16x128xf32>
    %351 = arith.mulf %350, %347 : vector<16x128xf32>
    %352 = arith.addf %349, %351 : vector<16x128xf32>
    %353 = vector.extract_strided_slice %345 {offsets = [0, 256], sizes = [16, 128], strides = [1, 1]} : vector<16x384xf32> to vector<16x128xf32>
    %354 = math.tanh %352 : vector<16x128xf32>
    %355 = arith.mulf %353, %354 : vector<16x128xf32>
    %356 = vector.extract_strided_slice %311 {offsets = [32, 0], sizes = [16, 512], strides = [1, 1]} : vector<64x1024xf32> to vector<16x512xf32>
    %357 = arith.truncf %355 : vector<16x128xf32> to vector<16x128xbf16>
    %cst_121 = arith.constant dense<0.000000e+00> : vector<16x512xf32>
    %358 = tpu.matmul %357, %121, %cst_121 {dimension_numbers = #tpu.dot_dimension_numbers<[1], [0], [0], [1], [0, 0, 1, 1], [], []>} : vector<16x128xbf16>, vector<128x512xbf16>, vector<16x512xf32> -> vector<16x512xf32>
    %359 = arith.addf %356, %358 : vector<16x512xf32>
    %360 = vector.extract_strided_slice %359 {offsets = [0, 0], sizes = [16, 384], strides = [1, 1]} : vector<16x512xf32> to vector<16x384xf32>
    %cst_122 = arith.constant 0.000000e+00 : f32
    %361 = vector.broadcast %cst_122 : f32 to vector<16x384xf32>
    %362 = arith.subf %361, %360 : vector<16x384xf32>
    %363 = math.exp %362 : vector<16x384xf32>
    %cst_123 = arith.constant 1.000000e+00 : f32
    %364 = vector.broadcast %cst_123 : f32 to vector<16x384xf32>
    %365 = arith.addf %364, %363 : vector<16x384xf32>
    %cst_124 = arith.constant 1.000000e+00 : f32
    %366 = vector.broadcast %cst_124 : f32 to vector<16x384xf32>
    %367 = arith.divf %366, %365 : vector<16x384xf32>
    %368 = vector.extract_strided_slice %359 {offsets = [0, 384], sizes = [16, 128], strides = [1, 1]} : vector<16x512xf32> to vector<16x128xf32>
    %369 = math.tanh %368 : vector<16x128xf32>
    %370 = vector.extract_strided_slice %367 {offsets = [0, 128], sizes = [16, 128], strides = [1, 1]} : vector<16x384xf32> to vector<16x128xf32>
    %371 = arith.mulf %370, %352 : vector<16x128xf32>
    %372 = vector.extract_strided_slice %367 {offsets = [0, 0], sizes = [16, 128], strides = [1, 1]} : vector<16x384xf32> to vector<16x128xf32>
    %373 = arith.mulf %372, %369 : vector<16x128xf32>
    %374 = arith.addf %371, %373 : vector<16x128xf32>
    %375 = vector.extract_strided_slice %367 {offsets = [0, 256], sizes = [16, 128], strides = [1, 1]} : vector<16x384xf32> to vector<16x128xf32>
    %376 = math.tanh %374 : vector<16x128xf32>
    %377 = arith.mulf %375, %376 : vector<16x128xf32>
    %378 = vector.extract_strided_slice %311 {offsets = [48, 0], sizes = [16, 512], strides = [1, 1]} : vector<64x1024xf32> to vector<16x512xf32>
    %379 = arith.truncf %377 : vector<16x128xf32> to vector<16x128xbf16>
    %cst_125 = arith.constant dense<0.000000e+00> : vector<16x512xf32>
    %380 = tpu.matmul %379, %121, %cst_125 {dimension_numbers = #tpu.dot_dimension_numbers<[1], [0], [0], [1], [0, 0, 1, 1], [], []>} : vector<16x128xbf16>, vector<128x512xbf16>, vector<16x512xf32> -> vector<16x512xf32>
    %381 = arith.addf %378, %380 : vector<16x512xf32>
    %382 = vector.extract_strided_slice %381 {offsets = [0, 0], sizes = [16, 384], strides = [1, 1]} : vector<16x512xf32> to vector<16x384xf32>
    %cst_126 = arith.constant 0.000000e+00 : f32
    %383 = vector.broadcast %cst_126 : f32 to vector<16x384xf32>
    %384 = arith.subf %383, %382 : vector<16x384xf32>
    %385 = math.exp %384 : vector<16x384xf32>
    %cst_127 = arith.constant 1.000000e+00 : f32
    %386 = vector.broadcast %cst_127 : f32 to vector<16x384xf32>
    %387 = arith.addf %386, %385 : vector<16x384xf32>
    %cst_128 = arith.constant 1.000000e+00 : f32
    %388 = vector.broadcast %cst_128 : f32 to vector<16x384xf32>
    %389 = arith.divf %388, %387 : vector<16x384xf32>
    %390 = vector.extract_strided_slice %381 {offsets = [0, 384], sizes = [16, 128], strides = [1, 1]} : vector<16x512xf32> to vector<16x128xf32>
    %391 = math.tanh %390 : vector<16x128xf32>
    %392 = vector.extract_strided_slice %389 {offsets = [0, 128], sizes = [16, 128], strides = [1, 1]} : vector<16x384xf32> to vector<16x128xf32>
    %393 = arith.mulf %392, %374 : vector<16x128xf32>
    %394 = vector.extract_strided_slice %389 {offsets = [0, 0], sizes = [16, 128], strides = [1, 1]} : vector<16x384xf32> to vector<16x128xf32>
    %395 = arith.mulf %394, %391 : vector<16x128xf32>
    %396 = arith.addf %393, %395 : vector<16x128xf32>
    %397 = vector.extract_strided_slice %389 {offsets = [0, 256], sizes = [16, 128], strides = [1, 1]} : vector<16x384xf32> to vector<16x128xf32>
    %398 = math.tanh %396 : vector<16x128xf32>
    %399 = arith.mulf %397, %398 : vector<16x128xf32>
    %400 = vector.extract_strided_slice %311 {offsets = [48, 512], sizes = [16, 512], strides = [1, 1]} : vector<64x1024xf32> to vector<16x512xf32>
    %401 = arith.truncf %124 : vector<16x128xf32> to vector<16x128xbf16>
    %cst_129 = arith.constant dense<0.000000e+00> : vector<16x512xf32>
    %402 = tpu.matmul %401, %123, %cst_129 {dimension_numbers = #tpu.dot_dimension_numbers<[1], [0], [0], [1], [0, 0, 1, 1], [], []>} : vector<16x128xbf16>, vector<128x512xbf16>, vector<16x512xf32> -> vector<16x512xf32>
    %403 = arith.addf %400, %402 : vector<16x512xf32>
    %404 = vector.extract_strided_slice %403 {offsets = [0, 0], sizes = [16, 384], strides = [1, 1]} : vector<16x512xf32> to vector<16x384xf32>
    %cst_130 = arith.constant 0.000000e+00 : f32
    %405 = vector.broadcast %cst_130 : f32 to vector<16x384xf32>
    %406 = arith.subf %405, %404 : vector<16x384xf32>
    %407 = math.exp %406 : vector<16x384xf32>
    %cst_131 = arith.constant 1.000000e+00 : f32
    %408 = vector.broadcast %cst_131 : f32 to vector<16x384xf32>
    %409 = arith.addf %408, %407 : vector<16x384xf32>
    %cst_132 = arith.constant 1.000000e+00 : f32
    %410 = vector.broadcast %cst_132 : f32 to vector<16x384xf32>
    %411 = arith.divf %410, %409 : vector<16x384xf32>
    %412 = vector.extract_strided_slice %403 {offsets = [0, 384], sizes = [16, 128], strides = [1, 1]} : vector<16x512xf32> to vector<16x128xf32>
    %413 = math.tanh %412 : vector<16x128xf32>
    %414 = vector.extract_strided_slice %411 {offsets = [0, 128], sizes = [16, 128], strides = [1, 1]} : vector<16x384xf32> to vector<16x128xf32>
    %415 = arith.mulf %414, %124 : vector<16x128xf32>
    %416 = vector.extract_strided_slice %411 {offsets = [0, 0], sizes = [16, 128], strides = [1, 1]} : vector<16x384xf32> to vector<16x128xf32>
    %417 = arith.mulf %416, %413 : vector<16x128xf32>
    %418 = arith.addf %415, %417 : vector<16x128xf32>
    %419 = vector.extract_strided_slice %411 {offsets = [0, 256], sizes = [16, 128], strides = [1, 1]} : vector<16x384xf32> to vector<16x128xf32>
    %420 = math.tanh %418 : vector<16x128xf32>
    %421 = arith.mulf %419, %420 : vector<16x128xf32>
    %422 = vector.extract_strided_slice %311 {offsets = [32, 512], sizes = [16, 512], strides = [1, 1]} : vector<64x1024xf32> to vector<16x512xf32>
    %423 = arith.truncf %421 : vector<16x128xf32> to vector<16x128xbf16>
    %cst_133 = arith.constant dense<0.000000e+00> : vector<16x512xf32>
    %424 = tpu.matmul %423, %123, %cst_133 {dimension_numbers = #tpu.dot_dimension_numbers<[1], [0], [0], [1], [0, 0, 1, 1], [], []>} : vector<16x128xbf16>, vector<128x512xbf16>, vector<16x512xf32> -> vector<16x512xf32>
    %425 = arith.addf %422, %424 : vector<16x512xf32>
    %426 = vector.extract_strided_slice %425 {offsets = [0, 0], sizes = [16, 384], strides = [1, 1]} : vector<16x512xf32> to vector<16x384xf32>
    %cst_134 = arith.constant 0.000000e+00 : f32
    %427 = vector.broadcast %cst_134 : f32 to vector<16x384xf32>
    %428 = arith.subf %427, %426 : vector<16x384xf32>
    %429 = math.exp %428 : vector<16x384xf32>
    %cst_135 = arith.constant 1.000000e+00 : f32
    %430 = vector.broadcast %cst_135 : f32 to vector<16x384xf32>
    %431 = arith.addf %430, %429 : vector<16x384xf32>
    %cst_136 = arith.constant 1.000000e+00 : f32
    %432 = vector.broadcast %cst_136 : f32 to vector<16x384xf32>
    %433 = arith.divf %432, %431 : vector<16x384xf32>
    %434 = vector.extract_strided_slice %425 {offsets = [0, 384], sizes = [16, 128], strides = [1, 1]} : vector<16x512xf32> to vector<16x128xf32>
    %435 = math.tanh %434 : vector<16x128xf32>
    %436 = vector.extract_strided_slice %433 {offsets = [0, 128], sizes = [16, 128], strides = [1, 1]} : vector<16x384xf32> to vector<16x128xf32>
    %437 = arith.mulf %436, %418 : vector<16x128xf32>
    %438 = vector.extract_strided_slice %433 {offsets = [0, 0], sizes = [16, 128], strides = [1, 1]} : vector<16x384xf32> to vector<16x128xf32>
    %439 = arith.mulf %438, %435 : vector<16x128xf32>
    %440 = arith.addf %437, %439 : vector<16x128xf32>
    %441 = vector.extract_strided_slice %433 {offsets = [0, 256], sizes = [16, 128], strides = [1, 1]} : vector<16x384xf32> to vector<16x128xf32>
    %442 = math.tanh %440 : vector<16x128xf32>
    %443 = arith.mulf %441, %442 : vector<16x128xf32>
    %444 = vector.extract_strided_slice %311 {offsets = [16, 512], sizes = [16, 512], strides = [1, 1]} : vector<64x1024xf32> to vector<16x512xf32>
    %445 = arith.truncf %443 : vector<16x128xf32> to vector<16x128xbf16>
    %cst_137 = arith.constant dense<0.000000e+00> : vector<16x512xf32>
    %446 = tpu.matmul %445, %123, %cst_137 {dimension_numbers = #tpu.dot_dimension_numbers<[1], [0], [0], [1], [0, 0, 1, 1], [], []>} : vector<16x128xbf16>, vector<128x512xbf16>, vector<16x512xf32> -> vector<16x512xf32>
    %447 = arith.addf %444, %446 : vector<16x512xf32>
    %448 = vector.extract_strided_slice %447 {offsets = [0, 0], sizes = [16, 384], strides = [1, 1]} : vector<16x512xf32> to vector<16x384xf32>
    %cst_138 = arith.constant 0.000000e+00 : f32
    %449 = vector.broadcast %cst_138 : f32 to vector<16x384xf32>
    %450 = arith.subf %449, %448 : vector<16x384xf32>
    %451 = math.exp %450 : vector<16x384xf32>
    %cst_139 = arith.constant 1.000000e+00 : f32
    %452 = vector.broadcast %cst_139 : f32 to vector<16x384xf32>
    %453 = arith.addf %452, %451 : vector<16x384xf32>
    %cst_140 = arith.constant 1.000000e+00 : f32
    %454 = vector.broadcast %cst_140 : f32 to vector<16x384xf32>
    %455 = arith.divf %454, %453 : vector<16x384xf32>
    %456 = vector.extract_strided_slice %447 {offsets = [0, 384], sizes = [16, 128], strides = [1, 1]} : vector<16x512xf32> to vector<16x128xf32>
    %457 = math.tanh %456 : vector<16x128xf32>
    %458 = vector.extract_strided_slice %455 {offsets = [0, 128], sizes = [16, 128], strides = [1, 1]} : vector<16x384xf32> to vector<16x128xf32>
    %459 = arith.mulf %458, %440 : vector<16x128xf32>
    %460 = vector.extract_strided_slice %455 {offsets = [0, 0], sizes = [16, 128], strides = [1, 1]} : vector<16x384xf32> to vector<16x128xf32>
    %461 = arith.mulf %460, %457 : vector<16x128xf32>
    %462 = arith.addf %459, %461 : vector<16x128xf32>
    %463 = vector.extract_strided_slice %455 {offsets = [0, 256], sizes = [16, 128], strides = [1, 1]} : vector<16x384xf32> to vector<16x128xf32>
    %464 = math.tanh %462 : vector<16x128xf32>
    %465 = arith.mulf %463, %464 : vector<16x128xf32>
    %466 = vector.extract_strided_slice %311 {offsets = [0, 512], sizes = [16, 512], strides = [1, 1]} : vector<64x1024xf32> to vector<16x512xf32>
    %467 = arith.truncf %465 : vector<16x128xf32> to vector<16x128xbf16>
    %cst_141 = arith.constant dense<0.000000e+00> : vector<16x512xf32>
    %468 = tpu.matmul %467, %123, %cst_141 {dimension_numbers = #tpu.dot_dimension_numbers<[1], [0], [0], [1], [0, 0, 1, 1], [], []>} : vector<16x128xbf16>, vector<128x512xbf16>, vector<16x512xf32> -> vector<16x512xf32>
    %469 = arith.addf %466, %468 : vector<16x512xf32>
    %470 = vector.extract_strided_slice %469 {offsets = [0, 0], sizes = [16, 384], strides = [1, 1]} : vector<16x512xf32> to vector<16x384xf32>
    %cst_142 = arith.constant 0.000000e+00 : f32
    %471 = vector.broadcast %cst_142 : f32 to vector<16x384xf32>
    %472 = arith.subf %471, %470 : vector<16x384xf32>
    %473 = math.exp %472 : vector<16x384xf32>
    %cst_143 = arith.constant 1.000000e+00 : f32
    %474 = vector.broadcast %cst_143 : f32 to vector<16x384xf32>
    %475 = arith.addf %474, %473 : vector<16x384xf32>
    %cst_144 = arith.constant 1.000000e+00 : f32
    %476 = vector.broadcast %cst_144 : f32 to vector<16x384xf32>
    %477 = arith.divf %476, %475 : vector<16x384xf32>
    %478 = vector.extract_strided_slice %469 {offsets = [0, 384], sizes = [16, 128], strides = [1, 1]} : vector<16x512xf32> to vector<16x128xf32>
    %479 = math.tanh %478 : vector<16x128xf32>
    %480 = vector.extract_strided_slice %477 {offsets = [0, 128], sizes = [16, 128], strides = [1, 1]} : vector<16x384xf32> to vector<16x128xf32>
    %481 = arith.mulf %480, %462 : vector<16x128xf32>
    %482 = vector.extract_strided_slice %477 {offsets = [0, 0], sizes = [16, 128], strides = [1, 1]} : vector<16x384xf32> to vector<16x128xf32>
    %483 = arith.mulf %482, %479 : vector<16x128xf32>
    %484 = arith.addf %481, %483 : vector<16x128xf32>
    %485 = vector.extract_strided_slice %477 {offsets = [0, 256], sizes = [16, 128], strides = [1, 1]} : vector<16x384xf32> to vector<16x128xf32>
    %486 = math.tanh %484 : vector<16x128xf32>
    %487 = arith.mulf %485, %486 : vector<16x128xf32>
    %c0_145 = arith.constant 0 : index
    %c0_146 = arith.constant 0 : index
    %488 = vector.load %arg18[%c0_145, %c0_146] : memref<384x256xbf16, #tpu.memory_space<vmem>>, vector<384x256xbf16>
    %489 = arith.truncf %399 : vector<16x128xf32> to vector<16x128xbf16>
    %490 = vector.extract_strided_slice %488 {offsets = [0, 0], sizes = [128, 256], strides = [1, 1]} : vector<384x256xbf16> to vector<128x256xbf16>
    %cst_147 = arith.constant dense<0.000000e+00> : vector<16x256xf32>
    %491 = tpu.matmul %489, %490, %cst_147 {dimension_numbers = #tpu.dot_dimension_numbers<[1], [0], [0], [1], [0, 0, 1, 1], [], []>} : vector<16x128xbf16>, vector<128x256xbf16>, vector<16x256xf32> -> vector<16x256xf32>
    %492 = arith.truncf %487 : vector<16x128xf32> to vector<16x128xbf16>
    %493 = vector.extract_strided_slice %488 {offsets = [128, 0], sizes = [128, 256], strides = [1, 1]} : vector<384x256xbf16> to vector<128x256xbf16>
    %cst_148 = arith.constant dense<0.000000e+00> : vector<16x256xf32>
    %494 = tpu.matmul %492, %493, %cst_148 {dimension_numbers = #tpu.dot_dimension_numbers<[1], [0], [0], [1], [0, 0, 1, 1], [], []>} : vector<16x128xbf16>, vector<128x256xbf16>, vector<16x256xf32> -> vector<16x256xf32>
    %495 = arith.addf %491, %494 : vector<16x256xf32>
    %496 = arith.truncf %21 : vector<16x128xf32> to vector<16x128xbf16>
    %497 = vector.extract_strided_slice %488 {offsets = [256, 0], sizes = [128, 256], strides = [1, 1]} : vector<384x256xbf16> to vector<128x256xbf16>
    %cst_149 = arith.constant dense<0.000000e+00> : vector<16x256xf32>
    %498 = tpu.matmul %496, %497, %cst_149 {dimension_numbers = #tpu.dot_dimension_numbers<[1], [0], [0], [1], [0, 0, 1, 1], [], []>} : vector<16x128xbf16>, vector<128x256xbf16>, vector<16x256xf32> -> vector<16x256xf32>
    %499 = arith.addf %495, %498 : vector<16x256xf32>
    %c0_150 = arith.constant 0 : index
    %c0_151 = arith.constant 0 : index
    %500 = vector.load %arg19[%c0_150, %c0_151] : memref<1x256xf32, #tpu.memory_space<vmem>>, vector<1x256xf32>
    %501 = vector.broadcast %500 : vector<1x256xf32> to vector<16x256xf32>
    %502 = arith.addf %499, %501 : vector<16x256xf32>
    %cst_152 = arith.constant 0.000000e+00 : f32
    %503 = vector.broadcast %cst_152 : f32 to vector<16x256xf32>
    %504 = arith.maximumf %502, %503 : vector<16x256xf32>
    %505 = arith.truncf %504 : vector<16x256xf32> to vector<16x256xbf16>
    %c0_153 = arith.constant 0 : index
    %c0_154 = arith.constant 0 : index
    %506 = vector.load %arg20[%c0_153, %c0_154] : memref<256x128xbf16, #tpu.memory_space<vmem>>, vector<256x128xbf16>
    %cst_155 = arith.constant dense<0.000000e+00> : vector<16x128xf32>
    %507 = tpu.matmul %505, %506, %cst_155 {dimension_numbers = #tpu.dot_dimension_numbers<[1], [0], [0], [1], [0, 0, 1, 1], [], []>} : vector<16x256xbf16>, vector<256x128xbf16>, vector<16x128xf32> -> vector<16x128xf32>
    %c0_156 = arith.constant 0 : index
    %c0_157 = arith.constant 0 : index
    %508 = vector.load %arg21[%c0_156, %c0_157] : memref<1x128xf32, #tpu.memory_space<vmem>>, vector<1x128xf32>
    %509 = vector.broadcast %508 : vector<1x128xf32> to vector<16x128xf32>
    %510 = arith.addf %507, %509 : vector<16x128xf32>
    %c0_158 = arith.constant 0 : index
    %c0_159 = arith.constant 0 : index
    %511 = vector.load %arg22[%c0_158, %c0_159] : memref<16x128xf32, #tpu.memory_space<vmem>>, vector<16x128xf32>
    tpu.vector_store %arg22[%c0_158, %c0_159], %510 {strides = array<i32>} : memref<16x128xf32, #tpu.memory_space<vmem>>, vector<16x128xf32>,
    return
  }
  func.func @transform_0(%arg0: i32) -> (i32, i32, i32) {
    %c0_i32 = arith.constant 0 : i32
    %c0_i32_0 = arith.constant 0 : i32
    %c0_i32_1 = arith.constant 0 : i32
    return %arg0, %c0_i32, %c0_i32_0 : i32, i32, i32
  }
  func.func @transform_1(%arg0: i32) -> (i32, i32) {
    %c0_i32 = arith.constant 0 : i32
    %c0_i32_0 = arith.constant 0 : i32
    return %arg0, %c0_i32 : i32, i32
  }
  func.func @transform_2(%arg0: i32) -> (i32, i32) {
    %c0_i32 = arith.constant 0 : i32
    %c0_i32_0 = arith.constant 0 : i32
    %c0_i32_1 = arith.constant 0 : i32
    return %c0_i32, %c0_i32_0 : i32, i32
  }
  func.func @transform_3(%arg0: i32) -> (i32, i32) {
    %c0_i32 = arith.constant 0 : i32
    %c0_i32_0 = arith.constant 0 : i32
    %c0_i32_1 = arith.constant 0 : i32
    return %c0_i32, %c0_i32_0 : i32, i32
  }
  func.func @transform_4(%arg0: i32) -> (i32, i32) {
    %c0_i32 = arith.constant 0 : i32
    %c0_i32_0 = arith.constant 0 : i32
    %c0_i32_1 = arith.constant 0 : i32
    return %c0_i32, %c0_i32_0 : i32, i32
  }
  func.func @transform_5(%arg0: i32) -> (i32, i32) {
    %c0_i32 = arith.constant 0 : i32
    %c0_i32_0 = arith.constant 0 : i32
    %c0_i32_1 = arith.constant 0 : i32
    return %c0_i32, %c0_i32_0 : i32, i32
  }
  func.func @transform_6(%arg0: i32) -> (i32, i32) {
    %c0_i32 = arith.constant 0 : i32
    %c0_i32_0 = arith.constant 0 : i32
    %c0_i32_1 = arith.constant 0 : i32
    return %c0_i32, %c0_i32_0 : i32, i32
  }
  func.func @transform_7(%arg0: i32) -> (i32, i32) {
    %c0_i32 = arith.constant 0 : i32
    %c0_i32_0 = arith.constant 0 : i32
    %c0_i32_1 = arith.constant 0 : i32
    return %c0_i32, %c0_i32_0 : i32, i32
  }
  func.func @transform_8(%arg0: i32) -> (i32, i32) {
    %c0_i32 = arith.constant 0 : i32
    %c0_i32_0 = arith.constant 0 : i32
    %c0_i32_1 = arith.constant 0 : i32
    return %c0_i32, %c0_i32_0 : i32, i32
  }
  func.func @transform_9(%arg0: i32) -> (i32, i32) {
    %c0_i32 = arith.constant 0 : i32
    %c0_i32_0 = arith.constant 0 : i32
    %c0_i32_1 = arith.constant 0 : i32
    return %c0_i32, %c0_i32_0 : i32, i32
  }
  func.func @transform_10(%arg0: i32) -> (i32, i32, i32) {
    %c0_i32 = arith.constant 0 : i32
    %c0_i32_0 = arith.constant 0 : i32
    %c0_i32_1 = arith.constant 0 : i32
    %c0_i32_2 = arith.constant 0 : i32
    return %c0_i32, %c0_i32_0, %c0_i32_1 : i32, i32, i32
  }
  func.func @transform_11(%arg0: i32) -> (i32, i32) {
    %c0_i32 = arith.constant 0 : i32
    %c0_i32_0 = arith.constant 0 : i32
    %c0_i32_1 = arith.constant 0 : i32
    return %c0_i32, %c0_i32_0 : i32, i32
  }
  func.func @transform_12(%arg0: i32) -> (i32, i32) {
    %c0_i32 = arith.constant 0 : i32
    %c0_i32_0 = arith.constant 0 : i32
    %c0_i32_1 = arith.constant 0 : i32
    return %c0_i32, %c0_i32_0 : i32, i32
  }
  func.func @transform_13(%arg0: i32) -> (i32, i32) {
    %c0_i32 = arith.constant 0 : i32
    %c0_i32_0 = arith.constant 0 : i32
    %c0_i32_1 = arith.constant 0 : i32
    return %c0_i32, %c0_i32_0 : i32, i32
  }
  func.func @transform_14(%arg0: i32) -> (i32, i32) {
    %c0_i32 = arith.constant 0 : i32
    %c0_i32_0 = arith.constant 0 : i32
    %c0_i32_1 = arith.constant 0 : i32
    return %c0_i32, %c0_i32_0 : i32, i32
  }
  func.func @transform_15(%arg0: i32) -> (i32, i32) {
    %c0_i32 = arith.constant 0 : i32
    %c0_i32_0 = arith.constant 0 : i32
    %c0_i32_1 = arith.constant 0 : i32
    return %c0_i32, %c0_i32_0 : i32, i32
  }
  func.func @transform_16(%arg0: i32) -> (i32, i32, i32) {
    %c0_i32 = arith.constant 0 : i32
    %c0_i32_0 = arith.constant 0 : i32
    %c0_i32_1 = arith.constant 0 : i32
    %c0_i32_2 = arith.constant 0 : i32
    return %c0_i32, %c0_i32_0, %c0_i32_1 : i32, i32, i32
  }
  func.func @transform_17(%arg0: i32) -> (i32, i32) {
    %c0_i32 = arith.constant 0 : i32
    %c0_i32_0 = arith.constant 0 : i32
    %c0_i32_1 = arith.constant 0 : i32
    return %c0_i32, %c0_i32_0 : i32, i32
  }
  func.func @transform_18(%arg0: i32) -> (i32, i32) {
    %c0_i32 = arith.constant 0 : i32
    %c0_i32_0 = arith.constant 0 : i32
    %c0_i32_1 = arith.constant 0 : i32
    return %c0_i32, %c0_i32_0 : i32, i32
  }
  func.func @transform_19(%arg0: i32) -> (i32, i32) {
    %c0_i32 = arith.constant 0 : i32
    %c0_i32_0 = arith.constant 0 : i32
    %c0_i32_1 = arith.constant 0 : i32
    return %c0_i32, %c0_i32_0 : i32, i32
  }
  func.func @transform_20(%arg0: i32) -> (i32, i32) {
    %c0_i32 = arith.constant 0 : i32
    %c0_i32_0 = arith.constant 0 : i32
    %c0_i32_1 = arith.constant 0 : i32
    return %c0_i32, %c0_i32_0 : i32, i32
  }
  func.func @transform_21(%arg0: i32) -> (i32, i32) {
    %c0_i32 = arith.constant 0 : i32
    %c0_i32_0 = arith.constant 0 : i32
    return %arg0, %c0_i32 : i32, i32
  }
  func.func @transform_22(%arg0: i32) -> (i32, i32) {
    %c0_i32 = arith.constant 0 : i32
    %c0_i32_0 = arith.constant 0 : i32
    return %arg0, %c0_i32 : i32, i32
  }
}

</mosaic_0001>

<llo_original>
// kernel: tpu_custom_call.1
$region0: #{tpu_custom_call.1}
  #allocation0 [shape = 'u32[]', space=smem, size = 0x4, offset = 0x4, fixed_abs, tag = 'smem constant byte address 0x4 - core index']
  #allocation1 [shape = 'u32[144,128]{1,0:T(1,128)}', space=vmem, size = 0x12000, scoped, tag = 'internal scratch']
  #allocation2 [shape = 'bf16[160,128]{1,0:T(16,128)(2,1)}', space=vmem, size = 0xa000, scoped, tag = 'scratch operand']
  %s0 = inlined_call_operand.vmem [shape: bf16[1,256,192], index: 0, kind: input, shape index: {}]
  %s1 = inlined_call_operand.hbm [shape: bf16[16,128], index: 1, kind: input, shape index: {}]
  %s2 = inlined_call_operand.hbm [shape: bf16[128,256], index: 2, kind: input, shape index: {}]
  %s3 = inlined_call_operand.hbm [shape: f32[1,256], index: 3, kind: input, shape index: {}]
  %s4 = inlined_call_operand.hbm [shape: bf16[256,512], index: 4, kind: input, shape index: {}]
  %s5 = inlined_call_operand.vmem [shape: f32[1,512], index: 5, kind: input, shape index: {}]
  %s6 = inlined_call_operand.hbm [shape: bf16[512,128], index: 6, kind: input, shape index: {}]
  %s7 = inlined_call_operand.hbm [shape: f32[1,128], index: 7, kind: input, shape index: {}]
  %s8 = inlined_call_operand.hbm [shape: bf16[192,128], index: 8, kind: input, shape index: {}]
  %s9 = inlined_call_operand.hbm [shape: f32[1,128], index: 9, kind: input, shape index: {}]
  %s10 = inlined_call_operand.vmem [shape: bf16[3,128,256], index: 10, kind: input, shape index: {}]
  %s11 = inlined_call_operand.hbm [shape: f32[1,256], index: 11, kind: input, shape index: {}]
  %s12 = inlined_call_operand.hbm [shape: bf16[256,1024], index: 12, kind: input, shape index: {}]
  %s13 = inlined_call_operand.hbm [shape: f32[1,1024], index: 13, kind: input, shape index: {}]
  %s14 = inlined_call_operand.hbm [shape: bf16[256,1024], index: 14, kind: input, shape index: {}]
  %s15 = inlined_call_operand.hbm [shape: f32[1,1024], index: 15, kind: input, shape index: {}]
  %s16 = inlined_call_operand.hbm [shape: bf16[4,128,512], index: 16, kind: input, shape index: {}]
  %s17 = inlined_call_operand.hbm [shape: bf16[384,256], index: 17, kind: input, shape index: {}]
  %s18 = inlined_call_operand.hbm [shape: f32[1,256], index: 18, kind: input, shape index: {}]
  %s19 = inlined_call_operand.vmem [shape: bf16[256,128], index: 19, kind: input, shape index: {}]
  %s20 = inlined_call_operand.vmem [shape: f32[1,128], index: 20, kind: input, shape index: {}]
  %s21 = inlined_call_operand.hbm [shape: f32[16,128], index: 21, kind: output, shape index: {0}]
  %s22 = inlined_call_operand.hbm [shape: f32[16,128], index: 22, kind: output, shape index: {1}]
  %23 = xla_tuple %s21, %s22
  %s24 = sld [smem:[#allocation0]]
  $region166: #{tpu_custom_call.1} parent=0
    _
  %s26 = ssub.s32 1, %s24
  %s27 = scalar_select 0, %s26, %s24
  $region1: #{tpu_custom_call.1} parent=0
    #allocation3 [shape = 'u8[4096]{0}', space=vmem, size = 0x1000, scoped, tag = 'input window, operand 1, single buffered']
    #allocation4 [shape = 's32[1]{0}', space=sflag, size = 0x4, scoped, tag = 'scoped memory for tpu_custom_call.1']
    #allocation5 [shape = 's32[1]{0}', space=sflag, size = 0x4, scoped, tag = 'scoped memory for tpu_custom_call.1']
    #allocation6 [shape = 'u8[65536]{0}', space=vmem, size = 0x10000, scoped, tag = 'input window, operand 2, single buffered']
    #allocation7 [shape = 's32[1]{0}', space=sflag, size = 0x4, scoped, tag = 'scoped memory for tpu_custom_call.1']
    #allocation8 [shape = 'u8[1024]{0}', space=vmem, size = 0x400, scoped, tag = 'input window, operand 3, single buffered']
    #allocation9 [shape = 'u8[262144]{0}', space=vmem, size = 0x40000, scoped, tag = 'input window, operand 4, single buffered']
    #allocation10 [shape = 's32[1]{0}', space=sflag, size = 0x4, scoped, tag = 'scoped memory for tpu_custom_call.1']
    #allocation11 [shape = 'u8[131072]{0}', space=vmem, size = 0x20000, scoped, tag = 'input window, operand 6, single buffered']
    #allocation12 [shape = 'u8[512]{0}', space=vmem, size = 0x400, scoped, tag = 'input window, operand 7, single buffered']
    #allocation13 [shape = 's32[1]{0}', space=sflag, size = 0x4, scoped, tag = 'scoped memory for tpu_custom_call.1']
    #allocation14 [shape = 'u8[49152]{0}', space=vmem, size = 0xc000, scoped, tag = 'input window, operand 8, single buffered']
    #allocation15 [shape = 'u8[512]{0}', space=vmem, size = 0x400, scoped, tag = 'input window, operand 9, single buffered']
    #allocation16 [shape = 's32[1]{0}', space=sflag, size = 0x4, scoped, tag = 'scoped memory for tpu_custom_call.1']
    #allocation17 [shape = 'u8[1024]{0}', space=vmem, size = 0x400, scoped, tag = 'input window, operand 11, single buffered']
    #allocation18 [shape = 'u8[524288]{0}', space=vmem, size = 0x80000, scoped, tag = 'input window, operand 12, single buffered']
    #allocation19 [shape = 's32[1]{0}', space=sflag, size = 0x4, scoped, tag = 'scoped memory for tpu_custom_call.1']
    #allocation20 [shape = 'u8[4096]{0}', space=vmem, size = 0x1000, scoped, tag = 'input window, operand 13, single buffered']
    #allocation21 [shape = 'u8[524288]{0}', space=vmem, size = 0x80000, scoped, tag = 'input window, operand 14, single buffered']
    #allocation22 [shape = 's32[1]{0}', space=sflag, size = 0x4, scoped, tag = 'scoped memory for tpu_custom_call.1']
    #allocation23 [shape = 'u8[4096]{0}', space=vmem, size = 0x1000, scoped, tag = 'input window, operand 15, single buffered']
    #allocation24 [shape = 'u8[524288]{0}', space=vmem, size = 0x80000, scoped, tag = 'input window, operand 16, single buffered']
    #allocation25 [shape = 's32[1]{0}', space=sflag, size = 0x4, scoped, tag = 'scoped memory for tpu_custom_call.1']
    #allocation26 [shape = 'u8[196608]{0}', space=vmem, size = 0x30000, scoped, tag = 'input window, operand 17, single buffered']
    #allocation27 [shape = 'u8[1024]{0}', space=vmem, size = 0x400, scoped, tag = 'input window, operand 18, single buffered']
    #allocation28 [shape = 's32[1]{0}', space=sflag, size = 0x4, scoped, tag = 'scoped memory for tpu_custom_call.1']
    #allocation29 [shape = 'u8[8192]{0}', space=vmem, size = 0x2000, scoped, tag = 'output window, operand 0, single buffered']
    #allocation30 [shape = 'u8[8192]{0}', space=vmem, size = 0x2000, scoped, tag = 'output window, operand 1, single buffered']
    #allocation31 [shape = 's32[1]{0}', space=sflag, size = 0x4, scoped, tag = 'scoped memory for tpu_custom_call.1']
    %28 = vsyncpa [#allocation4], 0
    %29 = vsyncpa [#allocation7], 0
    %30 = vsyncpa [#allocation10], 0
    %31 = vsyncpa [#allocation13], 0
    %32 = vsyncpa [#allocation16], 0
    %33 = vsyncpa [#allocation19], 0
    %34 = vsyncpa [#allocation22], 0
    %35 = vsyncpa [#allocation25], 0
    %36 = vsyncpa [#allocation28], 0
    %37 = vsyncpa [#allocation5], 0
    %38 = vsyncpa [#allocation31], 0
    // Predicated region
    $region2: #{tpu_custom_call.1} parent=1 // pred_check
      _
    $region3: #{tpu_custom_call.1} parent=1 // pred_check_branch
      %40 = sbr.rel (0) target = $region5
    $region4: #{tpu_custom_call.1} parent=1 // pred_region
      _
    $region5: #{tpu_custom_call.1} parent=1 // pred_fallthru
      _
    // Predicated region
    $region6: #{tpu_custom_call.1} parent=1 // pred_check
      _
    $region7: #{tpu_custom_call.1} parent=1 // pred_check_branch
      %42 = sbr.rel (0) target = $region9
    $region8: #{tpu_custom_call.1} parent=1 // pred_region
      %s44 = ssub.s32 128, 128
      %45 = vsyncadd [#allocation4], %s44
      %s46 = sshll.u32 [#allocation3], 4
      %s47 = int_to_ptr.vmem [resolvable:$true] %s46
      %52 = dma.hbm_to_vmem [thread:$0]  %s1, 128, %s47, [#allocation4], 64, 64, 4
    $region9: #{tpu_custom_call.1} parent=1 // pred_fallthru
      _
    // Predicated region
    $region10: #{tpu_custom_call.1} parent=1 // pred_check
      _
    $region11: #{tpu_custom_call.1} parent=1 // pred_check_branch
      %54 = sbr.rel (0) target = $region13
    $region12: #{tpu_custom_call.1} parent=1 // pred_region
      %s56 = ssub.s32 2048, 2048
      %57 = vsyncadd [#allocation7], %s56
      %s58 = sshll.u32 [#allocation6], 4
      %s59 = int_to_ptr.vmem [resolvable:$true] %s58
      %64 = dma.hbm_to_vmem [thread:$0]  %s2, 2048, %s59, [#allocation7], 128, 128, 8
    $region13: #{tpu_custom_call.1} parent=1 // pred_fallthru
      _
    // Predicated region
    $region14: #{tpu_custom_call.1} parent=1 // pred_check
      _
    $region15: #{tpu_custom_call.1} parent=1 // pred_check_branch
      %66 = sbr.rel (0) target = $region17
    $region16: #{tpu_custom_call.1} parent=1 // pred_region
      %s68 = ssub.s32 32, 32
      %69 = vsyncadd [#allocation7], %s68
      %s71 = sshll.u32 [#allocation8], 4
      %s72 = int_to_ptr.vmem [resolvable:$true] %s71
      %74 = dma.hbm_to_vmem [thread:$0]  %s3, 32, %s72, [#allocation7]
    $region17: #{tpu_custom_call.1} parent=1 // pred_fallthru
      _
    // Predicated region
    $region18: #{tpu_custom_call.1} parent=1 // pred_check
      _
    $region19: #{tpu_custom_call.1} parent=1 // pred_check_branch
      %76 = sbr.rel (0) target = $region21
    $region20: #{tpu_custom_call.1} parent=1 // pred_region
      %s78 = ssub.s32 8192, 8192
      %79 = vsyncadd [#allocation10], %s78
      %s80 = sshll.u32 [#allocation9], 4
      %s81 = int_to_ptr.vmem [resolvable:$true] %s80
      %86 = dma.hbm_to_vmem [thread:$0]  %s4, 8192, %s81, [#allocation10], 256, 256, 16
    $region21: #{tpu_custom_call.1} parent=1 // pred_fallthru
      _
    // Predicated region
    $region22: #{tpu_custom_call.1} parent=1 // pred_check
      _
    $region23: #{tpu_custom_call.1} parent=1 // pred_check_branch
      %88 = sbr.rel (0) target = $region25
    $region24: #{tpu_custom_call.1} parent=1 // pred_region
      _
    $region25: #{tpu_custom_call.1} parent=1 // pred_fallthru
      _
    // Predicated region
    $region26: #{tpu_custom_call.1} parent=1 // pred_check
      _
    $region27: #{tpu_custom_call.1} parent=1 // pred_check_branch
      %90 = sbr.rel (0) target = $region29
    $region28: #{tpu_custom_call.1} parent=1 // pred_region
      %s92 = ssub.s32 4096, 4096
      %93 = vsyncadd [#allocation10], %s92
      %s94 = sshll.u32 [#allocation11], 4
      %s95 = int_to_ptr.vmem [resolvable:$true] %s94
      %100 = dma.hbm_to_vmem [thread:$0]  %s6, 4096, %s95, [#allocation10], 64, 64, 4
    $region29: #{tpu_custom_call.1} parent=1 // pred_fallthru
      _
    // Predicated region
    $region30: #{tpu_custom_call.1} parent=1 // pred_check
      _
    $region31: #{tpu_custom_call.1} parent=1 // pred_check_branch
      %102 = sbr.rel (0) target = $region33
    $region32: #{tpu_custom_call.1} parent=1 // pred_region
      %s104 = ssub.s32 16, 16
      %105 = vsyncadd [#allocation13], %s104
      %s107 = sshll.u32 [#allocation12], 4
      %s108 = int_to_ptr.vmem [resolvable:$true] %s107
      %110 = dma.hbm_to_vmem [thread:$0]  %s7, 16, %s108, [#allocation13]
    $region33: #{tpu_custom_call.1} parent=1 // pred_fallthru
      _
    // Predicated region
    $region34: #{tpu_custom_call.1} parent=1 // pred_check
      _
    $region35: #{tpu_custom_call.1} parent=1 // pred_check_branch
      %112 = sbr.rel (0) target = $region37
    $region36: #{tpu_custom_call.1} parent=1 // pred_region
      %s114 = ssub.s32 1536, 1536
      %115 = vsyncadd [#allocation13], %s114
      %s116 = sshll.u32 [#allocation14], 4
      %s117 = int_to_ptr.vmem [resolvable:$true] %s116
      %122 = dma.hbm_to_vmem [thread:$0]  %s8, 1536, %s117, [#allocation13], 64, 64, 4
    $region37: #{tpu_custom_call.1} parent=1 // pred_fallthru
      _
    // Predicated region
    $region38: #{tpu_custom_call.1} parent=1 // pred_check
      _
    $region39: #{tpu_custom_call.1} parent=1 // pred_check_branch
      %124 = sbr.rel (0) target = $region41
    $region40: #{tpu_custom_call.1} parent=1 // pred_region
      %s126 = ssub.s32 16, 16
      %127 = vsyncadd [#allocation16], %s126
      %s129 = sshll.u32 [#allocation15], 4
      %s130 = int_to_ptr.vmem [resolvable:$true] %s129
      %132 = dma.hbm_to_vmem [thread:$0]  %s9, 16, %s130, [#allocation16]
    $region41: #{tpu_custom_call.1} parent=1 // pred_fallthru
      _
    // Predicated region
    $region42: #{tpu_custom_call.1} parent=1 // pred_check
      _
    $region43: #{tpu_custom_call.1} parent=1 // pred_check_branch
      %134 = sbr.rel (0) target = $region45
    $region44: #{tpu_custom_call.1} parent=1 // pred_region
      _
    $region45: #{tpu_custom_call.1} parent=1 // pred_fallthru
      _
    // Predicated region
    $region46: #{tpu_custom_call.1} parent=1 // pred_check
      _
    $region47: #{tpu_custom_call.1} parent=1 // pred_check_branch
      %136 = sbr.rel (0) target = $region49
    $region48: #{tpu_custom_call.1} parent=1 // pred_region
      %s138 = ssub.s32 32, 32
      %139 = vsyncadd [#allocation16], %s138
      %s141 = sshll.u32 [#allocation17], 4
      %s142 = int_to_ptr.vmem [resolvable:$true] %s141
      %144 = dma.hbm_to_vmem [thread:$0]  %s11, 32, %s142, [#allocation16]
    $region49: #{tpu_custom_call.1} parent=1 // pred_fallthru
      _
    // Predicated region
    $region50: #{tpu_custom_call.1} parent=1 // pred_check
      _
    $region51: #{tpu_custom_call.1} parent=1 // pred_check_branch
      %146 = sbr.rel (0) target = $region53
    $region52: #{tpu_custom_call.1} parent=1 // pred_region
      %s148 = ssub.s32 16384, 16384
      %149 = vsyncadd [#allocation19], %s148
      %s150 = sshll.u32 [#allocation18], 4
      %s151 = int_to_ptr.vmem [resolvable:$true] %s150
      %156 = dma.hbm_to_vmem [thread:$0]  %s12, 16384, %s151, [#allocation19], 512, 512, 32
    $region53: #{tpu_custom_call.1} parent=1 // pred_fallthru
      _
    // Predicated region
    $region54: #{tpu_custom_call.1} parent=1 // pred_check
      _
    $region55: #{tpu_custom_call.1} parent=1 // pred_check_branch
      %158 = sbr.rel (0) target = $region57
    $region56: #{tpu_custom_call.1} parent=1 // pred_region
      %s160 = ssub.s32 128, 128
      %161 = vsyncadd [#allocation19], %s160
      %s163 = sshll.u32 [#allocation20], 4
      %s164 = int_to_ptr.vmem [resolvable:$true] %s163
      %166 = dma.hbm_to_vmem [thread:$0]  %s13, 128, %s164, [#allocation19]
    $region57: #{tpu_custom_call.1} parent=1 // pred_fallthru
      _
    // Predicated region
    $region58: #{tpu_custom_call.1} parent=1 // pred_check
      _
    $region59: #{tpu_custom_call.1} parent=1 // pred_check_branch
      %168 = sbr.rel (0) target = $region61
    $region60: #{tpu_custom_call.1} parent=1 // pred_region
      %s170 = ssub.s32 16384, 16384
      %171 = vsyncadd [#allocation22], %s170
      %s172 = sshll.u32 [#allocation21], 4
      %s173 = int_to_ptr.vmem [resolvable:$true] %s172
      %178 = dma.hbm_to_vmem [thread:$0]  %s14, 16384, %s173, [#allocation22], 512, 512, 32
    $region61: #{tpu_custom_call.1} parent=1 // pred_fallthru
      _
    // Predicated region
    $region62: #{tpu_custom_call.1} parent=1 // pred_check
      _
    $region63: #{tpu_custom_call.1} parent=1 // pred_check_branch
      %180 = sbr.rel (0) target = $region65
    $region64: #{tpu_custom_call.1} parent=1 // pred_region
      %s182 = ssub.s32 128, 128
      %183 = vsyncadd [#allocation22], %s182
      %s185 = sshll.u32 [#allocation23], 4
      %s186 = int_to_ptr.vmem [resolvable:$true] %s185
      %188 = dma.hbm_to_vmem [thread:$0]  %s15, 128, %s186, [#allocation22]
    $region65: #{tpu_custom_call.1} parent=1 // pred_fallthru
      _
    // Predicated region
    $region66: #{tpu_custom_call.1} parent=1 // pred_check
      _
    $region67: #{tpu_custom_call.1} parent=1 // pred_check_branch
      %190 = sbr.rel (0) target = $region69
    $region68: #{tpu_custom_call.1} parent=1 // pred_region
      %s192 = ssub.s32 16384, 16384
      %193 = vsyncadd [#allocation25], %s192
      %s194 = sshll.u32 [#allocation24], 4
      %s195 = int_to_ptr.vmem [resolvable:$true] %s194
      %200 = dma.hbm_to_vmem [thread:$0]  %s16, 16384, %s195, [#allocation25], 256, 256, 16
    $region69: #{tpu_custom_call.1} parent=1 // pred_fallthru
      _
    // Predicated region
    $region70: #{tpu_custom_call.1} parent=1 // pred_check
      _
    $region71: #{tpu_custom_call.1} parent=1 // pred_check_branch
      %202 = sbr.rel (0) target = $region73
    $region72: #{tpu_custom_call.1} parent=1 // pred_region
      %s204 = ssub.s32 6144, 6144
      %205 = vsyncadd [#allocation25], %s204
      %s206 = sshll.u32 [#allocation26], 4
      %s207 = int_to_ptr.vmem [resolvable:$true] %s206
      %212 = dma.hbm_to_vmem [thread:$0]  %s17, 6144, %s207, [#allocation25], 128, 128, 8
    $region73: #{tpu_custom_call.1} parent=1 // pred_fallthru
      _
    // Predicated region
    $region74: #{tpu_custom_call.1} parent=1 // pred_check
      _
    $region75: #{tpu_custom_call.1} parent=1 // pred_check_branch
      %214 = sbr.rel (0) target = $region77
    $region76: #{tpu_custom_call.1} parent=1 // pred_region
      %s216 = ssub.s32 32, 32
      %217 = vsyncadd [#allocation28], %s216
      %s219 = sshll.u32 [#allocation27], 4
      %s220 = int_to_ptr.vmem [resolvable:$true] %s219
      %222 = dma.hbm_to_vmem [thread:$0]  %s18, 32, %s220, [#allocation28]
    $region77: #{tpu_custom_call.1} parent=1 // pred_fallthru
      _
    // Predicated region
    $region78: #{tpu_custom_call.1} parent=1 // pred_check
      _
    $region79: #{tpu_custom_call.1} parent=1 // pred_check_branch
      %224 = sbr.rel (0) target = $region81
    $region80: #{tpu_custom_call.1} parent=1 // pred_region
      _
    $region81: #{tpu_custom_call.1} parent=1 // pred_fallthru
      _
    // Predicated region
    $region82: #{tpu_custom_call.1} parent=1 // pred_check
      _
    $region83: #{tpu_custom_call.1} parent=1 // pred_check_branch
      %226 = sbr.rel (0) target = $region85
    $region84: #{tpu_custom_call.1} parent=1 // pred_region
      _
    $region85: #{tpu_custom_call.1} parent=1 // pred_fallthru
      _
    // Predicated region
    $region86: #{tpu_custom_call.1} parent=1 // pred_check
      _
    $region87: #{tpu_custom_call.1} parent=1 // pred_check_branch
      %228 = sbr.rel (0) target = $region89
    $region88: #{tpu_custom_call.1} parent=1 // pred_region
      %229 = dma.done [#allocation4], 128
    $region89: #{tpu_custom_call.1} parent=1 // pred_fallthru
      _
    // Predicated region
    $region90: #{tpu_custom_call.1} parent=1 // pred_check
      _
    $region91: #{tpu_custom_call.1} parent=1 // pred_check_branch
      %231 = sbr.rel (0) target = $region93
    $region92: #{tpu_custom_call.1} parent=1 // pred_region
      %232 = dma.done [#allocation7], 2048
    $region93: #{tpu_custom_call.1} parent=1 // pred_fallthru
      _
    // Predicated region
    $region94: #{tpu_custom_call.1} parent=1 // pred_check
      _
    $region95: #{tpu_custom_call.1} parent=1 // pred_check_branch
      %234 = sbr.rel (0) target = $region97
    $region96: #{tpu_custom_call.1} parent=1 // pred_region
      %235 = dma.done [#allocation7], 32
    $region97: #{tpu_custom_call.1} parent=1 // pred_fallthru
      _
    // Predicated region
    $region98: #{tpu_custom_call.1} parent=1 // pred_check
      _
    $region99: #{tpu_custom_call.1} parent=1 // pred_check_branch
      %237 = sbr.rel (0) target = $region101
    $region100: #{tpu_custom_call.1} parent=1 // pred_region
      %238 = dma.done [#allocation10], 8192
    $region101: #{tpu_custom_call.1} parent=1 // pred_fallthru
      _
    // Predicated region
    $region102: #{tpu_custom_call.1} parent=1 // pred_check
      _
    $region103: #{tpu_custom_call.1} parent=1 // pred_check_branch
      %240 = sbr.rel (0) target = $region105
    $region104: #{tpu_custom_call.1} parent=1 // pred_region
      %241 = dma.done [#allocation10], 4096
    $region105: #{tpu_custom_call.1} parent=1 // pred_fallthru
      _
    // Predicated region
    $region106: #{tpu_custom_call.1} parent=1 // pred_check
      _
    $region107: #{tpu_custom_call.1} parent=1 // pred_check_branch
      %243 = sbr.rel (0) target = $region109
    $region108: #{tpu_custom_call.1} parent=1 // pred_region
      %244 = dma.done [#allocation13], 16
    $region109: #{tpu_custom_call.1} parent=1 // pred_fallthru
      _
    // Predicated region
    $region110: #{tpu_custom_call.1} parent=1 // pred_check
      _
    $region111: #{tpu_custom_call.1} parent=1 // pred_check_branch
      %246 = sbr.rel (0) target = $region113
    $region112: #{tpu_custom_call.1} parent=1 // pred_region
      %247 = dma.done [#allocation13], 1536
    $region113: #{tpu_custom_call.1} parent=1 // pred_fallthru
      _
    // Predicated region
    $region114: #{tpu_custom_call.1} parent=1 // pred_check
      _
    $region115: #{tpu_custom_call.1} parent=1 // pred_check_branch
      %249 = sbr.rel (0) target = $region117
    $region116: #{tpu_custom_call.1} parent=1 // pred_region
      %250 = dma.done [#allocation16], 16
    $region117: #{tpu_custom_call.1} parent=1 // pred_fallthru
      _
    // Predicated region
    $region118: #{tpu_custom_call.1} parent=1 // pred_check
      _
    $region119: #{tpu_custom_call.1} parent=1 // pred_check_branch
      %252 = sbr.rel (0) target = $region121
    $region120: #{tpu_custom_call.1} parent=1 // pred_region
      %253 = dma.done [#allocation16], 32
    $region121: #{tpu_custom_call.1} parent=1 // pred_fallthru
      _
    // Predicated region
    $region122: #{tpu_custom_call.1} parent=1 // pred_check
      _
    $region123: #{tpu_custom_call.1} parent=1 // pred_check_branch
      %255 = sbr.rel (0) target = $region125
    $region124: #{tpu_custom_call.1} parent=1 // pred_region
      %256 = dma.done [#allocation19], 16384
    $region125: #{tpu_custom_call.1} parent=1 // pred_fallthru
      _
    // Predicated region
    $region126: #{tpu_custom_call.1} parent=1 // pred_check
      _
    $region127: #{tpu_custom_call.1} parent=1 // pred_check_branch
      %258 = sbr.rel (0) target = $region129
    $region128: #{tpu_custom_call.1} parent=1 // pred_region
      %259 = dma.done [#allocation19], 128
    $region129: #{tpu_custom_call.1} parent=1 // pred_fallthru
      _
    // Predicated region
    $region130: #{tpu_custom_call.1} parent=1 // pred_check
      _
    $region131: #{tpu_custom_call.1} parent=1 // pred_check_branch
      %261 = sbr.rel (0) target = $region133
    $region132: #{tpu_custom_call.1} parent=1 // pred_region
      %262 = dma.done [#allocation22], 16384
    $region133: #{tpu_custom_call.1} parent=1 // pred_fallthru
      _
    // Predicated region
    $region134: #{tpu_custom_call.1} parent=1 // pred_check
      _
    $region135: #{tpu_custom_call.1} parent=1 // pred_check_branch
      %264 = sbr.rel (0) target = $region137
    $region136: #{tpu_custom_call.1} parent=1 // pred_region
      %265 = dma.done [#allocation22], 128
    $region137: #{tpu_custom_call.1} parent=1 // pred_fallthru
      _
    // Predicated region
    $region138: #{tpu_custom_call.1} parent=1 // pred_check
      _
    $region139: #{tpu_custom_call.1} parent=1 // pred_check_branch
      %267 = sbr.rel (0) target = $region141
    $region140: #{tpu_custom_call.1} parent=1 // pred_region
      %268 = dma.done [#allocation25], 16384
    $region141: #{tpu_custom_call.1} parent=1 // pred_fallthru
      _
    // Predicated region
    $region142: #{tpu_custom_call.1} parent=1 // pred_check
      _
    $region143: #{tpu_custom_call.1} parent=1 // pred_check_branch
      %270 = sbr.rel (0) target = $region145
    $region144: #{tpu_custom_call.1} parent=1 // pred_region
      %271 = dma.done [#allocation25], 6144
    $region145: #{tpu_custom_call.1} parent=1 // pred_fallthru
      _
    // Predicated region
    $region146: #{tpu_custom_call.1} parent=1 // pred_check
      _
    $region147: #{tpu_custom_call.1} parent=1 // pred_check_branch
      %273 = sbr.rel (0) target = $region149
    $region148: #{tpu_custom_call.1} parent=1 // pred_region
      %274 = dma.done [#allocation28], 32
    $region149: #{tpu_custom_call.1} parent=1 // pred_fallthru
      _
    %v276 = vld [vmem:[#allocation3] sm:$0xf]
    %v277 = vld [vmem:[#allocation3 + $0x4] sm:$0xf]
    %v278 = vld [vmem:[#allocation6] sm:$0xff]
    %v279 = vld [vmem:[#allocation6 + $0x8] sm:$0xff]
    %v280 = vld [vmem:[#allocation6 + $0x10] sm:$0xff]
    %v281 = vld [vmem:[#allocation6 + $0x18] sm:$0xff]
    %v282 = vld [vmem:[#allocation6 + $0x20] sm:$0xff]
    %v283 = vld [vmem:[#allocation6 + $0x28] sm:$0xff]
    %v284 = vld [vmem:[#allocation6 + $0x30] sm:$0xff]
    %v285 = vld [vmem:[#allocation6 + $0x38] sm:$0xff]
    %v286 = vld [vmem:[#allocation6 + $0x40] sm:$0xff]
    %v287 = vld [vmem:[#allocation6 + $0x48] sm:$0xff]
    %v288 = vld [vmem:[#allocation6 + $0x50] sm:$0xff]
    %v289 = vld [vmem:[#allocation6 + $0x58] sm:$0xff]
    %v290 = vld [vmem:[#allocation6 + $0x60] sm:$0xff]
    %v291 = vld [vmem:[#allocation6 + $0x68] sm:$0xff]
    %v292 = vld [vmem:[#allocation6 + $0x70] sm:$0xff]
    %v293 = vld [vmem:[#allocation6 + $0x78] sm:$0xff]
    %v294 = vld [vmem:[#allocation8] sm:$0x3]
    %v296 = vlaneseq
    %v297 = vshrl.u32 %v296, 7
    %v298 = vsub.s32 0, %v297
    %v299 = vrot.slane %v294, %v298
    %v300 = vlaneseq
    %v301 = vshrl.u32 %v300, 7
    %v302 = vsub.s32 1, %v301
    %v303 = vrot.slane %v294, %v302
    %v308 = vunpack.c.l.b16 %v276
    %v309 = vunpack.c.l.b16 %v277
    %v310 = vpack.c.b16 %v309, %v308
    %v328 = vunpack.c.l.b16 %v278
    %v329 = vunpack.c.h.b16 %v278
    %v330 = vunpack.c.l.b16 %v279
    %v331 = vunpack.c.h.b16 %v279
    %v332 = vunpack.c.l.b16 %v280
    %v333 = vunpack.c.h.b16 %v280
    %v334 = vunpack.c.l.b16 %v281
    %v335 = vunpack.c.h.b16 %v281
    %v336 = vunpack.c.l.b16 %v282
    %v337 = vunpack.c.h.b16 %v282
    %v338 = vunpack.c.l.b16 %v283
    %v339 = vunpack.c.h.b16 %v283
    %v340 = vunpack.c.l.b16 %v284
    %v341 = vunpack.c.h.b16 %v284
    %v342 = vunpack.c.l.b16 %v285
    %v343 = vunpack.c.h.b16 %v285
    %v344 = vunpack.c.l.b16 %v286
    %v345 = vunpack.c.h.b16 %v286
    %v346 = vunpack.c.l.b16 %v287
    %v347 = vunpack.c.h.b16 %v287
    %v348 = vunpack.c.l.b16 %v288
    %v349 = vunpack.c.h.b16 %v288
    %v350 = vunpack.c.l.b16 %v289
    %v351 = vunpack.c.h.b16 %v289
    %v352 = vunpack.c.l.b16 %v290
    %v353 = vunpack.c.h.b16 %v290
    %v354 = vunpack.c.l.b16 %v291
    %v355 = vunpack.c.h.b16 %v291
    %v356 = vunpack.c.l.b16 %v292
    %v357 = vunpack.c.h.b16 %v292
    %v358 = vunpack.c.l.b16 %v293
    %v359 = vunpack.c.h.b16 %v293
    %v360 = vpack.c.b16 %v330, %v328
    %v361 = vpack.c.b16 %v331, %v329
    %v362 = vpack.c.b16 %v334, %v332
    %v363 = vpack.c.b16 %v335, %v333
    %v364 = vpack.c.b16 %v338, %v336
    %v365 = vpack.c.b16 %v339, %v337
    %v366 = vpack.c.b16 %v342, %v340
    %v367 = vpack.c.b16 %v343, %v341
    %v368 = vpack.c.b16 %v346, %v344
    %v369 = vpack.c.b16 %v347, %v345
    %v370 = vpack.c.b16 %v350, %v348
    %v371 = vpack.c.b16 %v351, %v349
    %v372 = vpack.c.b16 %v354, %v352
    %v373 = vpack.c.b16 %v355, %v353
    %v374 = vpack.c.b16 %v358, %v356
    %v375 = vpack.c.b16 %v359, %v357
    %392 = vmatprep.subr.bf16.mxu0 %v361
    %393 = vmatpush1.bf16.msra.mxu0 %v360
    %394 = vmatprep.subr.bf16.mxu0 %v363
    %395 = vmatpush1.bf16.msra.mxu0 %v362
    %396 = vmatprep.subr.bf16.mxu0 %v365
    %397 = vmatpush1.bf16.msra.mxu0 %v364
    %398 = vmatprep.subr.bf16.mxu0 %v367
    %399 = vmatpush1.bf16.msra.mxu0 %v366
    %400 = vmatprep.subr.bf16.mxu0 %v369
    %401 = vmatpush1.bf16.msra.mxu0 %v368
    %402 = vmatprep.subr.bf16.mxu0 %v371
    %403 = vmatpush1.bf16.msra.mxu0 %v370
    %404 = vmatprep.subr.bf16.mxu0 %v373
    %405 = vmatpush1.bf16.msra.mxu0 %v372
    %406 = vmatprep.subr.bf16.mxu0 %v375
    %407 = vmatpush1.bf16.msra.mxu0 %v374
    %408 = vmatprep.subr.bf16.mxu0 0
    %409 = vmatpush1.bf16.msra.mxu0 0
    %410 = vmatprep.subr.bf16.mxu0 0
    %411 = vmatpush1.bf16.msra.mxu0 0
    %412 = vmatprep.subr.bf16.mxu0 0
    %413 = vmatpush1.bf16.msra.mxu0 0
    %414 = vmatprep.subr.bf16.mxu0 0
    %415 = vmatpush1.bf16.msra.mxu0 0
    %416 = vmatprep.subr.bf16.mxu0 0
    %417 = vmatpush1.bf16.msra.mxu0 0
    %418 = vmatprep.subr.bf16.mxu0 0
    %419 = vmatpush1.bf16.msra.mxu0 0
    %420 = vmatprep.subr.bf16.mxu0 0
    %421 = vmatpush1.bf16.msra.mxu0 0
    %422 = vmatprep.subr.bf16.mxu0 0
    %423 = vmatpush1.bf16.msra.mxu0 0
    %424 = vmatprep.mubr.bf16.mxu0 0
    %425 = vmatmul.mubr.bf16.gmra.mrb[0].mxu0 %v310
    %v426 = vpop.f32.mrb[0].mxu0
    %v427 = vadd.f32 %v299, %v426
    %v428 = vpop.f32.mrb[0].mxu0
    %v429 = vadd.f32 %v303, %v428
    %v430 = vpop.f32.mrb[0].mxu0
    %v431 = vadd.f32 %v299, %v430
    %v432 = vpop.f32.mrb[0].mxu0
    %v433 = vadd.f32 %v303, %v432
    %434 = vdwg.mxu0
    %v435 = vmax.f32 %v427, 0.0
    %v436 = vmax.f32 %v429, 0.0
    %v437 = vmax.f32 %v431, 0.0
    %v438 = vmax.f32 %v433, 0.0
    %v439 = vpack.c.bf16 %v437, %v435
    %v440 = vpack.c.bf16 %v438, %v436
    %v441 = vld [vmem:[#allocation9] sm:$0xff]
    %v442 = vld [vmem:[#allocation9 + $0x8] sm:$0xff]
    %v443 = vld [vmem:[#allocation9 + $0x10] sm:$0xff]
    %v444 = vld [vmem:[#allocation9 + $0x18] sm:$0xff]
    %v445 = vld [vmem:[#allocation9 + $0x20] sm:$0xff]
    %v446 = vld [vmem:[#allocation9 + $0x28] sm:$0xff]
    %v447 = vld [vmem:[#allocation9 + $0x30] sm:$0xff]
    %v448 = vld [vmem:[#allocation9 + $0x38] sm:$0xff]
    %v449 = vld [vmem:[#allocation9 + $0x40] sm:$0xff]
    %v450 = vld [vmem:[#allocation9 + $0x48] sm:$0xff]
    %v451 = vld [vmem:[#allocation9 + $0x50] sm:$0xff]
    %v452 = vld [vmem:[#allocation9 + $0x58] sm:$0xff]
    %v453 = vld [vmem:[#allocation9 + $0x60] sm:$0xff]
    %v454 = vld [vmem:[#allocation9 + $0x68] sm:$0xff]
    %v455 = vld [vmem:[#allocation9 + $0x70] sm:$0xff]
    %v456 = vld [vmem:[#allocation9 + $0x78] sm:$0xff]
    %v457 = vld [vmem:[#allocation9 + $0x80] sm:$0xff]
    %v458 = vld [vmem:[#allocation9 + $0x88] sm:$0xff]
    %v459 = vld [vmem:[#allocation9 + $0x90] sm:$0xff]
    %v460 = vld [vmem:[#allocation9 + $0x98] sm:$0xff]
    %v461 = vld [vmem:[#allocation9 + $0xa0] sm:$0xff]
    %v462 = vld [vmem:[#allocation9 + $0xa8] sm:$0xff]
    %v463 = vld [vmem:[#allocation9 + $0xb0] sm:$0xff]
    %v464 = vld [vmem:[#allocation9 + $0xb8] sm:$0xff]
    %v465 = vld [vmem:[#allocation9 + $0xc0] sm:$0xff]
    %v466 = vld [vmem:[#allocation9 + $0xc8] sm:$0xff]
    %v467 = vld [vmem:[#allocation9 + $0xd0] sm:$0xff]
    %v468 = vld [vmem:[#allocation9 + $0xd8] sm:$0xff]
    %v469 = vld [vmem:[#allocation9 + $0xe0] sm:$0xff]
    %v470 = vld [vmem:[#allocation9 + $0xe8] sm:$0xff]
    %v471 = vld [vmem:[#allocation9 + $0xf0] sm:$0xff]
    %v472 = vld [vmem:[#allocation9 + $0xf8] sm:$0xff]
    %v473 = vld [vmem:[#allocation9 + $0x100] sm:$0xff]
    %v474 = vld [vmem:[#allocation9 + $0x108] sm:$0xff]
    %v475 = vld [vmem:[#allocation9 + $0x110] sm:$0xff]
    %v476 = vld [vmem:[#allocation9 + $0x118] sm:$0xff]
    %v477 = vld [vmem:[#allocation9 + $0x120] sm:$0xff]
    %v478 = vld [vmem:[#allocation9 + $0x128] sm:$0xff]
    %v479 = vld [vmem:[#allocation9 + $0x130] sm:$0xff]
    %v480 = vld [vmem:[#allocation9 + $0x138] sm:$0xff]
    %v481 = vld [vmem:[#allocation9 + $0x140] sm:$0xff]
    %v482 = vld [vmem:[#allocation9 + $0x148] sm:$0xff]
    %v483 = vld [vmem:[#allocation9 + $0x150] sm:$0xff]
    %v484 = vld [vmem:[#allocation9 + $0x158] sm:$0xff]
    %v485 = vld [vmem:[#allocation9 + $0x160] sm:$0xff]
    %v486 = vld [vmem:[#allocation9 + $0x168] sm:$0xff]
    %v487 = vld [vmem:[#allocation9 + $0x170] sm:$0xff]
    %v488 = vld [vmem:[#allocation9 + $0x178] sm:$0xff]
    %v489 = vld [vmem:[#allocation9 + $0x180] sm:$0xff]
    %v490 = vld [vmem:[#allocation9 + $0x188] sm:$0xff]
    %v491 = vld [vmem:[#allocation9 + $0x190] sm:$0xff]
    %v492 = vld [vmem:[#allocation9 + $0x198] sm:$0xff]
    %v493 = vld [vmem:[#allocation9 + $0x1a0] sm:$0xff]
    %v494 = vld [vmem:[#allocation9 + $0x1a8] sm:$0xff]
    %v495 = vld [vmem:[#allocation9 + $0x1b0] sm:$0xff]
    %v496 = vld [vmem:[#allocation9 + $0x1b8] sm:$0xff]
    %v497 = vld [vmem:[#allocation9 + $0x1c0] sm:$0xff]
    %v498 = vld [vmem:[#allocation9 + $0x1c8] sm:$0xff]
    %v499 = vld [vmem:[#allocation9 + $0x1d0] sm:$0xff]
    %v500 = vld [vmem:[#allocation9 + $0x1d8] sm:$0xff]
    %v501 = vld [vmem:[#allocation9 + $0x1e0] sm:$0xff]
    %v502 = vld [vmem:[#allocation9 + $0x1e8] sm:$0xff]
    %v503 = vld [vmem:[#allocation9 + $0x1f0] sm:$0xff]
    %v504 = vld [vmem:[#allocation9 + $0x1f8] sm:$0xff]
    %v505 = vld [vmem:[%s5] sm:$0xf]
    %v507 = vlaneseq
    %v508 = vshrl.u32 %v507, 7
    %v509 = vsub.s32 0, %v508
    %v510 = vrot.slane %v505, %v509
    %v511 = vlaneseq
    %v512 = vshrl.u32 %v511, 7
    %v513 = vsub.s32 1, %v512
    %v514 = vrot.slane %v505, %v513
    %v515 = vlaneseq
    %v516 = vshrl.u32 %v515, 7
    %v517 = vsub.s32 2, %v516
    %v518 = vrot.slane %v505, %v517
    %v519 = vlaneseq
    %v520 = vshrl.u32 %v519, 7
    %v521 = vsub.s32 3, %v520
    %v522 = vrot.slane %v505, %v521
    %v591 = vunpack.c.l.b16 %v441
    %v592 = vunpack.c.h.b16 %v441
    %v593 = vunpack.c.l.b16 %v442
    %v594 = vunpack.c.h.b16 %v442
    %v595 = vunpack.c.l.b16 %v443
    %v596 = vunpack.c.h.b16 %v443
    %v597 = vunpack.c.l.b16 %v444
    %v598 = vunpack.c.h.b16 %v444
    %v599 = vunpack.c.l.b16 %v445
    %v600 = vunpack.c.h.b16 %v445
    %v601 = vunpack.c.l.b16 %v446
    %v602 = vunpack.c.h.b16 %v446
    %v603 = vunpack.c.l.b16 %v447
    %v604 = vunpack.c.h.b16 %v447
    %v605 = vunpack.c.l.b16 %v448
    %v606 = vunpack.c.h.b16 %v448
    %v607 = vunpack.c.l.b16 %v449
    %v608 = vunpack.c.h.b16 %v449
    %v609 = vunpack.c.l.b16 %v450
    %v610 = vunpack.c.h.b16 %v450
    %v611 = vunpack.c.l.b16 %v451
    %v612 = vunpack.c.h.b16 %v451
    %v613 = vunpack.c.l.b16 %v452
    %v614 = vunpack.c.h.b16 %v452
    %v615 = vunpack.c.l.b16 %v453
    %v616 = vunpack.c.h.b16 %v453
    %v617 = vunpack.c.l.b16 %v454
    %v618 = vunpack.c.h.b16 %v454
    %v619 = vunpack.c.l.b16 %v455
    %v620 = vunpack.c.h.b16 %v455
    %v621 = vunpack.c.l.b16 %v456
    %v622 = vunpack.c.h.b16 %v456
    %v623 = vunpack.c.l.b16 %v457
    %v624 = vunpack.c.h.b16 %v457
    %v625 = vunpack.c.l.b16 %v458
    %v626 = vunpack.c.h.b16 %v458
    %v627 = vunpack.c.l.b16 %v459
    %v628 = vunpack.c.h.b16 %v459
    %v629 = vunpack.c.l.b16 %v460
    %v630 = vunpack.c.h.b16 %v460
    %v631 = vunpack.c.l.b16 %v461
    %v632 = vunpack.c.h.b16 %v461
    %v633 = vunpack.c.l.b16 %v462
    %v634 = vunpack.c.h.b16 %v462
    %v635 = vunpack.c.l.b16 %v463
    %v636 = vunpack.c.h.b16 %v463
    %v637 = vunpack.c.l.b16 %v464
    %v638 = vunpack.c.h.b16 %v464
    %v639 = vunpack.c.l.b16 %v465
    %v640 = vunpack.c.h.b16 %v465
    %v641 = vunpack.c.l.b16 %v466
    %v642 = vunpack.c.h.b16 %v466
    %v643 = vunpack.c.l.b16 %v467
    %v644 = vunpack.c.h.b16 %v467
    %v645 = vunpack.c.l.b16 %v468
    %v646 = vunpack.c.h.b16 %v468
    %v647 = vunpack.c.l.b16 %v469
    %v648 = vunpack.c.h.b16 %v469
    %v649 = vunpack.c.l.b16 %v470
    %v650 = vunpack.c.h.b16 %v470
    %v651 = vunpack.c.l.b16 %v471
    %v652 = vunpack.c.h.b16 %v471
    %v653 = vunpack.c.l.b16 %v472
    %v654 = vunpack.c.h.b16 %v472
    %v655 = vunpack.c.l.b16 %v473
    %v656 = vunpack.c.h.b16 %v473
    %v657 = vunpack.c.l.b16 %v474
    %v658 = vunpack.c.h.b16 %v474
    %v659 = vunpack.c.l.b16 %v475
    %v660 = vunpack.c.h.b16 %v475
    %v661 = vunpack.c.l.b16 %v476
    %v662 = vunpack.c.h.b16 %v476
    %v663 = vunpack.c.l.b16 %v477
    %v664 = vunpack.c.h.b16 %v477
    %v665 = vunpack.c.l.b16 %v478
    %v666 = vunpack.c.h.b16 %v478
    %v667 = vunpack.c.l.b16 %v479
    %v668 = vunpack.c.h.b16 %v479
    %v669 = vunpack.c.l.b16 %v480
    %v670 = vunpack.c.h.b16 %v480
    %v671 = vunpack.c.l.b16 %v481
    %v672 = vunpack.c.h.b16 %v481
    %v673 = vunpack.c.l.b16 %v482
    %v674 = vunpack.c.h.b16 %v482
    %v675 = vunpack.c.l.b16 %v483
    %v676 = vunpack.c.h.b16 %v483
    %v677 = vunpack.c.l.b16 %v484
    %v678 = vunpack.c.h.b16 %v484
    %v679 = vunpack.c.l.b16 %v485
    %v680 = vunpack.c.h.b16 %v485
    %v681 = vunpack.c.l.b16 %v486
    %v682 = vunpack.c.h.b16 %v486
    %v683 = vunpack.c.l.b16 %v487
    %v684 = vunpack.c.h.b16 %v487
    %v685 = vunpack.c.l.b16 %v488
    %v686 = vunpack.c.h.b16 %v488
    %v687 = vunpack.c.l.b16 %v489
    %v688 = vunpack.c.h.b16 %v489
    %v689 = vunpack.c.l.b16 %v490
    %v690 = vunpack.c.h.b16 %v490
    %v691 = vunpack.c.l.b16 %v491
    %v692 = vunpack.c.h.b16 %v491
    %v693 = vunpack.c.l.b16 %v492
    %v694 = vunpack.c.h.b16 %v492
    %v695 = vunpack.c.l.b16 %v493
    %v696 = vunpack.c.h.b16 %v493
    %v697 = vunpack.c.l.b16 %v494
    %v698 = vunpack.c.h.b16 %v494
    %v699 = vunpack.c.l.b16 %v495
    %v700 = vunpack.c.h.b16 %v495
    %v701 = vunpack.c.l.b16 %v496
    %v702 = vunpack.c.h.b16 %v496
    %v703 = vunpack.c.l.b16 %v497
    %v704 = vunpack.c.h.b16 %v497
    %v705 = vunpack.c.l.b16 %v498
    %v706 = vunpack.c.h.b16 %v498
    %v707 = vunpack.c.l.b16 %v499
    %v708 = vunpack.c.h.b16 %v499
    %v709 = vunpack.c.l.b16 %v500
    %v710 = vunpack.c.h.b16 %v500
    %v711 = vunpack.c.l.b16 %v501
    %v712 = vunpack.c.h.b16 %v501
    %v713 = vunpack.c.l.b16 %v502
    %v714 = vunpack.c.h.b16 %v502
    %v715 = vunpack.c.l.b16 %v503
    %v716 = vunpack.c.h.b16 %v503
    %v717 = vunpack.c.l.b16 %v504
    %v718 = vunpack.c.h.b16 %v504
    %v719 = vpack.c.b16 %v595, %v591
    %v720 = vpack.c.b16 %v596, %v592
    %v721 = vpack.c.b16 %v597, %v593
    %v722 = vpack.c.b16 %v598, %v594
    %v723 = vpack.c.b16 %v603, %v599
    %v724 = vpack.c.b16 %v604, %v600
    %v725 = vpack.c.b16 %v605, %v601
    %v726 = vpack.c.b16 %v606, %v602
    %v727 = vpack.c.b16 %v611, %v607
    %v728 = vpack.c.b16 %v612, %v608
    %v729 = vpack.c.b16 %v613, %v609
    %v730 = vpack.c.b16 %v614, %v610
    %v731 = vpack.c.b16 %v619, %v615
    %v732 = vpack.c.b16 %v620, %v616
    %v733 = vpack.c.b16 %v621, %v617
    %v734 = vpack.c.b16 %v622, %v618
    %v735 = vpack.c.b16 %v627, %v623
    %v736 = vpack.c.b16 %v628, %v624
    %v737 = vpack.c.b16 %v629, %v625
    %v738 = vpack.c.b16 %v630, %v626
    %v739 = vpack.c.b16 %v635, %v631
    %v740 = vpack.c.b16 %v636, %v632
    %v741 = vpack.c.b16 %v637, %v633
    %v742 = vpack.c.b16 %v638, %v634
    %v743 = vpack.c.b16 %v643, %v639
    %v744 = vpack.c.b16 %v644, %v640
    %v745 = vpack.c.b16 %v645, %v641
    %v746 = vpack.c.b16 %v646, %v642
    %v747 = vpack.c.b16 %v651, %v647
    %v748 = vpack.c.b16 %v652, %v648
    %v749 = vpack.c.b16 %v653, %v649
    %v750 = vpack.c.b16 %v654, %v650
    %v751 = vpack.c.b16 %v659, %v655
    %v752 = vpack.c.b16 %v660, %v656
    %v753 = vpack.c.b16 %v661, %v657
    %v754 = vpack.c.b16 %v662, %v658
    %v755 = vpack.c.b16 %v667, %v663
    %v756 = vpack.c.b16 %v668, %v664
    %v757 = vpack.c.b16 %v669, %v665
    %v758 = vpack.c.b16 %v670, %v666
    %v759 = vpack.c.b16 %v675, %v671
    %v760 = vpack.c.b16 %v676, %v672
    %v761 = vpack.c.b16 %v677, %v673
    %v762 = vpack.c.b16 %v678, %v674
    %v763 = vpack.c.b16 %v683, %v679
    %v764 = vpack.c.b16 %v684, %v680
    %v765 = vpack.c.b16 %v685, %v681
    %v766 = vpack.c.b16 %v686, %v682
    %v767 = vpack.c.b16 %v691, %v687
    %v768 = vpack.c.b16 %v692, %v688
    %v769 = vpack.c.b16 %v693, %v689
    %v770 = vpack.c.b16 %v694, %v690
    %v771 = vpack.c.b16 %v699, %v695
    %v772 = vpack.c.b16 %v700, %v696
    %v773 = vpack.c.b16 %v701, %v697
    %v774 = vpack.c.b16 %v702, %v698
    %v775 = vpack.c.b16 %v707, %v703
    %v776 = vpack.c.b16 %v708, %v704
    %v777 = vpack.c.b16 %v709, %v705
    %v778 = vpack.c.b16 %v710, %v706
    %v779 = vpack.c.b16 %v715, %v711
    %v780 = vpack.c.b16 %v716, %v712
    %v781 = vpack.c.b16 %v717, %v713
    %v782 = vpack.c.b16 %v718, %v714
    %847 = vmatprep.subr.bf16.mxu0 %v720
    %848 = vmatpush1.bf16.msra.mxu0 %v719
    %849 = vmatprep.subr.bf16.mxu0 %v724
    %850 = vmatpush1.bf16.msra.mxu0 %v723
    %851 = vmatprep.subr.bf16.mxu0 %v728
    %852 = vmatpush1.bf16.msra.mxu0 %v727
    %853 = vmatprep.subr.bf16.mxu0 %v732
    %854 = vmatpush1.bf16.msra.mxu0 %v731
    %855 = vmatprep.subr.bf16.mxu0 %v736
    %856 = vmatpush1.bf16.msra.mxu0 %v735
    %857 = vmatprep.subr.bf16.mxu0 %v740
    %858 = vmatpush1.bf16.msra.mxu0 %v739
    %859 = vmatprep.subr.bf16.mxu0 %v744
    %860 = vmatpush1.bf16.msra.mxu0 %v743
    %861 = vmatprep.subr.bf16.mxu0 %v748
    %862 = vmatpush1.bf16.msra.mxu0 %v747
    %863 = vmatprep.subr.bf16.mxu0 %v752
    %864 = vmatpush1.bf16.msra.mxu0 %v751
    %865 = vmatprep.subr.bf16.mxu0 %v756
    %866 = vmatpush1.bf16.msra.mxu0 %v755
    %867 = vmatprep.subr.bf16.mxu0 %v760
    %868 = vmatpush1.bf16.msra.mxu0 %v759
    %869 = vmatprep.subr.bf16.mxu0 %v764
    %870 = vmatpush1.bf16.msra.mxu0 %v763
    %871 = vmatprep.subr.bf16.mxu0 %v768
    %872 = vmatpush1.bf16.msra.mxu0 %v767
    %873 = vmatprep.subr.bf16.mxu0 %v772
    %874 = vmatpush1.bf16.msra.mxu0 %v771
    %875 = vmatprep.subr.bf16.mxu0 %v776
    %876 = vmatpush1.bf16.msra.mxu0 %v775
    %877 = vmatprep.subr.bf16.mxu0 %v780
    %878 = vmatpush1.bf16.msra.mxu0 %v779
    %879 = vmatprep.mubr.bf16.mxu0 %v440
    %880 = vmatmul.mubr.bf16.gmra.mrb[0].mxu0 %v439
    %v881 = vpop.f32.mrb[0].mxu0
    %v882 = vadd.f32 %v510, %v881
    %v883 = vpop.f32.mrb[0].mxu0
    %v884 = vadd.f32 %v514, %v883
    %v885 = vpop.f32.mrb[0].mxu0
    %v886 = vadd.f32 %v510, %v885
    %v887 = vpop.f32.mrb[0].mxu0
    %v888 = vadd.f32 %v514, %v887
    %889 = vdwg.mxu0
    %890 = vmatprep.subr.bf16.mxu0 %v722
    %891 = vmatpush1.bf16.msra.mxu0 %v721
    %892 = vmatprep.subr.bf16.mxu0 %v726
    %893 = vmatpush1.bf16.msra.mxu0 %v725
    %894 = vmatprep.subr.bf16.mxu0 %v730
    %895 = vmatpush1.bf16.msra.mxu0 %v729
    %896 = vmatprep.subr.bf16.mxu0 %v734
    %897 = vmatpush1.bf16.msra.mxu0 %v733
    %898 = vmatprep.subr.bf16.mxu0 %v738
    %899 = vmatpush1.bf16.msra.mxu0 %v737
    %900 = vmatprep.subr.bf16.mxu0 %v742
    %901 = vmatpush1.bf16.msra.mxu0 %v741
    %902 = vmatprep.subr.bf16.mxu0 %v746
    %903 = vmatpush1.bf16.msra.mxu0 %v745
    %904 = vmatprep.subr.bf16.mxu0 %v750
    %905 = vmatpush1.bf16.msra.mxu0 %v749
    %906 = vmatprep.subr.bf16.mxu0 %v754
    %907 = vmatpush1.bf16.msra.mxu0 %v753
    %908 = vmatprep.subr.bf16.mxu0 %v758
    %909 = vmatpush1.bf16.msra.mxu0 %v757
    %910 = vmatprep.subr.bf16.mxu0 %v762
    %911 = vmatpush1.bf16.msra.mxu0 %v761
    %912 = vmatprep.subr.bf16.mxu0 %v766
    %913 = vmatpush1.bf16.msra.mxu0 %v765
    %914 = vmatprep.subr.bf16.mxu0 %v770
    %915 = vmatpush1.bf16.msra.mxu0 %v769
    %916 = vmatprep.subr.bf16.mxu0 %v774
    %917 = vmatpush1.bf16.msra.mxu0 %v773
    %918 = vmatprep.subr.bf16.mxu0 %v778
    %919 = vmatpush1.bf16.msra.mxu0 %v777
    %920 = vmatprep.subr.bf16.mxu0 %v782
    %921 = vmatpush1.bf16.msra.mxu0 %v781
    %922 = vmatprep.mubr.bf16.mxu0 %v440
    %923 = vmatmul.mubr.bf16.gmra.mrb[0].mxu0 %v439
    %v924 = vpop.f32.mrb[0].mxu0
    %v925 = vadd.f32 %v518, %v924
    %v926 = vpop.f32.mrb[0].mxu0
    %v927 = vadd.f32 %v522, %v926
    %v928 = vpop.f32.mrb[0].mxu0
    %v929 = vadd.f32 %v518, %v928
    %v930 = vpop.f32.mrb[0].mxu0
    %v931 = vadd.f32 %v522, %v930
    %932 = vdwg.mxu0
    %v933 = vmax.f32 %v882, 0.0
    %v934 = vmax.f32 %v884, 0.0
    %v935 = vmax.f32 %v925, 0.0
    %v936 = vmax.f32 %v927, 0.0
    %v937 = vmax.f32 %v886, 0.0
    %v938 = vmax.f32 %v888, 0.0
    %v939 = vmax.f32 %v929, 0.0
    %v940 = vmax.f32 %v931, 0.0
    %v941 = vpack.c.bf16 %v937, %v933
    %v942 = vpack.c.bf16 %v938, %v934
    %v943 = vpack.c.bf16 %v939, %v935
    %v944 = vpack.c.bf16 %v940, %v936
    %v945 = vld [vmem:[#allocation11] sm:$0xf]
    %v946 = vld [vmem:[#allocation11 + $0x4] sm:$0xf]
    %v947 = vld [vmem:[#allocation11 + $0x8] sm:$0xf]
    %v948 = vld [vmem:[#allocation11 + $0xc] sm:$0xf]
    %v949 = vld [vmem:[#allocation11 + $0x10] sm:$0xf]
    %v950 = vld [vmem:[#allocation11 + $0x14] sm:$0xf]
    %v951 = vld [vmem:[#allocation11 + $0x18] sm:$0xf]
    %v952 = vld [vmem:[#allocation11 + $0x1c] sm:$0xf]
    %v953 = vld [vmem:[#allocation11 + $0x20] sm:$0xf]
    %v954 = vld [vmem:[#allocation11 + $0x24] sm:$0xf]
    %v955 = vld [vmem:[#allocation11 + $0x28] sm:$0xf]
    %v956 = vld [vmem:[#allocation11 + $0x2c] sm:$0xf]
    %v957 = vld [vmem:[#allocation11 + $0x30] sm:$0xf]
    %v958 = vld [vmem:[#allocation11 + $0x34] sm:$0xf]
    %v959 = vld [vmem:[#allocation11 + $0x38] sm:$0xf]
    %v960 = vld [vmem:[#allocation11 + $0x3c] sm:$0xf]
    %v961 = vld [vmem:[#allocation11 + $0x40] sm:$0xf]
    %v962 = vld [vmem:[#allocation11 + $0x44] sm:$0xf]
    %v963 = vld [vmem:[#allocation11 + $0x48] sm:$0xf]
    %v964 = vld [vmem:[#allocation11 + $0x4c] sm:$0xf]
    %v965 = vld [vmem:[#allocation11 + $0x50] sm:$0xf]
    %v966 = vld [vmem:[#allocation11 + $0x54] sm:$0xf]
    %v967 = vld [vmem:[#allocation11 + $0x58] sm:$0xf]
    %v968 = vld [vmem:[#allocation11 + $0x5c] sm:$0xf]
    %v969 = vld [vmem:[#allocation11 + $0x60] sm:$0xf]
    %v970 = vld [vmem:[#allocation11 + $0x64] sm:$0xf]
    %v971 = vld [vmem:[#allocation11 + $0x68] sm:$0xf]
    %v972 = vld [vmem:[#allocation11 + $0x6c] sm:$0xf]
    %v973 = vld [vmem:[#allocation11 + $0x70] sm:$0xf]
    %v974 = vld [vmem:[#allocation11 + $0x74] sm:$0xf]
    %v975 = vld [vmem:[#allocation11 + $0x78] sm:$0xf]
    %v976 = vld [vmem:[#allocation11 + $0x7c] sm:$0xf]
    %v977 = vld [vmem:[#allocation11 + $0x80] sm:$0xf]
    %v978 = vld [vmem:[#allocation11 + $0x84] sm:$0xf]
    %v979 = vld [vmem:[#allocation11 + $0x88] sm:$0xf]
    %v980 = vld [vmem:[#allocation11 + $0x8c] sm:$0xf]
    %v981 = vld [vmem:[#allocation11 + $0x90] sm:$0xf]
    %v982 = vld [vmem:[#allocation11 + $0x94] sm:$0xf]
    %v983 = vld [vmem:[#allocation11 + $0x98] sm:$0xf]
    %v984 = vld [vmem:[#allocation11 + $0x9c] sm:$0xf]
    %v985 = vld [vmem:[#allocation11 + $0xa0] sm:$0xf]
    %v986 = vld [vmem:[#allocation11 + $0xa4] sm:$0xf]
    %v987 = vld [vmem:[#allocation11 + $0xa8] sm:$0xf]
    %v988 = vld [vmem:[#allocation11 + $0xac] sm:$0xf]
    %v989 = vld [vmem:[#allocation11 + $0xb0] sm:$0xf]
    %v990 = vld [vmem:[#allocation11 + $0xb4] sm:$0xf]
    %v991 = vld [vmem:[#allocation11 + $0xb8] sm:$0xf]
    %v992 = vld [vmem:[#allocation11 + $0xbc] sm:$0xf]
    %v993 = vld [vmem:[#allocation11 + $0xc0] sm:$0xf]
    %v994 = vld [vmem:[#allocation11 + $0xc4] sm:$0xf]
    %v995 = vld [vmem:[#allocation11 + $0xc8] sm:$0xf]
    %v996 = vld [vmem:[#allocation11 + $0xcc] sm:$0xf]
    %v997 = vld [vmem:[#allocation11 + $0xd0] sm:$0xf]
    %v998 = vld [vmem:[#allocation11 + $0xd4] sm:$0xf]
    %v999 = vld [vmem:[#allocation11 + $0xd8] sm:$0xf]
    %v1000 = vld [vmem:[#allocation11 + $0xdc] sm:$0xf]
    %v1001 = vld [vmem:[#allocation11 + $0xe0] sm:$0xf]
    %v1002 = vld [vmem:[#allocation11 + $0xe4] sm:$0xf]
    %v1003 = vld [vmem:[#allocation11 + $0xe8] sm:$0xf]
    %v1004 = vld [vmem:[#allocation11 + $0xec] sm:$0xf]
    %v1005 = vld [vmem:[#allocation11 + $0xf0] sm:$0xf]
    %v1006 = vld [vmem:[#allocation11 + $0xf4] sm:$0xf]
    %v1007 = vld [vmem:[#allocation11 + $0xf8] sm:$0xf]
    %v1008 = vld [vmem:[#allocation11 + $0xfc] sm:$0xf]
    %v1009 = vld [vmem:[#allocation12] sm:$0x1]
    %v1011 = vlaneseq
    %v1012 = vshrl.u32 %v1011, 7
    %v1013 = vsub.s32 0, %v1012
    %v1014 = vrot.slane %v1009, %v1013
    %v1080 = vunpack.c.l.b16 %v945
    %v1081 = vunpack.c.l.b16 %v946
    %v1082 = vunpack.c.l.b16 %v947
    %v1083 = vunpack.c.l.b16 %v948
    %v1084 = vunpack.c.l.b16 %v949
    %v1085 = vunpack.c.l.b16 %v950
    %v1086 = vunpack.c.l.b16 %v951
    %v1087 = vunpack.c.l.b16 %v952
    %v1088 = vunpack.c.l.b16 %v953
    %v1089 = vunpack.c.l.b16 %v954
    %v1090 = vunpack.c.l.b16 %v955
    %v1091 = vunpack.c.l.b16 %v956
    %v1092 = vunpack.c.l.b16 %v957
    %v1093 = vunpack.c.l.b16 %v958
    %v1094 = vunpack.c.l.b16 %v959
    %v1095 = vunpack.c.l.b16 %v960
    %v1096 = vunpack.c.l.b16 %v961
    %v1097 = vunpack.c.l.b16 %v962
    %v1098 = vunpack.c.l.b16 %v963
    %v1099 = vunpack.c.l.b16 %v964
    %v1100 = vunpack.c.l.b16 %v965
    %v1101 = vunpack.c.l.b16 %v966
    %v1102 = vunpack.c.l.b16 %v967
    %v1103 = vunpack.c.l.b16 %v968
    %v1104 = vunpack.c.l.b16 %v969
    %v1105 = vunpack.c.l.b16 %v970
    %v1106 = vunpack.c.l.b16 %v971
    %v1107 = vunpack.c.l.b16 %v972
    %v1108 = vunpack.c.l.b16 %v973
    %v1109 = vunpack.c.l.b16 %v974
    %v1110 = vunpack.c.l.b16 %v975
    %v1111 = vunpack.c.l.b16 %v976
    %v1112 = vunpack.c.l.b16 %v977
    %v1113 = vunpack.c.l.b16 %v978
    %v1114 = vunpack.c.l.b16 %v979
    %v1115 = vunpack.c.l.b16 %v980
    %v1116 = vunpack.c.l.b16 %v981
    %v1117 = vunpack.c.l.b16 %v982
    %v1118 = vunpack.c.l.b16 %v983
    %v1119 = vunpack.c.l.b16 %v984
    %v1120 = vunpack.c.l.b16 %v985
    %v1121 = vunpack.c.l.b16 %v986
    %v1122 = vunpack.c.l.b16 %v987
    %v1123 = vunpack.c.l.b16 %v988
    %v1124 = vunpack.c.l.b16 %v989
    %v1125 = vunpack.c.l.b16 %v990
    %v1126 = vunpack.c.l.b16 %v991
    %v1127 = vunpack.c.l.b16 %v992
    %v1128 = vunpack.c.l.b16 %v993
    %v1129 = vunpack.c.l.b16 %v994
    %v1130 = vunpack.c.l.b16 %v995
    %v1131 = vunpack.c.l.b16 %v996
    %v1132 = vunpack.c.l.b16 %v997
    %v1133 = vunpack.c.l.b16 %v998
    %v1134 = vunpack.c.l.b16 %v999
    %v1135 = vunpack.c.l.b16 %v1000
    %v1136 = vunpack.c.l.b16 %v1001
    %v1137 = vunpack.c.l.b16 %v1002
    %v1138 = vunpack.c.l.b16 %v1003
    %v1139 = vunpack.c.l.b16 %v1004
    %v1140 = vunpack.c.l.b16 %v1005
    %v1141 = vunpack.c.l.b16 %v1006
    %v1142 = vunpack.c.l.b16 %v1007
    %v1143 = vunpack.c.l.b16 %v1008
    %v1144 = vpack.c.b16 %v1081, %v1080
    %v1145 = vpack.c.b16 %v1083, %v1082
    %v1146 = vpack.c.b16 %v1085, %v1084
    %v1147 = vpack.c.b16 %v1087, %v1086
    %v1148 = vpack.c.b16 %v1089, %v1088
    %v1149 = vpack.c.b16 %v1091, %v1090
    %v1150 = vpack.c.b16 %v1093, %v1092
    %v1151 = vpack.c.b16 %v1095, %v1094
    %v1152 = vpack.c.b16 %v1097, %v1096
    %v1153 = vpack.c.b16 %v1099, %v1098
    %v1154 = vpack.c.b16 %v1101, %v1100
    %v1155 = vpack.c.b16 %v1103, %v1102
    %v1156 = vpack.c.b16 %v1105, %v1104
    %v1157 = vpack.c.b16 %v1107, %v1106
    %v1158 = vpack.c.b16 %v1109, %v1108
    %v1159 = vpack.c.b16 %v1111, %v1110
    %v1160 = vpack.c.b16 %v1113, %v1112
    %v1161 = vpack.c.b16 %v1115, %v1114
    %v1162 = vpack.c.b16 %v1117, %v1116
    %v1163 = vpack.c.b16 %v1119, %v1118
    %v1164 = vpack.c.b16 %v1121, %v1120
    %v1165 = vpack.c.b16 %v1123, %v1122
    %v1166 = vpack.c.b16 %v1125, %v1124
    %v1167 = vpack.c.b16 %v1127, %v1126
    %v1168 = vpack.c.b16 %v1129, %v1128
    %v1169 = vpack.c.b16 %v1131, %v1130
    %v1170 = vpack.c.b16 %v1133, %v1132
    %v1171 = vpack.c.b16 %v1135, %v1134
    %v1172 = vpack.c.b16 %v1137, %v1136
    %v1173 = vpack.c.b16 %v1139, %v1138
    %v1174 = vpack.c.b16 %v1141, %v1140
    %v1175 = vpack.c.b16 %v1143, %v1142
    %1208 = vmatprep.subr.bf16.mxu0 0
    %1209 = vmatpush1.bf16.msra.mxu0 %v1144
    %1210 = vmatprep.subr.bf16.mxu0 0
    %1211 = vmatpush1.bf16.msra.mxu0 %v1145
    %1212 = vmatprep.subr.bf16.mxu0 0
    %1213 = vmatpush1.bf16.msra.mxu0 %v1146
    %1214 = vmatprep.subr.bf16.mxu0 0
    %1215 = vmatpush1.bf16.msra.mxu0 %v1147
    %1216 = vmatprep.subr.bf16.mxu0 0
    %1217 = vmatpush1.bf16.msra.mxu0 %v1148
    %1218 = vmatprep.subr.bf16.mxu0 0
    %1219 = vmatpush1.bf16.msra.mxu0 %v1149
    %1220 = vmatprep.subr.bf16.mxu0 0
    %1221 = vmatpush1.bf16.msra.mxu0 %v1150
    %1222 = vmatprep.subr.bf16.mxu0 0
    %1223 = vmatpush1.bf16.msra.mxu0 %v1151
    %1224 = vmatprep.subr.bf16.mxu0 0
    %1225 = vmatpush1.bf16.msra.mxu0 %v1152
    %1226 = vmatprep.subr.bf16.mxu0 0
    %1227 = vmatpush1.bf16.msra.mxu0 %v1153
    %1228 = vmatprep.subr.bf16.mxu0 0
    %1229 = vmatpush1.bf16.msra.mxu0 %v1154
    %1230 = vmatprep.subr.bf16.mxu0 0
    %1231 = vmatpush1.bf16.msra.mxu0 %v1155
    %1232 = vmatprep.subr.bf16.mxu0 0
    %1233 = vmatpush1.bf16.msra.mxu0 %v1156
    %1234 = vmatprep.subr.bf16.mxu0 0
    %1235 = vmatpush1.bf16.msra.mxu0 %v1157
    %1236 = vmatprep.subr.bf16.mxu0 0
    %1237 = vmatpush1.bf16.msra.mxu0 %v1158
    %1238 = vmatprep.subr.bf16.mxu0 0
    %1239 = vmatpush1.bf16.msra.mxu0 %v1159
    %1240 = vmatprep.mubr.bf16.mxu0 %v942
    %1241 = vmatmul.mubr.bf16.gmra.mrb[0].mxu0 %v941
    %v1242 = vpop.f32.mrb[0].mxu0
    %v1243 = vadd.f32 %v1014, %v1242
    %v1244 = vpop.f32.mrb[0].mxu0
    %v1245 = vpop.f32.mrb[0].mxu0
    %v1246 = vadd.f32 %v1014, %v1245
    %v1247 = vpop.f32.mrb[0].mxu0
    %1248 = vdwg.mxu0
    %1249 = vmatprep.subr.bf16.mxu0 0
    %1250 = vmatpush1.bf16.msra.mxu0 %v1160
    %1251 = vmatprep.subr.bf16.mxu0 0
    %1252 = vmatpush1.bf16.msra.mxu0 %v1161
    %1253 = vmatprep.subr.bf16.mxu0 0
    %1254 = vmatpush1.bf16.msra.mxu0 %v1162
    %1255 = vmatprep.subr.bf16.mxu0 0
    %1256 = vmatpush1.bf16.msra.mxu0 %v1163
    %1257 = vmatprep.subr.bf16.mxu0 0
    %1258 = vmatpush1.bf16.msra.mxu0 %v1164
    %1259 = vmatprep.subr.bf16.mxu0 0
    %1260 = vmatpush1.bf16.msra.mxu0 %v1165
    %1261 = vmatprep.subr.bf16.mxu0 0
    %1262 = vmatpush1.bf16.msra.mxu0 %v1166
    %1263 = vmatprep.subr.bf16.mxu0 0
    %1264 = vmatpush1.bf16.msra.mxu0 %v1167
    %1265 = vmatprep.subr.bf16.mxu0 0
    %1266 = vmatpush1.bf16.msra.mxu0 %v1168
    %1267 = vmatprep.subr.bf16.mxu0 0
    %1268 = vmatpush1.bf16.msra.mxu0 %v1169
    %1269 = vmatprep.subr.bf16.mxu0 0
    %1270 = vmatpush1.bf16.msra.mxu0 %v1170
    %1271 = vmatprep.subr.bf16.mxu0 0
    %1272 = vmatpush1.bf16.msra.mxu0 %v1171
    %1273 = vmatprep.subr.bf16.mxu0 0
    %1274 = vmatpush1.bf16.msra.mxu0 %v1172
    %1275 = vmatprep.subr.bf16.mxu0 0
    %1276 = vmatpush1.bf16.msra.mxu0 %v1173
    %1277 = vmatprep.subr.bf16.mxu0 0
    %1278 = vmatpush1.bf16.msra.mxu0 %v1174
    %1279 = vmatprep.subr.bf16.mxu0 0
    %1280 = vmatpush1.bf16.msra.mxu0 %v1175
    %1281 = vmatprep.mubr.bf16.mxu0 %v944
    %1282 = vmatmul.mubr.bf16.gmra.mrb[0].mxu0 %v943
    %v1283 = vpop.f32.mrb[0].mxu0
    %v1284 = vadd.f32 %v1243, %v1283
    %v1285 = vpop.f32.mrb[0].mxu0
    %v1286 = vpop.f32.mrb[0].mxu0
    %v1287 = vadd.f32 %v1246, %v1286
    %v1288 = vpop.f32.mrb[0].mxu0
    %1289 = vdwg.mxu0
    %1290 = vst [vmem:[#allocation30] sm:$0xff] %v1284
    %1291 = vst [vmem:[#allocation30 + $0x8] sm:$0xff] %v1287
    %v1292 = vld [vmem:[%s0] sm:$0xff]
    %v1293 = vld [vmem:[%s0 + $0x8] sm:$0xff]
    %v1294 = vld [vmem:[%s0 + $0x10] sm:$0xff]
    %v1295 = vld [vmem:[%s0 + $0x18] sm:$0xff]
    %v1296 = vld [vmem:[%s0 + $0x20] sm:$0xff]
    %v1297 = vld [vmem:[%s0 + $0x28] sm:$0xff]
    %v1298 = vld [vmem:[%s0 + $0x30] sm:$0xff]
    %v1299 = vld [vmem:[%s0 + $0x38] sm:$0xff]
    %v1300 = vld [vmem:[%s0 + $0x40] sm:$0xff]
    %v1301 = vld [vmem:[%s0 + $0x48] sm:$0xff]
    %v1302 = vld [vmem:[%s0 + $0x50] sm:$0xff]
    %v1303 = vld [vmem:[%s0 + $0x58] sm:$0xff]
    %v1304 = vld [vmem:[%s0 + $0x60] sm:$0xff]
    %v1305 = vld [vmem:[%s0 + $0x68] sm:$0xff]
    %v1306 = vld [vmem:[%s0 + $0x70] sm:$0xff]
    %v1307 = vld [vmem:[%s0 + $0x78] sm:$0xff]
    %v1308 = vld [vmem:[%s0 + $0x80] sm:$0xff]
    %v1309 = vld [vmem:[%s0 + $0x88] sm:$0xff]
    %v1310 = vld [vmem:[%s0 + $0x90] sm:$0xff]
    %v1311 = vld [vmem:[%s0 + $0x98] sm:$0xff]
    %v1312 = vld [vmem:[%s0 + $0xa0] sm:$0xff]
    %v1313 = vld [vmem:[%s0 + $0xa8] sm:$0xff]
    %v1314 = vld [vmem:[%s0 + $0xb0] sm:$0xff]
    %v1315 = vld [vmem:[%s0 + $0xb8] sm:$0xff]
    %v1316 = vld [vmem:[%s0 + $0xc0] sm:$0xff]
    %v1317 = vld [vmem:[%s0 + $0xc8] sm:$0xff]
    %v1318 = vld [vmem:[%s0 + $0xd0] sm:$0xff]
    %v1319 = vld [vmem:[%s0 + $0xd8] sm:$0xff]
    %v1320 = vld [vmem:[%s0 + $0xe0] sm:$0xff]
    %v1321 = vld [vmem:[%s0 + $0xe8] sm:$0xff]
    %v1322 = vld [vmem:[%s0 + $0xf0] sm:$0xff]
    %v1323 = vld [vmem:[%s0 + $0xf8] sm:$0xff]
    %v1324 = vld [vmem:[#allocation14] sm:$0xf]
    %v1325 = vld [vmem:[#allocation14 + $0x4] sm:$0xf]
    %v1326 = vld [vmem:[#allocation14 + $0x8] sm:$0xf]
    %v1327 = vld [vmem:[#allocation14 + $0xc] sm:$0xf]
    %v1328 = vld [vmem:[#allocation14 + $0x10] sm:$0xf]
    %v1329 = vld [vmem:[#allocation14 + $0x14] sm:$0xf]
    %v1330 = vld [vmem:[#allocation14 + $0x18] sm:$0xf]
    %v1331 = vld [vmem:[#allocation14 + $0x1c] sm:$0xf]
    %v1332 = vld [vmem:[#allocation14 + $0x20] sm:$0xf]
    %v1333 = vld [vmem:[#allocation14 + $0x24] sm:$0xf]
    %v1334 = vld [vmem:[#allocation14 + $0x28] sm:$0xf]
    %v1335 = vld [vmem:[#allocation14 + $0x2c] sm:$0xf]
    %v1336 = vld [vmem:[#allocation14 + $0x30] sm:$0xf]
    %v1337 = vld [vmem:[#allocation14 + $0x34] sm:$0xf]
    %v1338 = vld [vmem:[#allocation14 + $0x38] sm:$0xf]
    %v1339 = vld [vmem:[#allocation14 + $0x3c] sm:$0xf]
    %v1340 = vld [vmem:[#allocation14 + $0x40] sm:$0xf]
    %v1341 = vld [vmem:[#allocation14 + $0x44] sm:$0xf]
    %v1342 = vld [vmem:[#allocation14 + $0x48] sm:$0xf]
    %v1343 = vld [vmem:[#allocation14 + $0x4c] sm:$0xf]
    %v1344 = vld [vmem:[#allocation14 + $0x50] sm:$0xf]
    %v1345 = vld [vmem:[#allocation14 + $0x54] sm:$0xf]
    %v1346 = vld [vmem:[#allocation14 + $0x58] sm:$0xf]
    %v1347 = vld [vmem:[#allocation14 + $0x5c] sm:$0xf]
    %v1348 = vld [vmem:[#allocation15] sm:$0x1]
    %v1350 = vlaneseq
    %v1351 = vshrl.u32 %v1350, 7
    %v1352 = vsub.s32 0, %v1351
    %v1353 = vrot.slane %v1348, %v1352
    %v1387 = vunpack.c.l.b16 %v1292
    %v1388 = vunpack.c.h.b16 %v1292
    %v1389 = vunpack.c.l.b16 %v1293
    %v1390 = vunpack.c.h.b16 %v1293
    %v1391 = vunpack.c.l.b16 %v1294
    %v1392 = vunpack.c.h.b16 %v1294
    %v1393 = vunpack.c.l.b16 %v1295
    %v1394 = vunpack.c.h.b16 %v1295
    %v1395 = vunpack.c.l.b16 %v1296
    %v1396 = vunpack.c.h.b16 %v1296
    %v1397 = vunpack.c.l.b16 %v1297
    %v1398 = vunpack.c.h.b16 %v1297
    %v1399 = vunpack.c.l.b16 %v1298
    %v1400 = vunpack.c.h.b16 %v1298
    %v1401 = vunpack.c.l.b16 %v1299
    %v1402 = vunpack.c.h.b16 %v1299
    %v1403 = vunpack.c.l.b16 %v1300
    %v1404 = vunpack.c.h.b16 %v1300
    %v1405 = vunpack.c.l.b16 %v1301
    %v1406 = vunpack.c.h.b16 %v1301
    %v1407 = vunpack.c.l.b16 %v1302
    %v1408 = vunpack.c.h.b16 %v1302
    %v1409 = vunpack.c.l.b16 %v1303
    %v1410 = vunpack.c.h.b16 %v1303
    %v1411 = vunpack.c.l.b16 %v1304
    %v1412 = vunpack.c.h.b16 %v1304
    %v1413 = vunpack.c.l.b16 %v1305
    %v1414 = vunpack.c.h.b16 %v1305
    %v1415 = vunpack.c.l.b16 %v1306
    %v1416 = vunpack.c.h.b16 %v1306
    %v1417 = vunpack.c.l.b16 %v1307
    %v1418 = vunpack.c.h.b16 %v1307
    %v1419 = vunpack.c.l.b16 %v1308
    %v1420 = vunpack.c.h.b16 %v1308
    %v1421 = vunpack.c.l.b16 %v1309
    %v1422 = vunpack.c.h.b16 %v1309
    %v1423 = vunpack.c.l.b16 %v1310
    %v1424 = vunpack.c.h.b16 %v1310
    %v1425 = vunpack.c.l.b16 %v1311
    %v1426 = vunpack.c.h.b16 %v1311
    %v1427 = vunpack.c.l.b16 %v1312
    %v1428 = vunpack.c.h.b16 %v1312
    %v1429 = vunpack.c.l.b16 %v1313
    %v1430 = vunpack.c.h.b16 %v1313
    %v1431 = vunpack.c.l.b16 %v1314
    %v1432 = vunpack.c.h.b16 %v1314
    %v1433 = vunpack.c.l.b16 %v1315
    %v1434 = vunpack.c.h.b16 %v1315
    %v1435 = vunpack.c.l.b16 %v1316
    %v1436 = vunpack.c.h.b16 %v1316
    %v1437 = vunpack.c.l.b16 %v1317
    %v1438 = vunpack.c.h.b16 %v1317
    %v1439 = vunpack.c.l.b16 %v1318
    %v1440 = vunpack.c.h.b16 %v1318
    %v1441 = vunpack.c.l.b16 %v1319
    %v1442 = vunpack.c.h.b16 %v1319
    %v1443 = vunpack.c.l.b16 %v1320
    %v1444 = vunpack.c.h.b16 %v1320
    %v1445 = vunpack.c.l.b16 %v1321
    %v1446 = vunpack.c.h.b16 %v1321
    %v1447 = vunpack.c.l.b16 %v1322
    %v1448 = vunpack.c.h.b16 %v1322
    %v1449 = vunpack.c.l.b16 %v1323
    %v1450 = vunpack.c.h.b16 %v1323
    %v1451 = vpack.c.b16 %v1389, %v1387
    %v1452 = vpack.c.b16 %v1390, %v1388
    %v1453 = vpack.c.b16 %v1393, %v1391
    %v1454 = vpack.c.b16 %v1394, %v1392
    %v1455 = vpack.c.b16 %v1397, %v1395
    %v1456 = vpack.c.b16 %v1398, %v1396
    %v1457 = vpack.c.b16 %v1401, %v1399
    %v1458 = vpack.c.b16 %v1402, %v1400
    %v1459 = vpack.c.b16 %v1405, %v1403
    %v1460 = vpack.c.b16 %v1406, %v1404
    %v1461 = vpack.c.b16 %v1409, %v1407
    %v1462 = vpack.c.b16 %v1410, %v1408
    %v1463 = vpack.c.b16 %v1413, %v1411
    %v1464 = vpack.c.b16 %v1414, %v1412
    %v1465 = vpack.c.b16 %v1417, %v1415
    %v1466 = vpack.c.b16 %v1418, %v1416
    %v1467 = vpack.c.b16 %v1421, %v1419
    %v1468 = vpack.c.b16 %v1422, %v1420
    %v1469 = vpack.c.b16 %v1425, %v1423
    %v1470 = vpack.c.b16 %v1426, %v1424
    %v1471 = vpack.c.b16 %v1429, %v1427
    %v1472 = vpack.c.b16 %v1430, %v1428
    %v1473 = vpack.c.b16 %v1433, %v1431
    %v1474 = vpack.c.b16 %v1434, %v1432
    %v1475 = vpack.c.b16 %v1437, %v1435
    %v1476 = vpack.c.b16 %v1438, %v1436
    %v1477 = vpack.c.b16 %v1441, %v1439
    %v1478 = vpack.c.b16 %v1442, %v1440
    %v1479 = vpack.c.b16 %v1445, %v1443
    %v1480 = vpack.c.b16 %v1446, %v1444
    %v1481 = vpack.c.b16 %v1449, %v1447
    %v1482 = vpack.c.b16 %v1450, %v1448
    %v1523 = vunpack.c.l.b16 %v1324
    %v1524 = vunpack.c.l.b16 %v1325
    %v1525 = vunpack.c.l.b16 %v1326
    %v1526 = vunpack.c.l.b16 %v1327
    %v1527 = vunpack.c.l.b16 %v1328
    %v1528 = vunpack.c.l.b16 %v1329
    %v1529 = vunpack.c.l.b16 %v1330
    %v1530 = vunpack.c.l.b16 %v1331
    %v1531 = vunpack.c.l.b16 %v1332
    %v1532 = vunpack.c.l.b16 %v1333
    %v1533 = vunpack.c.l.b16 %v1334
    %v1534 = vunpack.c.l.b16 %v1335
    %v1535 = vunpack.c.l.b16 %v1336
    %v1536 = vunpack.c.l.b16 %v1337
    %v1537 = vunpack.c.l.b16 %v1338
    %v1538 = vunpack.c.l.b16 %v1339
    %v1539 = vunpack.c.l.b16 %v1340
    %v1540 = vunpack.c.l.b16 %v1341
    %v1541 = vunpack.c.l.b16 %v1342
    %v1542 = vunpack.c.l.b16 %v1343
    %v1543 = vunpack.c.l.b16 %v1344
    %v1544 = vunpack.c.l.b16 %v1345
    %v1545 = vunpack.c.l.b16 %v1346
    %v1546 = vunpack.c.l.b16 %v1347
    %v1547 = vpack.c.b16 %v1524, %v1523
    %v1548 = vpack.c.b16 %v1526, %v1525
    %v1549 = vpack.c.b16 %v1528, %v1527
    %v1550 = vpack.c.b16 %v1530, %v1529
    %v1551 = vpack.c.b16 %v1532, %v1531
    %v1552 = vpack.c.b16 %v1534, %v1533
    %v1553 = vpack.c.b16 %v1536, %v1535
    %v1554 = vpack.c.b16 %v1538, %v1537
    %v1555 = vpack.c.b16 %v1540, %v1539
    %v1556 = vpack.c.b16 %v1542, %v1541
    %v1557 = vpack.c.b16 %v1544, %v1543
    %v1558 = vpack.c.b16 %v1546, %v1545
    %vm1571 = vcmask 523264
    %v1573 = vsel %vm1571, %v1452, 0
    %v1576 = vsel %vm1571, %v1454, 0
    %v1579 = vsel %vm1571, %v1456, 0
    %v1582 = vsel %vm1571, %v1458, 0
    %v1585 = vsel %vm1571, %v1460, 0
    %v1588 = vsel %vm1571, %v1462, 0
    %v1591 = vsel %vm1571, %v1464, 0
    %v1594 = vsel %vm1571, %v1466, 0
    %v1597 = vsel %vm1571, %v1468, 0
    %v1600 = vsel %vm1571, %v1470, 0
    %v1603 = vsel %vm1571, %v1472, 0
    %v1606 = vsel %vm1571, %v1474, 0
    %v1609 = vsel %vm1571, %v1476, 0
    %v1612 = vsel %vm1571, %v1478, 0
    %v1615 = vsel %vm1571, %v1480, 0
    %v1618 = vsel %vm1571, %v1482, 0
    %1620 = vmatprep.subr.bf16.mxu0 0
    %1621 = vmatpush1.bf16.msra.mxu0 %v1547
    %1622 = vmatprep.subr.bf16.mxu0 0
    %1623 = vmatpush1.bf16.msra.mxu0 %v1548
    %1624 = vmatprep.subr.bf16.mxu0 0
    %1625 = vmatpush1.bf16.msra.mxu0 %v1549
    %1626 = vmatprep.subr.bf16.mxu0 0
    %1627 = vmatpush1.bf16.msra.mxu0 %v1550
    %1628 = vmatprep.subr.bf16.mxu0 0
    %1629 = vmatpush1.bf16.msra.mxu0 %v1551
    %1630 = vmatprep.subr.bf16.mxu0 0
    %1631 = vmatpush1.bf16.msra.mxu0 %v1552
    %1632 = vmatprep.subr.bf16.mxu0 0
    %1633 = vmatpush1.bf16.msra.mxu0 %v1553
    %1634 = vmatprep.subr.bf16.mxu0 0
    %1635 = vmatpush1.bf16.msra.mxu0 %v1554
    %1636 = vmatprep.subr.bf16.mxu0 0
    %1637 = vmatpush1.bf16.msra.mxu0 %v1555
    %1638 = vmatprep.subr.bf16.mxu0 0
    %1639 = vmatpush1.bf16.msra.mxu0 %v1556
    %1640 = vmatprep.subr.bf16.mxu0 0
    %1641 = vmatpush1.bf16.msra.mxu0 %v1557
    %1642 = vmatprep.subr.bf16.mxu0 0
    %1643 = vmatpush1.bf16.msra.mxu0 %v1558
    %1644 = vmatprep.subr.bf16.mxu0 0
    %1645 = vmatpush1.bf16.msra.mxu0 0
    %1646 = vmatprep.subr.bf16.mxu0 0
    %1647 = vmatpush1.bf16.msra.mxu0 0
    %1648 = vmatprep.subr.bf16.mxu0 0
    %1649 = vmatpush1.bf16.msra.mxu0 0
    %1650 = vmatprep.subr.bf16.mxu0 0
    %1651 = vmatpush1.bf16.msra.mxu0 0
    %1652 = vmatprep.mubr.bf16.mxu0 %v1573
    %1653 = vmatmul.mubr.bf16.gmra.mrb[0].mxu0 %v1451
    %v1654 = vpop.f32.mrb[0].mxu0
    %v1655 = vadd.f32 %v1353, %v1654
    %v1656 = vpop.f32.mrb[0].mxu0
    %v1657 = vpop.f32.mrb[0].mxu0
    %v1658 = vadd.f32 %v1353, %v1657
    %v1659 = vpop.f32.mrb[0].mxu0
    %1660 = vmatprep.mubr.bf16.mxu0 %v1576
    %1661 = vmatmul.mubr.bf16.gmra.mrb[0].mxu0 %v1453
    %v1662 = vpop.f32.mrb[0].mxu0
    %v1663 = vadd.f32 %v1353, %v1662
    %v1664 = vpop.f32.mrb[0].mxu0
    %v1665 = vpop.f32.mrb[0].mxu0
    %v1666 = vadd.f32 %v1353, %v1665
    %v1667 = vpop.f32.mrb[0].mxu0
    %1668 = vmatprep.mubr.bf16.mxu0 %v1579
    %1669 = vmatmul.mubr.bf16.gmra.mrb[0].mxu0 %v1455
    %v1670 = vpop.f32.mrb[0].mxu0
    %v1671 = vadd.f32 %v1353, %v1670
    %v1672 = vpop.f32.mrb[0].mxu0
    %v1673 = vpop.f32.mrb[0].mxu0
    %v1674 = vadd.f32 %v1353, %v1673
    %v1675 = vpop.f32.mrb[0].mxu0
    %1676 = vmatprep.mubr.bf16.mxu0 %v1582
    %1677 = vmatmul.mubr.bf16.gmra.mrb[0].mxu0 %v1457
    %v1678 = vpop.f32.mrb[0].mxu0
    %v1679 = vadd.f32 %v1353, %v1678
    %v1680 = vpop.f32.mrb[0].mxu0
    %v1681 = vpop.f32.mrb[0].mxu0
    %v1682 = vadd.f32 %v1353, %v1681
    %v1683 = vpop.f32.mrb[0].mxu0
    %1684 = vmatprep.mubr.bf16.mxu0 %v1585
    %1685 = vmatmul.mubr.bf16.gmra.mrb[0].mxu0 %v1459
    %v1686 = vpop.f32.mrb[0].mxu0
    %v1687 = vadd.f32 %v1353, %v1686
    %v1688 = vpop.f32.mrb[0].mxu0
    %v1689 = vpop.f32.mrb[0].mxu0
    %v1690 = vadd.f32 %v1353, %v1689
    %v1691 = vpop.f32.mrb[0].mxu0
    %1692 = vmatprep.mubr.bf16.mxu0 %v1588
    %1693 = vmatmul.mubr.bf16.gmra.mrb[0].mxu0 %v1461
    %v1694 = vpop.f32.mrb[0].mxu0
    %v1695 = vadd.f32 %v1353, %v1694
    %v1696 = vpop.f32.mrb[0].mxu0
    %v1697 = vpop.f32.mrb[0].mxu0
    %v1698 = vadd.f32 %v1353, %v1697
    %v1699 = vpop.f32.mrb[0].mxu0
    %1700 = vmatprep.mubr.bf16.mxu0 %v1591
    %1701 = vmatmul.mubr.bf16.gmra.mrb[0].mxu0 %v1463
    %v1702 = vpop.f32.mrb[0].mxu0
    %v1703 = vadd.f32 %v1353, %v1702
    %v1704 = vpop.f32.mrb[0].mxu0
    %v1705 = vpop.f32.mrb[0].mxu0
    %v1706 = vadd.f32 %v1353, %v1705
    %v1707 = vpop.f32.mrb[0].mxu0
    %1708 = vmatprep.mubr.bf16.mxu0 %v1594
    %1709 = vmatmul.mubr.bf16.gmra.mrb[0].mxu0 %v1465
    %v1710 = vpop.f32.mrb[0].mxu0
    %v1711 = vadd.f32 %v1353, %v1710
    %v1712 = vpop.f32.mrb[0].mxu0
    %v1713 = vpop.f32.mrb[0].mxu0
    %v1714 = vadd.f32 %v1353, %v1713
    %v1715 = vpop.f32.mrb[0].mxu0
    %1716 = vmatprep.mubr.bf16.mxu0 %v1597
    %1717 = vmatmul.mubr.bf16.gmra.mrb[0].mxu0 %v1467
    %v1718 = vpop.f32.mrb[0].mxu0
    %v1719 = vadd.f32 %v1353, %v1718
    %v1720 = vpop.f32.mrb[0].mxu0
    %v1721 = vpop.f32.mrb[0].mxu0
    %v1722 = vadd.f32 %v1353, %v1721
    %v1723 = vpop.f32.mrb[0].mxu0
    %1724 = vmatprep.mubr.bf16.mxu0 %v1600
    %1725 = vmatmul.mubr.bf16.gmra.mrb[0].mxu0 %v1469
    %v1726 = vpop.f32.mrb[0].mxu0
    %v1727 = vadd.f32 %v1353, %v1726
    %v1728 = vpop.f32.mrb[0].mxu0
    %v1729 = vpop.f32.mrb[0].mxu0
    %v1730 = vadd.f32 %v1353, %v1729
    %v1731 = vpop.f32.mrb[0].mxu0
    %1732 = vmatprep.mubr.bf16.mxu0 %v1603
    %1733 = vmatmul.mubr.bf16.gmra.mrb[0].mxu0 %v1471
    %v1734 = vpop.f32.mrb[0].mxu0
    %v1735 = vadd.f32 %v1353, %v1734
    %v1736 = vpop.f32.mrb[0].mxu0
    %v1737 = vpop.f32.mrb[0].mxu0
    %v1738 = vadd.f32 %v1353, %v1737
    %v1739 = vpop.f32.mrb[0].mxu0
    %1740 = vmatprep.mubr.bf16.mxu0 %v1606
    %1741 = vmatmul.mubr.bf16.gmra.mrb[0].mxu0 %v1473
    %v1742 = vpop.f32.mrb[0].mxu0
    %v1743 = vadd.f32 %v1353, %v1742
    %v1744 = vpop.f32.mrb[0].mxu0
    %v1745 = vpop.f32.mrb[0].mxu0
    %v1746 = vadd.f32 %v1353, %v1745
    %v1747 = vpop.f32.mrb[0].mxu0
    %1748 = vmatprep.mubr.bf16.mxu0 %v1609
    %1749 = vmatmul.mubr.bf16.gmra.mrb[0].mxu0 %v1475
    %v1750 = vpop.f32.mrb[0].mxu0
    %v1751 = vadd.f32 %v1353, %v1750
    %v1752 = vpop.f32.mrb[0].mxu0
    %v1753 = vpop.f32.mrb[0].mxu0
    %v1754 = vadd.f32 %v1353, %v1753
    %v1755 = vpop.f32.mrb[0].mxu0
    %1756 = vmatprep.mubr.bf16.mxu0 %v1612
    %1757 = vmatmul.mubr.bf16.gmra.mrb[0].mxu0 %v1477
    %v1758 = vpop.f32.mrb[0].mxu0
    %v1759 = vadd.f32 %v1353, %v1758
    %v1760 = vpop.f32.mrb[0].mxu0
    %v1761 = vpop.f32.mrb[0].mxu0
    %v1762 = vadd.f32 %v1353, %v1761
    %v1763 = vpop.f32.mrb[0].mxu0
    %1764 = vmatprep.mubr.bf16.mxu0 %v1615
    %1765 = vmatmul.mubr.bf16.gmra.mrb[0].mxu0 %v1479
    %v1766 = vpop.f32.mrb[0].mxu0
    %v1767 = vadd.f32 %v1353, %v1766
    %v1768 = vpop.f32.mrb[0].mxu0
    %v1769 = vpop.f32.mrb[0].mxu0
    %v1770 = vadd.f32 %v1353, %v1769
    %v1771 = vpop.f32.mrb[0].mxu0
    %1772 = vmatprep.mubr.bf16.mxu0 %v1618
    %1773 = vmatmul.mubr.bf16.gmra.mrb[0].mxu0 %v1481
    %v1774 = vpop.f32.mrb[0].mxu0
    %v1775 = vadd.f32 %v1353, %v1774
    %v1776 = vpop.f32.mrb[0].mxu0
    %v1777 = vpop.f32.mrb[0].mxu0
    %v1778 = vadd.f32 %v1353, %v1777
    %v1779 = vpop.f32.mrb[0].mxu0
    %1780 = vdwg.mxu0
    %v1781 = vmax.f32 %v1655, 0.0
    %v1782 = vmax.f32 %v1658, 0.0
    %v1783 = vmax.f32 %v1663, 0.0
    %v1784 = vmax.f32 %v1666, 0.0
    %v1785 = vmax.f32 %v1671, 0.0
    %v1786 = vmax.f32 %v1674, 0.0
    %v1787 = vmax.f32 %v1679, 0.0
    %v1788 = vmax.f32 %v1682, 0.0
    %v1789 = vmax.f32 %v1687, 0.0
    %v1790 = vmax.f32 %v1690, 0.0
    %v1791 = vmax.f32 %v1695, 0.0
    %v1792 = vmax.f32 %v1698, 0.0
    %v1793 = vmax.f32 %v1703, 0.0
    %v1794 = vmax.f32 %v1706, 0.0
    %v1795 = vmax.f32 %v1711, 0.0
    %v1796 = vmax.f32 %v1714, 0.0
    %v1797 = vmax.f32 %v1719, 0.0
    %v1798 = vmax.f32 %v1722, 0.0
    %v1799 = vmax.f32 %v1727, 0.0
    %v1800 = vmax.f32 %v1730, 0.0
    %v1801 = vmax.f32 %v1735, 0.0
    %v1802 = vmax.f32 %v1738, 0.0
    %v1803 = vmax.f32 %v1743, 0.0
    %v1804 = vmax.f32 %v1746, 0.0
    %v1805 = vmax.f32 %v1751, 0.0
    %v1806 = vmax.f32 %v1754, 0.0
    %v1807 = vmax.f32 %v1759, 0.0
    %v1808 = vmax.f32 %v1762, 0.0
    %v1809 = vmax.f32 %v1767, 0.0
    %v1810 = vmax.f32 %v1770, 0.0
    %v1811 = vmax.f32 %v1775, 0.0
    %v1812 = vmax.f32 %v1778, 0.0
    %1813 = vst [vmem:[#allocation2] sm:$0xff] 0
    %1814 = vst [vmem:[#allocation2 + $0x48] sm:$0xff] 0
    %v1815 = vmax.f32 %v1781, %v1783
    %v1816 = vmax.f32 %v1782, %v1784
    %v1817 = vpack.c.bf16 %v1816, %v1815
    %1818 = vst [vmem:[#allocation2 + $0x8] sm:$0xff] %v1817
    %v1819 = vmax.f32 %v1785, %v1787
    %v1820 = vmax.f32 %v1786, %v1788
    %v1821 = vpack.c.bf16 %v1820, %v1819
    %1822 = vst [vmem:[#allocation2 + $0x10] sm:$0xff] %v1821
    %v1823 = vmax.f32 %v1789, %v1791
    %v1824 = vmax.f32 %v1790, %v1792
    %v1825 = vpack.c.bf16 %v1824, %v1823
    %1826 = vst [vmem:[#allocation2 + $0x18] sm:$0xff] %v1825
    %v1827 = vmax.f32 %v1793, %v1795
    %v1828 = vmax.f32 %v1794, %v1796
    %v1829 = vpack.c.bf16 %v1828, %v1827
    %1830 = vst [vmem:[#allocation2 + $0x20] sm:$0xff] %v1829
    %v1831 = vmax.f32 %v1797, %v1799
    %v1832 = vmax.f32 %v1798, %v1800
    %v1833 = vpack.c.bf16 %v1832, %v1831
    %1834 = vst [vmem:[#allocation2 + $0x28] sm:$0xff] %v1833
    %v1835 = vmax.f32 %v1801, %v1803
    %v1836 = vmax.f32 %v1802, %v1804
    %v1837 = vpack.c.bf16 %v1836, %v1835
    %1838 = vst [vmem:[#allocation2 + $0x30] sm:$0xff] %v1837
    %v1839 = vmax.f32 %v1805, %v1807
    %v1840 = vmax.f32 %v1806, %v1808
    %v1841 = vpack.c.bf16 %v1840, %v1839
    %1842 = vst [vmem:[#allocation2 + $0x38] sm:$0xff] %v1841
    %v1843 = vmax.f32 %v1809, %v1811
    %v1844 = vmax.f32 %v1810, %v1812
    %v1845 = vpack.c.bf16 %v1844, %v1843
    %1846 = vst [vmem:[#allocation2 + $0x40] sm:$0xff] %v1845
    %v1847 = vld [vmem:[#allocation2] sm:$0xff]
    %v1848 = vld [vmem:[#allocation2 + $0x8] sm:$0xff]
    %v1849 = vld [vmem:[#allocation2 + $0x10] sm:$0xff]
    %v1850 = vld [vmem:[#allocation2 + $0x18] sm:$0xff]
    %v1851 = vld [vmem:[#allocation2 + $0x20] sm:$0xff]
    %v1852 = vld [vmem:[#allocation2 + $0x28] sm:$0xff]
    %v1853 = vld [vmem:[#allocation2 + $0x30] sm:$0xff]
    %v1854 = vld [vmem:[#allocation2 + $0x38] sm:$0xff]
    %v1855 = vld [vmem:[%s10] sm:$0xff]
    %v1856 = vld [vmem:[%s10 + $0x8] sm:$0xff]
    %v1857 = vld [vmem:[%s10 + $0x10] sm:$0xff]
    %v1858 = vld [vmem:[%s10 + $0x18] sm:$0xff]
    %v1859 = vld [vmem:[%s10 + $0x20] sm:$0xff]
    %v1860 = vld [vmem:[%s10 + $0x28] sm:$0xff]
    %v1861 = vld [vmem:[%s10 + $0x30] sm:$0xff]
    %v1862 = vld [vmem:[%s10 + $0x38] sm:$0xff]
    %v1863 = vld [vmem:[%s10 + $0x40] sm:$0xff]
    %v1864 = vld [vmem:[%s10 + $0x48] sm:$0xff]
    %v1865 = vld [vmem:[%s10 + $0x50] sm:$0xff]
    %v1866 = vld [vmem:[%s10 + $0x58] sm:$0xff]
    %v1867 = vld [vmem:[%s10 + $0x60] sm:$0xff]
    %v1868 = vld [vmem:[%s10 + $0x68] sm:$0xff]
    %v1869 = vld [vmem:[%s10 + $0x70] sm:$0xff]
    %v1870 = vld [vmem:[%s10 + $0x78] sm:$0xff]
    %v1871 = vld [vmem:[#allocation2 + $0x40] sm:$0xff]
    %s1872 = scalar_lea.vmem %s10, 128
    %v1873 = vld [vmem:[%s1872] sm:$0xff]
    %v1874 = vld [vmem:[%s1872 + $0x8] sm:$0xff]
    %v1875 = vld [vmem:[%s1872 + $0x10] sm:$0xff]
    %v1876 = vld [vmem:[%s1872 + $0x18] sm:$0xff]
    %v1877 = vld [vmem:[%s1872 + $0x20] sm:$0xff]
    %v1878 = vld [vmem:[%s1872 + $0x28] sm:$0xff]
    %v1879 = vld [vmem:[%s1872 + $0x30] sm:$0xff]
    %v1880 = vld [vmem:[%s1872 + $0x38] sm:$0xff]
    %v1881 = vld [vmem:[%s1872 + $0x40] sm:$0xff]
    %v1882 = vld [vmem:[%s1872 + $0x48] sm:$0xff]
    %v1883 = vld [vmem:[%s1872 + $0x50] sm:$0xff]
    %v1884 = vld [vmem:[%s1872 + $0x58] sm:$0xff]
    %v1885 = vld [vmem:[%s1872 + $0x60] sm:$0xff]
    %v1886 = vld [vmem:[%s1872 + $0x68] sm:$0xff]
    %v1887 = vld [vmem:[%s1872 + $0x70] sm:$0xff]
    %v1888 = vld [vmem:[%s1872 + $0x78] sm:$0xff]
    %v1905 = vunpack.c.l.b16 %v1873
    %v1906 = vunpack.c.h.b16 %v1873
    %v1907 = vunpack.c.l.b16 %v1874
    %v1908 = vunpack.c.h.b16 %v1874
    %v1909 = vunpack.c.l.b16 %v1875
    %v1910 = vunpack.c.h.b16 %v1875
    %v1911 = vunpack.c.l.b16 %v1876
    %v1912 = vunpack.c.h.b16 %v1876
    %v1913 = vunpack.c.l.b16 %v1877
    %v1914 = vunpack.c.h.b16 %v1877
    %v1915 = vunpack.c.l.b16 %v1878
    %v1916 = vunpack.c.h.b16 %v1878
    %v1917 = vunpack.c.l.b16 %v1879
    %v1918 = vunpack.c.h.b16 %v1879
    %v1919 = vunpack.c.l.b16 %v1880
    %v1920 = vunpack.c.h.b16 %v1880
    %v1921 = vunpack.c.l.b16 %v1881
    %v1922 = vunpack.c.h.b16 %v1881
    %v1923 = vunpack.c.l.b16 %v1882
    %v1924 = vunpack.c.h.b16 %v1882
    %v1925 = vunpack.c.l.b16 %v1883
    %v1926 = vunpack.c.h.b16 %v1883
    %v1927 = vunpack.c.l.b16 %v1884
    %v1928 = vunpack.c.h.b16 %v1884
    %v1929 = vunpack.c.l.b16 %v1885
    %v1930 = vunpack.c.h.b16 %v1885
    %v1931 = vunpack.c.l.b16 %v1886
    %v1932 = vunpack.c.h.b16 %v1886
    %v1933 = vunpack.c.l.b16 %v1887
    %v1934 = vunpack.c.h.b16 %v1887
    %v1935 = vunpack.c.l.b16 %v1888
    %v1936 = vunpack.c.h.b16 %v1888
    %v1937 = vpack.c.b16 %v1907, %v1905
    %v1938 = vpack.c.b16 %v1908, %v1906
    %v1939 = vpack.c.b16 %v1911, %v1909
    %v1940 = vpack.c.b16 %v1912, %v1910
    %v1941 = vpack.c.b16 %v1915, %v1913
    %v1942 = vpack.c.b16 %v1916, %v1914
    %v1943 = vpack.c.b16 %v1919, %v1917
    %v1944 = vpack.c.b16 %v1920, %v1918
    %v1945 = vpack.c.b16 %v1923, %v1921
    %v1946 = vpack.c.b16 %v1924, %v1922
    %v1947 = vpack.c.b16 %v1927, %v1925
    %v1948 = vpack.c.b16 %v1928, %v1926
    %v1949 = vpack.c.b16 %v1931, %v1929
    %v1950 = vpack.c.b16 %v1932, %v1930
    %v1951 = vpack.c.b16 %v1935, %v1933
    %v1952 = vpack.c.b16 %v1936, %v1934
    %1969 = vmatprep.subr.bf16.mxu0 %v1938
    %1970 = vmatpush1.bf16.msra.mxu0 %v1937
    %1971 = vmatprep.subr.bf16.mxu0 %v1940
    %1972 = vmatpush1.bf16.msra.mxu0 %v1939
    %1973 = vmatprep.subr.bf16.mxu0 %v1942
    %1974 = vmatpush1.bf16.msra.mxu0 %v1941
    %1975 = vmatprep.subr.bf16.mxu0 %v1944
    %1976 = vmatpush1.bf16.msra.mxu0 %v1943
    %1977 = vmatprep.subr.bf16.mxu0 %v1946
    %1978 = vmatpush1.bf16.msra.mxu0 %v1945
    %1979 = vmatprep.subr.bf16.mxu0 %v1948
    %1980 = vmatpush1.bf16.msra.mxu0 %v1947
    %1981 = vmatprep.subr.bf16.mxu0 %v1950
    %1982 = vmatpush1.bf16.msra.mxu0 %v1949
    %1983 = vmatprep.subr.bf16.mxu0 %v1952
    %1984 = vmatpush1.bf16.msra.mxu0 %v1951
    %1985 = vmatprep.subr.bf16.mxu0 0
    %1986 = vmatpush1.bf16.msra.mxu0 0
    %1987 = vmatprep.subr.bf16.mxu0 0
    %1988 = vmatpush1.bf16.msra.mxu0 0
    %1989 = vmatprep.subr.bf16.mxu0 0
    %1990 = vmatpush1.bf16.msra.mxu0 0
    %1991 = vmatprep.subr.bf16.mxu0 0
    %1992 = vmatpush1.bf16.msra.mxu0 0
    %1993 = vmatprep.subr.bf16.mxu0 0
    %1994 = vmatpush1.bf16.msra.mxu0 0
    %1995 = vmatprep.subr.bf16.mxu0 0
    %1996 = vmatpush1.bf16.msra.mxu0 0
    %1997 = vmatprep.subr.bf16.mxu0 0
    %1998 = vmatpush1.bf16.msra.mxu0 0
    %1999 = vmatprep.subr.bf16.mxu0 0
    %2000 = vmatpush1.bf16.msra.mxu0 0
    %2001 = vmatprep.mubr.bf16.mxu0 0
    %2002 = vmatmul.mubr.bf16.gmra.mrb[0].mxu0 %v1848
    %v2003 = vpop.f32.mrb[0].mxu0
    %v2004 = vadd.f32 0.0, %v2003
    %v2005 = vpop.f32.mrb[0].mxu0
    %v2006 = vadd.f32 0.0, %v2005
    %v2007 = vpop.f32.mrb[0].mxu0
    %v2008 = vadd.f32 0.0, %v2007
    %v2009 = vpop.f32.mrb[0].mxu0
    %v2010 = vadd.f32 0.0, %v2009
    %2011 = vmatprep.mubr.bf16.mxu0 0
    %2012 = vmatmul.mubr.bf16.gmra.mrb[0].mxu0 %v1849
    %v2013 = vpop.f32.mrb[0].mxu0
    %v2014 = vadd.f32 0.0, %v2013
    %v2015 = vpop.f32.mrb[0].mxu0
    %v2016 = vadd.f32 0.0, %v2015
    %v2017 = vpop.f32.mrb[0].mxu0
    %v2018 = vadd.f32 0.0, %v2017
    %v2019 = vpop.f32.mrb[0].mxu0
    %v2020 = vadd.f32 0.0, %v2019
    %2021 = vmatprep.mubr.bf16.mxu0 0
    %2022 = vmatmul.mubr.bf16.gmra.mrb[0].mxu0 %v1850
    %v2023 = vpop.f32.mrb[0].mxu0
    %v2024 = vadd.f32 0.0, %v2023
    %v2025 = vpop.f32.mrb[0].mxu0
    %v2026 = vadd.f32 0.0, %v2025
    %v2027 = vpop.f32.mrb[0].mxu0
    %v2028 = vadd.f32 0.0, %v2027
    %v2029 = vpop.f32.mrb[0].mxu0
    %v2030 = vadd.f32 0.0, %v2029
    %2031 = vmatprep.mubr.bf16.mxu0 0
    %2032 = vmatmul.mubr.bf16.gmra.mrb[0].mxu0 %v1851
    %v2033 = vpop.f32.mrb[0].mxu0
    %v2034 = vadd.f32 0.0, %v2033
    %v2035 = vpop.f32.mrb[0].mxu0
    %v2036 = vadd.f32 0.0, %v2035
    %v2037 = vpop.f32.mrb[0].mxu0
    %v2038 = vadd.f32 0.0, %v2037
    %v2039 = vpop.f32.mrb[0].mxu0
    %v2040 = vadd.f32 0.0, %v2039
    %2041 = vmatprep.mubr.bf16.mxu0 0
    %2042 = vmatmul.mubr.bf16.gmra.mrb[0].mxu0 %v1852
    %v2043 = vpop.f32.mrb[0].mxu0
    %v2044 = vadd.f32 0.0, %v2043
    %v2045 = vpop.f32.mrb[0].mxu0
    %v2046 = vadd.f32 0.0, %v2045
    %v2047 = vpop.f32.mrb[0].mxu0
    %v2048 = vadd.f32 0.0, %v2047
    %v2049 = vpop.f32.mrb[0].mxu0
    %v2050 = vadd.f32 0.0, %v2049
    %2051 = vmatprep.mubr.bf16.mxu0 0
    %2052 = vmatmul.mubr.bf16.gmra.mrb[0].mxu0 %v1853
    %v2053 = vpop.f32.mrb[0].mxu0
    %v2054 = vadd.f32 0.0, %v2053
    %v2055 = vpop.f32.mrb[0].mxu0
    %v2056 = vadd.f32 0.0, %v2055
    %v2057 = vpop.f32.mrb[0].mxu0
    %v2058 = vadd.f32 0.0, %v2057
    %v2059 = vpop.f32.mrb[0].mxu0
    %v2060 = vadd.f32 0.0, %v2059
    %2061 = vmatprep.mubr.bf16.mxu0 0
    %2062 = vmatmul.mubr.bf16.gmra.mrb[0].mxu0 %v1854
    %v2063 = vpop.f32.mrb[0].mxu0
    %v2064 = vadd.f32 0.0, %v2063
    %v2065 = vpop.f32.mrb[0].mxu0
    %v2066 = vadd.f32 0.0, %v2065
    %v2067 = vpop.f32.mrb[0].mxu0
    %v2068 = vadd.f32 0.0, %v2067
    %v2069 = vpop.f32.mrb[0].mxu0
    %v2070 = vadd.f32 0.0, %v2069
    %2071 = vmatprep.mubr.bf16.mxu0 0
    %2072 = vmatmul.mubr.bf16.gmra.mrb[0].mxu0 %v1871
    %v2073 = vpop.f32.mrb[0].mxu0
    %v2074 = vadd.f32 0.0, %v2073
    %v2075 = vpop.f32.mrb[0].mxu0
    %v2076 = vadd.f32 0.0, %v2075
    %v2077 = vpop.f32.mrb[0].mxu0
    %v2078 = vadd.f32 0.0, %v2077
    %v2079 = vpop.f32.mrb[0].mxu0
    %v2080 = vadd.f32 0.0, %v2079
    %2081 = vdwg.mxu0
    %v2098 = vunpack.c.l.b16 %v1855
    %v2099 = vunpack.c.h.b16 %v1855
    %v2100 = vunpack.c.l.b16 %v1856
    %v2101 = vunpack.c.h.b16 %v1856
    %v2102 = vunpack.c.l.b16 %v1857
    %v2103 = vunpack.c.h.b16 %v1857
    %v2104 = vunpack.c.l.b16 %v1858
    %v2105 = vunpack.c.h.b16 %v1858
    %v2106 = vunpack.c.l.b16 %v1859
    %v2107 = vunpack.c.h.b16 %v1859
    %v2108 = vunpack.c.l.b16 %v1860
    %v2109 = vunpack.c.h.b16 %v1860
    %v2110 = vunpack.c.l.b16 %v1861
    %v2111 = vunpack.c.h.b16 %v1861
    %v2112 = vunpack.c.l.b16 %v1862
    %v2113 = vunpack.c.h.b16 %v1862
    %v2114 = vunpack.c.l.b16 %v1863
    %v2115 = vunpack.c.h.b16 %v1863
    %v2116 = vunpack.c.l.b16 %v1864
    %v2117 = vunpack.c.h.b16 %v1864
    %v2118 = vunpack.c.l.b16 %v1865
    %v2119 = vunpack.c.h.b16 %v1865
    %v2120 = vunpack.c.l.b16 %v1866
    %v2121 = vunpack.c.h.b16 %v1866
    %v2122 = vunpack.c.l.b16 %v1867
    %v2123 = vunpack.c.h.b16 %v1867
    %v2124 = vunpack.c.l.b16 %v1868
    %v2125 = vunpack.c.h.b16 %v1868
    %v2126 = vunpack.c.l.b16 %v1869
    %v2127 = vunpack.c.h.b16 %v1869
    %v2128 = vunpack.c.l.b16 %v1870
    %v2129 = vunpack.c.h.b16 %v1870
    %v2130 = vpack.c.b16 %v2100, %v2098
    %v2131 = vpack.c.b16 %v2101, %v2099
    %v2132 = vpack.c.b16 %v2104, %v2102
    %v2133 = vpack.c.b16 %v2105, %v2103
    %v2134 = vpack.c.b16 %v2108, %v2106
    %v2135 = vpack.c.b16 %v2109, %v2107
    %v2136 = vpack.c.b16 %v2112, %v2110
    %v2137 = vpack.c.b16 %v2113, %v2111
    %v2138 = vpack.c.b16 %v2116, %v2114
    %v2139 = vpack.c.b16 %v2117, %v2115
    %v2140 = vpack.c.b16 %v2120, %v2118
    %v2141 = vpack.c.b16 %v2121, %v2119
    %v2142 = vpack.c.b16 %v2124, %v2122
    %v2143 = vpack.c.b16 %v2125, %v2123
    %v2144 = vpack.c.b16 %v2128, %v2126
    %v2145 = vpack.c.b16 %v2129, %v2127
    %2162 = vmatprep.subr.bf16.mxu0 %v2131
    %2163 = vmatpush1.bf16.msra.mxu0 %v2130
    %2164 = vmatprep.subr.bf16.mxu0 %v2133
    %2165 = vmatpush1.bf16.msra.mxu0 %v2132
    %2166 = vmatprep.subr.bf16.mxu0 %v2135
    %2167 = vmatpush1.bf16.msra.mxu0 %v2134
    %2168 = vmatprep.subr.bf16.mxu0 %v2137
    %2169 = vmatpush1.bf16.msra.mxu0 %v2136
    %2170 = vmatprep.subr.bf16.mxu0 %v2139
    %2171 = vmatpush1.bf16.msra.mxu0 %v2138
    %2172 = vmatprep.subr.bf16.mxu0 %v2141
    %2173 = vmatpush1.bf16.msra.mxu0 %v2140
    %2174 = vmatprep.subr.bf16.mxu0 %v2143
    %2175 = vmatpush1.bf16.msra.mxu0 %v2142
    %2176 = vmatprep.subr.bf16.mxu0 %v2145
    %2177 = vmatpush1.bf16.msra.mxu0 %v2144
    %2178 = vmatprep.subr.bf16.mxu0 0
    %2179 = vmatpush1.bf16.msra.mxu0 0
    %2180 = vmatprep.subr.bf16.mxu0 0
    %2181 = vmatpush1.bf16.msra.mxu0 0
    %2182 = vmatprep.subr.bf16.mxu0 0
    %2183 = vmatpush1.bf16.msra.mxu0 0
    %2184 = vmatprep.subr.bf16.mxu0 0
    %2185 = vmatpush1.bf16.msra.mxu0 0
    %2186 = vmatprep.subr.bf16.mxu0 0
    %2187 = vmatpush1.bf16.msra.mxu0 0
    %2188 = vmatprep.subr.bf16.mxu0 0
    %2189 = vmatpush1.bf16.msra.mxu0 0
    %2190 = vmatprep.subr.bf16.mxu0 0
    %2191 = vmatpush1.bf16.msra.mxu0 0
    %2192 = vmatprep.subr.bf16.mxu0 0
    %2193 = vmatpush1.bf16.msra.mxu0 0
    %2194 = vmatprep.mubr.bf16.mxu0 0
    %2195 = vmatmul.mubr.bf16.gmra.mrb[0].mxu0 %v1847
    %v2196 = vpop.f32.mrb[0].mxu0
    %v2197 = vadd.f32 %v2004, %v2196
    %v2198 = vpop.f32.mrb[0].mxu0
    %v2199 = vadd.f32 %v2006, %v2198
    %v2200 = vpop.f32.mrb[0].mxu0
    %v2201 = vadd.f32 %v2008, %v2200
    %v2202 = vpop.f32.mrb[0].mxu0
    %v2203 = vadd.f32 %v2010, %v2202
    %2204 = vmatprep.mubr.bf16.mxu0 0
    %2205 = vmatmul.mubr.bf16.gmra.mrb[0].mxu0 %v1848
    %v2206 = vpop.f32.mrb[0].mxu0
    %v2207 = vadd.f32 %v2014, %v2206
    %v2208 = vpop.f32.mrb[0].mxu0
    %v2209 = vadd.f32 %v2016, %v2208
    %v2210 = vpop.f32.mrb[0].mxu0
    %v2211 = vadd.f32 %v2018, %v2210
    %v2212 = vpop.f32.mrb[0].mxu0
    %v2213 = vadd.f32 %v2020, %v2212
    %2214 = vmatprep.mubr.bf16.mxu0 0
    %2215 = vmatmul.mubr.bf16.gmra.mrb[0].mxu0 %v1849
    %v2216 = vpop.f32.mrb[0].mxu0
    %v2217 = vadd.f32 %v2024, %v2216
    %v2218 = vpop.f32.mrb[0].mxu0
    %v2219 = vadd.f32 %v2026, %v2218
    %v2220 = vpop.f32.mrb[0].mxu0
    %v2221 = vadd.f32 %v2028, %v2220
    %v2222 = vpop.f32.mrb[0].mxu0
    %v2223 = vadd.f32 %v2030, %v2222
    %2224 = vmatprep.mubr.bf16.mxu0 0
    %2225 = vmatmul.mubr.bf16.gmra.mrb[0].mxu0 %v1850
    %v2226 = vpop.f32.mrb[0].mxu0
    %v2227 = vadd.f32 %v2034, %v2226
    %v2228 = vpop.f32.mrb[0].mxu0
    %v2229 = vadd.f32 %v2036, %v2228
    %v2230 = vpop.f32.mrb[0].mxu0
    %v2231 = vadd.f32 %v2038, %v2230
    %v2232 = vpop.f32.mrb[0].mxu0
    %v2233 = vadd.f32 %v2040, %v2232
    %2234 = vmatprep.mubr.bf16.mxu0 0
    %2235 = vmatmul.mubr.bf16.gmra.mrb[0].mxu0 %v1851
    %v2236 = vpop.f32.mrb[0].mxu0
    %v2237 = vadd.f32 %v2044, %v2236
    %v2238 = vpop.f32.mrb[0].mxu0
    %v2239 = vadd.f32 %v2046, %v2238
    %v2240 = vpop.f32.mrb[0].mxu0
    %v2241 = vadd.f32 %v2048, %v2240
    %v2242 = vpop.f32.mrb[0].mxu0
    %v2243 = vadd.f32 %v2050, %v2242
    %2244 = vmatprep.mubr.bf16.mxu0 0
    %2245 = vmatmul.mubr.bf16.gmra.mrb[0].mxu0 %v1852
    %v2246 = vpop.f32.mrb[0].mxu0
    %v2247 = vadd.f32 %v2054, %v2246
    %v2248 = vpop.f32.mrb[0].mxu0
    %v2249 = vadd.f32 %v2056, %v2248
    %v2250 = vpop.f32.mrb[0].mxu0
    %v2251 = vadd.f32 %v2058, %v2250
    %v2252 = vpop.f32.mrb[0].mxu0
    %v2253 = vadd.f32 %v2060, %v2252
    %2254 = vmatprep.mubr.bf16.mxu0 0
    %2255 = vmatmul.mubr.bf16.gmra.mrb[0].mxu0 %v1853
    %v2256 = vpop.f32.mrb[0].mxu0
    %v2257 = vadd.f32 %v2064, %v2256
    %v2258 = vpop.f32.mrb[0].mxu0
    %v2259 = vadd.f32 %v2066, %v2258
    %v2260 = vpop.f32.mrb[0].mxu0
    %v2261 = vadd.f32 %v2068, %v2260
    %v2262 = vpop.f32.mrb[0].mxu0
    %v2263 = vadd.f32 %v2070, %v2262
    %2264 = vmatprep.mubr.bf16.mxu0 0
    %2265 = vmatmul.mubr.bf16.gmra.mrb[0].mxu0 %v1854
    %v2266 = vpop.f32.mrb[0].mxu0
    %v2267 = vadd.f32 %v2074, %v2266
    %v2268 = vpop.f32.mrb[0].mxu0
    %v2269 = vadd.f32 %v2076, %v2268
    %v2270 = vpop.f32.mrb[0].mxu0
    %v2271 = vadd.f32 %v2078, %v2270
    %v2272 = vpop.f32.mrb[0].mxu0
    %v2273 = vadd.f32 %v2080, %v2272
    %2274 = vdwg.mxu0
    %v2275 = vld [vmem:[#allocation2 + $0x10] sm:$0xff]
    %v2276 = vld [vmem:[#allocation2 + $0x18] sm:$0xff]
    %v2277 = vld [vmem:[#allocation2 + $0x20] sm:$0xff]
    %v2278 = vld [vmem:[#allocation2 + $0x28] sm:$0xff]
    %v2279 = vld [vmem:[#allocation2 + $0x30] sm:$0xff]
    %v2280 = vld [vmem:[#allocation2 + $0x38] sm:$0xff]
    %v2281 = vld [vmem:[#allocation2 + $0x40] sm:$0xff]
    %v2282 = vld [vmem:[#allocation2 + $0x48] sm:$0xff]
    %s2283 = scalar_lea.vmem %s10, 256
    %v2284 = vld [vmem:[%s2283] sm:$0xff]
    %v2285 = vld [vmem:[%s2283 + $0x8] sm:$0xff]
    %v2286 = vld [vmem:[%s2283 + $0x10] sm:$0xff]
    %v2287 = vld [vmem:[%s2283 + $0x18] sm:$0xff]
    %v2288 = vld [vmem:[%s2283 + $0x20] sm:$0xff]
    %v2289 = vld [vmem:[%s2283 + $0x28] sm:$0xff]
    %v2290 = vld [vmem:[%s2283 + $0x30] sm:$0xff]
    %v2291 = vld [vmem:[%s2283 + $0x38] sm:$0xff]
    %v2292 = vld [vmem:[%s2283 + $0x40] sm:$0xff]
    %v2293 = vld [vmem:[%s2283 + $0x48] sm:$0xff]
    %v2294 = vld [vmem:[%s2283 + $0x50] sm:$0xff]
    %v2295 = vld [vmem:[%s2283 + $0x58] sm:$0xff]
    %v2296 = vld [vmem:[%s2283 + $0x60] sm:$0xff]
    %v2297 = vld [vmem:[%s2283 + $0x68] sm:$0xff]
    %v2298 = vld [vmem:[%s2283 + $0x70] sm:$0xff]
    %v2299 = vld [vmem:[%s2283 + $0x78] sm:$0xff]
    %v2316 = vunpack.c.l.b16 %v2284
    %v2317 = vunpack.c.h.b16 %v2284
    %v2318 = vunpack.c.l.b16 %v2285
    %v2319 = vunpack.c.h.b16 %v2285
    %v2320 = vunpack.c.l.b16 %v2286
    %v2321 = vunpack.c.h.b16 %v2286
    %v2322 = vunpack.c.l.b16 %v2287
    %v2323 = vunpack.c.h.b16 %v2287
    %v2324 = vunpack.c.l.b16 %v2288
    %v2325 = vunpack.c.h.b16 %v2288
    %v2326 = vunpack.c.l.b16 %v2289
    %v2327 = vunpack.c.h.b16 %v2289
    %v2328 = vunpack.c.l.b16 %v2290
    %v2329 = vunpack.c.h.b16 %v2290
    %v2330 = vunpack.c.l.b16 %v2291
    %v2331 = vunpack.c.h.b16 %v2291
    %v2332 = vunpack.c.l.b16 %v2292
    %v2333 = vunpack.c.h.b16 %v2292
    %v2334 = vunpack.c.l.b16 %v2293
    %v2335 = vunpack.c.h.b16 %v2293
    %v2336 = vunpack.c.l.b16 %v2294
    %v2337 = vunpack.c.h.b16 %v2294
    %v2338 = vunpack.c.l.b16 %v2295
    %v2339 = vunpack.c.h.b16 %v2295
    %v2340 = vunpack.c.l.b16 %v2296
    %v2341 = vunpack.c.h.b16 %v2296
    %v2342 = vunpack.c.l.b16 %v2297
    %v2343 = vunpack.c.h.b16 %v2297
    %v2344 = vunpack.c.l.b16 %v2298
    %v2345 = vunpack.c.h.b16 %v2298
    %v2346 = vunpack.c.l.b16 %v2299
    %v2347 = vunpack.c.h.b16 %v2299
    %v2348 = vpack.c.b16 %v2318, %v2316
    %v2349 = vpack.c.b16 %v2319, %v2317
    %v2350 = vpack.c.b16 %v2322, %v2320
    %v2351 = vpack.c.b16 %v2323, %v2321
    %v2352 = vpack.c.b16 %v2326, %v2324
    %v2353 = vpack.c.b16 %v2327, %v2325
    %v2354 = vpack.c.b16 %v2330, %v2328
    %v2355 = vpack.c.b16 %v2331, %v2329
    %v2356 = vpack.c.b16 %v2334, %v2332
    %v2357 = vpack.c.b16 %v2335, %v2333
    %v2358 = vpack.c.b16 %v2338, %v2336
    %v2359 = vpack.c.b16 %v2339, %v2337
    %v2360 = vpack.c.b16 %v2342, %v2340
    %v2361 = vpack.c.b16 %v2343, %v2341
    %v2362 = vpack.c.b16 %v2346, %v2344
    %v2363 = vpack.c.b16 %v2347, %v2345
    %2380 = vmatprep.subr.bf16.mxu0 %v2349
    %2381 = vmatpush1.bf16.msra.mxu0 %v2348
    %2382 = vmatprep.subr.bf16.mxu0 %v2351
    %2383 = vmatpush1.bf16.msra.mxu0 %v2350
    %2384 = vmatprep.subr.bf16.mxu0 %v2353
    %2385 = vmatpush1.bf16.msra.mxu0 %v2352
    %2386 = vmatprep.subr.bf16.mxu0 %v2355
    %2387 = vmatpush1.bf16.msra.mxu0 %v2354
    %2388 = vmatprep.subr.bf16.mxu0 %v2357
    %2389 = vmatpush1.bf16.msra.mxu0 %v2356
    %2390 = vmatprep.subr.bf16.mxu0 %v2359
    %2391 = vmatpush1.bf16.msra.mxu0 %v2358
    %2392 = vmatprep.subr.bf16.mxu0 %v2361
    %2393 = vmatpush1.bf16.msra.mxu0 %v2360
    %2394 = vmatprep.subr.bf16.mxu0 %v2363
    %2395 = vmatpush1.bf16.msra.mxu0 %v2362
    %2396 = vmatprep.subr.bf16.mxu0 0
    %2397 = vmatpush1.bf16.msra.mxu0 0
    %2398 = vmatprep.subr.bf16.mxu0 0
    %2399 = vmatpush1.bf16.msra.mxu0 0
    %2400 = vmatprep.subr.bf16.mxu0 0
    %2401 = vmatpush1.bf16.msra.mxu0 0
    %2402 = vmatprep.subr.bf16.mxu0 0
    %2403 = vmatpush1.bf16.msra.mxu0 0
    %2404 = vmatprep.subr.bf16.mxu0 0
    %2405 = vmatpush1.bf16.msra.mxu0 0
    %2406 = vmatprep.subr.bf16.mxu0 0
    %2407 = vmatpush1.bf16.msra.mxu0 0
    %2408 = vmatprep.subr.bf16.mxu0 0
    %2409 = vmatpush1.bf16.msra.mxu0 0
    %2410 = vmatprep.subr.bf16.mxu0 0
    %2411 = vmatpush1.bf16.msra.mxu0 0
    %2412 = vmatprep.mubr.bf16.mxu0 0
    %2413 = vmatmul.mubr.bf16.gmra.mrb[0].mxu0 %v2275
    %v2414 = vpop.f32.mrb[0].mxu0
    %v2415 = vadd.f32 0.0, %v2414
    %v2416 = vpop.f32.mrb[0].mxu0
    %v2417 = vadd.f32 0.0, %v2416
    %v2418 = vpop.f32.mrb[0].mxu0
    %v2419 = vadd.f32 0.0, %v2418
    %v2420 = vpop.f32.mrb[0].mxu0
    %v2421 = vadd.f32 0.0, %v2420
    %2422 = vmatprep.mubr.bf16.mxu0 0
    %2423 = vmatmul.mubr.bf16.gmra.mrb[0].mxu0 %v2276
    %v2424 = vpop.f32.mrb[0].mxu0
    %v2425 = vadd.f32 0.0, %v2424
    %v2426 = vpop.f32.mrb[0].mxu0
    %v2427 = vadd.f32 0.0, %v2426
    %v2428 = vpop.f32.mrb[0].mxu0
    %v2429 = vadd.f32 0.0, %v2428
    %v2430 = vpop.f32.mrb[0].mxu0
    %v2431 = vadd.f32 0.0, %v2430
    %2432 = vmatprep.mubr.bf16.mxu0 0
    %2433 = vmatmul.mubr.bf16.gmra.mrb[0].mxu0 %v2277
    %v2434 = vpop.f32.mrb[0].mxu0
    %v2435 = vadd.f32 0.0, %v2434
    %v2436 = vpop.f32.mrb[0].mxu0
    %v2437 = vadd.f32 0.0, %v2436
    %v2438 = vpop.f32.mrb[0].mxu0
    %v2439 = vadd.f32 0.0, %v2438
    %v2440 = vpop.f32.mrb[0].mxu0
    %v2441 = vadd.f32 0.0, %v2440
    %2442 = vmatprep.mubr.bf16.mxu0 0
    %2443 = vmatmul.mubr.bf16.gmra.mrb[0].mxu0 %v2278
    %v2444 = vpop.f32.mrb[0].mxu0
    %v2445 = vadd.f32 0.0, %v2444
    %v2446 = vpop.f32.mrb[0].mxu0
    %v2447 = vadd.f32 0.0, %v2446
    %v2448 = vpop.f32.mrb[0].mxu0
    %v2449 = vadd.f32 0.0, %v2448
    %v2450 = vpop.f32.mrb[0].mxu0
    %v2451 = vadd.f32 0.0, %v2450
    %2452 = vmatprep.mubr.bf16.mxu0 0
    %2453 = vmatmul.mubr.bf16.gmra.mrb[0].mxu0 %v2279
    %v2454 = vpop.f32.mrb[0].mxu0
    %v2455 = vadd.f32 0.0, %v2454
    %v2456 = vpop.f32.mrb[0].mxu0
    %v2457 = vadd.f32 0.0, %v2456
    %v2458 = vpop.f32.mrb[0].mxu0
    %v2459 = vadd.f32 0.0, %v2458
    %v2460 = vpop.f32.mrb[0].mxu0
    %v2461 = vadd.f32 0.0, %v2460
    %2462 = vmatprep.mubr.bf16.mxu0 0
    %2463 = vmatmul.mubr.bf16.gmra.mrb[0].mxu0 %v2280
    %v2464 = vpop.f32.mrb[0].mxu0
    %v2465 = vadd.f32 0.0, %v2464
    %v2466 = vpop.f32.mrb[0].mxu0
    %v2467 = vadd.f32 0.0, %v2466
    %v2468 = vpop.f32.mrb[0].mxu0
    %v2469 = vadd.f32 0.0, %v2468
    %v2470 = vpop.f32.mrb[0].mxu0
    %v2471 = vadd.f32 0.0, %v2470
    %2472 = vmatprep.mubr.bf16.mxu0 0
    %2473 = vmatmul.mubr.bf16.gmra.mrb[0].mxu0 %v2281
    %v2474 = vpop.f32.mrb[0].mxu0
    %v2475 = vadd.f32 0.0, %v2474
    %v2476 = vpop.f32.mrb[0].mxu0
    %v2477 = vadd.f32 0.0, %v2476
    %v2478 = vpop.f32.mrb[0].mxu0
    %v2479 = vadd.f32 0.0, %v2478
    %v2480 = vpop.f32.mrb[0].mxu0
    %v2481 = vadd.f32 0.0, %v2480
    %2482 = vmatprep.mubr.bf16.mxu0 0
    %2483 = vmatmul.mubr.bf16.gmra.mrb[0].mxu0 %v2282
    %v2484 = vpop.f32.mrb[0].mxu0
    %v2485 = vadd.f32 0.0, %v2484
    %v2486 = vpop.f32.mrb[0].mxu0
    %v2487 = vadd.f32 0.0, %v2486
    %v2488 = vpop.f32.mrb[0].mxu0
    %v2489 = vadd.f32 0.0, %v2488
    %v2490 = vpop.f32.mrb[0].mxu0
    %v2491 = vadd.f32 0.0, %v2490
    %2492 = vdwg.mxu0
    %v2493 = vadd.f32 %v2197, %v2415
    %v2494 = vadd.f32 %v2199, %v2417
    %v2495 = vadd.f32 %v2201, %v2419
    %v2496 = vadd.f32 %v2203, %v2421
    %v2497 = vadd.f32 %v2207, %v2425
    %v2498 = vadd.f32 %v2209, %v2427
    %v2499 = vadd.f32 %v2211, %v2429
    %v2500 = vadd.f32 %v2213, %v2431
    %v2501 = vadd.f32 %v2217, %v2435
    %v2502 = vadd.f32 %v2219, %v2437
    %v2503 = vadd.f32 %v2221, %v2439
    %v2504 = vadd.f32 %v2223, %v2441
    %v2505 = vadd.f32 %v2227, %v2445
    %v2506 = vadd.f32 %v2229, %v2447
    %v2507 = vadd.f32 %v2231, %v2449
    %v2508 = vadd.f32 %v2233, %v2451
    %v2509 = vadd.f32 %v2237, %v2455
    %v2510 = vadd.f32 %v2239, %v2457
    %v2511 = vadd.f32 %v2241, %v2459
    %v2512 = vadd.f32 %v2243, %v2461
    %v2513 = vadd.f32 %v2247, %v2465
    %v2514 = vadd.f32 %v2249, %v2467
    %v2515 = vadd.f32 %v2251, %v2469
    %v2516 = vadd.f32 %v2253, %v2471
    %v2517 = vadd.f32 %v2257, %v2475
    %v2518 = vadd.f32 %v2259, %v2477
    %v2519 = vadd.f32 %v2261, %v2479
    %v2520 = vadd.f32 %v2263, %v2481
    %v2521 = vadd.f32 %v2267, %v2485
    %v2522 = vadd.f32 %v2269, %v2487
    %v2523 = vadd.f32 %v2271, %v2489
    %v2524 = vadd.f32 %v2273, %v2491
    %v2525 = vld [vmem:[#allocation17] sm:$0x3]
    %v2527 = vlaneseq
    %v2528 = vshrl.u32 %v2527, 7
    %v2529 = vsub.s32 0, %v2528
    %v2530 = vrot.slane %v2525, %v2529
    %v2531 = vlaneseq
    %v2532 = vshrl.u32 %v2531, 7
    %v2533 = vsub.s32 1, %v2532
    %v2534 = vrot.slane %v2525, %v2533
    %v2537 = vadd.f32 %v2493, %v2530
    %v2538 = vadd.f32 %v2494, %v2534
    %v2539 = vadd.f32 %v2495, %v2530
    %v2540 = vadd.f32 %v2496, %v2534
    %v2541 = vadd.f32 %v2497, %v2530
    %v2542 = vadd.f32 %v2498, %v2534
    %v2543 = vadd.f32 %v2499, %v2530
    %v2544 = vadd.f32 %v2500, %v2534
    %v2545 = vadd.f32 %v2501, %v2530
    %v2546 = vadd.f32 %v2502, %v2534
    %v2547 = vadd.f32 %v2503, %v2530
    %v2548 = vadd.f32 %v2504, %v2534
    %v2549 = vadd.f32 %v2505, %v2530
    %v2550 = vadd.f32 %v2506, %v2534
    %v2551 = vadd.f32 %v2507, %v2530
    %v2552 = vadd.f32 %v2508, %v2534
    %v2553 = vadd.f32 %v2509, %v2530
    %v2554 = vadd.f32 %v2510, %v2534
    %v2555 = vadd.f32 %v2511, %v2530
    %v2556 = vadd.f32 %v2512, %v2534
    %v2557 = vadd.f32 %v2513, %v2530
    %v2558 = vadd.f32 %v2514, %v2534
    %v2559 = vadd.f32 %v2515, %v2530
    %v2560 = vadd.f32 %v2516, %v2534
    %v2561 = vadd.f32 %v2517, %v2530
    %v2562 = vadd.f32 %v2518, %v2534
    %v2563 = vadd.f32 %v2519, %v2530
    %v2564 = vadd.f32 %v2520, %v2534
    %v2565 = vadd.f32 %v2521, %v2530
    %v2566 = vadd.f32 %v2522, %v2534
    %v2567 = vadd.f32 %v2523, %v2530
    %v2568 = vadd.f32 %v2524, %v2534
    %v2569 = vmax.f32 %v2537, 0.0
    %v2570 = vmax.f32 %v2538, 0.0
    %v2571 = vmax.f32 %v2539, 0.0
    %v2572 = vmax.f32 %v2540, 0.0
    %v2573 = vmax.f32 %v2541, 0.0
    %v2574 = vmax.f32 %v2542, 0.0
    %v2575 = vmax.f32 %v2543, 0.0
    %v2576 = vmax.f32 %v2544, 0.0
    %v2577 = vmax.f32 %v2545, 0.0
    %v2578 = vmax.f32 %v2546, 0.0
    %v2579 = vmax.f32 %v2547, 0.0
    %v2580 = vmax.f32 %v2548, 0.0
    %v2581 = vmax.f32 %v2549, 0.0
    %v2582 = vmax.f32 %v2550, 0.0
    %v2583 = vmax.f32 %v2551, 0.0
    %v2584 = vmax.f32 %v2552, 0.0
    %v2585 = vmax.f32 %v2553, 0.0
    %v2586 = vmax.f32 %v2554, 0.0
    %v2587 = vmax.f32 %v2555, 0.0
    %v2588 = vmax.f32 %v2556, 0.0
    %v2589 = vmax.f32 %v2557, 0.0
    %v2590 = vmax.f32 %v2558, 0.0
    %v2591 = vmax.f32 %v2559, 0.0
    %v2592 = vmax.f32 %v2560, 0.0
    %v2593 = vmax.f32 %v2561, 0.0
    %v2594 = vmax.f32 %v2562, 0.0
    %v2595 = vmax.f32 %v2563, 0.0
    %v2596 = vmax.f32 %v2564, 0.0
    %v2597 = vmax.f32 %v2565, 0.0
    %v2598 = vmax.f32 %v2566, 0.0
    %v2599 = vmax.f32 %v2567, 0.0
    %v2600 = vmax.f32 %v2568, 0.0
    %v2601 = vmax.f32 %v2569, %v2573
    %v2602 = vmax.f32 %v2570, %v2574
    %v2603 = vmax.f32 %v2571, %v2575
    %v2604 = vmax.f32 %v2572, %v2576
    %v2605 = vpack.c.bf16 %v2603, %v2601
    %v2606 = vpack.c.bf16 %v2604, %v2602
    %v2607 = vmax.f32 %v2577, %v2581
    %v2608 = vmax.f32 %v2578, %v2582
    %v2609 = vmax.f32 %v2579, %v2583
    %v2610 = vmax.f32 %v2580, %v2584
    %v2611 = vpack.c.bf16 %v2609, %v2607
    %v2612 = vpack.c.bf16 %v2610, %v2608
    %v2613 = vmax.f32 %v2585, %v2589
    %v2614 = vmax.f32 %v2586, %v2590
    %v2615 = vmax.f32 %v2587, %v2591
    %v2616 = vmax.f32 %v2588, %v2592
    %v2617 = vpack.c.bf16 %v2615, %v2613
    %v2618 = vpack.c.bf16 %v2616, %v2614
    %v2619 = vmax.f32 %v2593, %v2597
    %v2620 = vmax.f32 %v2594, %v2598
    %v2621 = vmax.f32 %v2595, %v2599
    %v2622 = vmax.f32 %v2596, %v2600
    %v2623 = vpack.c.bf16 %v2621, %v2619
    %v2624 = vpack.c.bf16 %v2622, %v2620
    %v2625 = vld [vmem:[#allocation18] sm:$0xff]
    %v2626 = vld [vmem:[#allocation18 + $0x8] sm:$0xff]
    %v2627 = vld [vmem:[#allocation18 + $0x10] sm:$0xff]
    %v2628 = vld [vmem:[#allocation18 + $0x18] sm:$0xff]
    %v2629 = vld [vmem:[#allocation18 + $0x20] sm:$0xff]
    %v2630 = vld [vmem:[#allocation18 + $0x28] sm:$0xff]
    %v2631 = vld [vmem:[#allocation18 + $0x30] sm:$0xff]
    %v2632 = vld [vmem:[#allocation18 + $0x38] sm:$0xff]
    %v2633 = vld [vmem:[#allocation18 + $0x40] sm:$0xff]
    %v2634 = vld [vmem:[#allocation18 + $0x48] sm:$0xff]
    %v2635 = vld [vmem:[#allocation18 + $0x50] sm:$0xff]
    %v2636 = vld [vmem:[#allocation18 + $0x58] sm:$0xff]
    %v2637 = vld [vmem:[#allocation18 + $0x60] sm:$0xff]
    %v2638 = vld [vmem:[#allocation18 + $0x68] sm:$0xff]
    %v2639 = vld [vmem:[#allocation18 + $0x70] sm:$0xff]
    %v2640 = vld [vmem:[#allocation18 + $0x78] sm:$0xff]
    %v2641 = vld [vmem:[#allocation18 + $0x80] sm:$0xff]
    %v2642 = vld [vmem:[#allocation18 + $0x88] sm:$0xff]
    %v2643 = vld [vmem:[#allocation18 + $0x90] sm:$0xff]
    %v2644 = vld [vmem:[#allocation18 + $0x98] sm:$0xff]
    %v2645 = vld [vmem:[#allocation18 + $0xa0] sm:$0xff]
    %v2646 = vld [vmem:[#allocation18 + $0xa8] sm:$0xff]
    %v2647 = vld [vmem:[#allocation18 + $0xb0] sm:$0xff]
    %v2648 = vld [vmem:[#allocation18 + $0xb8] sm:$0xff]
    %v2649 = vld [vmem:[#allocation18 + $0xc0] sm:$0xff]
    %v2650 = vld [vmem:[#allocation18 + $0xc8] sm:$0xff]
    %v2651 = vld [vmem:[#allocation18 + $0xd0] sm:$0xff]
    %v2652 = vld [vmem:[#allocation18 + $0xd8] sm:$0xff]
    %v2653 = vld [vmem:[#allocation18 + $0xe0] sm:$0xff]
    %v2654 = vld [vmem:[#allocation18 + $0xe8] sm:$0xff]
    %v2655 = vld [vmem:[#allocation18 + $0xf0] sm:$0xff]
    %v2656 = vld [vmem:[#allocation18 + $0xf8] sm:$0xff]
    %v2657 = vld [vmem:[#allocation18 + $0x100] sm:$0xff]
    %v2658 = vld [vmem:[#allocation18 + $0x108] sm:$0xff]
    %v2659 = vld [vmem:[#allocation18 + $0x110] sm:$0xff]
    %v2660 = vld [vmem:[#allocation18 + $0x118] sm:$0xff]
    %v2661 = vld [vmem:[#allocation18 + $0x120] sm:$0xff]
    %v2662 = vld [vmem:[#allocation18 + $0x128] sm:$0xff]
    %v2663 = vld [vmem:[#allocation18 + $0x130] sm:$0xff]
    %v2664 = vld [vmem:[#allocation18 + $0x138] sm:$0xff]
    %v2665 = vld [vmem:[#allocation18 + $0x140] sm:$0xff]
    %v2666 = vld [vmem:[#allocation18 + $0x148] sm:$0xff]
    %v2667 = vld [vmem:[#allocation18 + $0x150] sm:$0xff]
    %v2668 = vld [vmem:[#allocation18 + $0x158] sm:$0xff]
    %v2669 = vld [vmem:[#allocation18 + $0x160] sm:$0xff]
    %v2670 = vld [vmem:[#allocation18 + $0x168] sm:$0xff]
    %v2671 = vld [vmem:[#allocation18 + $0x170] sm:$0xff]
    %v2672 = vld [vmem:[#allocation18 + $0x178] sm:$0xff]
    %v2673 = vld [vmem:[#allocation18 + $0x180] sm:$0xff]
    %v2674 = vld [vmem:[#allocation18 + $0x188] sm:$0xff]
    %v2675 = vld [vmem:[#allocation18 + $0x190] sm:$0xff]
    %v2676 = vld [vmem:[#allocation18 + $0x198] sm:$0xff]
    %v2677 = vld [vmem:[#allocation18 + $0x1a0] sm:$0xff]
    %v2678 = vld [vmem:[#allocation18 + $0x1a8] sm:$0xff]
    %v2679 = vld [vmem:[#allocation18 + $0x1b0] sm:$0xff]
    %v2680 = vld [vmem:[#allocation18 + $0x1b8] sm:$0xff]
    %v2681 = vld [vmem:[#allocation18 + $0x1c0] sm:$0xff]
    %v2682 = vld [vmem:[#allocation18 + $0x1c8] sm:$0xff]
    %v2683 = vld [vmem:[#allocation18 + $0x1d0] sm:$0xff]
    %v2684 = vld [vmem:[#allocation18 + $0x1d8] sm:$0xff]
    %v2685 = vld [vmem:[#allocation18 + $0x1e0] sm:$0xff]
    %v2686 = vld [vmem:[#allocation18 + $0x1e8] sm:$0xff]
    %v2687 = vld [vmem:[#allocation18 + $0x1f0] sm:$0xff]
    %v2688 = vld [vmem:[#allocation18 + $0x1f8] sm:$0xff]
    %v2689 = vld [vmem:[#allocation18 + $0x200] sm:$0xff]
    %v2690 = vld [vmem:[#allocation18 + $0x208] sm:$0xff]
    %v2691 = vld [vmem:[#allocation18 + $0x210] sm:$0xff]
    %v2692 = vld [vmem:[#allocation18 + $0x218] sm:$0xff]
    %v2693 = vld [vmem:[#allocation18 + $0x220] sm:$0xff]
    %v2694 = vld [vmem:[#allocation18 + $0x228] sm:$0xff]
    %v2695 = vld [vmem:[#allocation18 + $0x230] sm:$0xff]
    %v2696 = vld [vmem:[#allocation18 + $0x238] sm:$0xff]
    %v2697 = vld [vmem:[#allocation18 + $0x240] sm:$0xff]
    %v2698 = vld [vmem:[#allocation18 + $0x248] sm:$0xff]
    %v2699 = vld [vmem:[#allocation18 + $0x250] sm:$0xff]
    %v2700 = vld [vmem:[#allocation18 + $0x258] sm:$0xff]
    %v2701 = vld [vmem:[#allocation18 + $0x260] sm:$0xff]
    %v2702 = vld [vmem:[#allocation18 + $0x268] sm:$0xff]
    %v2703 = vld [vmem:[#allocation18 + $0x270] sm:$0xff]
    %v2704 = vld [vmem:[#allocation18 + $0x278] sm:$0xff]
    %v2705 = vld [vmem:[#allocation18 + $0x280] sm:$0xff]
    %v2706 = vld [vmem:[#allocation18 + $0x288] sm:$0xff]
    %v2707 = vld [vmem:[#allocation18 + $0x290] sm:$0xff]
    %v2708 = vld [vmem:[#allocation18 + $0x298] sm:$0xff]
    %v2709 = vld [vmem:[#allocation18 + $0x2a0] sm:$0xff]
    %v2710 = vld [vmem:[#allocation18 + $0x2a8] sm:$0xff]
    %v2711 = vld [vmem:[#allocation18 + $0x2b0] sm:$0xff]
    %v2712 = vld [vmem:[#allocation18 + $0x2b8] sm:$0xff]
    %v2713 = vld [vmem:[#allocation18 + $0x2c0] sm:$0xff]
    %v2714 = vld [vmem:[#allocation18 + $0x2c8] sm:$0xff]
    %v2715 = vld [vmem:[#allocation18 + $0x2d0] sm:$0xff]
    %v2716 = vld [vmem:[#allocation18 + $0x2d8] sm:$0xff]
    %v2717 = vld [vmem:[#allocation18 + $0x2e0] sm:$0xff]
    %v2718 = vld [vmem:[#allocation18 + $0x2e8] sm:$0xff]
    %v2719 = vld [vmem:[#allocation18 + $0x2f0] sm:$0xff]
    %v2720 = vld [vmem:[#allocation18 + $0x2f8] sm:$0xff]
    %v2721 = vld [vmem:[#allocation18 + $0x300] sm:$0xff]
    %v2722 = vld [vmem:[#allocation18 + $0x308] sm:$0xff]
    %v2723 = vld [vmem:[#allocation18 + $0x310] sm:$0xff]
    %v2724 = vld [vmem:[#allocation18 + $0x318] sm:$0xff]
    %v2725 = vld [vmem:[#allocation18 + $0x320] sm:$0xff]
    %v2726 = vld [vmem:[#allocation18 + $0x328] sm:$0xff]
    %v2727 = vld [vmem:[#allocation18 + $0x330] sm:$0xff]
    %v2728 = vld [vmem:[#allocation18 + $0x338] sm:$0xff]
    %v2729 = vld [vmem:[#allocation18 + $0x340] sm:$0xff]
    %v2730 = vld [vmem:[#allocation18 + $0x348] sm:$0xff]
    %v2731 = vld [vmem:[#allocation18 + $0x350] sm:$0xff]
    %v2732 = vld [vmem:[#allocation18 + $0x358] sm:$0xff]
    %v2733 = vld [vmem:[#allocation18 + $0x360] sm:$0xff]
    %v2734 = vld [vmem:[#allocation18 + $0x368] sm:$0xff]
    %v2735 = vld [vmem:[#allocation18 + $0x370] sm:$0xff]
    %v2736 = vld [vmem:[#allocation18 + $0x378] sm:$0xff]
    %v2737 = vld [vmem:[#allocation18 + $0x380] sm:$0xff]
    %v2738 = vld [vmem:[#allocation18 + $0x388] sm:$0xff]
    %v2739 = vld [vmem:[#allocation18 + $0x390] sm:$0xff]
    %v2740 = vld [vmem:[#allocation18 + $0x398] sm:$0xff]
    %v2741 = vld [vmem:[#allocation18 + $0x3a0] sm:$0xff]
    %v2742 = vld [vmem:[#allocation18 + $0x3a8] sm:$0xff]
    %v2743 = vld [vmem:[#allocation18 + $0x3b0] sm:$0xff]
    %v2744 = vld [vmem:[#allocation18 + $0x3b8] sm:$0xff]
    %v2745 = vld [vmem:[#allocation18 + $0x3c0] sm:$0xff]
    %v2746 = vld [vmem:[#allocation18 + $0x3c8] sm:$0xff]
    %v2747 = vld [vmem:[#allocation18 + $0x3d0] sm:$0xff]
    %v2748 = vld [vmem:[#allocation18 + $0x3d8] sm:$0xff]
    %v2749 = vld [vmem:[#allocation18 + $0x3e0] sm:$0xff]
    %v2750 = vld [vmem:[#allocation18 + $0x3e8] sm:$0xff]
    %v2751 = vld [vmem:[#allocation18 + $0x3f0] sm:$0xff]
    %v2752 = vld [vmem:[#allocation18 + $0x3f8] sm:$0xff]
    %v2753 = vld [vmem:[#allocation20] sm:$0xff]
    %v2755 = vlaneseq
    %v2756 = vshrl.u32 %v2755, 7
    %v2757 = vsub.s32 0, %v2756
    %v2758 = vrot.slane %v2753, %v2757
    %v2759 = vlaneseq
    %v2760 = vshrl.u32 %v2759, 7
    %v2761 = vsub.s32 1, %v2760
    %v2762 = vrot.slane %v2753, %v2761
    %v2763 = vlaneseq
    %v2764 = vshrl.u32 %v2763, 7
    %v2765 = vsub.s32 2, %v2764
    %v2766 = vrot.slane %v2753, %v2765
    %v2767 = vlaneseq
    %v2768 = vshrl.u32 %v2767, 7
    %v2769 = vsub.s32 3, %v2768
    %v2770 = vrot.slane %v2753, %v2769
    %v2771 = vlaneseq
    %v2772 = vshrl.u32 %v2771, 7
    %v2773 = vsub.s32 4, %v2772
    %v2774 = vrot.slane %v2753, %v2773
    %v2775 = vlaneseq
    %v2776 = vshrl.u32 %v2775, 7
    %v2777 = vsub.s32 5, %v2776
    %v2778 = vrot.slane %v2753, %v2777
    %v2779 = vlaneseq
    %v2780 = vshrl.u32 %v2779, 7
    %v2781 = vsub.s32 6, %v2780
    %v2782 = vrot.slane %v2753, %v2781
    %v2783 = vlaneseq
    %v2784 = vshrl.u32 %v2783, 7
    %v2785 = vsub.s32 7, %v2784
    %v2786 = vrot.slane %v2753, %v2785
    %v2923 = vunpack.c.l.b16 %v2625
    %v2924 = vunpack.c.h.b16 %v2625
    %v2925 = vunpack.c.l.b16 %v2626
    %v2926 = vunpack.c.h.b16 %v2626
    %v2927 = vunpack.c.l.b16 %v2627
    %v2928 = vunpack.c.h.b16 %v2627
    %v2929 = vunpack.c.l.b16 %v2628
    %v2930 = vunpack.c.h.b16 %v2628
    %v2931 = vunpack.c.l.b16 %v2629
    %v2932 = vunpack.c.h.b16 %v2629
    %v2933 = vunpack.c.l.b16 %v2630
    %v2934 = vunpack.c.h.b16 %v2630
    %v2935 = vunpack.c.l.b16 %v2631
    %v2936 = vunpack.c.h.b16 %v2631
    %v2937 = vunpack.c.l.b16 %v2632
    %v2938 = vunpack.c.h.b16 %v2632
    %v2939 = vunpack.c.l.b16 %v2633
    %v2940 = vunpack.c.h.b16 %v2633
    %v2941 = vunpack.c.l.b16 %v2634
    %v2942 = vunpack.c.h.b16 %v2634
    %v2943 = vunpack.c.l.b16 %v2635
    %v2944 = vunpack.c.h.b16 %v2635
    %v2945 = vunpack.c.l.b16 %v2636
    %v2946 = vunpack.c.h.b16 %v2636
    %v2947 = vunpack.c.l.b16 %v2637
    %v2948 = vunpack.c.h.b16 %v2637
    %v2949 = vunpack.c.l.b16 %v2638
    %v2950 = vunpack.c.h.b16 %v2638
    %v2951 = vunpack.c.l.b16 %v2639
    %v2952 = vunpack.c.h.b16 %v2639
    %v2953 = vunpack.c.l.b16 %v2640
    %v2954 = vunpack.c.h.b16 %v2640
    %v2955 = vunpack.c.l.b16 %v2641
    %v2956 = vunpack.c.h.b16 %v2641
    %v2957 = vunpack.c.l.b16 %v2642
    %v2958 = vunpack.c.h.b16 %v2642
    %v2959 = vunpack.c.l.b16 %v2643
    %v2960 = vunpack.c.h.b16 %v2643
    %v2961 = vunpack.c.l.b16 %v2644
    %v2962 = vunpack.c.h.b16 %v2644
    %v2963 = vunpack.c.l.b16 %v2645
    %v2964 = vunpack.c.h.b16 %v2645
    %v2965 = vunpack.c.l.b16 %v2646
    %v2966 = vunpack.c.h.b16 %v2646
    %v2967 = vunpack.c.l.b16 %v2647
    %v2968 = vunpack.c.h.b16 %v2647
    %v2969 = vunpack.c.l.b16 %v2648
    %v2970 = vunpack.c.h.b16 %v2648
    %v2971 = vunpack.c.l.b16 %v2649
    %v2972 = vunpack.c.h.b16 %v2649
    %v2973 = vunpack.c.l.b16 %v2650
    %v2974 = vunpack.c.h.b16 %v2650
    %v2975 = vunpack.c.l.b16 %v2651
    %v2976 = vunpack.c.h.b16 %v2651
    %v2977 = vunpack.c.l.b16 %v2652
    %v2978 = vunpack.c.h.b16 %v2652
    %v2979 = vunpack.c.l.b16 %v2653
    %v2980 = vunpack.c.h.b16 %v2653
    %v2981 = vunpack.c.l.b16 %v2654
    %v2982 = vunpack.c.h.b16 %v2654
    %v2983 = vunpack.c.l.b16 %v2655
    %v2984 = vunpack.c.h.b16 %v2655
    %v2985 = vunpack.c.l.b16 %v2656
    %v2986 = vunpack.c.h.b16 %v2656
    %v2987 = vunpack.c.l.b16 %v2657
    %v2988 = vunpack.c.h.b16 %v2657
    %v2989 = vunpack.c.l.b16 %v2658
    %v2990 = vunpack.c.h.b16 %v2658
    %v2991 = vunpack.c.l.b16 %v2659
    %v2992 = vunpack.c.h.b16 %v2659
    %v2993 = vunpack.c.l.b16 %v2660
    %v2994 = vunpack.c.h.b16 %v2660
    %v2995 = vunpack.c.l.b16 %v2661
    %v2996 = vunpack.c.h.b16 %v2661
    %v2997 = vunpack.c.l.b16 %v2662
    %v2998 = vunpack.c.h.b16 %v2662
    %v2999 = vunpack.c.l.b16 %v2663
    %v3000 = vunpack.c.h.b16 %v2663
    %v3001 = vunpack.c.l.b16 %v2664
    %v3002 = vunpack.c.h.b16 %v2664
    %v3003 = vunpack.c.l.b16 %v2665
    %v3004 = vunpack.c.h.b16 %v2665
    %v3005 = vunpack.c.l.b16 %v2666
    %v3006 = vunpack.c.h.b16 %v2666
    %v3007 = vunpack.c.l.b16 %v2667
    %v3008 = vunpack.c.h.b16 %v2667
    %v3009 = vunpack.c.l.b16 %v2668
    %v3010 = vunpack.c.h.b16 %v2668
    %v3011 = vunpack.c.l.b16 %v2669
    %v3012 = vunpack.c.h.b16 %v2669
    %v3013 = vunpack.c.l.b16 %v2670
    %v3014 = vunpack.c.h.b16 %v2670
    %v3015 = vunpack.c.l.b16 %v2671
    %v3016 = vunpack.c.h.b16 %v2671
    %v3017 = vunpack.c.l.b16 %v2672
    %v3018 = vunpack.c.h.b16 %v2672
    %v3019 = vunpack.c.l.b16 %v2673
    %v3020 = vunpack.c.h.b16 %v2673
    %v3021 = vunpack.c.l.b16 %v2674
    %v3022 = vunpack.c.h.b16 %v2674
    %v3023 = vunpack.c.l.b16 %v2675
    %v3024 = vunpack.c.h.b16 %v2675
    %v3025 = vunpack.c.l.b16 %v2676
    %v3026 = vunpack.c.h.b16 %v2676
    %v3027 = vunpack.c.l.b16 %v2677
    %v3028 = vunpack.c.h.b16 %v2677
    %v3029 = vunpack.c.l.b16 %v2678
    %v3030 = vunpack.c.h.b16 %v2678
    %v3031 = vunpack.c.l.b16 %v2679
    %v3032 = vunpack.c.h.b16 %v2679
    %v3033 = vunpack.c.l.b16 %v2680
    %v3034 = vunpack.c.h.b16 %v2680
    %v3035 = vunpack.c.l.b16 %v2681
    %v3036 = vunpack.c.h.b16 %v2681
    %v3037 = vunpack.c.l.b16 %v2682
    %v3038 = vunpack.c.h.b16 %v2682
    %v3039 = vunpack.c.l.b16 %v2683
    %v3040 = vunpack.c.h.b16 %v2683
    %v3041 = vunpack.c.l.b16 %v2684
    %v3042 = vunpack.c.h.b16 %v2684
    %v3043 = vunpack.c.l.b16 %v2685
    %v3044 = vunpack.c.h.b16 %v2685
    %v3045 = vunpack.c.l.b16 %v2686
    %v3046 = vunpack.c.h.b16 %v2686
    %v3047 = vunpack.c.l.b16 %v2687
    %v3048 = vunpack.c.h.b16 %v2687
    %v3049 = vunpack.c.l.b16 %v2688
    %v3050 = vunpack.c.h.b16 %v2688
    %v3051 = vunpack.c.l.b16 %v2689
    %v3052 = vunpack.c.h.b16 %v2689
    %v3053 = vunpack.c.l.b16 %v2690
    %v3054 = vunpack.c.h.b16 %v2690
    %v3055 = vunpack.c.l.b16 %v2691
    %v3056 = vunpack.c.h.b16 %v2691
    %v3057 = vunpack.c.l.b16 %v2692
    %v3058 = vunpack.c.h.b16 %v2692
    %v3059 = vunpack.c.l.b16 %v2693
    %v3060 = vunpack.c.h.b16 %v2693
    %v3061 = vunpack.c.l.b16 %v2694
    %v3062 = vunpack.c.h.b16 %v2694
    %v3063 = vunpack.c.l.b16 %v2695
    %v3064 = vunpack.c.h.b16 %v2695
    %v3065 = vunpack.c.l.b16 %v2696
    %v3066 = vunpack.c.h.b16 %v2696
    %v3067 = vunpack.c.l.b16 %v2697
    %v3068 = vunpack.c.h.b16 %v2697
    %v3069 = vunpack.c.l.b16 %v2698
    %v3070 = vunpack.c.h.b16 %v2698
    %v3071 = vunpack.c.l.b16 %v2699
    %v3072 = vunpack.c.h.b16 %v2699
    %v3073 = vunpack.c.l.b16 %v2700
    %v3074 = vunpack.c.h.b16 %v2700
    %v3075 = vunpack.c.l.b16 %v2701
    %v3076 = vunpack.c.h.b16 %v2701
    %v3077 = vunpack.c.l.b16 %v2702
    %v3078 = vunpack.c.h.b16 %v2702
    %v3079 = vunpack.c.l.b16 %v2703
    %v3080 = vunpack.c.h.b16 %v2703
    %v3081 = vunpack.c.l.b16 %v2704
    %v3082 = vunpack.c.h.b16 %v2704
    %v3083 = vunpack.c.l.b16 %v2705
    %v3084 = vunpack.c.h.b16 %v2705
    %v3085 = vunpack.c.l.b16 %v2706
    %v3086 = vunpack.c.h.b16 %v2706
    %v3087 = vunpack.c.l.b16 %v2707
    %v3088 = vunpack.c.h.b16 %v2707
    %v3089 = vunpack.c.l.b16 %v2708
    %v3090 = vunpack.c.h.b16 %v2708
    %v3091 = vunpack.c.l.b16 %v2709
    %v3092 = vunpack.c.h.b16 %v2709
    %v3093 = vunpack.c.l.b16 %v2710
    %v3094 = vunpack.c.h.b16 %v2710
    %v3095 = vunpack.c.l.b16 %v2711
    %v3096 = vunpack.c.h.b16 %v2711
    %v3097 = vunpack.c.l.b16 %v2712
    %v3098 = vunpack.c.h.b16 %v2712
    %v3099 = vunpack.c.l.b16 %v2713
    %v3100 = vunpack.c.h.b16 %v2713
    %v3101 = vunpack.c.l.b16 %v2714
    %v3102 = vunpack.c.h.b16 %v2714
    %v3103 = vunpack.c.l.b16 %v2715
    %v3104 = vunpack.c.h.b16 %v2715
    %v3105 = vunpack.c.l.b16 %v2716
    %v3106 = vunpack.c.h.b16 %v2716
    %v3107 = vunpack.c.l.b16 %v2717
    %v3108 = vunpack.c.h.b16 %v2717
    %v3109 = vunpack.c.l.b16 %v2718
    %v3110 = vunpack.c.h.b16 %v2718
    %v3111 = vunpack.c.l.b16 %v2719
    %v3112 = vunpack.c.h.b16 %v2719
    %v3113 = vunpack.c.l.b16 %v2720
    %v3114 = vunpack.c.h.b16 %v2720
    %v3115 = vunpack.c.l.b16 %v2721
    %v3116 = vunpack.c.h.b16 %v2721
    %v3117 = vunpack.c.l.b16 %v2722
    %v3118 = vunpack.c.h.b16 %v2722
    %v3119 = vunpack.c.l.b16 %v2723
    %v3120 = vunpack.c.h.b16 %v2723
    %v3121 = vunpack.c.l.b16 %v2724
    %v3122 = vunpack.c.h.b16 %v2724
    %v3123 = vunpack.c.l.b16 %v2725
    %v3124 = vunpack.c.h.b16 %v2725
    %v3125 = vunpack.c.l.b16 %v2726
    %v3126 = vunpack.c.h.b16 %v2726
    %v3127 = vunpack.c.l.b16 %v2727
    %v3128 = vunpack.c.h.b16 %v2727
    %v3129 = vunpack.c.l.b16 %v2728
    %v3130 = vunpack.c.h.b16 %v2728
    %v3131 = vunpack.c.l.b16 %v2729
    %v3132 = vunpack.c.h.b16 %v2729
    %v3133 = vunpack.c.l.b16 %v2730
    %v3134 = vunpack.c.h.b16 %v2730
    %v3135 = vunpack.c.l.b16 %v2731
    %v3136 = vunpack.c.h.b16 %v2731
    %v3137 = vunpack.c.l.b16 %v2732
    %v3138 = vunpack.c.h.b16 %v2732
    %v3139 = vunpack.c.l.b16 %v2733
    %v3140 = vunpack.c.h.b16 %v2733
    %v3141 = vunpack.c.l.b16 %v2734
    %v3142 = vunpack.c.h.b16 %v2734
    %v3143 = vunpack.c.l.b16 %v2735
    %v3144 = vunpack.c.h.b16 %v2735
    %v3145 = vunpack.c.l.b16 %v2736
    %v3146 = vunpack.c.h.b16 %v2736
    %v3147 = vunpack.c.l.b16 %v2737
    %v3148 = vunpack.c.h.b16 %v2737
    %v3149 = vunpack.c.l.b16 %v2738
    %v3150 = vunpack.c.h.b16 %v2738
    %v3151 = vunpack.c.l.b16 %v2739
    %v3152 = vunpack.c.h.b16 %v2739
    %v3153 = vunpack.c.l.b16 %v2740
    %v3154 = vunpack.c.h.b16 %v2740
    %v3155 = vunpack.c.l.b16 %v2741
    %v3156 = vunpack.c.h.b16 %v2741
    %v3157 = vunpack.c.l.b16 %v2742
    %v3158 = vunpack.c.h.b16 %v2742
    %v3159 = vunpack.c.l.b16 %v2743
    %v3160 = vunpack.c.h.b16 %v2743
    %v3161 = vunpack.c.l.b16 %v2744
    %v3162 = vunpack.c.h.b16 %v2744
    %v3163 = vunpack.c.l.b16 %v2745
    %v3164 = vunpack.c.h.b16 %v2745
    %v3165 = vunpack.c.l.b16 %v2746
    %v3166 = vunpack.c.h.b16 %v2746
    %v3167 = vunpack.c.l.b16 %v2747
    %v3168 = vunpack.c.h.b16 %v2747
    %v3169 = vunpack.c.l.b16 %v2748
    %v3170 = vunpack.c.h.b16 %v2748
    %v3171 = vunpack.c.l.b16 %v2749
    %v3172 = vunpack.c.h.b16 %v2749
    %v3173 = vunpack.c.l.b16 %v2750
    %v3174 = vunpack.c.h.b16 %v2750
    %v3175 = vunpack.c.l.b16 %v2751
    %v3176 = vunpack.c.h.b16 %v2751
    %v3177 = vunpack.c.l.b16 %v2752
    %v3178 = vunpack.c.h.b16 %v2752
    %v3179 = vpack.c.b16 %v2931, %v2923
    %v3180 = vpack.c.b16 %v2932, %v2924
    %v3181 = vpack.c.b16 %v2933, %v2925
    %v3182 = vpack.c.b16 %v2934, %v2926
    %v3183 = vpack.c.b16 %v2935, %v2927
    %v3184 = vpack.c.b16 %v2936, %v2928
    %v3185 = vpack.c.b16 %v2937, %v2929
    %v3186 = vpack.c.b16 %v2938, %v2930
    %v3187 = vpack.c.b16 %v2947, %v2939
    %v3188 = vpack.c.b16 %v2948, %v2940
    %v3189 = vpack.c.b16 %v2949, %v2941
    %v3190 = vpack.c.b16 %v2950, %v2942
    %v3191 = vpack.c.b16 %v2951, %v2943
    %v3192 = vpack.c.b16 %v2952, %v2944
    %v3193 = vpack.c.b16 %v2953, %v2945
    %v3194 = vpack.c.b16 %v2954, %v2946
    %v3195 = vpack.c.b16 %v2963, %v2955
    %v3196 = vpack.c.b16 %v2964, %v2956
    %v3197 = vpack.c.b16 %v2965, %v2957
    %v3198 = vpack.c.b16 %v2966, %v2958
    %v3199 = vpack.c.b16 %v2967, %v2959
    %v3200 = vpack.c.b16 %v2968, %v2960
    %v3201 = vpack.c.b16 %v2969, %v2961
    %v3202 = vpack.c.b16 %v2970, %v2962
    %v3203 = vpack.c.b16 %v2979, %v2971
    %v3204 = vpack.c.b16 %v2980, %v2972
    %v3205 = vpack.c.b16 %v2981, %v2973
    %v3206 = vpack.c.b16 %v2982, %v2974
    %v3207 = vpack.c.b16 %v2983, %v2975
    %v3208 = vpack.c.b16 %v2984, %v2976
    %v3209 = vpack.c.b16 %v2985, %v2977
    %v3210 = vpack.c.b16 %v2986, %v2978
    %v3211 = vpack.c.b16 %v2995, %v2987
    %v3212 = vpack.c.b16 %v2996, %v2988
    %v3213 = vpack.c.b16 %v2997, %v2989
    %v3214 = vpack.c.b16 %v2998, %v2990
    %v3215 = vpack.c.b16 %v2999, %v2991
    %v3216 = vpack.c.b16 %v3000, %v2992
    %v3217 = vpack.c.b16 %v3001, %v2993
    %v3218 = vpack.c.b16 %v3002, %v2994
    %v3219 = vpack.c.b16 %v3011, %v3003
    %v3220 = vpack.c.b16 %v3012, %v3004
    %v3221 = vpack.c.b16 %v3013, %v3005
    %v3222 = vpack.c.b16 %v3014, %v3006
    %v3223 = vpack.c.b16 %v3015, %v3007
    %v3224 = vpack.c.b16 %v3016, %v3008
    %v3225 = vpack.c.b16 %v3017, %v3009
    %v3226 = vpack.c.b16 %v3018, %v3010
    %v3227 = vpack.c.b16 %v3027, %v3019
    %v3228 = vpack.c.b16 %v3028, %v3020
    %v3229 = vpack.c.b16 %v3029, %v3021
    %v3230 = vpack.c.b16 %v3030, %v3022
    %v3231 = vpack.c.b16 %v3031, %v3023
    %v3232 = vpack.c.b16 %v3032, %v3024
    %v3233 = vpack.c.b16 %v3033, %v3025
    %v3234 = vpack.c.b16 %v3034, %v3026
    %v3235 = vpack.c.b16 %v3043, %v3035
    %v3236 = vpack.c.b16 %v3044, %v3036
    %v3237 = vpack.c.b16 %v3045, %v3037
    %v3238 = vpack.c.b16 %v3046, %v3038
    %v3239 = vpack.c.b16 %v3047, %v3039
    %v3240 = vpack.c.b16 %v3048, %v3040
    %v3241 = vpack.c.b16 %v3049, %v3041
    %v3242 = vpack.c.b16 %v3050, %v3042
    %v3243 = vpack.c.b16 %v3059, %v3051
    %v3244 = vpack.c.b16 %v3060, %v3052
    %v3245 = vpack.c.b16 %v3061, %v3053
    %v3246 = vpack.c.b16 %v3062, %v3054
    %v3247 = vpack.c.b16 %v3063, %v3055
    %v3248 = vpack.c.b16 %v3064, %v3056
    %v3249 = vpack.c.b16 %v3065, %v3057
    %v3250 = vpack.c.b16 %v3066, %v3058
    %v3251 = vpack.c.b16 %v3075, %v3067
    %v3252 = vpack.c.b16 %v3076, %v3068
    %v3253 = vpack.c.b16 %v3077, %v3069
    %v3254 = vpack.c.b16 %v3078, %v3070
    %v3255 = vpack.c.b16 %v3079, %v3071
    %v3256 = vpack.c.b16 %v3080, %v3072
    %v3257 = vpack.c.b16 %v3081, %v3073
    %v3258 = vpack.c.b16 %v3082, %v3074
    %v3259 = vpack.c.b16 %v3091, %v3083
    %v3260 = vpack.c.b16 %v3092, %v3084
    %v3261 = vpack.c.b16 %v3093, %v3085
    %v3262 = vpack.c.b16 %v3094, %v3086
    %v3263 = vpack.c.b16 %v3095, %v3087
    %v3264 = vpack.c.b16 %v3096, %v3088
    %v3265 = vpack.c.b16 %v3097, %v3089
    %v3266 = vpack.c.b16 %v3098, %v3090
    %v3267 = vpack.c.b16 %v3107, %v3099
    %v3268 = vpack.c.b16 %v3108, %v3100
    %v3269 = vpack.c.b16 %v3109, %v3101
    %v3270 = vpack.c.b16 %v3110, %v3102
    %v3271 = vpack.c.b16 %v3111, %v3103
    %v3272 = vpack.c.b16 %v3112, %v3104
    %v3273 = vpack.c.b16 %v3113, %v3105
    %v3274 = vpack.c.b16 %v3114, %v3106
    %v3275 = vpack.c.b16 %v3123, %v3115
    %v3276 = vpack.c.b16 %v3124, %v3116
    %v3277 = vpack.c.b16 %v3125, %v3117
    %v3278 = vpack.c.b16 %v3126, %v3118
    %v3279 = vpack.c.b16 %v3127, %v3119
    %v3280 = vpack.c.b16 %v3128, %v3120
    %v3281 = vpack.c.b16 %v3129, %v3121
    %v3282 = vpack.c.b16 %v3130, %v3122
    %v3283 = vpack.c.b16 %v3139, %v3131
    %v3284 = vpack.c.b16 %v3140, %v3132
    %v3285 = vpack.c.b16 %v3141, %v3133
    %v3286 = vpack.c.b16 %v3142, %v3134
    %v3287 = vpack.c.b16 %v3143, %v3135
    %v3288 = vpack.c.b16 %v3144, %v3136
    %v3289 = vpack.c.b16 %v3145, %v3137
    %v3290 = vpack.c.b16 %v3146, %v3138
    %v3291 = vpack.c.b16 %v3155, %v3147
    %v3292 = vpack.c.b16 %v3156, %v3148
    %v3293 = vpack.c.b16 %v3157, %v3149
    %v3294 = vpack.c.b16 %v3158, %v3150
    %v3295 = vpack.c.b16 %v3159, %v3151
    %v3296 = vpack.c.b16 %v3160, %v3152
    %v3297 = vpack.c.b16 %v3161, %v3153
    %v3298 = vpack.c.b16 %v3162, %v3154
    %v3299 = vpack.c.b16 %v3171, %v3163
    %v3300 = vpack.c.b16 %v3172, %v3164
    %v3301 = vpack.c.b16 %v3173, %v3165
    %v3302 = vpack.c.b16 %v3174, %v3166
    %v3303 = vpack.c.b16 %v3175, %v3167
    %v3304 = vpack.c.b16 %v3176, %v3168
    %v3305 = vpack.c.b16 %v3177, %v3169
    %v3306 = vpack.c.b16 %v3178, %v3170
    %3435 = vmatprep.subr.bf16.mxu0 %v3180
    %3436 = vmatpush1.bf16.msra.mxu0 %v3179
    %3437 = vmatprep.subr.bf16.mxu0 %v3188
    %3438 = vmatpush1.bf16.msra.mxu0 %v3187
    %3439 = vmatprep.subr.bf16.mxu0 %v3196
    %3440 = vmatpush1.bf16.msra.mxu0 %v3195
    %3441 = vmatprep.subr.bf16.mxu0 %v3204
    %3442 = vmatpush1.bf16.msra.mxu0 %v3203
    %3443 = vmatprep.subr.bf16.mxu0 %v3212
    %3444 = vmatpush1.bf16.msra.mxu0 %v3211
    %3445 = vmatprep.subr.bf16.mxu0 %v3220
    %3446 = vmatpush1.bf16.msra.mxu0 %v3219
    %3447 = vmatprep.subr.bf16.mxu0 %v3228
    %3448 = vmatpush1.bf16.msra.mxu0 %v3227
    %3449 = vmatprep.subr.bf16.mxu0 %v3236
    %3450 = vmatpush1.bf16.msra.mxu0 %v3235
    %3451 = vmatprep.subr.bf16.mxu0 %v3244
    %3452 = vmatpush1.bf16.msra.mxu0 %v3243
    %3453 = vmatprep.subr.bf16.mxu0 %v3252
    %3454 = vmatpush1.bf16.msra.mxu0 %v3251
    %3455 = vmatprep.subr.bf16.mxu0 %v3260
    %3456 = vmatpush1.bf16.msra.mxu0 %v3259
    %3457 = vmatprep.subr.bf16.mxu0 %v3268
    %3458 = vmatpush1.bf16.msra.mxu0 %v3267
    %3459 = vmatprep.subr.bf16.mxu0 %v3276
    %3460 = vmatpush1.bf16.msra.mxu0 %v3275
    %3461 = vmatprep.subr.bf16.mxu0 %v3284
    %3462 = vmatpush1.bf16.msra.mxu0 %v3283
    %3463 = vmatprep.subr.bf16.mxu0 %v3292
    %3464 = vmatpush1.bf16.msra.mxu0 %v3291
    %3465 = vmatprep.subr.bf16.mxu0 %v3300
    %3466 = vmatpush1.bf16.msra.mxu0 %v3299
    %3467 = vmatprep.mubr.bf16.mxu0 %v2606
    %3468 = vmatmul.mubr.bf16.gmra.mrb[0].mxu0 %v2605
    %v3469 = vpop.f32.mrb[0].mxu0
    %v3470 = vadd.f32 %v2758, %v3469
    %v3471 = vpop.f32.mrb[0].mxu0
    %v3472 = vadd.f32 %v2762, %v3471
    %v3473 = vpop.f32.mrb[0].mxu0
    %v3474 = vadd.f32 %v2758, %v3473
    %v3475 = vpop.f32.mrb[0].mxu0
    %v3476 = vadd.f32 %v2762, %v3475
    %3477 = vmatprep.mubr.bf16.mxu0 %v2612
    %3478 = vmatmul.mubr.bf16.gmra.mrb[0].mxu0 %v2611
    %v3479 = vpop.f32.mrb[0].mxu0
    %v3480 = vadd.f32 %v2758, %v3479
    %v3481 = vpop.f32.mrb[0].mxu0
    %v3482 = vadd.f32 %v2762, %v3481
    %v3483 = vpop.f32.mrb[0].mxu0
    %v3484 = vadd.f32 %v2758, %v3483
    %v3485 = vpop.f32.mrb[0].mxu0
    %v3486 = vadd.f32 %v2762, %v3485
    %3487 = vmatprep.mubr.bf16.mxu0 %v2618
    %3488 = vmatmul.mubr.bf16.gmra.mrb[0].mxu0 %v2617
    %v3489 = vpop.f32.mrb[0].mxu0
    %v3490 = vadd.f32 %v2758, %v3489
    %v3491 = vpop.f32.mrb[0].mxu0
    %v3492 = vadd.f32 %v2762, %v3491
    %v3493 = vpop.f32.mrb[0].mxu0
    %v3494 = vadd.f32 %v2758, %v3493
    %v3495 = vpop.f32.mrb[0].mxu0
    %v3496 = vadd.f32 %v2762, %v3495
    %3497 = vmatprep.mubr.bf16.mxu0 %v2624
    %3498 = vmatmul.mubr.bf16.gmra.mrb[0].mxu0 %v2623
    %v3499 = vpop.f32.mrb[0].mxu0
    %v3500 = vadd.f32 %v2758, %v3499
    %v3501 = vpop.f32.mrb[0].mxu0
    %v3502 = vadd.f32 %v2762, %v3501
    %v3503 = vpop.f32.mrb[0].mxu0
    %v3504 = vadd.f32 %v2758, %v3503
    %v3505 = vpop.f32.mrb[0].mxu0
    %v3506 = vadd.f32 %v2762, %v3505
    %3507 = vdwg.mxu0
    %3508 = vmatprep.subr.bf16.mxu0 %v3182
    %3509 = vmatpush1.bf16.msra.mxu0 %v3181
    %3510 = vmatprep.subr.bf16.mxu0 %v3190
    %3511 = vmatpush1.bf16.msra.mxu0 %v3189
    %3512 = vmatprep.subr.bf16.mxu0 %v3198
    %3513 = vmatpush1.bf16.msra.mxu0 %v3197
    %3514 = vmatprep.subr.bf16.mxu0 %v3206
    %3515 = vmatpush1.bf16.msra.mxu0 %v3205
    %3516 = vmatprep.subr.bf16.mxu0 %v3214
    %3517 = vmatpush1.bf16.msra.mxu0 %v3213
    %3518 = vmatprep.subr.bf16.mxu0 %v3222
    %3519 = vmatpush1.bf16.msra.mxu0 %v3221
    %3520 = vmatprep.subr.bf16.mxu0 %v3230
    %3521 = vmatpush1.bf16.msra.mxu0 %v3229
    %3522 = vmatprep.subr.bf16.mxu0 %v3238
    %3523 = vmatpush1.bf16.msra.mxu0 %v3237
    %3524 = vmatprep.subr.bf16.mxu0 %v3246
    %3525 = vmatpush1.bf16.msra.mxu0 %v3245
    %3526 = vmatprep.subr.bf16.mxu0 %v3254
    %3527 = vmatpush1.bf16.msra.mxu0 %v3253
    %3528 = vmatprep.subr.bf16.mxu0 %v3262
    %3529 = vmatpush1.bf16.msra.mxu0 %v3261
    %3530 = vmatprep.subr.bf16.mxu0 %v3270
    %3531 = vmatpush1.bf16.msra.mxu0 %v3269
    %3532 = vmatprep.subr.bf16.mxu0 %v3278
    %3533 = vmatpush1.bf16.msra.mxu0 %v3277
    %3534 = vmatprep.subr.bf16.mxu0 %v3286
    %3535 = vmatpush1.bf16.msra.mxu0 %v3285
    %3536 = vmatprep.subr.bf16.mxu0 %v3294
    %3537 = vmatpush1.bf16.msra.mxu0 %v3293
    %3538 = vmatprep.subr.bf16.mxu0 %v3302
    %3539 = vmatpush1.bf16.msra.mxu0 %v3301
    %3540 = vmatprep.mubr.bf16.mxu0 %v2606
    %3541 = vmatmul.mubr.bf16.gmra.mrb[0].mxu0 %v2605
    %v3542 = vpop.f32.mrb[0].mxu0
    %v3543 = vadd.f32 %v2766, %v3542
    %v3544 = vpop.f32.mrb[0].mxu0
    %v3545 = vadd.f32 %v2770, %v3544
    %v3546 = vpop.f32.mrb[0].mxu0
    %v3547 = vadd.f32 %v2766, %v3546
    %v3548 = vpop.f32.mrb[0].mxu0
    %v3549 = vadd.f32 %v2770, %v3548
    %3550 = vmatprep.mubr.bf16.mxu0 %v2612
    %3551 = vmatmul.mubr.bf16.gmra.mrb[0].mxu0 %v2611
    %v3552 = vpop.f32.mrb[0].mxu0
    %v3553 = vadd.f32 %v2766, %v3552
    %v3554 = vpop.f32.mrb[0].mxu0
    %v3555 = vadd.f32 %v2770, %v3554
    %v3556 = vpop.f32.mrb[0].mxu0
    %v3557 = vadd.f32 %v2766, %v3556
    %v3558 = vpop.f32.mrb[0].mxu0
    %v3559 = vadd.f32 %v2770, %v3558
    %3560 = vmatprep.mubr.bf16.mxu0 %v2618
    %3561 = vmatmul.mubr.bf16.gmra.mrb[0].mxu0 %v2617
    %v3562 = vpop.f32.mrb[0].mxu0
    %v3563 = vadd.f32 %v2766, %v3562
    %v3564 = vpop.f32.mrb[0].mxu0
    %v3565 = vadd.f32 %v2770, %v3564
    %v3566 = vpop.f32.mrb[0].mxu0
    %v3567 = vadd.f32 %v2766, %v3566
    %v3568 = vpop.f32.mrb[0].mxu0
    %v3569 = vadd.f32 %v2770, %v3568
    %3570 = vmatprep.mubr.bf16.mxu0 %v2624
    %3571 = vmatmul.mubr.bf16.gmra.mrb[0].mxu0 %v2623
    %v3572 = vpop.f32.mrb[0].mxu0
    %v3573 = vadd.f32 %v2766, %v3572
    %v3574 = vpop.f32.mrb[0].mxu0
    %v3575 = vadd.f32 %v2770, %v3574
    %v3576 = vpop.f32.mrb[0].mxu0
    %v3577 = vadd.f32 %v2766, %v3576
    %v3578 = vpop.f32.mrb[0].mxu0
    %v3579 = vadd.f32 %v2770, %v3578
    %3580 = vdwg.mxu0
    %3581 = vmatprep.subr.bf16.mxu0 %v3184
    %3582 = vmatpush1.bf16.msra.mxu0 %v3183
    %3583 = vmatprep.subr.bf16.mxu0 %v3192
    %3584 = vmatpush1.bf16.msra.mxu0 %v3191
    %3585 = vmatprep.subr.bf16.mxu0 %v3200
    %3586 = vmatpush1.bf16.msra.mxu0 %v3199
    %3587 = vmatprep.subr.bf16.mxu0 %v3208
    %3588 = vmatpush1.bf16.msra.mxu0 %v3207
    %3589 = vmatprep.subr.bf16.mxu0 %v3216
    %3590 = vmatpush1.bf16.msra.mxu0 %v3215
    %3591 = vmatprep.subr.bf16.mxu0 %v3224
    %3592 = vmatpush1.bf16.msra.mxu0 %v3223
    %3593 = vmatprep.subr.bf16.mxu0 %v3232
    %3594 = vmatpush1.bf16.msra.mxu0 %v3231
    %3595 = vmatprep.subr.bf16.mxu0 %v3240
    %3596 = vmatpush1.bf16.msra.mxu0 %v3239
    %3597 = vmatprep.subr.bf16.mxu0 %v3248
    %3598 = vmatpush1.bf16.msra.mxu0 %v3247
    %3599 = vmatprep.subr.bf16.mxu0 %v3256
    %3600 = vmatpush1.bf16.msra.mxu0 %v3255
    %3601 = vmatprep.subr.bf16.mxu0 %v3264
    %3602 = vmatpush1.bf16.msra.mxu0 %v3263
    %3603 = vmatprep.subr.bf16.mxu0 %v3272
    %3604 = vmatpush1.bf16.msra.mxu0 %v3271
    %3605 = vmatprep.subr.bf16.mxu0 %v3280
    %3606 = vmatpush1.bf16.msra.mxu0 %v3279
    %3607 = vmatprep.subr.bf16.mxu0 %v3288
    %3608 = vmatpush1.bf16.msra.mxu0 %v3287
    %3609 = vmatprep.subr.bf16.mxu0 %v3296
    %3610 = vmatpush1.bf16.msra.mxu0 %v3295
    %3611 = vmatprep.subr.bf16.mxu0 %v3304
    %3612 = vmatpush1.bf16.msra.mxu0 %v3303
    %3613 = vmatprep.mubr.bf16.mxu0 %v2606
    %3614 = vmatmul.mubr.bf16.gmra.mrb[0].mxu0 %v2605
    %v3615 = vpop.f32.mrb[0].mxu0
    %v3616 = vadd.f32 %v2774, %v3615
    %v3617 = vpop.f32.mrb[0].mxu0
    %v3618 = vadd.f32 %v2778, %v3617
    %v3619 = vpop.f32.mrb[0].mxu0
    %v3620 = vadd.f32 %v2774, %v3619
    %v3621 = vpop.f32.mrb[0].mxu0
    %v3622 = vadd.f32 %v2778, %v3621
    %3623 = vmatprep.mubr.bf16.mxu0 %v2612
    %3624 = vmatmul.mubr.bf16.gmra.mrb[0].mxu0 %v2611
    %v3625 = vpop.f32.mrb[0].mxu0
    %v3626 = vadd.f32 %v2774, %v3625
    %v3627 = vpop.f32.mrb[0].mxu0
    %v3628 = vadd.f32 %v2778, %v3627
    %v3629 = vpop.f32.mrb[0].mxu0
    %v3630 = vadd.f32 %v2774, %v3629
    %v3631 = vpop.f32.mrb[0].mxu0
    %v3632 = vadd.f32 %v2778, %v3631
    %3633 = vmatprep.mubr.bf16.mxu0 %v2618
    %3634 = vmatmul.mubr.bf16.gmra.mrb[0].mxu0 %v2617
    %v3635 = vpop.f32.mrb[0].mxu0
    %v3636 = vadd.f32 %v2774, %v3635
    %v3637 = vpop.f32.mrb[0].mxu0
    %v3638 = vadd.f32 %v2778, %v3637
    %v3639 = vpop.f32.mrb[0].mxu0
    %v3640 = vadd.f32 %v2774, %v3639
    %v3641 = vpop.f32.mrb[0].mxu0
    %v3642 = vadd.f32 %v2778, %v3641
    %3643 = vmatprep.mubr.bf16.mxu0 %v2624
    %3644 = vmatmul.mubr.bf16.gmra.mrb[0].mxu0 %v2623
    %v3645 = vpop.f32.mrb[0].mxu0
    %v3646 = vadd.f32 %v2774, %v3645
    %v3647 = vpop.f32.mrb[0].mxu0
    %v3648 = vadd.f32 %v2778, %v3647
    %v3649 = vpop.f32.mrb[0].mxu0
    %v3650 = vadd.f32 %v2774, %v3649
    %v3651 = vpop.f32.mrb[0].mxu0
    %v3652 = vadd.f32 %v2778, %v3651
    %3653 = vdwg.mxu0
    %3654 = vmatprep.subr.bf16.mxu0 %v3186
    %3655 = vmatpush1.bf16.msra.mxu0 %v3185
    %3656 = vmatprep.subr.bf16.mxu0 %v3194
    %3657 = vmatpush1.bf16.msra.mxu0 %v3193
    %3658 = vmatprep.subr.bf16.mxu0 %v3202
    %3659 = vmatpush1.bf16.msra.mxu0 %v3201
    %3660 = vmatprep.subr.bf16.mxu0 %v3210
    %3661 = vmatpush1.bf16.msra.mxu0 %v3209
    %3662 = vmatprep.subr.bf16.mxu0 %v3218
    %3663 = vmatpush1.bf16.msra.mxu0 %v3217
    %3664 = vmatprep.subr.bf16.mxu0 %v3226
    %3665 = vmatpush1.bf16.msra.mxu0 %v3225
    %3666 = vmatprep.subr.bf16.mxu0 %v3234
    %3667 = vmatpush1.bf16.msra.mxu0 %v3233
    %3668 = vmatprep.subr.bf16.mxu0 %v3242
    %3669 = vmatpush1.bf16.msra.mxu0 %v3241
    %3670 = vmatprep.subr.bf16.mxu0 %v3250
    %3671 = vmatpush1.bf16.msra.mxu0 %v3249
    %3672 = vmatprep.subr.bf16.mxu0 %v3258
    %3673 = vmatpush1.bf16.msra.mxu0 %v3257
    %3674 = vmatprep.subr.bf16.mxu0 %v3266
    %3675 = vmatpush1.bf16.msra.mxu0 %v3265
    %3676 = vmatprep.subr.bf16.mxu0 %v3274
    %3677 = vmatpush1.bf16.msra.mxu0 %v3273
    %3678 = vmatprep.subr.bf16.mxu0 %v3282
    %3679 = vmatpush1.bf16.msra.mxu0 %v3281
    %3680 = vmatprep.subr.bf16.mxu0 %v3290
    %3681 = vmatpush1.bf16.msra.mxu0 %v3289
    %3682 = vmatprep.subr.bf16.mxu0 %v3298
    %3683 = vmatpush1.bf16.msra.mxu0 %v3297
    %3684 = vmatprep.subr.bf16.mxu0 %v3306
    %3685 = vmatpush1.bf16.msra.mxu0 %v3305
    %3686 = vmatprep.mubr.bf16.mxu0 %v2606
    %3687 = vmatmul.mubr.bf16.gmra.mrb[0].mxu0 %v2605
    %v3688 = vpop.f32.mrb[0].mxu0
    %v3689 = vadd.f32 %v2782, %v3688
    %v3690 = vpop.f32.mrb[0].mxu0
    %v3691 = vadd.f32 %v2786, %v3690
    %v3692 = vpop.f32.mrb[0].mxu0
    %v3693 = vadd.f32 %v2782, %v3692
    %v3694 = vpop.f32.mrb[0].mxu0
    %v3695 = vadd.f32 %v2786, %v3694
    %3696 = vmatprep.mubr.bf16.mxu0 %v2612
    %3697 = vmatmul.mubr.bf16.gmra.mrb[0].mxu0 %v2611
    %v3698 = vpop.f32.mrb[0].mxu0
    %v3699 = vadd.f32 %v2782, %v3698
    %v3700 = vpop.f32.mrb[0].mxu0
    %v3701 = vadd.f32 %v2786, %v3700
    %v3702 = vpop.f32.mrb[0].mxu0
    %v3703 = vadd.f32 %v2782, %v3702
    %v3704 = vpop.f32.mrb[0].mxu0
    %v3705 = vadd.f32 %v2786, %v3704
    %3706 = vmatprep.mubr.bf16.mxu0 %v2618
    %3707 = vmatmul.mubr.bf16.gmra.mrb[0].mxu0 %v2617
    %v3708 = vpop.f32.mrb[0].mxu0
    %v3709 = vadd.f32 %v2782, %v3708
    %v3710 = vpop.f32.mrb[0].mxu0
    %v3711 = vadd.f32 %v2786, %v3710
    %v3712 = vpop.f32.mrb[0].mxu0
    %v3713 = vadd.f32 %v2782, %v3712
    %v3714 = vpop.f32.mrb[0].mxu0
    %v3715 = vadd.f32 %v2786, %v3714
    %3716 = vmatprep.mubr.bf16.mxu0 %v2624
    %3717 = vmatmul.mubr.bf16.gmra.mrb[0].mxu0 %v2623
    %v3718 = vpop.f32.mrb[0].mxu0
    %v3719 = vadd.f32 %v2782, %v3718
    %v3720 = vpop.f32.mrb[0].mxu0
    %v3721 = vadd.f32 %v2786, %v3720
    %v3722 = vpop.f32.mrb[0].mxu0
    %v3723 = vadd.f32 %v2782, %v3722
    %v3724 = vpop.f32.mrb[0].mxu0
    %v3725 = vadd.f32 %v2786, %v3724
    %3726 = vdwg.mxu0
    %v3727 = vld [vmem:[#allocation24] sm:$0xff]
    %v3728 = vld [vmem:[#allocation24 + $0x8] sm:$0xff]
    %v3729 = vld [vmem:[#allocation24 + $0x10] sm:$0xff]
    %v3730 = vld [vmem:[#allocation24 + $0x18] sm:$0xff]
    %v3731 = vld [vmem:[#allocation24 + $0x20] sm:$0xff]
    %v3732 = vld [vmem:[#allocation24 + $0x28] sm:$0xff]
    %v3733 = vld [vmem:[#allocation24 + $0x30] sm:$0xff]
    %v3734 = vld [vmem:[#allocation24 + $0x38] sm:$0xff]
    %v3735 = vld [vmem:[#allocation24 + $0x40] sm:$0xff]
    %v3736 = vld [vmem:[#allocation24 + $0x48] sm:$0xff]
    %v3737 = vld [vmem:[#allocation24 + $0x50] sm:$0xff]
    %v3738 = vld [vmem:[#allocation24 + $0x58] sm:$0xff]
    %v3739 = vld [vmem:[#allocation24 + $0x60] sm:$0xff]
    %v3740 = vld [vmem:[#allocation24 + $0x68] sm:$0xff]
    %v3741 = vld [vmem:[#allocation24 + $0x70] sm:$0xff]
    %v3742 = vld [vmem:[#allocation24 + $0x78] sm:$0xff]
    %v3743 = vld [vmem:[#allocation24 + $0x80] sm:$0xff]
    %v3744 = vld [vmem:[#allocation24 + $0x88] sm:$0xff]
    %v3745 = vld [vmem:[#allocation24 + $0x90] sm:$0xff]
    %v3746 = vld [vmem:[#allocation24 + $0x98] sm:$0xff]
    %v3747 = vld [vmem:[#allocation24 + $0xa0] sm:$0xff]
    %v3748 = vld [vmem:[#allocation24 + $0xa8] sm:$0xff]
    %v3749 = vld [vmem:[#allocation24 + $0xb0] sm:$0xff]
    %v3750 = vld [vmem:[#allocation24 + $0xb8] sm:$0xff]
    %v3751 = vld [vmem:[#allocation24 + $0xc0] sm:$0xff]
    %v3752 = vld [vmem:[#allocation24 + $0xc8] sm:$0xff]
    %v3753 = vld [vmem:[#allocation24 + $0xd0] sm:$0xff]
    %v3754 = vld [vmem:[#allocation24 + $0xd8] sm:$0xff]
    %v3755 = vld [vmem:[#allocation24 + $0xe0] sm:$0xff]
    %v3756 = vld [vmem:[#allocation24 + $0xe8] sm:$0xff]
    %v3757 = vld [vmem:[#allocation24 + $0xf0] sm:$0xff]
    %v3758 = vld [vmem:[#allocation24 + $0xf8] sm:$0xff]
    %s3759 = scalar_lea.vmem [#allocation24], 256
    %v3760 = vld [vmem:[%s3759] sm:$0xff]
    %v3761 = vld [vmem:[%s3759 + $0x8] sm:$0xff]
    %v3762 = vld [vmem:[%s3759 + $0x10] sm:$0xff]
    %v3763 = vld [vmem:[%s3759 + $0x18] sm:$0xff]
    %v3764 = vld [vmem:[%s3759 + $0x20] sm:$0xff]
    %v3765 = vld [vmem:[%s3759 + $0x28] sm:$0xff]
    %v3766 = vld [vmem:[%s3759 + $0x30] sm:$0xff]
    %v3767 = vld [vmem:[%s3759 + $0x38] sm:$0xff]
    %v3768 = vld [vmem:[%s3759 + $0x40] sm:$0xff]
    %v3769 = vld [vmem:[%s3759 + $0x48] sm:$0xff]
    %v3770 = vld [vmem:[%s3759 + $0x50] sm:$0xff]
    %v3771 = vld [vmem:[%s3759 + $0x58] sm:$0xff]
    %v3772 = vld [vmem:[%s3759 + $0x60] sm:$0xff]
    %v3773 = vld [vmem:[%s3759 + $0x68] sm:$0xff]
    %v3774 = vld [vmem:[%s3759 + $0x70] sm:$0xff]
    %v3775 = vld [vmem:[%s3759 + $0x78] sm:$0xff]
    %v3776 = vld [vmem:[%s3759 + $0x80] sm:$0xff]
    %v3777 = vld [vmem:[%s3759 + $0x88] sm:$0xff]
    %v3778 = vld [vmem:[%s3759 + $0x90] sm:$0xff]
    %v3779 = vld [vmem:[%s3759 + $0x98] sm:$0xff]
    %v3780 = vld [vmem:[%s3759 + $0xa0] sm:$0xff]
    %v3781 = vld [vmem:[%s3759 + $0xa8] sm:$0xff]
    %v3782 = vld [vmem:[%s3759 + $0xb0] sm:$0xff]
    %v3783 = vld [vmem:[%s3759 + $0xb8] sm:$0xff]
    %v3784 = vld [vmem:[%s3759 + $0xc0] sm:$0xff]
    %v3785 = vld [vmem:[%s3759 + $0xc8] sm:$0xff]
    %v3786 = vld [vmem:[%s3759 + $0xd0] sm:$0xff]
    %v3787 = vld [vmem:[%s3759 + $0xd8] sm:$0xff]
    %v3788 = vld [vmem:[%s3759 + $0xe0] sm:$0xff]
    %v3789 = vld [vmem:[%s3759 + $0xe8] sm:$0xff]
    %v3790 = vld [vmem:[%s3759 + $0xf0] sm:$0xff]
    %v3791 = vld [vmem:[%s3759 + $0xf8] sm:$0xff]
    %s3792 = scalar_lea.vmem [#allocation24], 512
    %v3793 = vld [vmem:[%s3792] sm:$0xff]
    %v3794 = vld [vmem:[%s3792 + $0x8] sm:$0xff]
    %v3795 = vld [vmem:[%s3792 + $0x10] sm:$0xff]
    %v3796 = vld [vmem:[%s3792 + $0x18] sm:$0xff]
    %v3797 = vld [vmem:[%s3792 + $0x20] sm:$0xff]
    %v3798 = vld [vmem:[%s3792 + $0x28] sm:$0xff]
    %v3799 = vld [vmem:[%s3792 + $0x30] sm:$0xff]
    %v3800 = vld [vmem:[%s3792 + $0x38] sm:$0xff]
    %v3801 = vld [vmem:[%s3792 + $0x40] sm:$0xff]
    %v3802 = vld [vmem:[%s3792 + $0x48] sm:$0xff]
    %v3803 = vld [vmem:[%s3792 + $0x50] sm:$0xff]
    %v3804 = vld [vmem:[%s3792 + $0x58] sm:$0xff]
    %v3805 = vld [vmem:[%s3792 + $0x60] sm:$0xff]
    %v3806 = vld [vmem:[%s3792 + $0x68] sm:$0xff]
    %v3807 = vld [vmem:[%s3792 + $0x70] sm:$0xff]
    %v3808 = vld [vmem:[%s3792 + $0x78] sm:$0xff]
    %v3809 = vld [vmem:[%s3792 + $0x80] sm:$0xff]
    %v3810 = vld [vmem:[%s3792 + $0x88] sm:$0xff]
    %v3811 = vld [vmem:[%s3792 + $0x90] sm:$0xff]
    %v3812 = vld [vmem:[%s3792 + $0x98] sm:$0xff]
    %v3813 = vld [vmem:[%s3792 + $0xa0] sm:$0xff]
    %v3814 = vld [vmem:[%s3792 + $0xa8] sm:$0xff]
    %v3815 = vld [vmem:[%s3792 + $0xb0] sm:$0xff]
    %v3816 = vld [vmem:[%s3792 + $0xb8] sm:$0xff]
    %v3817 = vld [vmem:[%s3792 + $0xc0] sm:$0xff]
    %v3818 = vld [vmem:[%s3792 + $0xc8] sm:$0xff]
    %v3819 = vld [vmem:[%s3792 + $0xd0] sm:$0xff]
    %v3820 = vld [vmem:[%s3792 + $0xd8] sm:$0xff]
    %v3821 = vld [vmem:[%s3792 + $0xe0] sm:$0xff]
    %v3822 = vld [vmem:[%s3792 + $0xe8] sm:$0xff]
    %v3823 = vld [vmem:[%s3792 + $0xf0] sm:$0xff]
    %v3824 = vld [vmem:[%s3792 + $0xf8] sm:$0xff]
    %s3825 = scalar_lea.vmem [#allocation24], 768
    %v3826 = vld [vmem:[%s3825] sm:$0xff]
    %v3827 = vld [vmem:[%s3825 + $0x8] sm:$0xff]
    %v3828 = vld [vmem:[%s3825 + $0x10] sm:$0xff]
    %v3829 = vld [vmem:[%s3825 + $0x18] sm:$0xff]
    %v3830 = vld [vmem:[%s3825 + $0x20] sm:$0xff]
    %v3831 = vld [vmem:[%s3825 + $0x28] sm:$0xff]
    %v3832 = vld [vmem:[%s3825 + $0x30] sm:$0xff]
    %v3833 = vld [vmem:[%s3825 + $0x38] sm:$0xff]
    %v3834 = vld [vmem:[%s3825 + $0x40] sm:$0xff]
    %v3835 = vld [vmem:[%s3825 + $0x48] sm:$0xff]
    %v3836 = vld [vmem:[%s3825 + $0x50] sm:$0xff]
    %v3837 = vld [vmem:[%s3825 + $0x58] sm:$0xff]
    %v3838 = vld [vmem:[%s3825 + $0x60] sm:$0xff]
    %v3839 = vld [vmem:[%s3825 + $0x68] sm:$0xff]
    %v3840 = vld [vmem:[%s3825 + $0x70] sm:$0xff]
    %v3841 = vld [vmem:[%s3825 + $0x78] sm:$0xff]
    %v3842 = vld [vmem:[%s3825 + $0x80] sm:$0xff]
    %v3843 = vld [vmem:[%s3825 + $0x88] sm:$0xff]
    %v3844 = vld [vmem:[%s3825 + $0x90] sm:$0xff]
    %v3845 = vld [vmem:[%s3825 + $0x98] sm:$0xff]
    %v3846 = vld [vmem:[%s3825 + $0xa0] sm:$0xff]
    %v3847 = vld [vmem:[%s3825 + $0xa8] sm:$0xff]
    %v3848 = vld [vmem:[%s3825 + $0xb0] sm:$0xff]
    %v3849 = vld [vmem:[%s3825 + $0xb8] sm:$0xff]
    %v3850 = vld [vmem:[%s3825 + $0xc0] sm:$0xff]
    %v3851 = vld [vmem:[%s3825 + $0xc8] sm:$0xff]
    %v3852 = vld [vmem:[%s3825 + $0xd0] sm:$0xff]
    %v3853 = vld [vmem:[%s3825 + $0xd8] sm:$0xff]
    %v3854 = vld [vmem:[%s3825 + $0xe0] sm:$0xff]
    %v3855 = vld [vmem:[%s3825 + $0xe8] sm:$0xff]
    %v3856 = vld [vmem:[%s3825 + $0xf0] sm:$0xff]
    %v3857 = vld [vmem:[%s3825 + $0xf8] sm:$0xff]
    %v3890 = vunpack.c.l.b16 %v3727
    %v3891 = vunpack.c.h.b16 %v3727
    %v3892 = vunpack.c.l.b16 %v3728
    %v3893 = vunpack.c.h.b16 %v3728
    %v3894 = vunpack.c.l.b16 %v3729
    %v3895 = vunpack.c.h.b16 %v3729
    %v3896 = vunpack.c.l.b16 %v3730
    %v3897 = vunpack.c.h.b16 %v3730
    %v3898 = vunpack.c.l.b16 %v3731
    %v3899 = vunpack.c.h.b16 %v3731
    %v3900 = vunpack.c.l.b16 %v3732
    %v3901 = vunpack.c.h.b16 %v3732
    %v3902 = vunpack.c.l.b16 %v3733
    %v3903 = vunpack.c.h.b16 %v3733
    %v3904 = vunpack.c.l.b16 %v3734
    %v3905 = vunpack.c.h.b16 %v3734
    %v3906 = vunpack.c.l.b16 %v3735
    %v3907 = vunpack.c.h.b16 %v3735
    %v3908 = vunpack.c.l.b16 %v3736
    %v3909 = vunpack.c.h.b16 %v3736
    %v3910 = vunpack.c.l.b16 %v3737
    %v3911 = vunpack.c.h.b16 %v3737
    %v3912 = vunpack.c.l.b16 %v3738
    %v3913 = vunpack.c.h.b16 %v3738
    %v3914 = vunpack.c.l.b16 %v3739
    %v3915 = vunpack.c.h.b16 %v3739
    %v3916 = vunpack.c.l.b16 %v3740
    %v3917 = vunpack.c.h.b16 %v3740
    %v3918 = vunpack.c.l.b16 %v3741
    %v3919 = vunpack.c.h.b16 %v3741
    %v3920 = vunpack.c.l.b16 %v3742
    %v3921 = vunpack.c.h.b16 %v3742
    %v3922 = vunpack.c.l.b16 %v3743
    %v3923 = vunpack.c.h.b16 %v3743
    %v3924 = vunpack.c.l.b16 %v3744
    %v3925 = vunpack.c.h.b16 %v3744
    %v3926 = vunpack.c.l.b16 %v3745
    %v3927 = vunpack.c.h.b16 %v3745
    %v3928 = vunpack.c.l.b16 %v3746
    %v3929 = vunpack.c.h.b16 %v3746
    %v3930 = vunpack.c.l.b16 %v3747
    %v3931 = vunpack.c.h.b16 %v3747
    %v3932 = vunpack.c.l.b16 %v3748
    %v3933 = vunpack.c.h.b16 %v3748
    %v3934 = vunpack.c.l.b16 %v3749
    %v3935 = vunpack.c.h.b16 %v3749
    %v3936 = vunpack.c.l.b16 %v3750
    %v3937 = vunpack.c.h.b16 %v3750
    %v3938 = vunpack.c.l.b16 %v3751
    %v3939 = vunpack.c.h.b16 %v3751
    %v3940 = vunpack.c.l.b16 %v3752
    %v3941 = vunpack.c.h.b16 %v3752
    %v3942 = vunpack.c.l.b16 %v3753
    %v3943 = vunpack.c.h.b16 %v3753
    %v3944 = vunpack.c.l.b16 %v3754
    %v3945 = vunpack.c.h.b16 %v3754
    %v3946 = vunpack.c.l.b16 %v3755
    %v3947 = vunpack.c.h.b16 %v3755
    %v3948 = vunpack.c.l.b16 %v3756
    %v3949 = vunpack.c.h.b16 %v3756
    %v3950 = vunpack.c.l.b16 %v3757
    %v3951 = vunpack.c.h.b16 %v3757
    %v3952 = vunpack.c.l.b16 %v3758
    %v3953 = vunpack.c.h.b16 %v3758
    %v3954 = vpack.c.b16 %v3894, %v3890
    %v3955 = vpack.c.b16 %v3895, %v3891
    %v3956 = vpack.c.b16 %v3896, %v3892
    %v3957 = vpack.c.b16 %v3897, %v3893
    %v3958 = vpack.c.b16 %v3902, %v3898
    %v3959 = vpack.c.b16 %v3903, %v3899
    %v3960 = vpack.c.b16 %v3904, %v3900
    %v3961 = vpack.c.b16 %v3905, %v3901
    %v3962 = vpack.c.b16 %v3910, %v3906
    %v3963 = vpack.c.b16 %v3911, %v3907
    %v3964 = vpack.c.b16 %v3912, %v3908
    %v3965 = vpack.c.b16 %v3913, %v3909
    %v3966 = vpack.c.b16 %v3918, %v3914
    %v3967 = vpack.c.b16 %v3919, %v3915
    %v3968 = vpack.c.b16 %v3920, %v3916
    %v3969 = vpack.c.b16 %v3921, %v3917
    %v3970 = vpack.c.b16 %v3926, %v3922
    %v3971 = vpack.c.b16 %v3927, %v3923
    %v3972 = vpack.c.b16 %v3928, %v3924
    %v3973 = vpack.c.b16 %v3929, %v3925
    %v3974 = vpack.c.b16 %v3934, %v3930
    %v3975 = vpack.c.b16 %v3935, %v3931
    %v3976 = vpack.c.b16 %v3936, %v3932
    %v3977 = vpack.c.b16 %v3937, %v3933
    %v3978 = vpack.c.b16 %v3942, %v3938
    %v3979 = vpack.c.b16 %v3943, %v3939
    %v3980 = vpack.c.b16 %v3944, %v3940
    %v3981 = vpack.c.b16 %v3945, %v3941
    %v3982 = vpack.c.b16 %v3950, %v3946
    %v3983 = vpack.c.b16 %v3951, %v3947
    %v3984 = vpack.c.b16 %v3952, %v3948
    %v3985 = vpack.c.b16 %v3953, %v3949
    %4018 = vmatprep.subr.bf16.mxu0 %v3955
    %4019 = vmatpush1.bf16.msra.mxu0 %v3954
    %4020 = vmatprep.subr.bf16.mxu0 %v3959
    %4021 = vmatpush1.bf16.msra.mxu0 %v3958
    %4022 = vmatprep.subr.bf16.mxu0 %v3963
    %4023 = vmatpush1.bf16.msra.mxu0 %v3962
    %4024 = vmatprep.subr.bf16.mxu0 %v3967
    %4025 = vmatpush1.bf16.msra.mxu0 %v3966
    %4026 = vmatprep.subr.bf16.mxu0 %v3971
    %4027 = vmatpush1.bf16.msra.mxu0 %v3970
    %4028 = vmatprep.subr.bf16.mxu0 %v3975
    %4029 = vmatpush1.bf16.msra.mxu0 %v3974
    %4030 = vmatprep.subr.bf16.mxu0 %v3979
    %4031 = vmatpush1.bf16.msra.mxu0 %v3978
    %4032 = vmatprep.subr.bf16.mxu0 %v3983
    %4033 = vmatpush1.bf16.msra.mxu0 %v3982
    %4034 = vmatprep.subr.bf16.mxu0 0
    %4035 = vmatpush1.bf16.msra.mxu0 0
    %4036 = vmatprep.subr.bf16.mxu0 0
    %4037 = vmatpush1.bf16.msra.mxu0 0
    %4038 = vmatprep.subr.bf16.mxu0 0
    %4039 = vmatpush1.bf16.msra.mxu0 0
    %4040 = vmatprep.subr.bf16.mxu0 0
    %4041 = vmatpush1.bf16.msra.mxu0 0
    %4042 = vmatprep.subr.bf16.mxu0 0
    %4043 = vmatpush1.bf16.msra.mxu0 0
    %4044 = vmatprep.subr.bf16.mxu0 0
    %4045 = vmatpush1.bf16.msra.mxu0 0
    %4046 = vmatprep.subr.bf16.mxu0 0
    %4047 = vmatpush1.bf16.msra.mxu0 0
    %4048 = vmatprep.subr.bf16.mxu0 0
    %4049 = vmatpush1.bf16.msra.mxu0 0
    %4050 = vmatprep.mubr.bf16.mxu0 0
    %4051 = vmatmul.mubr.bf16.gmra.mrb[0].mxu0 0
    %v4052 = vpop.f32.mrb[0].mxu0
    %v4053 = vadd.f32 0.0, %v4052
    %v4054 = vpop.f32.mrb[0].mxu0
    %v4055 = vadd.f32 0.0, %v4054
    %v4056 = vpop.f32.mrb[0].mxu0
    %v4057 = vadd.f32 0.0, %v4056
    %v4058 = vpop.f32.mrb[0].mxu0
    %v4059 = vadd.f32 0.0, %v4058
    %4060 = vdwg.mxu0
    %4061 = vmatprep.subr.bf16.mxu0 %v3957
    %4062 = vmatpush1.bf16.msra.mxu0 %v3956
    %4063 = vmatprep.subr.bf16.mxu0 %v3961
    %4064 = vmatpush1.bf16.msra.mxu0 %v3960
    %4065 = vmatprep.subr.bf16.mxu0 %v3965
    %4066 = vmatpush1.bf16.msra.mxu0 %v3964
    %4067 = vmatprep.subr.bf16.mxu0 %v3969
    %4068 = vmatpush1.bf16.msra.mxu0 %v3968
    %4069 = vmatprep.subr.bf16.mxu0 %v3973
    %4070 = vmatpush1.bf16.msra.mxu0 %v3972
    %4071 = vmatprep.subr.bf16.mxu0 %v3977
    %4072 = vmatpush1.bf16.msra.mxu0 %v3976
    %4073 = vmatprep.subr.bf16.mxu0 %v3981
    %4074 = vmatpush1.bf16.msra.mxu0 %v3980
    %4075 = vmatprep.subr.bf16.mxu0 %v3985
    %4076 = vmatpush1.bf16.msra.mxu0 %v3984
    %4077 = vmatprep.subr.bf16.mxu0 0
    %4078 = vmatpush1.bf16.msra.mxu0 0
    %4079 = vmatprep.subr.bf16.mxu0 0
    %4080 = vmatpush1.bf16.msra.mxu0 0
    %4081 = vmatprep.subr.bf16.mxu0 0
    %4082 = vmatpush1.bf16.msra.mxu0 0
    %4083 = vmatprep.subr.bf16.mxu0 0
    %4084 = vmatpush1.bf16.msra.mxu0 0
    %4085 = vmatprep.subr.bf16.mxu0 0
    %4086 = vmatpush1.bf16.msra.mxu0 0
    %4087 = vmatprep.subr.bf16.mxu0 0
    %4088 = vmatpush1.bf16.msra.mxu0 0
    %4089 = vmatprep.subr.bf16.mxu0 0
    %4090 = vmatpush1.bf16.msra.mxu0 0
    %4091 = vmatprep.subr.bf16.mxu0 0
    %4092 = vmatpush1.bf16.msra.mxu0 0
    %4093 = vmatprep.mubr.bf16.mxu0 0
    %4094 = vmatmul.mubr.bf16.gmra.mrb[0].mxu0 0
    %v4095 = vpop.f32.mrb[0].mxu0
    %v4096 = vadd.f32 0.0, %v4095
    %v4097 = vpop.f32.mrb[0].mxu0
    %v4098 = vadd.f32 0.0, %v4097
    %v4099 = vpop.f32.mrb[0].mxu0
    %v4100 = vadd.f32 0.0, %v4099
    %v4101 = vpop.f32.mrb[0].mxu0
    %v4102 = vadd.f32 0.0, %v4101
    %4103 = vdwg.mxu0
    %v4104 = vadd.f32 %v3470, %v4053
    %v4105 = vadd.f32 %v3472, %v4055
    %v4106 = vadd.f32 %v3543, %v4096
    %v4107 = vadd.f32 %v3545, %v4098
    %v4108 = vadd.f32 %v3474, %v4057
    %v4109 = vadd.f32 %v3476, %v4059
    %v4110 = vadd.f32 %v3547, %v4100
    %v4111 = vadd.f32 %v3549, %v4102
    %v4112 = vsub.f32 0.0, %v4104
    %v4113 = vsub.f32 0.0, %v4105
    %v4114 = vsub.f32 0.0, %v4106
    %v4115 = vsub.f32 0.0, %v4108
    %v4116 = vsub.f32 0.0, %v4109
    %v4117 = vsub.f32 0.0, %v4110
    %v4118 = vmul.f32 %v4112, 1.442695
    %v4119 = vpow.pop %v4118
    %v4120 = vmul.f32 %v4113, 1.442695
    %v4121 = vpow.pop %v4120
    %v4122 = vmul.f32 %v4114, 1.442695
    %v4123 = vpow.pop %v4122
    %v4124 = vmul.f32 %v4115, 1.442695
    %v4125 = vpow.pop %v4124
    %v4126 = vmul.f32 %v4116, 1.442695
    %v4127 = vpow.pop %v4126
    %v4128 = vmul.f32 %v4117, 1.442695
    %v4129 = vpow.pop %v4128
    %v4130 = vadd.f32 %v4119, 1.0
    %v4131 = vadd.f32 %v4121, 1.0
    %v4132 = vadd.f32 %v4123, 1.0
    %v4133 = vadd.f32 %v4125, 1.0
    %v4134 = vadd.f32 %v4127, 1.0
    %v4135 = vadd.f32 %v4129, 1.0
    %v4136 = vrcp.pop %v4130
    %v4137 = vmul.f32 1.0, %v4136
    %v4138 = vrcp.pop %v4131
    %v4139 = vmul.f32 1.0, %v4138
    %v4140 = vrcp.pop %v4132
    %v4141 = vmul.f32 1.0, %v4140
    %v4142 = vrcp.pop %v4133
    %v4143 = vmul.f32 1.0, %v4142
    %v4144 = vrcp.pop %v4134
    %v4145 = vmul.f32 1.0, %v4144
    %v4146 = vrcp.pop %v4135
    %v4147 = vmul.f32 1.0, %v4146
    %v4148 = vtanh.pop %v4107
    %v4149 = vtanh.pop %v4111
    %v4150 = vmul.f32 %v4139, 0.0
    %v4151 = vmul.f32 %v4145, 0.0
    %v4152 = vmul.f32 %v4137, %v4148
    %v4153 = vmul.f32 %v4143, %v4149
    %v4154 = vadd.f32 %v4150, %v4152
    %v4155 = vadd.f32 %v4151, %v4153
    %v4156 = vtanh.pop %v4154
    %v4157 = vtanh.pop %v4155
    %v4158 = vmul.f32 %v4141, %v4156
    %v4159 = vmul.f32 %v4147, %v4157
    %v4160 = vpack.c.bf16 %v4159, %v4158
    %4161 = vmatprep.subr.bf16.mxu0 %v3955
    %4162 = vmatpush1.bf16.msra.mxu0 %v3954
    %4163 = vmatprep.subr.bf16.mxu0 %v3959
    %4164 = vmatpush1.bf16.msra.mxu0 %v3958
    %4165 = vmatprep.subr.bf16.mxu0 %v3963
    %4166 = vmatpush1.bf16.msra.mxu0 %v3962
    %4167 = vmatprep.subr.bf16.mxu0 %v3967
    %4168 = vmatpush1.bf16.msra.mxu0 %v3966
    %4169 = vmatprep.subr.bf16.mxu0 %v3971
    %4170 = vmatpush1.bf16.msra.mxu0 %v3970
    %4171 = vmatprep.subr.bf16.mxu0 %v3975
    %4172 = vmatpush1.bf16.msra.mxu0 %v3974
    %4173 = vmatprep.subr.bf16.mxu0 %v3979
    %4174 = vmatpush1.bf16.msra.mxu0 %v3978
    %4175 = vmatprep.subr.bf16.mxu0 %v3983
    %4176 = vmatpush1.bf16.msra.mxu0 %v3982
    %4177 = vmatprep.subr.bf16.mxu0 0
    %4178 = vmatpush1.bf16.msra.mxu0 0
    %4179 = vmatprep.subr.bf16.mxu0 0
    %4180 = vmatpush1.bf16.msra.mxu0 0
    %4181 = vmatprep.subr.bf16.mxu0 0
    %4182 = vmatpush1.bf16.msra.mxu0 0
    %4183 = vmatprep.subr.bf16.mxu0 0
    %4184 = vmatpush1.bf16.msra.mxu0 0
    %4185 = vmatprep.subr.bf16.mxu0 0
    %4186 = vmatpush1.bf16.msra.mxu0 0
    %4187 = vmatprep.subr.bf16.mxu0 0
    %4188 = vmatpush1.bf16.msra.mxu0 0
    %4189 = vmatprep.subr.bf16.mxu0 0
    %4190 = vmatpush1.bf16.msra.mxu0 0
    %4191 = vmatprep.subr.bf16.mxu0 0
    %4192 = vmatpush1.bf16.msra.mxu0 0
    %4193 = vmatprep.mubr.bf16.mxu0 0
    %4194 = vmatmul.mubr.bf16.gmra.mrb[0].mxu0 %v4160
    %v4195 = vpop.f32.mrb[0].mxu0
    %v4196 = vadd.f32 0.0, %v4195
    %v4197 = vpop.f32.mrb[0].mxu0
    %v4198 = vadd.f32 0.0, %v4197
    %v4199 = vpop.f32.mrb[0].mxu0
    %v4200 = vadd.f32 0.0, %v4199
    %v4201 = vpop.f32.mrb[0].mxu0
    %v4202 = vadd.f32 0.0, %v4201
    %4203 = vdwg.mxu0
    %4204 = vmatprep.subr.bf16.mxu0 %v3957
    %4205 = vmatpush1.bf16.msra.mxu0 %v3956
    %4206 = vmatprep.subr.bf16.mxu0 %v3961
    %4207 = vmatpush1.bf16.msra.mxu0 %v3960
    %4208 = vmatprep.subr.bf16.mxu0 %v3965
    %4209 = vmatpush1.bf16.msra.mxu0 %v3964
    %4210 = vmatprep.subr.bf16.mxu0 %v3969
    %4211 = vmatpush1.bf16.msra.mxu0 %v3968
    %4212 = vmatprep.subr.bf16.mxu0 %v3973
    %4213 = vmatpush1.bf16.msra.mxu0 %v3972
    %4214 = vmatprep.subr.bf16.mxu0 %v3977
    %4215 = vmatpush1.bf16.msra.mxu0 %v3976
    %4216 = vmatprep.subr.bf16.mxu0 %v3981
    %4217 = vmatpush1.bf16.msra.mxu0 %v3980
    %4218 = vmatprep.subr.bf16.mxu0 %v3985
    %4219 = vmatpush1.bf16.msra.mxu0 %v3984
    %4220 = vmatprep.subr.bf16.mxu0 0
    %4221 = vmatpush1.bf16.msra.mxu0 0
    %4222 = vmatprep.subr.bf16.mxu0 0
    %4223 = vmatpush1.bf16.msra.mxu0 0
    %4224 = vmatprep.subr.bf16.mxu0 0
    %4225 = vmatpush1.bf16.msra.mxu0 0
    %4226 = vmatprep.subr.bf16.mxu0 0
    %4227 = vmatpush1.bf16.msra.mxu0 0
    %4228 = vmatprep.subr.bf16.mxu0 0
    %4229 = vmatpush1.bf16.msra.mxu0 0
    %4230 = vmatprep.subr.bf16.mxu0 0
    %4231 = vmatpush1.bf16.msra.mxu0 0
    %4232 = vmatprep.subr.bf16.mxu0 0
    %4233 = vmatpush1.bf16.msra.mxu0 0
    %4234 = vmatprep.subr.bf16.mxu0 0
    %4235 = vmatpush1.bf16.msra.mxu0 0
    %4236 = vmatprep.mubr.bf16.mxu0 0
    %4237 = vmatmul.mubr.bf16.gmra.mrb[0].mxu0 %v4160
    %v4238 = vpop.f32.mrb[0].mxu0
    %v4239 = vadd.f32 0.0, %v4238
    %v4240 = vpop.f32.mrb[0].mxu0
    %v4241 = vadd.f32 0.0, %v4240
    %v4242 = vpop.f32.mrb[0].mxu0
    %v4243 = vadd.f32 0.0, %v4242
    %v4244 = vpop.f32.mrb[0].mxu0
    %v4245 = vadd.f32 0.0, %v4244
    %4246 = vdwg.mxu0
    %v4247 = vadd.f32 %v3480, %v4196
    %v4248 = vadd.f32 %v3482, %v4198
    %v4249 = vadd.f32 %v3553, %v4239
    %v4250 = vadd.f32 %v3555, %v4241
    %v4251 = vadd.f32 %v3484, %v4200
    %v4252 = vadd.f32 %v3486, %v4202
    %v4253 = vadd.f32 %v3557, %v4243
    %v4254 = vadd.f32 %v3559, %v4245
    %v4255 = vsub.f32 0.0, %v4247
    %v4256 = vsub.f32 0.0, %v4248
    %v4257 = vsub.f32 0.0, %v4249
    %v4258 = vsub.f32 0.0, %v4251
    %v4259 = vsub.f32 0.0, %v4252
    %v4260 = vsub.f32 0.0, %v4253
    %v4261 = vmul.f32 %v4255, 1.442695
    %v4262 = vpow.pop %v4261
    %v4263 = vmul.f32 %v4256, 1.442695
    %v4264 = vpow.pop %v4263
    %v4265 = vmul.f32 %v4257, 1.442695
    %v4266 = vpow.pop %v4265
    %v4267 = vmul.f32 %v4258, 1.442695
    %v4268 = vpow.pop %v4267
    %v4269 = vmul.f32 %v4259, 1.442695
    %v4270 = vpow.pop %v4269
    %v4271 = vmul.f32 %v4260, 1.442695
    %v4272 = vpow.pop %v4271
    %v4273 = vadd.f32 %v4262, 1.0
    %v4274 = vadd.f32 %v4264, 1.0
    %v4275 = vadd.f32 %v4266, 1.0
    %v4276 = vadd.f32 %v4268, 1.0
    %v4277 = vadd.f32 %v4270, 1.0
    %v4278 = vadd.f32 %v4272, 1.0
    %v4279 = vrcp.pop %v4273
    %v4280 = vmul.f32 1.0, %v4279
    %v4281 = vrcp.pop %v4274
    %v4282 = vmul.f32 1.0, %v4281
    %v4283 = vrcp.pop %v4275
    %v4284 = vmul.f32 1.0, %v4283
    %v4285 = vrcp.pop %v4276
    %v4286 = vmul.f32 1.0, %v4285
    %v4287 = vrcp.pop %v4277
    %v4288 = vmul.f32 1.0, %v4287
    %v4289 = vrcp.pop %v4278
    %v4290 = vmul.f32 1.0, %v4289
    %v4291 = vtanh.pop %v4250
    %v4292 = vtanh.pop %v4254
    %v4293 = vmul.f32 %v4282, %v4154
    %v4294 = vmul.f32 %v4288, %v4155
    %v4295 = vmul.f32 %v4280, %v4291
    %v4296 = vmul.f32 %v4286, %v4292
    %v4297 = vadd.f32 %v4293, %v4295
    %v4298 = vadd.f32 %v4294, %v4296
    %v4299 = vtanh.pop %v4297
    %v4300 = vtanh.pop %v4298
    %v4301 = vmul.f32 %v4284, %v4299
    %v4302 = vmul.f32 %v4290, %v4300
    %v4303 = vpack.c.bf16 %v4302, %v4301
    %4304 = vmatprep.subr.bf16.mxu0 %v3955
    %4305 = vmatpush1.bf16.msra.mxu0 %v3954
    %4306 = vmatprep.subr.bf16.mxu0 %v3959
    %4307 = vmatpush1.bf16.msra.mxu0 %v3958
    %4308 = vmatprep.subr.bf16.mxu0 %v3963
    %4309 = vmatpush1.bf16.msra.mxu0 %v3962
    %4310 = vmatprep.subr.bf16.mxu0 %v3967
    %4311 = vmatpush1.bf16.msra.mxu0 %v3966
    %4312 = vmatprep.subr.bf16.mxu0 %v3971
    %4313 = vmatpush1.bf16.msra.mxu0 %v3970
    %4314 = vmatprep.subr.bf16.mxu0 %v3975
    %4315 = vmatpush1.bf16.msra.mxu0 %v3974
    %4316 = vmatprep.subr.bf16.mxu0 %v3979
    %4317 = vmatpush1.bf16.msra.mxu0 %v3978
    %4318 = vmatprep.subr.bf16.mxu0 %v3983
    %4319 = vmatpush1.bf16.msra.mxu0 %v3982
    %4320 = vmatprep.subr.bf16.mxu0 0
    %4321 = vmatpush1.bf16.msra.mxu0 0
    %4322 = vmatprep.subr.bf16.mxu0 0
    %4323 = vmatpush1.bf16.msra.mxu0 0
    %4324 = vmatprep.subr.bf16.mxu0 0
    %4325 = vmatpush1.bf16.msra.mxu0 0
    %4326 = vmatprep.subr.bf16.mxu0 0
    %4327 = vmatpush1.bf16.msra.mxu0 0
    %4328 = vmatprep.subr.bf16.mxu0 0
    %4329 = vmatpush1.bf16.msra.mxu0 0
    %4330 = vmatprep.subr.bf16.mxu0 0
    %4331 = vmatpush1.bf16.msra.mxu0 0
    %4332 = vmatprep.subr.bf16.mxu0 0
    %4333 = vmatpush1.bf16.msra.mxu0 0
    %4334 = vmatprep.subr.bf16.mxu0 0
    %4335 = vmatpush1.bf16.msra.mxu0 0
    %4336 = vmatprep.mubr.bf16.mxu0 0
    %4337 = vmatmul.mubr.bf16.gmra.mrb[0].mxu0 %v4303
    %v4338 = vpop.f32.mrb[0].mxu0
    %v4339 = vadd.f32 0.0, %v4338
    %v4340 = vpop.f32.mrb[0].mxu0
    %v4341 = vadd.f32 0.0, %v4340
    %v4342 = vpop.f32.mrb[0].mxu0
    %v4343 = vadd.f32 0.0, %v4342
    %v4344 = vpop.f32.mrb[0].mxu0
    %v4345 = vadd.f32 0.0, %v4344
    %4346 = vdwg.mxu0
    %4347 = vmatprep.subr.bf16.mxu0 %v3957
    %4348 = vmatpush1.bf16.msra.mxu0 %v3956
    %4349 = vmatprep.subr.bf16.mxu0 %v3961
    %4350 = vmatpush1.bf16.msra.mxu0 %v3960
    %4351 = vmatprep.subr.bf16.mxu0 %v3965
    %4352 = vmatpush1.bf16.msra.mxu0 %v3964
    %4353 = vmatprep.subr.bf16.mxu0 %v3969
    %4354 = vmatpush1.bf16.msra.mxu0 %v3968
    %4355 = vmatprep.subr.bf16.mxu0 %v3973
    %4356 = vmatpush1.bf16.msra.mxu0 %v3972
    %4357 = vmatprep.subr.bf16.mxu0 %v3977
    %4358 = vmatpush1.bf16.msra.mxu0 %v3976
    %4359 = vmatprep.subr.bf16.mxu0 %v3981
    %4360 = vmatpush1.bf16.msra.mxu0 %v3980
    %4361 = vmatprep.subr.bf16.mxu0 %v3985
    %4362 = vmatpush1.bf16.msra.mxu0 %v3984
    %4363 = vmatprep.subr.bf16.mxu0 0
    %4364 = vmatpush1.bf16.msra.mxu0 0
    %4365 = vmatprep.subr.bf16.mxu0 0
    %4366 = vmatpush1.bf16.msra.mxu0 0
    %4367 = vmatprep.subr.bf16.mxu0 0
    %4368 = vmatpush1.bf16.msra.mxu0 0
    %4369 = vmatprep.subr.bf16.mxu0 0
    %4370 = vmatpush1.bf16.msra.mxu0 0
    %4371 = vmatprep.subr.bf16.mxu0 0
    %4372 = vmatpush1.bf16.msra.mxu0 0
    %4373 = vmatprep.subr.bf16.mxu0 0
    %4374 = vmatpush1.bf16.msra.mxu0 0
    %4375 = vmatprep.subr.bf16.mxu0 0
    %4376 = vmatpush1.bf16.msra.mxu0 0
    %4377 = vmatprep.subr.bf16.mxu0 0
    %4378 = vmatpush1.bf16.msra.mxu0 0
    %4379 = vmatprep.mubr.bf16.mxu0 0
    %4380 = vmatmul.mubr.bf16.gmra.mrb[0].mxu0 %v4303
    %v4381 = vpop.f32.mrb[0].mxu0
    %v4382 = vadd.f32 0.0, %v4381
    %v4383 = vpop.f32.mrb[0].mxu0
    %v4384 = vadd.f32 0.0, %v4383
    %v4385 = vpop.f32.mrb[0].mxu0
    %v4386 = vadd.f32 0.0, %v4385
    %v4387 = vpop.f32.mrb[0].mxu0
    %v4388 = vadd.f32 0.0, %v4387
    %4389 = vdwg.mxu0
    %v4390 = vadd.f32 %v3490, %v4339
    %v4391 = vadd.f32 %v3492, %v4341
    %v4392 = vadd.f32 %v3563, %v4382
    %v4393 = vadd.f32 %v3565, %v4384
    %v4394 = vadd.f32 %v3494, %v4343
    %v4395 = vadd.f32 %v3496, %v4345
    %v4396 = vadd.f32 %v3567, %v4386
    %v4397 = vadd.f32 %v3569, %v4388
    %v4398 = vsub.f32 0.0, %v4390
    %v4399 = vsub.f32 0.0, %v4391
    %v4400 = vsub.f32 0.0, %v4392
    %v4401 = vsub.f32 0.0, %v4394
    %v4402 = vsub.f32 0.0, %v4395
    %v4403 = vsub.f32 0.0, %v4396
    %v4404 = vmul.f32 %v4398, 1.442695
    %v4405 = vpow.pop %v4404
    %v4406 = vmul.f32 %v4399, 1.442695
    %v4407 = vpow.pop %v4406
    %v4408 = vmul.f32 %v4400, 1.442695
    %v4409 = vpow.pop %v4408
    %v4410 = vmul.f32 %v4401, 1.442695
    %v4411 = vpow.pop %v4410
    %v4412 = vmul.f32 %v4402, 1.442695
    %v4413 = vpow.pop %v4412
    %v4414 = vmul.f32 %v4403, 1.442695
    %v4415 = vpow.pop %v4414
    %v4416 = vadd.f32 %v4405, 1.0
    %v4417 = vadd.f32 %v4407, 1.0
    %v4418 = vadd.f32 %v4409, 1.0
    %v4419 = vadd.f32 %v4411, 1.0
    %v4420 = vadd.f32 %v4413, 1.0
    %v4421 = vadd.f32 %v4415, 1.0
    %v4422 = vrcp.pop %v4416
    %v4423 = vmul.f32 1.0, %v4422
    %v4424 = vrcp.pop %v4417
    %v4425 = vmul.f32 1.0, %v4424
    %v4426 = vrcp.pop %v4418
    %v4427 = vmul.f32 1.0, %v4426
    %v4428 = vrcp.pop %v4419
    %v4429 = vmul.f32 1.0, %v4428
    %v4430 = vrcp.pop %v4420
    %v4431 = vmul.f32 1.0, %v4430
    %v4432 = vrcp.pop %v4421
    %v4433 = vmul.f32 1.0, %v4432
    %v4434 = vtanh.pop %v4393
    %v4435 = vtanh.pop %v4397
    %v4436 = vmul.f32 %v4425, %v4297
    %v4437 = vmul.f32 %v4431, %v4298
    %v4438 = vmul.f32 %v4423, %v4434
    %v4439 = vmul.f32 %v4429, %v4435
    %v4440 = vadd.f32 %v4436, %v4438
    %v4441 = vadd.f32 %v4437, %v4439
    %v4442 = vtanh.pop %v4440
    %v4443 = vtanh.pop %v4441
    %v4444 = vmul.f32 %v4427, %v4442
    %v4445 = vmul.f32 %v4433, %v4443
    %v4446 = vpack.c.bf16 %v4445, %v4444
    %4447 = vmatprep.subr.bf16.mxu0 %v3955
    %4448 = vmatpush1.bf16.msra.mxu0 %v3954
    %4449 = vmatprep.subr.bf16.mxu0 %v3959
    %4450 = vmatpush1.bf16.msra.mxu0 %v3958
    %4451 = vmatprep.subr.bf16.mxu0 %v3963
    %4452 = vmatpush1.bf16.msra.mxu0 %v3962
    %4453 = vmatprep.subr.bf16.mxu0 %v3967
    %4454 = vmatpush1.bf16.msra.mxu0 %v3966
    %4455 = vmatprep.subr.bf16.mxu0 %v3971
    %4456 = vmatpush1.bf16.msra.mxu0 %v3970
    %4457 = vmatprep.subr.bf16.mxu0 %v3975
    %4458 = vmatpush1.bf16.msra.mxu0 %v3974
    %4459 = vmatprep.subr.bf16.mxu0 %v3979
    %4460 = vmatpush1.bf16.msra.mxu0 %v3978
    %4461 = vmatprep.subr.bf16.mxu0 %v3983
    %4462 = vmatpush1.bf16.msra.mxu0 %v3982
    %4463 = vmatprep.subr.bf16.mxu0 0
    %4464 = vmatpush1.bf16.msra.mxu0 0
    %4465 = vmatprep.subr.bf16.mxu0 0
    %4466 = vmatpush1.bf16.msra.mxu0 0
    %4467 = vmatprep.subr.bf16.mxu0 0
    %4468 = vmatpush1.bf16.msra.mxu0 0
    %4469 = vmatprep.subr.bf16.mxu0 0
    %4470 = vmatpush1.bf16.msra.mxu0 0
    %4471 = vmatprep.subr.bf16.mxu0 0
    %4472 = vmatpush1.bf16.msra.mxu0 0
    %4473 = vmatprep.subr.bf16.mxu0 0
    %4474 = vmatpush1.bf16.msra.mxu0 0
    %4475 = vmatprep.subr.bf16.mxu0 0
    %4476 = vmatpush1.bf16.msra.mxu0 0
    %4477 = vmatprep.subr.bf16.mxu0 0
    %4478 = vmatpush1.bf16.msra.mxu0 0
    %4479 = vmatprep.mubr.bf16.mxu0 0
    %4480 = vmatmul.mubr.bf16.gmra.mrb[0].mxu0 %v4446
    %v4481 = vpop.f32.mrb[0].mxu0
    %v4482 = vadd.f32 0.0, %v4481
    %v4483 = vpop.f32.mrb[0].mxu0
    %v4484 = vadd.f32 0.0, %v4483
    %v4485 = vpop.f32.mrb[0].mxu0
    %v4486 = vadd.f32 0.0, %v4485
    %v4487 = vpop.f32.mrb[0].mxu0
    %v4488 = vadd.f32 0.0, %v4487
    %4489 = vdwg.mxu0
    %4490 = vmatprep.subr.bf16.mxu0 %v3957
    %4491 = vmatpush1.bf16.msra.mxu0 %v3956
    %4492 = vmatprep.subr.bf16.mxu0 %v3961
    %4493 = vmatpush1.bf16.msra.mxu0 %v3960
    %4494 = vmatprep.subr.bf16.mxu0 %v3965
    %4495 = vmatpush1.bf16.msra.mxu0 %v3964
    %4496 = vmatprep.subr.bf16.mxu0 %v3969
    %4497 = vmatpush1.bf16.msra.mxu0 %v3968
    %4498 = vmatprep.subr.bf16.mxu0 %v3973
    %4499 = vmatpush1.bf16.msra.mxu0 %v3972
    %4500 = vmatprep.subr.bf16.mxu0 %v3977
    %4501 = vmatpush1.bf16.msra.mxu0 %v3976
    %4502 = vmatprep.subr.bf16.mxu0 %v3981
    %4503 = vmatpush1.bf16.msra.mxu0 %v3980
    %4504 = vmatprep.subr.bf16.mxu0 %v3985
    %4505 = vmatpush1.bf16.msra.mxu0 %v3984
    %4506 = vmatprep.subr.bf16.mxu0 0
    %4507 = vmatpush1.bf16.msra.mxu0 0
    %4508 = vmatprep.subr.bf16.mxu0 0
    %4509 = vmatpush1.bf16.msra.mxu0 0
    %4510 = vmatprep.subr.bf16.mxu0 0
    %4511 = vmatpush1.bf16.msra.mxu0 0
    %4512 = vmatprep.subr.bf16.mxu0 0
    %4513 = vmatpush1.bf16.msra.mxu0 0
    %4514 = vmatprep.subr.bf16.mxu0 0
    %4515 = vmatpush1.bf16.msra.mxu0 0
    %4516 = vmatprep.subr.bf16.mxu0 0
    %4517 = vmatpush1.bf16.msra.mxu0 0
    %4518 = vmatprep.subr.bf16.mxu0 0
    %4519 = vmatpush1.bf16.msra.mxu0 0
    %4520 = vmatprep.subr.bf16.mxu0 0
    %4521 = vmatpush1.bf16.msra.mxu0 0
    %4522 = vmatprep.mubr.bf16.mxu0 0
    %4523 = vmatmul.mubr.bf16.gmra.mrb[0].mxu0 %v4446
    %v4524 = vpop.f32.mrb[0].mxu0
    %v4525 = vadd.f32 0.0, %v4524
    %v4526 = vpop.f32.mrb[0].mxu0
    %v4527 = vadd.f32 0.0, %v4526
    %v4528 = vpop.f32.mrb[0].mxu0
    %v4529 = vadd.f32 0.0, %v4528
    %v4530 = vpop.f32.mrb[0].mxu0
    %v4531 = vadd.f32 0.0, %v4530
    %4532 = vdwg.mxu0
    %v4533 = vadd.f32 %v3500, %v4482
    %v4534 = vadd.f32 %v3502, %v4484
    %v4535 = vadd.f32 %v3573, %v4525
    %v4536 = vadd.f32 %v3575, %v4527
    %v4537 = vadd.f32 %v3504, %v4486
    %v4538 = vadd.f32 %v3506, %v4488
    %v4539 = vadd.f32 %v3577, %v4529
    %v4540 = vadd.f32 %v3579, %v4531
    %v4541 = vsub.f32 0.0, %v4533
    %v4542 = vsub.f32 0.0, %v4534
    %v4543 = vsub.f32 0.0, %v4535
    %v4544 = vsub.f32 0.0, %v4537
    %v4545 = vsub.f32 0.0, %v4538
    %v4546 = vsub.f32 0.0, %v4539
    %v4547 = vmul.f32 %v4541, 1.442695
    %v4548 = vpow.pop %v4547
    %v4549 = vmul.f32 %v4542, 1.442695
    %v4550 = vpow.pop %v4549
    %v4551 = vmul.f32 %v4543, 1.442695
    %v4552 = vpow.pop %v4551
    %v4553 = vmul.f32 %v4544, 1.442695
    %v4554 = vpow.pop %v4553
    %v4555 = vmul.f32 %v4545, 1.442695
    %v4556 = vpow.pop %v4555
    %v4557 = vmul.f32 %v4546, 1.442695
    %v4558 = vpow.pop %v4557
    %v4559 = vadd.f32 %v4548, 1.0
    %v4560 = vadd.f32 %v4550, 1.0
    %v4561 = vadd.f32 %v4552, 1.0
    %v4562 = vadd.f32 %v4554, 1.0
    %v4563 = vadd.f32 %v4556, 1.0
    %v4564 = vadd.f32 %v4558, 1.0
    %v4565 = vrcp.pop %v4559
    %v4566 = vmul.f32 1.0, %v4565
    %v4567 = vrcp.pop %v4560
    %v4568 = vmul.f32 1.0, %v4567
    %v4569 = vrcp.pop %v4561
    %v4570 = vmul.f32 1.0, %v4569
    %v4571 = vrcp.pop %v4562
    %v4572 = vmul.f32 1.0, %v4571
    %v4573 = vrcp.pop %v4563
    %v4574 = vmul.f32 1.0, %v4573
    %v4575 = vrcp.pop %v4564
    %v4576 = vmul.f32 1.0, %v4575
    %v4577 = vtanh.pop %v4536
    %v4578 = vtanh.pop %v4540
    %v4579 = vmul.f32 %v4568, %v4440
    %v4580 = vmul.f32 %v4574, %v4441
    %v4581 = vmul.f32 %v4566, %v4577
    %v4582 = vmul.f32 %v4572, %v4578
    %v4583 = vadd.f32 %v4579, %v4581
    %v4584 = vadd.f32 %v4580, %v4582
    %v4585 = vtanh.pop %v4583
    %v4586 = vtanh.pop %v4584
    %v4587 = vmul.f32 %v4570, %v4585
    %v4588 = vmul.f32 %v4576, %v4586
    %v4621 = vunpack.c.l.b16 %v3760
    %v4622 = vunpack.c.h.b16 %v3760
    %v4623 = vunpack.c.l.b16 %v3761
    %v4624 = vunpack.c.h.b16 %v3761
    %v4625 = vunpack.c.l.b16 %v3762
    %v4626 = vunpack.c.h.b16 %v3762
    %v4627 = vunpack.c.l.b16 %v3763
    %v4628 = vunpack.c.h.b16 %v3763
    %v4629 = vunpack.c.l.b16 %v3764
    %v4630 = vunpack.c.h.b16 %v3764
    %v4631 = vunpack.c.l.b16 %v3765
    %v4632 = vunpack.c.h.b16 %v3765
    %v4633 = vunpack.c.l.b16 %v3766
    %v4634 = vunpack.c.h.b16 %v3766
    %v4635 = vunpack.c.l.b16 %v3767
    %v4636 = vunpack.c.h.b16 %v3767
    %v4637 = vunpack.c.l.b16 %v3768
    %v4638 = vunpack.c.h.b16 %v3768
    %v4639 = vunpack.c.l.b16 %v3769
    %v4640 = vunpack.c.h.b16 %v3769
    %v4641 = vunpack.c.l.b16 %v3770
    %v4642 = vunpack.c.h.b16 %v3770
    %v4643 = vunpack.c.l.b16 %v3771
    %v4644 = vunpack.c.h.b16 %v3771
    %v4645 = vunpack.c.l.b16 %v3772
    %v4646 = vunpack.c.h.b16 %v3772
    %v4647 = vunpack.c.l.b16 %v3773
    %v4648 = vunpack.c.h.b16 %v3773
    %v4649 = vunpack.c.l.b16 %v3774
    %v4650 = vunpack.c.h.b16 %v3774
    %v4651 = vunpack.c.l.b16 %v3775
    %v4652 = vunpack.c.h.b16 %v3775
    %v4653 = vunpack.c.l.b16 %v3776
    %v4654 = vunpack.c.h.b16 %v3776
    %v4655 = vunpack.c.l.b16 %v3777
    %v4656 = vunpack.c.h.b16 %v3777
    %v4657 = vunpack.c.l.b16 %v3778
    %v4658 = vunpack.c.h.b16 %v3778
    %v4659 = vunpack.c.l.b16 %v3779
    %v4660 = vunpack.c.h.b16 %v3779
    %v4661 = vunpack.c.l.b16 %v3780
    %v4662 = vunpack.c.h.b16 %v3780
    %v4663 = vunpack.c.l.b16 %v3781
    %v4664 = vunpack.c.h.b16 %v3781
    %v4665 = vunpack.c.l.b16 %v3782
    %v4666 = vunpack.c.h.b16 %v3782
    %v4667 = vunpack.c.l.b16 %v3783
    %v4668 = vunpack.c.h.b16 %v3783
    %v4669 = vunpack.c.l.b16 %v3784
    %v4670 = vunpack.c.h.b16 %v3784
    %v4671 = vunpack.c.l.b16 %v3785
    %v4672 = vunpack.c.h.b16 %v3785
    %v4673 = vunpack.c.l.b16 %v3786
    %v4674 = vunpack.c.h.b16 %v3786
    %v4675 = vunpack.c.l.b16 %v3787
    %v4676 = vunpack.c.h.b16 %v3787
    %v4677 = vunpack.c.l.b16 %v3788
    %v4678 = vunpack.c.h.b16 %v3788
    %v4679 = vunpack.c.l.b16 %v3789
    %v4680 = vunpack.c.h.b16 %v3789
    %v4681 = vunpack.c.l.b16 %v3790
    %v4682 = vunpack.c.h.b16 %v3790
    %v4683 = vunpack.c.l.b16 %v3791
    %v4684 = vunpack.c.h.b16 %v3791
    %v4685 = vpack.c.b16 %v4625, %v4621
    %v4686 = vpack.c.b16 %v4626, %v4622
    %v4687 = vpack.c.b16 %v4627, %v4623
    %v4688 = vpack.c.b16 %v4628, %v4624
    %v4689 = vpack.c.b16 %v4633, %v4629
    %v4690 = vpack.c.b16 %v4634, %v4630
    %v4691 = vpack.c.b16 %v4635, %v4631
    %v4692 = vpack.c.b16 %v4636, %v4632
    %v4693 = vpack.c.b16 %v4641, %v4637
    %v4694 = vpack.c.b16 %v4642, %v4638
    %v4695 = vpack.c.b16 %v4643, %v4639
    %v4696 = vpack.c.b16 %v4644, %v4640
    %v4697 = vpack.c.b16 %v4649, %v4645
    %v4698 = vpack.c.b16 %v4650, %v4646
    %v4699 = vpack.c.b16 %v4651, %v4647
    %v4700 = vpack.c.b16 %v4652, %v4648
    %v4701 = vpack.c.b16 %v4657, %v4653
    %v4702 = vpack.c.b16 %v4658, %v4654
    %v4703 = vpack.c.b16 %v4659, %v4655
    %v4704 = vpack.c.b16 %v4660, %v4656
    %v4705 = vpack.c.b16 %v4665, %v4661
    %v4706 = vpack.c.b16 %v4666, %v4662
    %v4707 = vpack.c.b16 %v4667, %v4663
    %v4708 = vpack.c.b16 %v4668, %v4664
    %v4709 = vpack.c.b16 %v4673, %v4669
    %v4710 = vpack.c.b16 %v4674, %v4670
    %v4711 = vpack.c.b16 %v4675, %v4671
    %v4712 = vpack.c.b16 %v4676, %v4672
    %v4713 = vpack.c.b16 %v4681, %v4677
    %v4714 = vpack.c.b16 %v4682, %v4678
    %v4715 = vpack.c.b16 %v4683, %v4679
    %v4716 = vpack.c.b16 %v4684, %v4680
    %4749 = vmatprep.subr.bf16.mxu0 %v4686
    %4750 = vmatpush1.bf16.msra.mxu0 %v4685
    %4751 = vmatprep.subr.bf16.mxu0 %v4690
    %4752 = vmatpush1.bf16.msra.mxu0 %v4689
    %4753 = vmatprep.subr.bf16.mxu0 %v4694
    %4754 = vmatpush1.bf16.msra.mxu0 %v4693
    %4755 = vmatprep.subr.bf16.mxu0 %v4698
    %4756 = vmatpush1.bf16.msra.mxu0 %v4697
    %4757 = vmatprep.subr.bf16.mxu0 %v4702
    %4758 = vmatpush1.bf16.msra.mxu0 %v4701
    %4759 = vmatprep.subr.bf16.mxu0 %v4706
    %4760 = vmatpush1.bf16.msra.mxu0 %v4705
    %4761 = vmatprep.subr.bf16.mxu0 %v4710
    %4762 = vmatpush1.bf16.msra.mxu0 %v4709
    %4763 = vmatprep.subr.bf16.mxu0 %v4714
    %4764 = vmatpush1.bf16.msra.mxu0 %v4713
    %4765 = vmatprep.subr.bf16.mxu0 0
    %4766 = vmatpush1.bf16.msra.mxu0 0
    %4767 = vmatprep.subr.bf16.mxu0 0
    %4768 = vmatpush1.bf16.msra.mxu0 0
    %4769 = vmatprep.subr.bf16.mxu0 0
    %4770 = vmatpush1.bf16.msra.mxu0 0
    %4771 = vmatprep.subr.bf16.mxu0 0
    %4772 = vmatpush1.bf16.msra.mxu0 0
    %4773 = vmatprep.subr.bf16.mxu0 0
    %4774 = vmatpush1.bf16.msra.mxu0 0
    %4775 = vmatprep.subr.bf16.mxu0 0
    %4776 = vmatpush1.bf16.msra.mxu0 0
    %4777 = vmatprep.subr.bf16.mxu0 0
    %4778 = vmatpush1.bf16.msra.mxu0 0
    %4779 = vmatprep.subr.bf16.mxu0 0
    %4780 = vmatpush1.bf16.msra.mxu0 0
    %4781 = vmatprep.mubr.bf16.mxu0 0
    %4782 = vmatmul.mubr.bf16.gmra.mrb[0].mxu0 0
    %v4783 = vpop.f32.mrb[0].mxu0
    %v4784 = vadd.f32 0.0, %v4783
    %v4785 = vpop.f32.mrb[0].mxu0
    %v4786 = vadd.f32 0.0, %v4785
    %v4787 = vpop.f32.mrb[0].mxu0
    %v4788 = vadd.f32 0.0, %v4787
    %v4789 = vpop.f32.mrb[0].mxu0
    %v4790 = vadd.f32 0.0, %v4789
    %4791 = vdwg.mxu0
    %4792 = vmatprep.subr.bf16.mxu0 %v4688
    %4793 = vmatpush1.bf16.msra.mxu0 %v4687
    %4794 = vmatprep.subr.bf16.mxu0 %v4692
    %4795 = vmatpush1.bf16.msra.mxu0 %v4691
    %4796 = vmatprep.subr.bf16.mxu0 %v4696
    %4797 = vmatpush1.bf16.msra.mxu0 %v4695
    %4798 = vmatprep.subr.bf16.mxu0 %v4700
    %4799 = vmatpush1.bf16.msra.mxu0 %v4699
    %4800 = vmatprep.subr.bf16.mxu0 %v4704
    %4801 = vmatpush1.bf16.msra.mxu0 %v4703
    %4802 = vmatprep.subr.bf16.mxu0 %v4708
    %4803 = vmatpush1.bf16.msra.mxu0 %v4707
    %4804 = vmatprep.subr.bf16.mxu0 %v4712
    %4805 = vmatpush1.bf16.msra.mxu0 %v4711
    %4806 = vmatprep.subr.bf16.mxu0 %v4716
    %4807 = vmatpush1.bf16.msra.mxu0 %v4715
    %4808 = vmatprep.subr.bf16.mxu0 0
    %4809 = vmatpush1.bf16.msra.mxu0 0
    %4810 = vmatprep.subr.bf16.mxu0 0
    %4811 = vmatpush1.bf16.msra.mxu0 0
    %4812 = vmatprep.subr.bf16.mxu0 0
    %4813 = vmatpush1.bf16.msra.mxu0 0
    %4814 = vmatprep.subr.bf16.mxu0 0
    %4815 = vmatpush1.bf16.msra.mxu0 0
    %4816 = vmatprep.subr.bf16.mxu0 0
    %4817 = vmatpush1.bf16.msra.mxu0 0
    %4818 = vmatprep.subr.bf16.mxu0 0
    %4819 = vmatpush1.bf16.msra.mxu0 0
    %4820 = vmatprep.subr.bf16.mxu0 0
    %4821 = vmatpush1.bf16.msra.mxu0 0
    %4822 = vmatprep.subr.bf16.mxu0 0
    %4823 = vmatpush1.bf16.msra.mxu0 0
    %4824 = vmatprep.mubr.bf16.mxu0 0
    %4825 = vmatmul.mubr.bf16.gmra.mrb[0].mxu0 0
    %v4826 = vpop.f32.mrb[0].mxu0
    %v4827 = vadd.f32 0.0, %v4826
    %v4828 = vpop.f32.mrb[0].mxu0
    %v4829 = vadd.f32 0.0, %v4828
    %v4830 = vpop.f32.mrb[0].mxu0
    %v4831 = vadd.f32 0.0, %v4830
    %v4832 = vpop.f32.mrb[0].mxu0
    %v4833 = vadd.f32 0.0, %v4832
    %4834 = vdwg.mxu0
    %v4835 = vadd.f32 %v3646, %v4784
    %v4836 = vadd.f32 %v3648, %v4786
    %v4837 = vadd.f32 %v3719, %v4827
    %v4838 = vadd.f32 %v3721, %v4829
    %v4839 = vadd.f32 %v3650, %v4788
    %v4840 = vadd.f32 %v3652, %v4790
    %v4841 = vadd.f32 %v3723, %v4831
    %v4842 = vadd.f32 %v3725, %v4833
    %v4843 = vsub.f32 0.0, %v4835
    %v4844 = vsub.f32 0.0, %v4836
    %v4845 = vsub.f32 0.0, %v4837
    %v4846 = vsub.f32 0.0, %v4839
    %v4847 = vsub.f32 0.0, %v4840
    %v4848 = vsub.f32 0.0, %v4841
    %v4849 = vmul.f32 %v4843, 1.442695
    %v4850 = vpow.pop %v4849
    %v4851 = vmul.f32 %v4844, 1.442695
    %v4852 = vpow.pop %v4851
    %v4853 = vmul.f32 %v4845, 1.442695
    %v4854 = vpow.pop %v4853
    %v4855 = vmul.f32 %v4846, 1.442695
    %v4856 = vpow.pop %v4855
    %v4857 = vmul.f32 %v4847, 1.442695
    %v4858 = vpow.pop %v4857
    %v4859 = vmul.f32 %v4848, 1.442695
    %v4860 = vpow.pop %v4859
    %v4861 = vadd.f32 %v4850, 1.0
    %v4862 = vadd.f32 %v4852, 1.0
    %v4863 = vadd.f32 %v4854, 1.0
    %v4864 = vadd.f32 %v4856, 1.0
    %v4865 = vadd.f32 %v4858, 1.0
    %v4866 = vadd.f32 %v4860, 1.0
    %v4867 = vrcp.pop %v4861
    %v4868 = vmul.f32 1.0, %v4867
    %v4869 = vrcp.pop %v4862
    %v4870 = vmul.f32 1.0, %v4869
    %v4871 = vrcp.pop %v4863
    %v4872 = vmul.f32 1.0, %v4871
    %v4873 = vrcp.pop %v4864
    %v4874 = vmul.f32 1.0, %v4873
    %v4875 = vrcp.pop %v4865
    %v4876 = vmul.f32 1.0, %v4875
    %v4877 = vrcp.pop %v4866
    %v4878 = vmul.f32 1.0, %v4877
    %v4879 = vtanh.pop %v4838
    %v4880 = vtanh.pop %v4842
    %v4881 = vmul.f32 %v4870, 0.0
    %v4882 = vmul.f32 %v4876, 0.0
    %v4883 = vmul.f32 %v4868, %v4879
    %v4884 = vmul.f32 %v4874, %v4880
    %v4885 = vadd.f32 %v4881, %v4883
    %v4886 = vadd.f32 %v4882, %v4884
    %v4887 = vtanh.pop %v4885
    %v4888 = vtanh.pop %v4886
    %v4889 = vmul.f32 %v4872, %v4887
    %v4890 = vmul.f32 %v4878, %v4888
    %v4891 = vpack.c.bf16 %v4890, %v4889
    %4892 = vmatprep.subr.bf16.mxu0 %v4686
    %4893 = vmatpush1.bf16.msra.mxu0 %v4685
    %4894 = vmatprep.subr.bf16.mxu0 %v4690
    %4895 = vmatpush1.bf16.msra.mxu0 %v4689
    %4896 = vmatprep.subr.bf16.mxu0 %v4694
    %4897 = vmatpush1.bf16.msra.mxu0 %v4693
    %4898 = vmatprep.subr.bf16.mxu0 %v4698
    %4899 = vmatpush1.bf16.msra.mxu0 %v4697
    %4900 = vmatprep.subr.bf16.mxu0 %v4702
    %4901 = vmatpush1.bf16.msra.mxu0 %v4701
    %4902 = vmatprep.subr.bf16.mxu0 %v4706
    %4903 = vmatpush1.bf16.msra.mxu0 %v4705
    %4904 = vmatprep.subr.bf16.mxu0 %v4710
    %4905 = vmatpush1.bf16.msra.mxu0 %v4709
    %4906 = vmatprep.subr.bf16.mxu0 %v4714
    %4907 = vmatpush1.bf16.msra.mxu0 %v4713
    %4908 = vmatprep.subr.bf16.mxu0 0
    %4909 = vmatpush1.bf16.msra.mxu0 0
    %4910 = vmatprep.subr.bf16.mxu0 0
    %4911 = vmatpush1.bf16.msra.mxu0 0
    %4912 = vmatprep.subr.bf16.mxu0 0
    %4913 = vmatpush1.bf16.msra.mxu0 0
    %4914 = vmatprep.subr.bf16.mxu0 0
    %4915 = vmatpush1.bf16.msra.mxu0 0
    %4916 = vmatprep.subr.bf16.mxu0 0
    %4917 = vmatpush1.bf16.msra.mxu0 0
    %4918 = vmatprep.subr.bf16.mxu0 0
    %4919 = vmatpush1.bf16.msra.mxu0 0
    %4920 = vmatprep.subr.bf16.mxu0 0
    %4921 = vmatpush1.bf16.msra.mxu0 0
    %4922 = vmatprep.subr.bf16.mxu0 0
    %4923 = vmatpush1.bf16.msra.mxu0 0
    %4924 = vmatprep.mubr.bf16.mxu0 0
    %4925 = vmatmul.mubr.bf16.gmra.mrb[0].mxu0 %v4891
    %v4926 = vpop.f32.mrb[0].mxu0
    %v4927 = vadd.f32 0.0, %v4926
    %v4928 = vpop.f32.mrb[0].mxu0
    %v4929 = vadd.f32 0.0, %v4928
    %v4930 = vpop.f32.mrb[0].mxu0
    %v4931 = vadd.f32 0.0, %v4930
    %v4932 = vpop.f32.mrb[0].mxu0
    %v4933 = vadd.f32 0.0, %v4932
    %4934 = vdwg.mxu0
    %4935 = vmatprep.subr.bf16.mxu0 %v4688
    %4936 = vmatpush1.bf16.msra.mxu0 %v4687
    %4937 = vmatprep.subr.bf16.mxu0 %v4692
    %4938 = vmatpush1.bf16.msra.mxu0 %v4691
    %4939 = vmatprep.subr.bf16.mxu0 %v4696
    %4940 = vmatpush1.bf16.msra.mxu0 %v4695
    %4941 = vmatprep.subr.bf16.mxu0 %v4700
    %4942 = vmatpush1.bf16.msra.mxu0 %v4699
    %4943 = vmatprep.subr.bf16.mxu0 %v4704
    %4944 = vmatpush1.bf16.msra.mxu0 %v4703
    %4945 = vmatprep.subr.bf16.mxu0 %v4708
    %4946 = vmatpush1.bf16.msra.mxu0 %v4707
    %4947 = vmatprep.subr.bf16.mxu0 %v4712
    %4948 = vmatpush1.bf16.msra.mxu0 %v4711
    %4949 = vmatprep.subr.bf16.mxu0 %v4716
    %4950 = vmatpush1.bf16.msra.mxu0 %v4715
    %4951 = vmatprep.subr.bf16.mxu0 0
    %4952 = vmatpush1.bf16.msra.mxu0 0
    %4953 = vmatprep.subr.bf16.mxu0 0
    %4954 = vmatpush1.bf16.msra.mxu0 0
    %4955 = vmatprep.subr.bf16.mxu0 0
    %4956 = vmatpush1.bf16.msra.mxu0 0
    %4957 = vmatprep.subr.bf16.mxu0 0
    %4958 = vmatpush1.bf16.msra.mxu0 0
    %4959 = vmatprep.subr.bf16.mxu0 0
    %4960 = vmatpush1.bf16.msra.mxu0 0
    %4961 = vmatprep.subr.bf16.mxu0 0
    %4962 = vmatpush1.bf16.msra.mxu0 0
    %4963 = vmatprep.subr.bf16.mxu0 0
    %4964 = vmatpush1.bf16.msra.mxu0 0
    %4965 = vmatprep.subr.bf16.mxu0 0
    %4966 = vmatpush1.bf16.msra.mxu0 0
    %4967 = vmatprep.mubr.bf16.mxu0 0
    %4968 = vmatmul.mubr.bf16.gmra.mrb[0].mxu0 %v4891
    %v4969 = vpop.f32.mrb[0].mxu0
    %v4970 = vadd.f32 0.0, %v4969
    %v4971 = vpop.f32.mrb[0].mxu0
    %v4972 = vadd.f32 0.0, %v4971
    %v4973 = vpop.f32.mrb[0].mxu0
    %v4974 = vadd.f32 0.0, %v4973
    %v4975 = vpop.f32.mrb[0].mxu0
    %v4976 = vadd.f32 0.0, %v4975
    %4977 = vdwg.mxu0
    %v4978 = vadd.f32 %v3636, %v4927
    %v4979 = vadd.f32 %v3638, %v4929
    %v4980 = vadd.f32 %v3709, %v4970
    %v4981 = vadd.f32 %v3711, %v4972
    %v4982 = vadd.f32 %v3640, %v4931
    %v4983 = vadd.f32 %v3642, %v4933
    %v4984 = vadd.f32 %v3713, %v4974
    %v4985 = vadd.f32 %v3715, %v4976
    %v4986 = vsub.f32 0.0, %v4978
    %v4987 = vsub.f32 0.0, %v4979
    %v4988 = vsub.f32 0.0, %v4980
    %v4989 = vsub.f32 0.0, %v4982
    %v4990 = vsub.f32 0.0, %v4983
    %v4991 = vsub.f32 0.0, %v4984
    %v4992 = vmul.f32 %v4986, 1.442695
    %v4993 = vpow.pop %v4992
    %v4994 = vmul.f32 %v4987, 1.442695
    %v4995 = vpow.pop %v4994
    %v4996 = vmul.f32 %v4988, 1.442695
    %v4997 = vpow.pop %v4996
    %v4998 = vmul.f32 %v4989, 1.442695
    %v4999 = vpow.pop %v4998
    %v5000 = vmul.f32 %v4990, 1.442695
    %v5001 = vpow.pop %v5000
    %v5002 = vmul.f32 %v4991, 1.442695
    %v5003 = vpow.pop %v5002
    %v5004 = vadd.f32 %v4993, 1.0
    %v5005 = vadd.f32 %v4995, 1.0
    %v5006 = vadd.f32 %v4997, 1.0
    %v5007 = vadd.f32 %v4999, 1.0
    %v5008 = vadd.f32 %v5001, 1.0
    %v5009 = vadd.f32 %v5003, 1.0
    %v5010 = vrcp.pop %v5004
    %v5011 = vmul.f32 1.0, %v5010
    %v5012 = vrcp.pop %v5005
    %v5013 = vmul.f32 1.0, %v5012
    %v5014 = vrcp.pop %v5006
    %v5015 = vmul.f32 1.0, %v5014
    %v5016 = vrcp.pop %v5007
    %v5017 = vmul.f32 1.0, %v5016
    %v5018 = vrcp.pop %v5008
    %v5019 = vmul.f32 1.0, %v5018
    %v5020 = vrcp.pop %v5009
    %v5021 = vmul.f32 1.0, %v5020
    %v5022 = vtanh.pop %v4981
    %v5023 = vtanh.pop %v4985
    %v5024 = vmul.f32 %v5013, %v4885
    %v5025 = vmul.f32 %v5019, %v4886
    %v5026 = vmul.f32 %v5011, %v5022
    %v5027 = vmul.f32 %v5017, %v5023
    %v5028 = vadd.f32 %v5024, %v5026
    %v5029 = vadd.f32 %v5025, %v5027
    %v5030 = vtanh.pop %v5028
    %v5031 = vtanh.pop %v5029
    %v5032 = vmul.f32 %v5015, %v5030
    %v5033 = vmul.f32 %v5021, %v5031
    %v5034 = vpack.c.bf16 %v5033, %v5032
    %5035 = vmatprep.subr.bf16.mxu0 %v4686
    %5036 = vmatpush1.bf16.msra.mxu0 %v4685
    %5037 = vmatprep.subr.bf16.mxu0 %v4690
    %5038 = vmatpush1.bf16.msra.mxu0 %v4689
    %5039 = vmatprep.subr.bf16.mxu0 %v4694
    %5040 = vmatpush1.bf16.msra.mxu0 %v4693
    %5041 = vmatprep.subr.bf16.mxu0 %v4698
    %5042 = vmatpush1.bf16.msra.mxu0 %v4697
    %5043 = vmatprep.subr.bf16.mxu0 %v4702
    %5044 = vmatpush1.bf16.msra.mxu0 %v4701
    %5045 = vmatprep.subr.bf16.mxu0 %v4706
    %5046 = vmatpush1.bf16.msra.mxu0 %v4705
    %5047 = vmatprep.subr.bf16.mxu0 %v4710
    %5048 = vmatpush1.bf16.msra.mxu0 %v4709
    %5049 = vmatprep.subr.bf16.mxu0 %v4714
    %5050 = vmatpush1.bf16.msra.mxu0 %v4713
    %5051 = vmatprep.subr.bf16.mxu0 0
    %5052 = vmatpush1.bf16.msra.mxu0 0
    %5053 = vmatprep.subr.bf16.mxu0 0
    %5054 = vmatpush1.bf16.msra.mxu0 0
    %5055 = vmatprep.subr.bf16.mxu0 0
    %5056 = vmatpush1.bf16.msra.mxu0 0
    %5057 = vmatprep.subr.bf16.mxu0 0
    %5058 = vmatpush1.bf16.msra.mxu0 0
    %5059 = vmatprep.subr.bf16.mxu0 0
    %5060 = vmatpush1.bf16.msra.mxu0 0
    %5061 = vmatprep.subr.bf16.mxu0 0
    %5062 = vmatpush1.bf16.msra.mxu0 0
    %5063 = vmatprep.subr.bf16.mxu0 0
    %5064 = vmatpush1.bf16.msra.mxu0 0
    %5065 = vmatprep.subr.bf16.mxu0 0
    %5066 = vmatpush1.bf16.msra.mxu0 0
    %5067 = vmatprep.mubr.bf16.mxu0 0
    %5068 = vmatmul.mubr.bf16.gmra.mrb[0].mxu0 %v5034
    %v5069 = vpop.f32.mrb[0].mxu0
    %v5070 = vadd.f32 0.0, %v5069
    %v5071 = vpop.f32.mrb[0].mxu0
    %v5072 = vadd.f32 0.0, %v5071
    %v5073 = vpop.f32.mrb[0].mxu0
    %v5074 = vadd.f32 0.0, %v5073
    %v5075 = vpop.f32.mrb[0].mxu0
    %v5076 = vadd.f32 0.0, %v5075
    %5077 = vdwg.mxu0
    %5078 = vmatprep.subr.bf16.mxu0 %v4688
    %5079 = vmatpush1.bf16.msra.mxu0 %v4687
    %5080 = vmatprep.subr.bf16.mxu0 %v4692
    %5081 = vmatpush1.bf16.msra.mxu0 %v4691
    %5082 = vmatprep.subr.bf16.mxu0 %v4696
    %5083 = vmatpush1.bf16.msra.mxu0 %v4695
    %5084 = vmatprep.subr.bf16.mxu0 %v4700
    %5085 = vmatpush1.bf16.msra.mxu0 %v4699
    %5086 = vmatprep.subr.bf16.mxu0 %v4704
    %5087 = vmatpush1.bf16.msra.mxu0 %v4703
    %5088 = vmatprep.subr.bf16.mxu0 %v4708
    %5089 = vmatpush1.bf16.msra.mxu0 %v4707
    %5090 = vmatprep.subr.bf16.mxu0 %v4712
    %5091 = vmatpush1.bf16.msra.mxu0 %v4711
    %5092 = vmatprep.subr.bf16.mxu0 %v4716
    %5093 = vmatpush1.bf16.msra.mxu0 %v4715
    %5094 = vmatprep.subr.bf16.mxu0 0
    %5095 = vmatpush1.bf16.msra.mxu0 0
    %5096 = vmatprep.subr.bf16.mxu0 0
    %5097 = vmatpush1.bf16.msra.mxu0 0
    %5098 = vmatprep.subr.bf16.mxu0 0
    %5099 = vmatpush1.bf16.msra.mxu0 0
    %5100 = vmatprep.subr.bf16.mxu0 0
    %5101 = vmatpush1.bf16.msra.mxu0 0
    %5102 = vmatprep.subr.bf16.mxu0 0
    %5103 = vmatpush1.bf16.msra.mxu0 0
    %5104 = vmatprep.subr.bf16.mxu0 0
    %5105 = vmatpush1.bf16.msra.mxu0 0
    %5106 = vmatprep.subr.bf16.mxu0 0
    %5107 = vmatpush1.bf16.msra.mxu0 0
    %5108 = vmatprep.subr.bf16.mxu0 0
    %5109 = vmatpush1.bf16.msra.mxu0 0
    %5110 = vmatprep.mubr.bf16.mxu0 0
    %5111 = vmatmul.mubr.bf16.gmra.mrb[0].mxu0 %v5034
    %v5112 = vpop.f32.mrb[0].mxu0
    %v5113 = vadd.f32 0.0, %v5112
    %v5114 = vpop.f32.mrb[0].mxu0
    %v5115 = vadd.f32 0.0, %v5114
    %v5116 = vpop.f32.mrb[0].mxu0
    %v5117 = vadd.f32 0.0, %v5116
    %v5118 = vpop.f32.mrb[0].mxu0
    %v5119 = vadd.f32 0.0, %v5118
    %5120 = vdwg.mxu0
    %v5121 = vadd.f32 %v3626, %v5070
    %v5122 = vadd.f32 %v3628, %v5072
    %v5123 = vadd.f32 %v3699, %v5113
    %v5124 = vadd.f32 %v3701, %v5115
    %v5125 = vadd.f32 %v3630, %v5074
    %v5126 = vadd.f32 %v3632, %v5076
    %v5127 = vadd.f32 %v3703, %v5117
    %v5128 = vadd.f32 %v3705, %v5119
    %v5129 = vsub.f32 0.0, %v5121
    %v5130 = vsub.f32 0.0, %v5122
    %v5131 = vsub.f32 0.0, %v5123
    %v5132 = vsub.f32 0.0, %v5125
    %v5133 = vsub.f32 0.0, %v5126
    %v5134 = vsub.f32 0.0, %v5127
    %v5135 = vmul.f32 %v5129, 1.442695
    %v5136 = vpow.pop %v5135
    %v5137 = vmul.f32 %v5130, 1.442695
    %v5138 = vpow.pop %v5137
    %v5139 = vmul.f32 %v5131, 1.442695
    %v5140 = vpow.pop %v5139
    %v5141 = vmul.f32 %v5132, 1.442695
    %v5142 = vpow.pop %v5141
    %v5143 = vmul.f32 %v5133, 1.442695
    %v5144 = vpow.pop %v5143
    %v5145 = vmul.f32 %v5134, 1.442695
    %v5146 = vpow.pop %v5145
    %v5147 = vadd.f32 %v5136, 1.0
    %v5148 = vadd.f32 %v5138, 1.0
    %v5149 = vadd.f32 %v5140, 1.0
    %v5150 = vadd.f32 %v5142, 1.0
    %v5151 = vadd.f32 %v5144, 1.0
    %v5152 = vadd.f32 %v5146, 1.0
    %v5153 = vrcp.pop %v5147
    %v5154 = vmul.f32 1.0, %v5153
    %v5155 = vrcp.pop %v5148
    %v5156 = vmul.f32 1.0, %v5155
    %v5157 = vrcp.pop %v5149
    %v5158 = vmul.f32 1.0, %v5157
    %v5159 = vrcp.pop %v5150
    %v5160 = vmul.f32 1.0, %v5159
    %v5161 = vrcp.pop %v5151
    %v5162 = vmul.f32 1.0, %v5161
    %v5163 = vrcp.pop %v5152
    %v5164 = vmul.f32 1.0, %v5163
    %v5165 = vtanh.pop %v5124
    %v5166 = vtanh.pop %v5128
    %v5167 = vmul.f32 %v5156, %v5028
    %v5168 = vmul.f32 %v5162, %v5029
    %v5169 = vmul.f32 %v5154, %v5165
    %v5170 = vmul.f32 %v5160, %v5166
    %v5171 = vadd.f32 %v5167, %v5169
    %v5172 = vadd.f32 %v5168, %v5170
    %v5173 = vtanh.pop %v5171
    %v5174 = vtanh.pop %v5172
    %v5175 = vmul.f32 %v5158, %v5173
    %v5176 = vmul.f32 %v5164, %v5174
    %v5177 = vpack.c.bf16 %v5176, %v5175
    %5178 = vmatprep.subr.bf16.mxu0 %v4686
    %5179 = vmatpush1.bf16.msra.mxu0 %v4685
    %5180 = vmatprep.subr.bf16.mxu0 %v4690
    %5181 = vmatpush1.bf16.msra.mxu0 %v4689
    %5182 = vmatprep.subr.bf16.mxu0 %v4694
    %5183 = vmatpush1.bf16.msra.mxu0 %v4693
    %5184 = vmatprep.subr.bf16.mxu0 %v4698
    %5185 = vmatpush1.bf16.msra.mxu0 %v4697
    %5186 = vmatprep.subr.bf16.mxu0 %v4702
    %5187 = vmatpush1.bf16.msra.mxu0 %v4701
    %5188 = vmatprep.subr.bf16.mxu0 %v4706
    %5189 = vmatpush1.bf16.msra.mxu0 %v4705
    %5190 = vmatprep.subr.bf16.mxu0 %v4710
    %5191 = vmatpush1.bf16.msra.mxu0 %v4709
    %5192 = vmatprep.subr.bf16.mxu0 %v4714
    %5193 = vmatpush1.bf16.msra.mxu0 %v4713
    %5194 = vmatprep.subr.bf16.mxu0 0
    %5195 = vmatpush1.bf16.msra.mxu0 0
    %5196 = vmatprep.subr.bf16.mxu0 0
    %5197 = vmatpush1.bf16.msra.mxu0 0
    %5198 = vmatprep.subr.bf16.mxu0 0
    %5199 = vmatpush1.bf16.msra.mxu0 0
    %5200 = vmatprep.subr.bf16.mxu0 0
    %5201 = vmatpush1.bf16.msra.mxu0 0
    %5202 = vmatprep.subr.bf16.mxu0 0
    %5203 = vmatpush1.bf16.msra.mxu0 0
    %5204 = vmatprep.subr.bf16.mxu0 0
    %5205 = vmatpush1.bf16.msra.mxu0 0
    %5206 = vmatprep.subr.bf16.mxu0 0
    %5207 = vmatpush1.bf16.msra.mxu0 0
    %5208 = vmatprep.subr.bf16.mxu0 0
    %5209 = vmatpush1.bf16.msra.mxu0 0
    %5210 = vmatprep.mubr.bf16.mxu0 0
    %5211 = vmatmul.mubr.bf16.gmra.mrb[0].mxu0 %v5177
    %v5212 = vpop.f32.mrb[0].mxu0
    %v5213 = vadd.f32 0.0, %v5212
    %v5214 = vpop.f32.mrb[0].mxu0
    %v5215 = vadd.f32 0.0, %v5214
    %v5216 = vpop.f32.mrb[0].mxu0
    %v5217 = vadd.f32 0.0, %v5216
    %v5218 = vpop.f32.mrb[0].mxu0
    %v5219 = vadd.f32 0.0, %v5218
    %5220 = vdwg.mxu0
    %5221 = vmatprep.subr.bf16.mxu0 %v4688
    %5222 = vmatpush1.bf16.msra.mxu0 %v4687
    %5223 = vmatprep.subr.bf16.mxu0 %v4692
    %5224 = vmatpush1.bf16.msra.mxu0 %v4691
    %5225 = vmatprep.subr.bf16.mxu0 %v4696
    %5226 = vmatpush1.bf16.msra.mxu0 %v4695
    %5227 = vmatprep.subr.bf16.mxu0 %v4700
    %5228 = vmatpush1.bf16.msra.mxu0 %v4699
    %5229 = vmatprep.subr.bf16.mxu0 %v4704
    %5230 = vmatpush1.bf16.msra.mxu0 %v4703
    %5231 = vmatprep.subr.bf16.mxu0 %v4708
    %5232 = vmatpush1.bf16.msra.mxu0 %v4707
    %5233 = vmatprep.subr.bf16.mxu0 %v4712
    %5234 = vmatpush1.bf16.msra.mxu0 %v4711
    %5235 = vmatprep.subr.bf16.mxu0 %v4716
    %5236 = vmatpush1.bf16.msra.mxu0 %v4715
    %5237 = vmatprep.subr.bf16.mxu0 0
    %5238 = vmatpush1.bf16.msra.mxu0 0
    %5239 = vmatprep.subr.bf16.mxu0 0
    %5240 = vmatpush1.bf16.msra.mxu0 0
    %5241 = vmatprep.subr.bf16.mxu0 0
    %5242 = vmatpush1.bf16.msra.mxu0 0
    %5243 = vmatprep.subr.bf16.mxu0 0
    %5244 = vmatpush1.bf16.msra.mxu0 0
    %5245 = vmatprep.subr.bf16.mxu0 0
    %5246 = vmatpush1.bf16.msra.mxu0 0
    %5247 = vmatprep.subr.bf16.mxu0 0
    %5248 = vmatpush1.bf16.msra.mxu0 0
    %5249 = vmatprep.subr.bf16.mxu0 0
    %5250 = vmatpush1.bf16.msra.mxu0 0
    %5251 = vmatprep.subr.bf16.mxu0 0
    %5252 = vmatpush1.bf16.msra.mxu0 0
    %5253 = vmatprep.mubr.bf16.mxu0 0
    %5254 = vmatmul.mubr.bf16.gmra.mrb[0].mxu0 %v5177
    %v5255 = vpop.f32.mrb[0].mxu0
    %v5256 = vadd.f32 0.0, %v5255
    %v5257 = vpop.f32.mrb[0].mxu0
    %v5258 = vadd.f32 0.0, %v5257
    %v5259 = vpop.f32.mrb[0].mxu0
    %v5260 = vadd.f32 0.0, %v5259
    %v5261 = vpop.f32.mrb[0].mxu0
    %v5262 = vadd.f32 0.0, %v5261
    %5263 = vdwg.mxu0
    %v5264 = vadd.f32 %v3616, %v5213
    %v5265 = vadd.f32 %v3618, %v5215
    %v5266 = vadd.f32 %v3689, %v5256
    %v5267 = vadd.f32 %v3691, %v5258
    %v5268 = vadd.f32 %v3620, %v5217
    %v5269 = vadd.f32 %v3622, %v5219
    %v5270 = vadd.f32 %v3693, %v5260
    %v5271 = vadd.f32 %v3695, %v5262
    %v5272 = vsub.f32 0.0, %v5264
    %v5273 = vsub.f32 0.0, %v5265
    %v5274 = vsub.f32 0.0, %v5266
    %v5275 = vsub.f32 0.0, %v5268
    %v5276 = vsub.f32 0.0, %v5269
    %v5277 = vsub.f32 0.0, %v5270
    %v5278 = vmul.f32 %v5272, 1.442695
    %v5279 = vpow.pop %v5278
    %v5280 = vmul.f32 %v5273, 1.442695
    %v5281 = vpow.pop %v5280
    %v5282 = vmul.f32 %v5274, 1.442695
    %v5283 = vpow.pop %v5282
    %v5284 = vmul.f32 %v5275, 1.442695
    %v5285 = vpow.pop %v5284
    %v5286 = vmul.f32 %v5276, 1.442695
    %v5287 = vpow.pop %v5286
    %v5288 = vmul.f32 %v5277, 1.442695
    %v5289 = vpow.pop %v5288
    %v5290 = vadd.f32 %v5279, 1.0
    %v5291 = vadd.f32 %v5281, 1.0
    %v5292 = vadd.f32 %v5283, 1.0
    %v5293 = vadd.f32 %v5285, 1.0
    %v5294 = vadd.f32 %v5287, 1.0
    %v5295 = vadd.f32 %v5289, 1.0
    %v5296 = vrcp.pop %v5290
    %v5297 = vmul.f32 1.0, %v5296
    %v5298 = vrcp.pop %v5291
    %v5299 = vmul.f32 1.0, %v5298
    %v5300 = vrcp.pop %v5292
    %v5301 = vmul.f32 1.0, %v5300
    %v5302 = vrcp.pop %v5293
    %v5303 = vmul.f32 1.0, %v5302
    %v5304 = vrcp.pop %v5294
    %v5305 = vmul.f32 1.0, %v5304
    %v5306 = vrcp.pop %v5295
    %v5307 = vmul.f32 1.0, %v5306
    %v5308 = vtanh.pop %v5267
    %v5309 = vtanh.pop %v5271
    %v5310 = vmul.f32 %v5299, %v5171
    %v5311 = vmul.f32 %v5305, %v5172
    %v5312 = vmul.f32 %v5297, %v5308
    %v5313 = vmul.f32 %v5303, %v5309
    %v5314 = vadd.f32 %v5310, %v5312
    %v5315 = vadd.f32 %v5311, %v5313
    %v5316 = vtanh.pop %v5314
    %v5317 = vtanh.pop %v5315
    %v5318 = vmul.f32 %v5301, %v5316
    %v5319 = vmul.f32 %v5307, %v5317
    %v5320 = vpack.c.bf16 %v5319, %v5318
    %v5321 = vpack.c.bf16 %v4588, %v4587
    %v5322 = vld [vmem:[#allocation21] sm:$0xff]
    %v5323 = vld [vmem:[#allocation21 + $0x8] sm:$0xff]
    %v5324 = vld [vmem:[#allocation21 + $0x10] sm:$0xff]
    %v5325 = vld [vmem:[#allocation21 + $0x18] sm:$0xff]
    %v5326 = vld [vmem:[#allocation21 + $0x20] sm:$0xff]
    %v5327 = vld [vmem:[#allocation21 + $0x28] sm:$0xff]
    %v5328 = vld [vmem:[#allocation21 + $0x30] sm:$0xff]
    %v5329 = vld [vmem:[#allocation21 + $0x38] sm:$0xff]
    %v5330 = vld [vmem:[#allocation21 + $0x40] sm:$0xff]
    %v5331 = vld [vmem:[#allocation21 + $0x48] sm:$0xff]
    %v5332 = vld [vmem:[#allocation21 + $0x50] sm:$0xff]
    %v5333 = vld [vmem:[#allocation21 + $0x58] sm:$0xff]
    %v5334 = vld [vmem:[#allocation21 + $0x60] sm:$0xff]
    %v5335 = vld [vmem:[#allocation21 + $0x68] sm:$0xff]
    %v5336 = vld [vmem:[#allocation21 + $0x70] sm:$0xff]
    %v5337 = vld [vmem:[#allocation21 + $0x78] sm:$0xff]
    %v5338 = vld [vmem:[#allocation21 + $0x80] sm:$0xff]
    %v5339 = vld [vmem:[#allocation21 + $0x88] sm:$0xff]
    %v5340 = vld [vmem:[#allocation21 + $0x90] sm:$0xff]
    %v5341 = vld [vmem:[#allocation21 + $0x98] sm:$0xff]
    %v5342 = vld [vmem:[#allocation21 + $0xa0] sm:$0xff]
    %v5343 = vld [vmem:[#allocation21 + $0xa8] sm:$0xff]
    %v5344 = vld [vmem:[#allocation21 + $0xb0] sm:$0xff]
    %v5345 = vld [vmem:[#allocation21 + $0xb8] sm:$0xff]
    %v5346 = vld [vmem:[#allocation21 + $0xc0] sm:$0xff]
    %v5347 = vld [vmem:[#allocation21 + $0xc8] sm:$0xff]
    %v5348 = vld [vmem:[#allocation21 + $0xd0] sm:$0xff]
    %v5349 = vld [vmem:[#allocation21 + $0xd8] sm:$0xff]
    %v5350 = vld [vmem:[#allocation21 + $0xe0] sm:$0xff]
    %v5351 = vld [vmem:[#allocation21 + $0xe8] sm:$0xff]
    %v5352 = vld [vmem:[#allocation21 + $0xf0] sm:$0xff]
    %v5353 = vld [vmem:[#allocation21 + $0xf8] sm:$0xff]
    %v5354 = vld [vmem:[#allocation21 + $0x100] sm:$0xff]
    %v5355 = vld [vmem:[#allocation21 + $0x108] sm:$0xff]
    %v5356 = vld [vmem:[#allocation21 + $0x110] sm:$0xff]
    %v5357 = vld [vmem:[#allocation21 + $0x118] sm:$0xff]
    %v5358 = vld [vmem:[#allocation21 + $0x120] sm:$0xff]
    %v5359 = vld [vmem:[#allocation21 + $0x128] sm:$0xff]
    %v5360 = vld [vmem:[#allocation21 + $0x130] sm:$0xff]
    %v5361 = vld [vmem:[#allocation21 + $0x138] sm:$0xff]
    %v5362 = vld [vmem:[#allocation21 + $0x140] sm:$0xff]
    %v5363 = vld [vmem:[#allocation21 + $0x148] sm:$0xff]
    %v5364 = vld [vmem:[#allocation21 + $0x150] sm:$0xff]
    %v5365 = vld [vmem:[#allocation21 + $0x158] sm:$0xff]
    %v5366 = vld [vmem:[#allocation21 + $0x160] sm:$0xff]
    %v5367 = vld [vmem:[#allocation21 + $0x168] sm:$0xff]
    %v5368 = vld [vmem:[#allocation21 + $0x170] sm:$0xff]
    %v5369 = vld [vmem:[#allocation21 + $0x178] sm:$0xff]
    %v5370 = vld [vmem:[#allocation21 + $0x180] sm:$0xff]
    %v5371 = vld [vmem:[#allocation21 + $0x188] sm:$0xff]
    %v5372 = vld [vmem:[#allocation21 + $0x190] sm:$0xff]
    %v5373 = vld [vmem:[#allocation21 + $0x198] sm:$0xff]
    %v5374 = vld [vmem:[#allocation21 + $0x1a0] sm:$0xff]
    %v5375 = vld [vmem:[#allocation21 + $0x1a8] sm:$0xff]
    %v5376 = vld [vmem:[#allocation21 + $0x1b0] sm:$0xff]
    %v5377 = vld [vmem:[#allocation21 + $0x1b8] sm:$0xff]
    %v5378 = vld [vmem:[#allocation21 + $0x1c0] sm:$0xff]
    %v5379 = vld [vmem:[#allocation21 + $0x1c8] sm:$0xff]
    %v5380 = vld [vmem:[#allocation21 + $0x1d0] sm:$0xff]
    %v5381 = vld [vmem:[#allocation21 + $0x1d8] sm:$0xff]
    %v5382 = vld [vmem:[#allocation21 + $0x1e0] sm:$0xff]
    %v5383 = vld [vmem:[#allocation21 + $0x1e8] sm:$0xff]
    %v5384 = vld [vmem:[#allocation21 + $0x1f0] sm:$0xff]
    %v5385 = vld [vmem:[#allocation21 + $0x1f8] sm:$0xff]
    %v5386 = vld [vmem:[#allocation21 + $0x200] sm:$0xff]
    %v5387 = vld [vmem:[#allocation21 + $0x208] sm:$0xff]
    %v5388 = vld [vmem:[#allocation21 + $0x210] sm:$0xff]
    %v5389 = vld [vmem:[#allocation21 + $0x218] sm:$0xff]
    %v5390 = vld [vmem:[#allocation21 + $0x220] sm:$0xff]
    %v5391 = vld [vmem:[#allocation21 + $0x228] sm:$0xff]
    %v5392 = vld [vmem:[#allocation21 + $0x230] sm:$0xff]
    %v5393 = vld [vmem:[#allocation21 + $0x238] sm:$0xff]
    %v5394 = vld [vmem:[#allocation21 + $0x240] sm:$0xff]
    %v5395 = vld [vmem:[#allocation21 + $0x248] sm:$0xff]
    %v5396 = vld [vmem:[#allocation21 + $0x250] sm:$0xff]
    %v5397 = vld [vmem:[#allocation21 + $0x258] sm:$0xff]
    %v5398 = vld [vmem:[#allocation21 + $0x260] sm:$0xff]
    %v5399 = vld [vmem:[#allocation21 + $0x268] sm:$0xff]
    %v5400 = vld [vmem:[#allocation21 + $0x270] sm:$0xff]
    %v5401 = vld [vmem:[#allocation21 + $0x278] sm:$0xff]
    %v5402 = vld [vmem:[#allocation21 + $0x280] sm:$0xff]
    %v5403 = vld [vmem:[#allocation21 + $0x288] sm:$0xff]
    %v5404 = vld [vmem:[#allocation21 + $0x290] sm:$0xff]
    %v5405 = vld [vmem:[#allocation21 + $0x298] sm:$0xff]
    %v5406 = vld [vmem:[#allocation21 + $0x2a0] sm:$0xff]
    %v5407 = vld [vmem:[#allocation21 + $0x2a8] sm:$0xff]
    %v5408 = vld [vmem:[#allocation21 + $0x2b0] sm:$0xff]
    %v5409 = vld [vmem:[#allocation21 + $0x2b8] sm:$0xff]
    %v5410 = vld [vmem:[#allocation21 + $0x2c0] sm:$0xff]
    %v5411 = vld [vmem:[#allocation21 + $0x2c8] sm:$0xff]
    %v5412 = vld [vmem:[#allocation21 + $0x2d0] sm:$0xff]
    %v5413 = vld [vmem:[#allocation21 + $0x2d8] sm:$0xff]
    %v5414 = vld [vmem:[#allocation21 + $0x2e0] sm:$0xff]
    %v5415 = vld [vmem:[#allocation21 + $0x2e8] sm:$0xff]
    %v5416 = vld [vmem:[#allocation21 + $0x2f0] sm:$0xff]
    %v5417 = vld [vmem:[#allocation21 + $0x2f8] sm:$0xff]
    %v5418 = vld [vmem:[#allocation21 + $0x300] sm:$0xff]
    %v5419 = vld [vmem:[#allocation21 + $0x308] sm:$0xff]
    %v5420 = vld [vmem:[#allocation21 + $0x310] sm:$0xff]
    %v5421 = vld [vmem:[#allocation21 + $0x318] sm:$0xff]
    %v5422 = vld [vmem:[#allocation21 + $0x320] sm:$0xff]
    %v5423 = vld [vmem:[#allocation21 + $0x328] sm:$0xff]
    %v5424 = vld [vmem:[#allocation21 + $0x330] sm:$0xff]
    %v5425 = vld [vmem:[#allocation21 + $0x338] sm:$0xff]
    %v5426 = vld [vmem:[#allocation21 + $0x340] sm:$0xff]
    %v5427 = vld [vmem:[#allocation21 + $0x348] sm:$0xff]
    %v5428 = vld [vmem:[#allocation21 + $0x350] sm:$0xff]
    %v5429 = vld [vmem:[#allocation21 + $0x358] sm:$0xff]
    %v5430 = vld [vmem:[#allocation21 + $0x360] sm:$0xff]
    %v5431 = vld [vmem:[#allocation21 + $0x368] sm:$0xff]
    %v5432 = vld [vmem:[#allocation21 + $0x370] sm:$0xff]
    %v5433 = vld [vmem:[#allocation21 + $0x378] sm:$0xff]
    %v5434 = vld [vmem:[#allocation21 + $0x380] sm:$0xff]
    %v5435 = vld [vmem:[#allocation21 + $0x388] sm:$0xff]
    %v5436 = vld [vmem:[#allocation21 + $0x390] sm:$0xff]
    %v5437 = vld [vmem:[#allocation21 + $0x398] sm:$0xff]
    %v5438 = vld [vmem:[#allocation21 + $0x3a0] sm:$0xff]
    %v5439 = vld [vmem:[#allocation21 + $0x3a8] sm:$0xff]
    %v5440 = vld [vmem:[#allocation21 + $0x3b0] sm:$0xff]
    %v5441 = vld [vmem:[#allocation21 + $0x3b8] sm:$0xff]
    %v5442 = vld [vmem:[#allocation21 + $0x3c0] sm:$0xff]
    %v5443 = vld [vmem:[#allocation21 + $0x3c8] sm:$0xff]
    %v5444 = vld [vmem:[#allocation21 + $0x3d0] sm:$0xff]
    %v5445 = vld [vmem:[#allocation21 + $0x3d8] sm:$0xff]
    %v5446 = vld [vmem:[#allocation21 + $0x3e0] sm:$0xff]
    %v5447 = vld [vmem:[#allocation21 + $0x3e8] sm:$0xff]
    %v5448 = vld [vmem:[#allocation21 + $0x3f0] sm:$0xff]
    %v5449 = vld [vmem:[#allocation21 + $0x3f8] sm:$0xff]
    %v5450 = vld [vmem:[#allocation23] sm:$0xff]
    %v5452 = vlaneseq
    %v5453 = vshrl.u32 %v5452, 7
    %v5454 = vsub.s32 0, %v5453
    %v5455 = vrot.slane %v5450, %v5454
    %v5456 = vlaneseq
    %v5457 = vshrl.u32 %v5456, 7
    %v5458 = vsub.s32 1, %v5457
    %v5459 = vrot.slane %v5450, %v5458
    %v5460 = vlaneseq
    %v5461 = vshrl.u32 %v5460, 7
    %v5462 = vsub.s32 2, %v5461
    %v5463 = vrot.slane %v5450, %v5462
    %v5464 = vlaneseq
    %v5465 = vshrl.u32 %v5464, 7
    %v5466 = vsub.s32 3, %v5465
    %v5467 = vrot.slane %v5450, %v5466
    %v5468 = vlaneseq
    %v5469 = vshrl.u32 %v5468, 7
    %v5470 = vsub.s32 4, %v5469
    %v5471 = vrot.slane %v5450, %v5470
    %v5472 = vlaneseq
    %v5473 = vshrl.u32 %v5472, 7
    %v5474 = vsub.s32 5, %v5473
    %v5475 = vrot.slane %v5450, %v5474
    %v5476 = vlaneseq
    %v5477 = vshrl.u32 %v5476, 7
    %v5478 = vsub.s32 6, %v5477
    %v5479 = vrot.slane %v5450, %v5478
    %v5480 = vlaneseq
    %v5481 = vshrl.u32 %v5480, 7
    %v5482 = vsub.s32 7, %v5481
    %v5483 = vrot.slane %v5450, %v5482
    %v5620 = vunpack.c.l.b16 %v5322
    %v5621 = vunpack.c.h.b16 %v5322
    %v5622 = vunpack.c.l.b16 %v5323
    %v5623 = vunpack.c.h.b16 %v5323
    %v5624 = vunpack.c.l.b16 %v5324
    %v5625 = vunpack.c.h.b16 %v5324
    %v5626 = vunpack.c.l.b16 %v5325
    %v5627 = vunpack.c.h.b16 %v5325
    %v5628 = vunpack.c.l.b16 %v5326
    %v5629 = vunpack.c.h.b16 %v5326
    %v5630 = vunpack.c.l.b16 %v5327
    %v5631 = vunpack.c.h.b16 %v5327
    %v5632 = vunpack.c.l.b16 %v5328
    %v5633 = vunpack.c.h.b16 %v5328
    %v5634 = vunpack.c.l.b16 %v5329
    %v5635 = vunpack.c.h.b16 %v5329
    %v5636 = vunpack.c.l.b16 %v5330
    %v5637 = vunpack.c.h.b16 %v5330
    %v5638 = vunpack.c.l.b16 %v5331
    %v5639 = vunpack.c.h.b16 %v5331
    %v5640 = vunpack.c.l.b16 %v5332
    %v5641 = vunpack.c.h.b16 %v5332
    %v5642 = vunpack.c.l.b16 %v5333
    %v5643 = vunpack.c.h.b16 %v5333
    %v5644 = vunpack.c.l.b16 %v5334
    %v5645 = vunpack.c.h.b16 %v5334
    %v5646 = vunpack.c.l.b16 %v5335
    %v5647 = vunpack.c.h.b16 %v5335
    %v5648 = vunpack.c.l.b16 %v5336
    %v5649 = vunpack.c.h.b16 %v5336
    %v5650 = vunpack.c.l.b16 %v5337
    %v5651 = vunpack.c.h.b16 %v5337
    %v5652 = vunpack.c.l.b16 %v5338
    %v5653 = vunpack.c.h.b16 %v5338
    %v5654 = vunpack.c.l.b16 %v5339
    %v5655 = vunpack.c.h.b16 %v5339
    %v5656 = vunpack.c.l.b16 %v5340
    %v5657 = vunpack.c.h.b16 %v5340
    %v5658 = vunpack.c.l.b16 %v5341
    %v5659 = vunpack.c.h.b16 %v5341
    %v5660 = vunpack.c.l.b16 %v5342
    %v5661 = vunpack.c.h.b16 %v5342
    %v5662 = vunpack.c.l.b16 %v5343
    %v5663 = vunpack.c.h.b16 %v5343
    %v5664 = vunpack.c.l.b16 %v5344
    %v5665 = vunpack.c.h.b16 %v5344
    %v5666 = vunpack.c.l.b16 %v5345
    %v5667 = vunpack.c.h.b16 %v5345
    %v5668 = vunpack.c.l.b16 %v5346
    %v5669 = vunpack.c.h.b16 %v5346
    %v5670 = vunpack.c.l.b16 %v5347
    %v5671 = vunpack.c.h.b16 %v5347
    %v5672 = vunpack.c.l.b16 %v5348
    %v5673 = vunpack.c.h.b16 %v5348
    %v5674 = vunpack.c.l.b16 %v5349
    %v5675 = vunpack.c.h.b16 %v5349
    %v5676 = vunpack.c.l.b16 %v5350
    %v5677 = vunpack.c.h.b16 %v5350
    %v5678 = vunpack.c.l.b16 %v5351
    %v5679 = vunpack.c.h.b16 %v5351
    %v5680 = vunpack.c.l.b16 %v5352
    %v5681 = vunpack.c.h.b16 %v5352
    %v5682 = vunpack.c.l.b16 %v5353
    %v5683 = vunpack.c.h.b16 %v5353
    %v5684 = vunpack.c.l.b16 %v5354
    %v5685 = vunpack.c.h.b16 %v5354
    %v5686 = vunpack.c.l.b16 %v5355
    %v5687 = vunpack.c.h.b16 %v5355
    %v5688 = vunpack.c.l.b16 %v5356
    %v5689 = vunpack.c.h.b16 %v5356
    %v5690 = vunpack.c.l.b16 %v5357
    %v5691 = vunpack.c.h.b16 %v5357
    %v5692 = vunpack.c.l.b16 %v5358
    %v5693 = vunpack.c.h.b16 %v5358
    %v5694 = vunpack.c.l.b16 %v5359
    %v5695 = vunpack.c.h.b16 %v5359
    %v5696 = vunpack.c.l.b16 %v5360
    %v5697 = vunpack.c.h.b16 %v5360
    %v5698 = vunpack.c.l.b16 %v5361
    %v5699 = vunpack.c.h.b16 %v5361
    %v5700 = vunpack.c.l.b16 %v5362
    %v5701 = vunpack.c.h.b16 %v5362
    %v5702 = vunpack.c.l.b16 %v5363
    %v5703 = vunpack.c.h.b16 %v5363
    %v5704 = vunpack.c.l.b16 %v5364
    %v5705 = vunpack.c.h.b16 %v5364
    %v5706 = vunpack.c.l.b16 %v5365
    %v5707 = vunpack.c.h.b16 %v5365
    %v5708 = vunpack.c.l.b16 %v5366
    %v5709 = vunpack.c.h.b16 %v5366
    %v5710 = vunpack.c.l.b16 %v5367
    %v5711 = vunpack.c.h.b16 %v5367
    %v5712 = vunpack.c.l.b16 %v5368
    %v5713 = vunpack.c.h.b16 %v5368
    %v5714 = vunpack.c.l.b16 %v5369
    %v5715 = vunpack.c.h.b16 %v5369
    %v5716 = vunpack.c.l.b16 %v5370
    %v5717 = vunpack.c.h.b16 %v5370
    %v5718 = vunpack.c.l.b16 %v5371
    %v5719 = vunpack.c.h.b16 %v5371
    %v5720 = vunpack.c.l.b16 %v5372
    %v5721 = vunpack.c.h.b16 %v5372
    %v5722 = vunpack.c.l.b16 %v5373
    %v5723 = vunpack.c.h.b16 %v5373
    %v5724 = vunpack.c.l.b16 %v5374
    %v5725 = vunpack.c.h.b16 %v5374
    %v5726 = vunpack.c.l.b16 %v5375
    %v5727 = vunpack.c.h.b16 %v5375
    %v5728 = vunpack.c.l.b16 %v5376
    %v5729 = vunpack.c.h.b16 %v5376
    %v5730 = vunpack.c.l.b16 %v5377
    %v5731 = vunpack.c.h.b16 %v5377
    %v5732 = vunpack.c.l.b16 %v5378
    %v5733 = vunpack.c.h.b16 %v5378
    %v5734 = vunpack.c.l.b16 %v5379
    %v5735 = vunpack.c.h.b16 %v5379
    %v5736 = vunpack.c.l.b16 %v5380
    %v5737 = vunpack.c.h.b16 %v5380
    %v5738 = vunpack.c.l.b16 %v5381
    %v5739 = vunpack.c.h.b16 %v5381
    %v5740 = vunpack.c.l.b16 %v5382
    %v5741 = vunpack.c.h.b16 %v5382
    %v5742 = vunpack.c.l.b16 %v5383
    %v5743 = vunpack.c.h.b16 %v5383
    %v5744 = vunpack.c.l.b16 %v5384
    %v5745 = vunpack.c.h.b16 %v5384
    %v5746 = vunpack.c.l.b16 %v5385
    %v5747 = vunpack.c.h.b16 %v5385
    %v5748 = vunpack.c.l.b16 %v5386
    %v5749 = vunpack.c.h.b16 %v5386
    %v5750 = vunpack.c.l.b16 %v5387
    %v5751 = vunpack.c.h.b16 %v5387
    %v5752 = vunpack.c.l.b16 %v5388
    %v5753 = vunpack.c.h.b16 %v5388
    %v5754 = vunpack.c.l.b16 %v5389
    %v5755 = vunpack.c.h.b16 %v5389
    %v5756 = vunpack.c.l.b16 %v5390
    %v5757 = vunpack.c.h.b16 %v5390
    %v5758 = vunpack.c.l.b16 %v5391
    %v5759 = vunpack.c.h.b16 %v5391
    %v5760 = vunpack.c.l.b16 %v5392
    %v5761 = vunpack.c.h.b16 %v5392
    %v5762 = vunpack.c.l.b16 %v5393
    %v5763 = vunpack.c.h.b16 %v5393
    %v5764 = vunpack.c.l.b16 %v5394
    %v5765 = vunpack.c.h.b16 %v5394
    %v5766 = vunpack.c.l.b16 %v5395
    %v5767 = vunpack.c.h.b16 %v5395
    %v5768 = vunpack.c.l.b16 %v5396
    %v5769 = vunpack.c.h.b16 %v5396
    %v5770 = vunpack.c.l.b16 %v5397
    %v5771 = vunpack.c.h.b16 %v5397
    %v5772 = vunpack.c.l.b16 %v5398
    %v5773 = vunpack.c.h.b16 %v5398
    %v5774 = vunpack.c.l.b16 %v5399
    %v5775 = vunpack.c.h.b16 %v5399
    %v5776 = vunpack.c.l.b16 %v5400
    %v5777 = vunpack.c.h.b16 %v5400
    %v5778 = vunpack.c.l.b16 %v5401
    %v5779 = vunpack.c.h.b16 %v5401
    %v5780 = vunpack.c.l.b16 %v5402
    %v5781 = vunpack.c.h.b16 %v5402
    %v5782 = vunpack.c.l.b16 %v5403
    %v5783 = vunpack.c.h.b16 %v5403
    %v5784 = vunpack.c.l.b16 %v5404
    %v5785 = vunpack.c.h.b16 %v5404
    %v5786 = vunpack.c.l.b16 %v5405
    %v5787 = vunpack.c.h.b16 %v5405
    %v5788 = vunpack.c.l.b16 %v5406
    %v5789 = vunpack.c.h.b16 %v5406
    %v5790 = vunpack.c.l.b16 %v5407
    %v5791 = vunpack.c.h.b16 %v5407
    %v5792 = vunpack.c.l.b16 %v5408
    %v5793 = vunpack.c.h.b16 %v5408
    %v5794 = vunpack.c.l.b16 %v5409
    %v5795 = vunpack.c.h.b16 %v5409
    %v5796 = vunpack.c.l.b16 %v5410
    %v5797 = vunpack.c.h.b16 %v5410
    %v5798 = vunpack.c.l.b16 %v5411
    %v5799 = vunpack.c.h.b16 %v5411
    %v5800 = vunpack.c.l.b16 %v5412
    %v5801 = vunpack.c.h.b16 %v5412
    %v5802 = vunpack.c.l.b16 %v5413
    %v5803 = vunpack.c.h.b16 %v5413
    %v5804 = vunpack.c.l.b16 %v5414
    %v5805 = vunpack.c.h.b16 %v5414
    %v5806 = vunpack.c.l.b16 %v5415
    %v5807 = vunpack.c.h.b16 %v5415
    %v5808 = vunpack.c.l.b16 %v5416
    %v5809 = vunpack.c.h.b16 %v5416
    %v5810 = vunpack.c.l.b16 %v5417
    %v5811 = vunpack.c.h.b16 %v5417
    %v5812 = vunpack.c.l.b16 %v5418
    %v5813 = vunpack.c.h.b16 %v5418
    %v5814 = vunpack.c.l.b16 %v5419
    %v5815 = vunpack.c.h.b16 %v5419
    %v5816 = vunpack.c.l.b16 %v5420
    %v5817 = vunpack.c.h.b16 %v5420
    %v5818 = vunpack.c.l.b16 %v5421
    %v5819 = vunpack.c.h.b16 %v5421
    %v5820 = vunpack.c.l.b16 %v5422
    %v5821 = vunpack.c.h.b16 %v5422
    %v5822 = vunpack.c.l.b16 %v5423
    %v5823 = vunpack.c.h.b16 %v5423
    %v5824 = vunpack.c.l.b16 %v5424
    %v5825 = vunpack.c.h.b16 %v5424
    %v5826 = vunpack.c.l.b16 %v5425
    %v5827 = vunpack.c.h.b16 %v5425
    %v5828 = vunpack.c.l.b16 %v5426
    %v5829 = vunpack.c.h.b16 %v5426
    %v5830 = vunpack.c.l.b16 %v5427
    %v5831 = vunpack.c.h.b16 %v5427
    %v5832 = vunpack.c.l.b16 %v5428
    %v5833 = vunpack.c.h.b16 %v5428
    %v5834 = vunpack.c.l.b16 %v5429
    %v5835 = vunpack.c.h.b16 %v5429
    %v5836 = vunpack.c.l.b16 %v5430
    %v5837 = vunpack.c.h.b16 %v5430
    %v5838 = vunpack.c.l.b16 %v5431
    %v5839 = vunpack.c.h.b16 %v5431
    %v5840 = vunpack.c.l.b16 %v5432
    %v5841 = vunpack.c.h.b16 %v5432
    %v5842 = vunpack.c.l.b16 %v5433
    %v5843 = vunpack.c.h.b16 %v5433
    %v5844 = vunpack.c.l.b16 %v5434
    %v5845 = vunpack.c.h.b16 %v5434
    %v5846 = vunpack.c.l.b16 %v5435
    %v5847 = vunpack.c.h.b16 %v5435
    %v5848 = vunpack.c.l.b16 %v5436
    %v5849 = vunpack.c.h.b16 %v5436
    %v5850 = vunpack.c.l.b16 %v5437
    %v5851 = vunpack.c.h.b16 %v5437
    %v5852 = vunpack.c.l.b16 %v5438
    %v5853 = vunpack.c.h.b16 %v5438
    %v5854 = vunpack.c.l.b16 %v5439
    %v5855 = vunpack.c.h.b16 %v5439
    %v5856 = vunpack.c.l.b16 %v5440
    %v5857 = vunpack.c.h.b16 %v5440
    %v5858 = vunpack.c.l.b16 %v5441
    %v5859 = vunpack.c.h.b16 %v5441
    %v5860 = vunpack.c.l.b16 %v5442
    %v5861 = vunpack.c.h.b16 %v5442
    %v5862 = vunpack.c.l.b16 %v5443
    %v5863 = vunpack.c.h.b16 %v5443
    %v5864 = vunpack.c.l.b16 %v5444
    %v5865 = vunpack.c.h.b16 %v5444
    %v5866 = vunpack.c.l.b16 %v5445
    %v5867 = vunpack.c.h.b16 %v5445
    %v5868 = vunpack.c.l.b16 %v5446
    %v5869 = vunpack.c.h.b16 %v5446
    %v5870 = vunpack.c.l.b16 %v5447
    %v5871 = vunpack.c.h.b16 %v5447
    %v5872 = vunpack.c.l.b16 %v5448
    %v5873 = vunpack.c.h.b16 %v5448
    %v5874 = vunpack.c.l.b16 %v5449
    %v5875 = vunpack.c.h.b16 %v5449
    %v5876 = vpack.c.b16 %v5628, %v5620
    %v5877 = vpack.c.b16 %v5629, %v5621
    %v5878 = vpack.c.b16 %v5630, %v5622
    %v5879 = vpack.c.b16 %v5631, %v5623
    %v5880 = vpack.c.b16 %v5632, %v5624
    %v5881 = vpack.c.b16 %v5633, %v5625
    %v5882 = vpack.c.b16 %v5634, %v5626
    %v5883 = vpack.c.b16 %v5635, %v5627
    %v5884 = vpack.c.b16 %v5644, %v5636
    %v5885 = vpack.c.b16 %v5645, %v5637
    %v5886 = vpack.c.b16 %v5646, %v5638
    %v5887 = vpack.c.b16 %v5647, %v5639
    %v5888 = vpack.c.b16 %v5648, %v5640
    %v5889 = vpack.c.b16 %v5649, %v5641
    %v5890 = vpack.c.b16 %v5650, %v5642
    %v5891 = vpack.c.b16 %v5651, %v5643
    %v5892 = vpack.c.b16 %v5660, %v5652
    %v5893 = vpack.c.b16 %v5661, %v5653
    %v5894 = vpack.c.b16 %v5662, %v5654
    %v5895 = vpack.c.b16 %v5663, %v5655
    %v5896 = vpack.c.b16 %v5664, %v5656
    %v5897 = vpack.c.b16 %v5665, %v5657
    %v5898 = vpack.c.b16 %v5666, %v5658
    %v5899 = vpack.c.b16 %v5667, %v5659
    %v5900 = vpack.c.b16 %v5676, %v5668
    %v5901 = vpack.c.b16 %v5677, %v5669
    %v5902 = vpack.c.b16 %v5678, %v5670
    %v5903 = vpack.c.b16 %v5679, %v5671
    %v5904 = vpack.c.b16 %v5680, %v5672
    %v5905 = vpack.c.b16 %v5681, %v5673
    %v5906 = vpack.c.b16 %v5682, %v5674
    %v5907 = vpack.c.b16 %v5683, %v5675
    %v5908 = vpack.c.b16 %v5692, %v5684
    %v5909 = vpack.c.b16 %v5693, %v5685
    %v5910 = vpack.c.b16 %v5694, %v5686
    %v5911 = vpack.c.b16 %v5695, %v5687
    %v5912 = vpack.c.b16 %v5696, %v5688
    %v5913 = vpack.c.b16 %v5697, %v5689
    %v5914 = vpack.c.b16 %v5698, %v5690
    %v5915 = vpack.c.b16 %v5699, %v5691
    %v5916 = vpack.c.b16 %v5708, %v5700
    %v5917 = vpack.c.b16 %v5709, %v5701
    %v5918 = vpack.c.b16 %v5710, %v5702
    %v5919 = vpack.c.b16 %v5711, %v5703
    %v5920 = vpack.c.b16 %v5712, %v5704
    %v5921 = vpack.c.b16 %v5713, %v5705
    %v5922 = vpack.c.b16 %v5714, %v5706
    %v5923 = vpack.c.b16 %v5715, %v5707
    %v5924 = vpack.c.b16 %v5724, %v5716
    %v5925 = vpack.c.b16 %v5725, %v5717
    %v5926 = vpack.c.b16 %v5726, %v5718
    %v5927 = vpack.c.b16 %v5727, %v5719
    %v5928 = vpack.c.b16 %v5728, %v5720
    %v5929 = vpack.c.b16 %v5729, %v5721
    %v5930 = vpack.c.b16 %v5730, %v5722
    %v5931 = vpack.c.b16 %v5731, %v5723
    %v5932 = vpack.c.b16 %v5740, %v5732
    %v5933 = vpack.c.b16 %v5741, %v5733
    %v5934 = vpack.c.b16 %v5742, %v5734
    %v5935 = vpack.c.b16 %v5743, %v5735
    %v5936 = vpack.c.b16 %v5744, %v5736
    %v5937 = vpack.c.b16 %v5745, %v5737
    %v5938 = vpack.c.b16 %v5746, %v5738
    %v5939 = vpack.c.b16 %v5747, %v5739
    %v5940 = vpack.c.b16 %v5756, %v5748
    %v5941 = vpack.c.b16 %v5757, %v5749
    %v5942 = vpack.c.b16 %v5758, %v5750
    %v5943 = vpack.c.b16 %v5759, %v5751
    %v5944 = vpack.c.b16 %v5760, %v5752
    %v5945 = vpack.c.b16 %v5761, %v5753
    %v5946 = vpack.c.b16 %v5762, %v5754
    %v5947 = vpack.c.b16 %v5763, %v5755
    %v5948 = vpack.c.b16 %v5772, %v5764
    %v5949 = vpack.c.b16 %v5773, %v5765
    %v5950 = vpack.c.b16 %v5774, %v5766
    %v5951 = vpack.c.b16 %v5775, %v5767
    %v5952 = vpack.c.b16 %v5776, %v5768
    %v5953 = vpack.c.b16 %v5777, %v5769
    %v5954 = vpack.c.b16 %v5778, %v5770
    %v5955 = vpack.c.b16 %v5779, %v5771
    %v5956 = vpack.c.b16 %v5788, %v5780
    %v5957 = vpack.c.b16 %v5789, %v5781
    %v5958 = vpack.c.b16 %v5790, %v5782
    %v5959 = vpack.c.b16 %v5791, %v5783
    %v5960 = vpack.c.b16 %v5792, %v5784
    %v5961 = vpack.c.b16 %v5793, %v5785
    %v5962 = vpack.c.b16 %v5794, %v5786
    %v5963 = vpack.c.b16 %v5795, %v5787
    %v5964 = vpack.c.b16 %v5804, %v5796
    %v5965 = vpack.c.b16 %v5805, %v5797
    %v5966 = vpack.c.b16 %v5806, %v5798
    %v5967 = vpack.c.b16 %v5807, %v5799
    %v5968 = vpack.c.b16 %v5808, %v5800
    %v5969 = vpack.c.b16 %v5809, %v5801
    %v5970 = vpack.c.b16 %v5810, %v5802
    %v5971 = vpack.c.b16 %v5811, %v5803
    %v5972 = vpack.c.b16 %v5820, %v5812
    %v5973 = vpack.c.b16 %v5821, %v5813
    %v5974 = vpack.c.b16 %v5822, %v5814
    %v5975 = vpack.c.b16 %v5823, %v5815
    %v5976 = vpack.c.b16 %v5824, %v5816
    %v5977 = vpack.c.b16 %v5825, %v5817
    %v5978 = vpack.c.b16 %v5826, %v5818
    %v5979 = vpack.c.b16 %v5827, %v5819
    %v5980 = vpack.c.b16 %v5836, %v5828
    %v5981 = vpack.c.b16 %v5837, %v5829
    %v5982 = vpack.c.b16 %v5838, %v5830
    %v5983 = vpack.c.b16 %v5839, %v5831
    %v5984 = vpack.c.b16 %v5840, %v5832
    %v5985 = vpack.c.b16 %v5841, %v5833
    %v5986 = vpack.c.b16 %v5842, %v5834
    %v5987 = vpack.c.b16 %v5843, %v5835
    %v5988 = vpack.c.b16 %v5852, %v5844
    %v5989 = vpack.c.b16 %v5853, %v5845
    %v5990 = vpack.c.b16 %v5854, %v5846
    %v5991 = vpack.c.b16 %v5855, %v5847
    %v5992 = vpack.c.b16 %v5856, %v5848
    %v5993 = vpack.c.b16 %v5857, %v5849
    %v5994 = vpack.c.b16 %v5858, %v5850
    %v5995 = vpack.c.b16 %v5859, %v5851
    %v5996 = vpack.c.b16 %v5868, %v5860
    %v5997 = vpack.c.b16 %v5869, %v5861
    %v5998 = vpack.c.b16 %v5870, %v5862
    %v5999 = vpack.c.b16 %v5871, %v5863
    %v6000 = vpack.c.b16 %v5872, %v5864
    %v6001 = vpack.c.b16 %v5873, %v5865
    %v6002 = vpack.c.b16 %v5874, %v5866
    %v6003 = vpack.c.b16 %v5875, %v5867
    %6132 = vmatprep.subr.bf16.mxu0 %v5877
    %6133 = vmatpush1.bf16.msra.mxu0 %v5876
    %6134 = vmatprep.subr.bf16.mxu0 %v5885
    %6135 = vmatpush1.bf16.msra.mxu0 %v5884
    %6136 = vmatprep.subr.bf16.mxu0 %v5893
    %6137 = vmatpush1.bf16.msra.mxu0 %v5892
    %6138 = vmatprep.subr.bf16.mxu0 %v5901
    %6139 = vmatpush1.bf16.msra.mxu0 %v5900
    %6140 = vmatprep.subr.bf16.mxu0 %v5909
    %6141 = vmatpush1.bf16.msra.mxu0 %v5908
    %6142 = vmatprep.subr.bf16.mxu0 %v5917
    %6143 = vmatpush1.bf16.msra.mxu0 %v5916
    %6144 = vmatprep.subr.bf16.mxu0 %v5925
    %6145 = vmatpush1.bf16.msra.mxu0 %v5924
    %6146 = vmatprep.subr.bf16.mxu0 %v5933
    %6147 = vmatpush1.bf16.msra.mxu0 %v5932
    %6148 = vmatprep.subr.bf16.mxu0 %v5941
    %6149 = vmatpush1.bf16.msra.mxu0 %v5940
    %6150 = vmatprep.subr.bf16.mxu0 %v5949
    %6151 = vmatpush1.bf16.msra.mxu0 %v5948
    %6152 = vmatprep.subr.bf16.mxu0 %v5957
    %6153 = vmatpush1.bf16.msra.mxu0 %v5956
    %6154 = vmatprep.subr.bf16.mxu0 %v5965
    %6155 = vmatpush1.bf16.msra.mxu0 %v5964
    %6156 = vmatprep.subr.bf16.mxu0 %v5973
    %6157 = vmatpush1.bf16.msra.mxu0 %v5972
    %6158 = vmatprep.subr.bf16.mxu0 %v5981
    %6159 = vmatpush1.bf16.msra.mxu0 %v5980
    %6160 = vmatprep.subr.bf16.mxu0 %v5989
    %6161 = vmatpush1.bf16.msra.mxu0 %v5988
    %6162 = vmatprep.subr.bf16.mxu0 %v5997
    %6163 = vmatpush1.bf16.msra.mxu0 %v5996
    %6164 = vmatprep.mubr.bf16.mxu0 %v5320
    %6165 = vmatmul.mubr.bf16.gmra.mrb[0].mxu0 %v4160
    %v6166 = vpop.f32.mrb[0].mxu0
    %v6167 = vadd.f32 %v5455, %v6166
    %v6168 = vpop.f32.mrb[0].mxu0
    %v6169 = vadd.f32 %v5459, %v6168
    %v6170 = vpop.f32.mrb[0].mxu0
    %v6171 = vadd.f32 %v5455, %v6170
    %v6172 = vpop.f32.mrb[0].mxu0
    %v6173 = vadd.f32 %v5459, %v6172
    %6174 = vmatprep.mubr.bf16.mxu0 %v5177
    %6175 = vmatmul.mubr.bf16.gmra.mrb[0].mxu0 %v4303
    %v6176 = vpop.f32.mrb[0].mxu0
    %v6177 = vadd.f32 %v5455, %v6176
    %v6178 = vpop.f32.mrb[0].mxu0
    %v6179 = vadd.f32 %v5459, %v6178
    %v6180 = vpop.f32.mrb[0].mxu0
    %v6181 = vadd.f32 %v5455, %v6180
    %v6182 = vpop.f32.mrb[0].mxu0
    %v6183 = vadd.f32 %v5459, %v6182
    %6184 = vmatprep.mubr.bf16.mxu0 %v5034
    %6185 = vmatmul.mubr.bf16.gmra.mrb[0].mxu0 %v4446
    %v6186 = vpop.f32.mrb[0].mxu0
    %v6187 = vadd.f32 %v5455, %v6186
    %v6188 = vpop.f32.mrb[0].mxu0
    %v6189 = vadd.f32 %v5459, %v6188
    %v6190 = vpop.f32.mrb[0].mxu0
    %v6191 = vadd.f32 %v5455, %v6190
    %v6192 = vpop.f32.mrb[0].mxu0
    %v6193 = vadd.f32 %v5459, %v6192
    %6194 = vmatprep.mubr.bf16.mxu0 %v4891
    %6195 = vmatmul.mubr.bf16.gmra.mrb[0].mxu0 %v5321
    %v6196 = vpop.f32.mrb[0].mxu0
    %v6197 = vadd.f32 %v5455, %v6196
    %v6198 = vpop.f32.mrb[0].mxu0
    %v6199 = vadd.f32 %v5459, %v6198
    %v6200 = vpop.f32.mrb[0].mxu0
    %v6201 = vadd.f32 %v5455, %v6200
    %v6202 = vpop.f32.mrb[0].mxu0
    %v6203 = vadd.f32 %v5459, %v6202
    %6204 = vdwg.mxu0
    %6205 = vmatprep.subr.bf16.mxu0 %v5879
    %6206 = vmatpush1.bf16.msra.mxu0 %v5878
    %6207 = vmatprep.subr.bf16.mxu0 %v5887
    %6208 = vmatpush1.bf16.msra.mxu0 %v5886
    %6209 = vmatprep.subr.bf16.mxu0 %v5895
    %6210 = vmatpush1.bf16.msra.mxu0 %v5894
    %6211 = vmatprep.subr.bf16.mxu0 %v5903
    %6212 = vmatpush1.bf16.msra.mxu0 %v5902
    %6213 = vmatprep.subr.bf16.mxu0 %v5911
    %6214 = vmatpush1.bf16.msra.mxu0 %v5910
    %6215 = vmatprep.subr.bf16.mxu0 %v5919
    %6216 = vmatpush1.bf16.msra.mxu0 %v5918
    %6217 = vmatprep.subr.bf16.mxu0 %v5927
    %6218 = vmatpush1.bf16.msra.mxu0 %v5926
    %6219 = vmatprep.subr.bf16.mxu0 %v5935
    %6220 = vmatpush1.bf16.msra.mxu0 %v5934
    %6221 = vmatprep.subr.bf16.mxu0 %v5943
    %6222 = vmatpush1.bf16.msra.mxu0 %v5942
    %6223 = vmatprep.subr.bf16.mxu0 %v5951
    %6224 = vmatpush1.bf16.msra.mxu0 %v5950
    %6225 = vmatprep.subr.bf16.mxu0 %v5959
    %6226 = vmatpush1.bf16.msra.mxu0 %v5958
    %6227 = vmatprep.subr.bf16.mxu0 %v5967
    %6228 = vmatpush1.bf16.msra.mxu0 %v5966
    %6229 = vmatprep.subr.bf16.mxu0 %v5975
    %6230 = vmatpush1.bf16.msra.mxu0 %v5974
    %6231 = vmatprep.subr.bf16.mxu0 %v5983
    %6232 = vmatpush1.bf16.msra.mxu0 %v5982
    %6233 = vmatprep.subr.bf16.mxu0 %v5991
    %6234 = vmatpush1.bf16.msra.mxu0 %v5990
    %6235 = vmatprep.subr.bf16.mxu0 %v5999
    %6236 = vmatpush1.bf16.msra.mxu0 %v5998
    %6237 = vmatprep.mubr.bf16.mxu0 %v5320
    %6238 = vmatmul.mubr.bf16.gmra.mrb[0].mxu0 %v4160
    %v6239 = vpop.f32.mrb[0].mxu0
    %v6240 = vadd.f32 %v5463, %v6239
    %v6241 = vpop.f32.mrb[0].mxu0
    %v6242 = vadd.f32 %v5467, %v6241
    %v6243 = vpop.f32.mrb[0].mxu0
    %v6244 = vadd.f32 %v5463, %v6243
    %v6245 = vpop.f32.mrb[0].mxu0
    %v6246 = vadd.f32 %v5467, %v6245
    %6247 = vmatprep.mubr.bf16.mxu0 %v5177
    %6248 = vmatmul.mubr.bf16.gmra.mrb[0].mxu0 %v4303
    %v6249 = vpop.f32.mrb[0].mxu0
    %v6250 = vadd.f32 %v5463, %v6249
    %v6251 = vpop.f32.mrb[0].mxu0
    %v6252 = vadd.f32 %v5467, %v6251
    %v6253 = vpop.f32.mrb[0].mxu0
    %v6254 = vadd.f32 %v5463, %v6253
    %v6255 = vpop.f32.mrb[0].mxu0
    %v6256 = vadd.f32 %v5467, %v6255
    %6257 = vmatprep.mubr.bf16.mxu0 %v5034
    %6258 = vmatmul.mubr.bf16.gmra.mrb[0].mxu0 %v4446
    %v6259 = vpop.f32.mrb[0].mxu0
    %v6260 = vadd.f32 %v5463, %v6259
    %v6261 = vpop.f32.mrb[0].mxu0
    %v6262 = vadd.f32 %v5467, %v6261
    %v6263 = vpop.f32.mrb[0].mxu0
    %v6264 = vadd.f32 %v5463, %v6263
    %v6265 = vpop.f32.mrb[0].mxu0
    %v6266 = vadd.f32 %v5467, %v6265
    %6267 = vmatprep.mubr.bf16.mxu0 %v4891
    %6268 = vmatmul.mubr.bf16.gmra.mrb[0].mxu0 %v5321
    %v6269 = vpop.f32.mrb[0].mxu0
    %v6270 = vadd.f32 %v5463, %v6269
    %v6271 = vpop.f32.mrb[0].mxu0
    %v6272 = vadd.f32 %v5467, %v6271
    %v6273 = vpop.f32.mrb[0].mxu0
    %v6274 = vadd.f32 %v5463, %v6273
    %v6275 = vpop.f32.mrb[0].mxu0
    %v6276 = vadd.f32 %v5467, %v6275
    %6277 = vdwg.mxu0
    %6278 = vmatprep.subr.bf16.mxu0 %v5881
    %6279 = vmatpush1.bf16.msra.mxu0 %v5880
    %6280 = vmatprep.subr.bf16.mxu0 %v5889
    %6281 = vmatpush1.bf16.msra.mxu0 %v5888
    %6282 = vmatprep.subr.bf16.mxu0 %v5897
    %6283 = vmatpush1.bf16.msra.mxu0 %v5896
    %6284 = vmatprep.subr.bf16.mxu0 %v5905
    %6285 = vmatpush1.bf16.msra.mxu0 %v5904
    %6286 = vmatprep.subr.bf16.mxu0 %v5913
    %6287 = vmatpush1.bf16.msra.mxu0 %v5912
    %6288 = vmatprep.subr.bf16.mxu0 %v5921
    %6289 = vmatpush1.bf16.msra.mxu0 %v5920
    %6290 = vmatprep.subr.bf16.mxu0 %v5929
    %6291 = vmatpush1.bf16.msra.mxu0 %v5928
    %6292 = vmatprep.subr.bf16.mxu0 %v5937
    %6293 = vmatpush1.bf16.msra.mxu0 %v5936
    %6294 = vmatprep.subr.bf16.mxu0 %v5945
    %6295 = vmatpush1.bf16.msra.mxu0 %v5944
    %6296 = vmatprep.subr.bf16.mxu0 %v5953
    %6297 = vmatpush1.bf16.msra.mxu0 %v5952
    %6298 = vmatprep.subr.bf16.mxu0 %v5961
    %6299 = vmatpush1.bf16.msra.mxu0 %v5960
    %6300 = vmatprep.subr.bf16.mxu0 %v5969
    %6301 = vmatpush1.bf16.msra.mxu0 %v5968
    %6302 = vmatprep.subr.bf16.mxu0 %v5977
    %6303 = vmatpush1.bf16.msra.mxu0 %v5976
    %6304 = vmatprep.subr.bf16.mxu0 %v5985
    %6305 = vmatpush1.bf16.msra.mxu0 %v5984
    %6306 = vmatprep.subr.bf16.mxu0 %v5993
    %6307 = vmatpush1.bf16.msra.mxu0 %v5992
    %6308 = vmatprep.subr.bf16.mxu0 %v6001
    %6309 = vmatpush1.bf16.msra.mxu0 %v6000
    %6310 = vmatprep.mubr.bf16.mxu0 %v5320
    %6311 = vmatmul.mubr.bf16.gmra.mrb[0].mxu0 %v4160
    %v6312 = vpop.f32.mrb[0].mxu0
    %v6313 = vadd.f32 %v5471, %v6312
    %v6314 = vpop.f32.mrb[0].mxu0
    %v6315 = vadd.f32 %v5475, %v6314
    %v6316 = vpop.f32.mrb[0].mxu0
    %v6317 = vadd.f32 %v5471, %v6316
    %v6318 = vpop.f32.mrb[0].mxu0
    %v6319 = vadd.f32 %v5475, %v6318
    %6320 = vmatprep.mubr.bf16.mxu0 %v5177
    %6321 = vmatmul.mubr.bf16.gmra.mrb[0].mxu0 %v4303
    %v6322 = vpop.f32.mrb[0].mxu0
    %v6323 = vadd.f32 %v5471, %v6322
    %v6324 = vpop.f32.mrb[0].mxu0
    %v6325 = vadd.f32 %v5475, %v6324
    %v6326 = vpop.f32.mrb[0].mxu0
    %v6327 = vadd.f32 %v5471, %v6326
    %v6328 = vpop.f32.mrb[0].mxu0
    %v6329 = vadd.f32 %v5475, %v6328
    %6330 = vmatprep.mubr.bf16.mxu0 %v5034
    %6331 = vmatmul.mubr.bf16.gmra.mrb[0].mxu0 %v4446
    %v6332 = vpop.f32.mrb[0].mxu0
    %v6333 = vadd.f32 %v5471, %v6332
    %v6334 = vpop.f32.mrb[0].mxu0
    %v6335 = vadd.f32 %v5475, %v6334
    %v6336 = vpop.f32.mrb[0].mxu0
    %v6337 = vadd.f32 %v5471, %v6336
    %v6338 = vpop.f32.mrb[0].mxu0
    %v6339 = vadd.f32 %v5475, %v6338
    %6340 = vmatprep.mubr.bf16.mxu0 %v4891
    %6341 = vmatmul.mubr.bf16.gmra.mrb[0].mxu0 %v5321
    %v6342 = vpop.f32.mrb[0].mxu0
    %v6343 = vadd.f32 %v5471, %v6342
    %v6344 = vpop.f32.mrb[0].mxu0
    %v6345 = vadd.f32 %v5475, %v6344
    %v6346 = vpop.f32.mrb[0].mxu0
    %v6347 = vadd.f32 %v5471, %v6346
    %v6348 = vpop.f32.mrb[0].mxu0
    %v6349 = vadd.f32 %v5475, %v6348
    %6350 = vdwg.mxu0
    %6351 = vmatprep.subr.bf16.mxu0 %v5883
    %6352 = vmatpush1.bf16.msra.mxu0 %v5882
    %6353 = vmatprep.subr.bf16.mxu0 %v5891
    %6354 = vmatpush1.bf16.msra.mxu0 %v5890
    %6355 = vmatprep.subr.bf16.mxu0 %v5899
    %6356 = vmatpush1.bf16.msra.mxu0 %v5898
    %6357 = vmatprep.subr.bf16.mxu0 %v5907
    %6358 = vmatpush1.bf16.msra.mxu0 %v5906
    %6359 = vmatprep.subr.bf16.mxu0 %v5915
    %6360 = vmatpush1.bf16.msra.mxu0 %v5914
    %6361 = vmatprep.subr.bf16.mxu0 %v5923
    %6362 = vmatpush1.bf16.msra.mxu0 %v5922
    %6363 = vmatprep.subr.bf16.mxu0 %v5931
    %6364 = vmatpush1.bf16.msra.mxu0 %v5930
    %6365 = vmatprep.subr.bf16.mxu0 %v5939
    %6366 = vmatpush1.bf16.msra.mxu0 %v5938
    %6367 = vmatprep.subr.bf16.mxu0 %v5947
    %6368 = vmatpush1.bf16.msra.mxu0 %v5946
    %6369 = vmatprep.subr.bf16.mxu0 %v5955
    %6370 = vmatpush1.bf16.msra.mxu0 %v5954
    %6371 = vmatprep.subr.bf16.mxu0 %v5963
    %6372 = vmatpush1.bf16.msra.mxu0 %v5962
    %6373 = vmatprep.subr.bf16.mxu0 %v5971
    %6374 = vmatpush1.bf16.msra.mxu0 %v5970
    %6375 = vmatprep.subr.bf16.mxu0 %v5979
    %6376 = vmatpush1.bf16.msra.mxu0 %v5978
    %6377 = vmatprep.subr.bf16.mxu0 %v5987
    %6378 = vmatpush1.bf16.msra.mxu0 %v5986
    %6379 = vmatprep.subr.bf16.mxu0 %v5995
    %6380 = vmatpush1.bf16.msra.mxu0 %v5994
    %6381 = vmatprep.subr.bf16.mxu0 %v6003
    %6382 = vmatpush1.bf16.msra.mxu0 %v6002
    %6383 = vmatprep.mubr.bf16.mxu0 %v5320
    %6384 = vmatmul.mubr.bf16.gmra.mrb[0].mxu0 %v4160
    %v6385 = vpop.f32.mrb[0].mxu0
    %v6386 = vadd.f32 %v5479, %v6385
    %v6387 = vpop.f32.mrb[0].mxu0
    %v6388 = vadd.f32 %v5483, %v6387
    %v6389 = vpop.f32.mrb[0].mxu0
    %v6390 = vadd.f32 %v5479, %v6389
    %v6391 = vpop.f32.mrb[0].mxu0
    %v6392 = vadd.f32 %v5483, %v6391
    %6393 = vmatprep.mubr.bf16.mxu0 %v5177
    %6394 = vmatmul.mubr.bf16.gmra.mrb[0].mxu0 %v4303
    %v6395 = vpop.f32.mrb[0].mxu0
    %v6396 = vadd.f32 %v5479, %v6395
    %v6397 = vpop.f32.mrb[0].mxu0
    %v6398 = vadd.f32 %v5483, %v6397
    %v6399 = vpop.f32.mrb[0].mxu0
    %v6400 = vadd.f32 %v5479, %v6399
    %v6401 = vpop.f32.mrb[0].mxu0
    %v6402 = vadd.f32 %v5483, %v6401
    %6403 = vmatprep.mubr.bf16.mxu0 %v5034
    %6404 = vmatmul.mubr.bf16.gmra.mrb[0].mxu0 %v4446
    %v6405 = vpop.f32.mrb[0].mxu0
    %v6406 = vadd.f32 %v5479, %v6405
    %v6407 = vpop.f32.mrb[0].mxu0
    %v6408 = vadd.f32 %v5483, %v6407
    %v6409 = vpop.f32.mrb[0].mxu0
    %v6410 = vadd.f32 %v5479, %v6409
    %v6411 = vpop.f32.mrb[0].mxu0
    %v6412 = vadd.f32 %v5483, %v6411
    %6413 = vmatprep.mubr.bf16.mxu0 %v4891
    %6414 = vmatmul.mubr.bf16.gmra.mrb[0].mxu0 %v5321
    %v6415 = vpop.f32.mrb[0].mxu0
    %v6416 = vadd.f32 %v5479, %v6415
    %v6417 = vpop.f32.mrb[0].mxu0
    %v6418 = vadd.f32 %v5483, %v6417
    %v6419 = vpop.f32.mrb[0].mxu0
    %v6420 = vadd.f32 %v5479, %v6419
    %v6421 = vpop.f32.mrb[0].mxu0
    %v6422 = vadd.f32 %v5483, %v6421
    %6423 = vdwg.mxu0
    %v6456 = vunpack.c.l.b16 %v3793
    %v6457 = vunpack.c.h.b16 %v3793
    %v6458 = vunpack.c.l.b16 %v3794
    %v6459 = vunpack.c.h.b16 %v3794
    %v6460 = vunpack.c.l.b16 %v3795
    %v6461 = vunpack.c.h.b16 %v3795
    %v6462 = vunpack.c.l.b16 %v3796
    %v6463 = vunpack.c.h.b16 %v3796
    %v6464 = vunpack.c.l.b16 %v3797
    %v6465 = vunpack.c.h.b16 %v3797
    %v6466 = vunpack.c.l.b16 %v3798
    %v6467 = vunpack.c.h.b16 %v3798
    %v6468 = vunpack.c.l.b16 %v3799
    %v6469 = vunpack.c.h.b16 %v3799
    %v6470 = vunpack.c.l.b16 %v3800
    %v6471 = vunpack.c.h.b16 %v3800
    %v6472 = vunpack.c.l.b16 %v3801
    %v6473 = vunpack.c.h.b16 %v3801
    %v6474 = vunpack.c.l.b16 %v3802
    %v6475 = vunpack.c.h.b16 %v3802
    %v6476 = vunpack.c.l.b16 %v3803
    %v6477 = vunpack.c.h.b16 %v3803
    %v6478 = vunpack.c.l.b16 %v3804
    %v6479 = vunpack.c.h.b16 %v3804
    %v6480 = vunpack.c.l.b16 %v3805
    %v6481 = vunpack.c.h.b16 %v3805
    %v6482 = vunpack.c.l.b16 %v3806
    %v6483 = vunpack.c.h.b16 %v3806
    %v6484 = vunpack.c.l.b16 %v3807
    %v6485 = vunpack.c.h.b16 %v3807
    %v6486 = vunpack.c.l.b16 %v3808
    %v6487 = vunpack.c.h.b16 %v3808
    %v6488 = vunpack.c.l.b16 %v3809
    %v6489 = vunpack.c.h.b16 %v3809
    %v6490 = vunpack.c.l.b16 %v3810
    %v6491 = vunpack.c.h.b16 %v3810
    %v6492 = vunpack.c.l.b16 %v3811
    %v6493 = vunpack.c.h.b16 %v3811
    %v6494 = vunpack.c.l.b16 %v3812
    %v6495 = vunpack.c.h.b16 %v3812
    %v6496 = vunpack.c.l.b16 %v3813
    %v6497 = vunpack.c.h.b16 %v3813
    %v6498 = vunpack.c.l.b16 %v3814
    %v6499 = vunpack.c.h.b16 %v3814
    %v6500 = vunpack.c.l.b16 %v3815
    %v6501 = vunpack.c.h.b16 %v3815
    %v6502 = vunpack.c.l.b16 %v3816
    %v6503 = vunpack.c.h.b16 %v3816
    %v6504 = vunpack.c.l.b16 %v3817
    %v6505 = vunpack.c.h.b16 %v3817
    %v6506 = vunpack.c.l.b16 %v3818
    %v6507 = vunpack.c.h.b16 %v3818
    %v6508 = vunpack.c.l.b16 %v3819
    %v6509 = vunpack.c.h.b16 %v3819
    %v6510 = vunpack.c.l.b16 %v3820
    %v6511 = vunpack.c.h.b16 %v3820
    %v6512 = vunpack.c.l.b16 %v3821
    %v6513 = vunpack.c.h.b16 %v3821
    %v6514 = vunpack.c.l.b16 %v3822
    %v6515 = vunpack.c.h.b16 %v3822
    %v6516 = vunpack.c.l.b16 %v3823
    %v6517 = vunpack.c.h.b16 %v3823
    %v6518 = vunpack.c.l.b16 %v3824
    %v6519 = vunpack.c.h.b16 %v3824
    %v6520 = vpack.c.b16 %v6460, %v6456
    %v6521 = vpack.c.b16 %v6461, %v6457
    %v6522 = vpack.c.b16 %v6462, %v6458
    %v6523 = vpack.c.b16 %v6463, %v6459
    %v6524 = vpack.c.b16 %v6468, %v6464
    %v6525 = vpack.c.b16 %v6469, %v6465
    %v6526 = vpack.c.b16 %v6470, %v6466
    %v6527 = vpack.c.b16 %v6471, %v6467
    %v6528 = vpack.c.b16 %v6476, %v6472
    %v6529 = vpack.c.b16 %v6477, %v6473
    %v6530 = vpack.c.b16 %v6478, %v6474
    %v6531 = vpack.c.b16 %v6479, %v6475
    %v6532 = vpack.c.b16 %v6484, %v6480
    %v6533 = vpack.c.b16 %v6485, %v6481
    %v6534 = vpack.c.b16 %v6486, %v6482
    %v6535 = vpack.c.b16 %v6487, %v6483
    %v6536 = vpack.c.b16 %v6492, %v6488
    %v6537 = vpack.c.b16 %v6493, %v6489
    %v6538 = vpack.c.b16 %v6494, %v6490
    %v6539 = vpack.c.b16 %v6495, %v6491
    %v6540 = vpack.c.b16 %v6500, %v6496
    %v6541 = vpack.c.b16 %v6501, %v6497
    %v6542 = vpack.c.b16 %v6502, %v6498
    %v6543 = vpack.c.b16 %v6503, %v6499
    %v6544 = vpack.c.b16 %v6508, %v6504
    %v6545 = vpack.c.b16 %v6509, %v6505
    %v6546 = vpack.c.b16 %v6510, %v6506
    %v6547 = vpack.c.b16 %v6511, %v6507
    %v6548 = vpack.c.b16 %v6516, %v6512
    %v6549 = vpack.c.b16 %v6517, %v6513
    %v6550 = vpack.c.b16 %v6518, %v6514
    %v6551 = vpack.c.b16 %v6519, %v6515
    %6584 = vmatprep.subr.bf16.mxu0 %v6521
    %6585 = vmatpush1.bf16.msra.mxu0 %v6520
    %6586 = vmatprep.subr.bf16.mxu0 %v6525
    %6587 = vmatpush1.bf16.msra.mxu0 %v6524
    %6588 = vmatprep.subr.bf16.mxu0 %v6529
    %6589 = vmatpush1.bf16.msra.mxu0 %v6528
    %6590 = vmatprep.subr.bf16.mxu0 %v6533
    %6591 = vmatpush1.bf16.msra.mxu0 %v6532
    %6592 = vmatprep.subr.bf16.mxu0 %v6537
    %6593 = vmatpush1.bf16.msra.mxu0 %v6536
    %6594 = vmatprep.subr.bf16.mxu0 %v6541
    %6595 = vmatpush1.bf16.msra.mxu0 %v6540
    %6596 = vmatprep.subr.bf16.mxu0 %v6545
    %6597 = vmatpush1.bf16.msra.mxu0 %v6544
    %6598 = vmatprep.subr.bf16.mxu0 %v6549
    %6599 = vmatpush1.bf16.msra.mxu0 %v6548
    %6600 = vmatprep.subr.bf16.mxu0 0
    %6601 = vmatpush1.bf16.msra.mxu0 0
    %6602 = vmatprep.subr.bf16.mxu0 0
    %6603 = vmatpush1.bf16.msra.mxu0 0
    %6604 = vmatprep.subr.bf16.mxu0 0
    %6605 = vmatpush1.bf16.msra.mxu0 0
    %6606 = vmatprep.subr.bf16.mxu0 0
    %6607 = vmatpush1.bf16.msra.mxu0 0
    %6608 = vmatprep.subr.bf16.mxu0 0
    %6609 = vmatpush1.bf16.msra.mxu0 0
    %6610 = vmatprep.subr.bf16.mxu0 0
    %6611 = vmatpush1.bf16.msra.mxu0 0
    %6612 = vmatprep.subr.bf16.mxu0 0
    %6613 = vmatpush1.bf16.msra.mxu0 0
    %6614 = vmatprep.subr.bf16.mxu0 0
    %6615 = vmatpush1.bf16.msra.mxu0 0
    %6616 = vmatprep.mubr.bf16.mxu0 0
    %6617 = vmatmul.mubr.bf16.gmra.mrb[0].mxu0 0
    %v6618 = vpop.f32.mrb[0].mxu0
    %v6619 = vadd.f32 0.0, %v6618
    %v6620 = vpop.f32.mrb[0].mxu0
    %v6621 = vadd.f32 0.0, %v6620
    %v6622 = vpop.f32.mrb[0].mxu0
    %v6623 = vadd.f32 0.0, %v6622
    %v6624 = vpop.f32.mrb[0].mxu0
    %v6625 = vadd.f32 0.0, %v6624
    %6626 = vdwg.mxu0
    %6627 = vmatprep.subr.bf16.mxu0 %v6523
    %6628 = vmatpush1.bf16.msra.mxu0 %v6522
    %6629 = vmatprep.subr.bf16.mxu0 %v6527
    %6630 = vmatpush1.bf16.msra.mxu0 %v6526
    %6631 = vmatprep.subr.bf16.mxu0 %v6531
    %6632 = vmatpush1.bf16.msra.mxu0 %v6530
    %6633 = vmatprep.subr.bf16.mxu0 %v6535
    %6634 = vmatpush1.bf16.msra.mxu0 %v6534
    %6635 = vmatprep.subr.bf16.mxu0 %v6539
    %6636 = vmatpush1.bf16.msra.mxu0 %v6538
    %6637 = vmatprep.subr.bf16.mxu0 %v6543
    %6638 = vmatpush1.bf16.msra.mxu0 %v6542
    %6639 = vmatprep.subr.bf16.mxu0 %v6547
    %6640 = vmatpush1.bf16.msra.mxu0 %v6546
    %6641 = vmatprep.subr.bf16.mxu0 %v6551
    %6642 = vmatpush1.bf16.msra.mxu0 %v6550
    %6643 = vmatprep.subr.bf16.mxu0 0
    %6644 = vmatpush1.bf16.msra.mxu0 0
    %6645 = vmatprep.subr.bf16.mxu0 0
    %6646 = vmatpush1.bf16.msra.mxu0 0
    %6647 = vmatprep.subr.bf16.mxu0 0
    %6648 = vmatpush1.bf16.msra.mxu0 0
    %6649 = vmatprep.subr.bf16.mxu0 0
    %6650 = vmatpush1.bf16.msra.mxu0 0
    %6651 = vmatprep.subr.bf16.mxu0 0
    %6652 = vmatpush1.bf16.msra.mxu0 0
    %6653 = vmatprep.subr.bf16.mxu0 0
    %6654 = vmatpush1.bf16.msra.mxu0 0
    %6655 = vmatprep.subr.bf16.mxu0 0
    %6656 = vmatpush1.bf16.msra.mxu0 0
    %6657 = vmatprep.subr.bf16.mxu0 0
    %6658 = vmatpush1.bf16.msra.mxu0 0
    %6659 = vmatprep.mubr.bf16.mxu0 0
    %6660 = vmatmul.mubr.bf16.gmra.mrb[0].mxu0 0
    %v6661 = vpop.f32.mrb[0].mxu0
    %v6662 = vadd.f32 0.0, %v6661
    %v6663 = vpop.f32.mrb[0].mxu0
    %v6664 = vadd.f32 0.0, %v6663
    %v6665 = vpop.f32.mrb[0].mxu0
    %v6666 = vadd.f32 0.0, %v6665
    %v6667 = vpop.f32.mrb[0].mxu0
    %v6668 = vadd.f32 0.0, %v6667
    %6669 = vdwg.mxu0
    %v6670 = vadd.f32 %v6167, %v6619
    %v6671 = vadd.f32 %v6169, %v6621
    %v6672 = vadd.f32 %v6240, %v6662
    %v6673 = vadd.f32 %v6242, %v6664
    %v6674 = vadd.f32 %v6171, %v6623
    %v6675 = vadd.f32 %v6173, %v6625
    %v6676 = vadd.f32 %v6244, %v6666
    %v6677 = vadd.f32 %v6246, %v6668
    %v6678 = vsub.f32 0.0, %v6670
    %v6679 = vsub.f32 0.0, %v6671
    %v6680 = vsub.f32 0.0, %v6672
    %v6681 = vsub.f32 0.0, %v6674
    %v6682 = vsub.f32 0.0, %v6675
    %v6683 = vsub.f32 0.0, %v6676
    %v6684 = vmul.f32 %v6678, 1.442695
    %v6685 = vpow.pop %v6684
    %v6686 = vmul.f32 %v6679, 1.442695
    %v6687 = vpow.pop %v6686
    %v6688 = vmul.f32 %v6680, 1.442695
    %v6689 = vpow.pop %v6688
    %v6690 = vmul.f32 %v6681, 1.442695
    %v6691 = vpow.pop %v6690
    %v6692 = vmul.f32 %v6682, 1.442695
    %v6693 = vpow.pop %v6692
    %v6694 = vmul.f32 %v6683, 1.442695
    %v6695 = vpow.pop %v6694
    %v6696 = vadd.f32 %v6685, 1.0
    %v6697 = vadd.f32 %v6687, 1.0
    %v6698 = vadd.f32 %v6689, 1.0
    %v6699 = vadd.f32 %v6691, 1.0
    %v6700 = vadd.f32 %v6693, 1.0
    %v6701 = vadd.f32 %v6695, 1.0
    %v6702 = vrcp.pop %v6696
    %v6703 = vmul.f32 1.0, %v6702
    %v6704 = vrcp.pop %v6697
    %v6705 = vmul.f32 1.0, %v6704
    %v6706 = vrcp.pop %v6698
    %v6707 = vmul.f32 1.0, %v6706
    %v6708 = vrcp.pop %v6699
    %v6709 = vmul.f32 1.0, %v6708
    %v6710 = vrcp.pop %v6700
    %v6711 = vmul.f32 1.0, %v6710
    %v6712 = vrcp.pop %v6701
    %v6713 = vmul.f32 1.0, %v6712
    %v6714 = vtanh.pop %v6673
    %v6715 = vtanh.pop %v6677
    %v6716 = vmul.f32 %v6705, 0.0
    %v6717 = vmul.f32 %v6711, 0.0
    %v6718 = vmul.f32 %v6703, %v6714
    %v6719 = vmul.f32 %v6709, %v6715
    %v6720 = vadd.f32 %v6716, %v6718
    %v6721 = vadd.f32 %v6717, %v6719
    %v6722 = vtanh.pop %v6720
    %v6723 = vtanh.pop %v6721
    %v6724 = vmul.f32 %v6707, %v6722
    %v6725 = vmul.f32 %v6713, %v6723
    %v6726 = vpack.c.bf16 %v6725, %v6724
    %6727 = vmatprep.subr.bf16.mxu0 %v6521
    %6728 = vmatpush1.bf16.msra.mxu0 %v6520
    %6729 = vmatprep.subr.bf16.mxu0 %v6525
    %6730 = vmatpush1.bf16.msra.mxu0 %v6524
    %6731 = vmatprep.subr.bf16.mxu0 %v6529
    %6732 = vmatpush1.bf16.msra.mxu0 %v6528
    %6733 = vmatprep.subr.bf16.mxu0 %v6533
    %6734 = vmatpush1.bf16.msra.mxu0 %v6532
    %6735 = vmatprep.subr.bf16.mxu0 %v6537
    %6736 = vmatpush1.bf16.msra.mxu0 %v6536
    %6737 = vmatprep.subr.bf16.mxu0 %v6541
    %6738 = vmatpush1.bf16.msra.mxu0 %v6540
    %6739 = vmatprep.subr.bf16.mxu0 %v6545
    %6740 = vmatpush1.bf16.msra.mxu0 %v6544
    %6741 = vmatprep.subr.bf16.mxu0 %v6549
    %6742 = vmatpush1.bf16.msra.mxu0 %v6548
    %6743 = vmatprep.subr.bf16.mxu0 0
    %6744 = vmatpush1.bf16.msra.mxu0 0
    %6745 = vmatprep.subr.bf16.mxu0 0
    %6746 = vmatpush1.bf16.msra.mxu0 0
    %6747 = vmatprep.subr.bf16.mxu0 0
    %6748 = vmatpush1.bf16.msra.mxu0 0
    %6749 = vmatprep.subr.bf16.mxu0 0
    %6750 = vmatpush1.bf16.msra.mxu0 0
    %6751 = vmatprep.subr.bf16.mxu0 0
    %6752 = vmatpush1.bf16.msra.mxu0 0
    %6753 = vmatprep.subr.bf16.mxu0 0
    %6754 = vmatpush1.bf16.msra.mxu0 0
    %6755 = vmatprep.subr.bf16.mxu0 0
    %6756 = vmatpush1.bf16.msra.mxu0 0
    %6757 = vmatprep.subr.bf16.mxu0 0
    %6758 = vmatpush1.bf16.msra.mxu0 0
    %6759 = vmatprep.mubr.bf16.mxu0 0
    %6760 = vmatmul.mubr.bf16.gmra.mrb[0].mxu0 %v6726
    %v6761 = vpop.f32.mrb[0].mxu0
    %v6762 = vadd.f32 0.0, %v6761
    %v6763 = vpop.f32.mrb[0].mxu0
    %v6764 = vadd.f32 0.0, %v6763
    %v6765 = vpop.f32.mrb[0].mxu0
    %v6766 = vadd.f32 0.0, %v6765
    %v6767 = vpop.f32.mrb[0].mxu0
    %v6768 = vadd.f32 0.0, %v6767
    %6769 = vdwg.mxu0
    %6770 = vmatprep.subr.bf16.mxu0 %v6523
    %6771 = vmatpush1.bf16.msra.mxu0 %v6522
    %6772 = vmatprep.subr.bf16.mxu0 %v6527
    %6773 = vmatpush1.bf16.msra.mxu0 %v6526
    %6774 = vmatprep.subr.bf16.mxu0 %v6531
    %6775 = vmatpush1.bf16.msra.mxu0 %v6530
    %6776 = vmatprep.subr.bf16.mxu0 %v6535
    %6777 = vmatpush1.bf16.msra.mxu0 %v6534
    %6778 = vmatprep.subr.bf16.mxu0 %v6539
    %6779 = vmatpush1.bf16.msra.mxu0 %v6538
    %6780 = vmatprep.subr.bf16.mxu0 %v6543
    %6781 = vmatpush1.bf16.msra.mxu0 %v6542
    %6782 = vmatprep.subr.bf16.mxu0 %v6547
    %6783 = vmatpush1.bf16.msra.mxu0 %v6546
    %6784 = vmatprep.subr.bf16.mxu0 %v6551
    %6785 = vmatpush1.bf16.msra.mxu0 %v6550
    %6786 = vmatprep.subr.bf16.mxu0 0
    %6787 = vmatpush1.bf16.msra.mxu0 0
    %6788 = vmatprep.subr.bf16.mxu0 0
    %6789 = vmatpush1.bf16.msra.mxu0 0
    %6790 = vmatprep.subr.bf16.mxu0 0
    %6791 = vmatpush1.bf16.msra.mxu0 0
    %6792 = vmatprep.subr.bf16.mxu0 0
    %6793 = vmatpush1.bf16.msra.mxu0 0
    %6794 = vmatprep.subr.bf16.mxu0 0
    %6795 = vmatpush1.bf16.msra.mxu0 0
    %6796 = vmatprep.subr.bf16.mxu0 0
    %6797 = vmatpush1.bf16.msra.mxu0 0
    %6798 = vmatprep.subr.bf16.mxu0 0
    %6799 = vmatpush1.bf16.msra.mxu0 0
    %6800 = vmatprep.subr.bf16.mxu0 0
    %6801 = vmatpush1.bf16.msra.mxu0 0
    %6802 = vmatprep.mubr.bf16.mxu0 0
    %6803 = vmatmul.mubr.bf16.gmra.mrb[0].mxu0 %v6726
    %v6804 = vpop.f32.mrb[0].mxu0
    %v6805 = vadd.f32 0.0, %v6804
    %v6806 = vpop.f32.mrb[0].mxu0
    %v6807 = vadd.f32 0.0, %v6806
    %v6808 = vpop.f32.mrb[0].mxu0
    %v6809 = vadd.f32 0.0, %v6808
    %v6810 = vpop.f32.mrb[0].mxu0
    %v6811 = vadd.f32 0.0, %v6810
    %6812 = vdwg.mxu0
    %v6813 = vadd.f32 %v6177, %v6762
    %v6814 = vadd.f32 %v6179, %v6764
    %v6815 = vadd.f32 %v6250, %v6805
    %v6816 = vadd.f32 %v6252, %v6807
    %v6817 = vadd.f32 %v6181, %v6766
    %v6818 = vadd.f32 %v6183, %v6768
    %v6819 = vadd.f32 %v6254, %v6809
    %v6820 = vadd.f32 %v6256, %v6811
    %v6821 = vsub.f32 0.0, %v6813
    %v6822 = vsub.f32 0.0, %v6814
    %v6823 = vsub.f32 0.0, %v6815
    %v6824 = vsub.f32 0.0, %v6817
    %v6825 = vsub.f32 0.0, %v6818
    %v6826 = vsub.f32 0.0, %v6819
    %v6827 = vmul.f32 %v6821, 1.442695
    %v6828 = vpow.pop %v6827
    %v6829 = vmul.f32 %v6822, 1.442695
    %v6830 = vpow.pop %v6829
    %v6831 = vmul.f32 %v6823, 1.442695
    %v6832 = vpow.pop %v6831
    %v6833 = vmul.f32 %v6824, 1.442695
    %v6834 = vpow.pop %v6833
    %v6835 = vmul.f32 %v6825, 1.442695
    %v6836 = vpow.pop %v6835
    %v6837 = vmul.f32 %v6826, 1.442695
    %v6838 = vpow.pop %v6837
    %v6839 = vadd.f32 %v6828, 1.0
    %v6840 = vadd.f32 %v6830, 1.0
    %v6841 = vadd.f32 %v6832, 1.0
    %v6842 = vadd.f32 %v6834, 1.0
    %v6843 = vadd.f32 %v6836, 1.0
    %v6844 = vadd.f32 %v6838, 1.0
    %v6845 = vrcp.pop %v6839
    %v6846 = vmul.f32 1.0, %v6845
    %v6847 = vrcp.pop %v6840
    %v6848 = vmul.f32 1.0, %v6847
    %v6849 = vrcp.pop %v6841
    %v6850 = vmul.f32 1.0, %v6849
    %v6851 = vrcp.pop %v6842
    %v6852 = vmul.f32 1.0, %v6851
    %v6853 = vrcp.pop %v6843
    %v6854 = vmul.f32 1.0, %v6853
    %v6855 = vrcp.pop %v6844
    %v6856 = vmul.f32 1.0, %v6855
    %v6857 = vtanh.pop %v6816
    %v6858 = vtanh.pop %v6820
    %v6859 = vmul.f32 %v6848, %v6720
    %v6860 = vmul.f32 %v6854, %v6721
    %v6861 = vmul.f32 %v6846, %v6857
    %v6862 = vmul.f32 %v6852, %v6858
    %v6863 = vadd.f32 %v6859, %v6861
    %v6864 = vadd.f32 %v6860, %v6862
    %v6865 = vtanh.pop %v6863
    %v6866 = vtanh.pop %v6864
    %v6867 = vmul.f32 %v6850, %v6865
    %v6868 = vmul.f32 %v6856, %v6866
    %v6869 = vpack.c.bf16 %v6868, %v6867
    %6870 = vmatprep.subr.bf16.mxu0 %v6521
    %6871 = vmatpush1.bf16.msra.mxu0 %v6520
    %6872 = vmatprep.subr.bf16.mxu0 %v6525
    %6873 = vmatpush1.bf16.msra.mxu0 %v6524
    %6874 = vmatprep.subr.bf16.mxu0 %v6529
    %6875 = vmatpush1.bf16.msra.mxu0 %v6528
    %6876 = vmatprep.subr.bf16.mxu0 %v6533
    %6877 = vmatpush1.bf16.msra.mxu0 %v6532
    %6878 = vmatprep.subr.bf16.mxu0 %v6537
    %6879 = vmatpush1.bf16.msra.mxu0 %v6536
    %6880 = vmatprep.subr.bf16.mxu0 %v6541
    %6881 = vmatpush1.bf16.msra.mxu0 %v6540
    %6882 = vmatprep.subr.bf16.mxu0 %v6545
    %6883 = vmatpush1.bf16.msra.mxu0 %v6544
    %6884 = vmatprep.subr.bf16.mxu0 %v6549
    %6885 = vmatpush1.bf16.msra.mxu0 %v6548
    %6886 = vmatprep.subr.bf16.mxu0 0
    %6887 = vmatpush1.bf16.msra.mxu0 0
    %6888 = vmatprep.subr.bf16.mxu0 0
    %6889 = vmatpush1.bf16.msra.mxu0 0
    %6890 = vmatprep.subr.bf16.mxu0 0
    %6891 = vmatpush1.bf16.msra.mxu0 0
    %6892 = vmatprep.subr.bf16.mxu0 0
    %6893 = vmatpush1.bf16.msra.mxu0 0
    %6894 = vmatprep.subr.bf16.mxu0 0
    %6895 = vmatpush1.bf16.msra.mxu0 0
    %6896 = vmatprep.subr.bf16.mxu0 0
    %6897 = vmatpush1.bf16.msra.mxu0 0
    %6898 = vmatprep.subr.bf16.mxu0 0
    %6899 = vmatpush1.bf16.msra.mxu0 0
    %6900 = vmatprep.subr.bf16.mxu0 0
    %6901 = vmatpush1.bf16.msra.mxu0 0
    %6902 = vmatprep.mubr.bf16.mxu0 0
    %6903 = vmatmul.mubr.bf16.gmra.mrb[0].mxu0 %v6869
    %v6904 = vpop.f32.mrb[0].mxu0
    %v6905 = vadd.f32 0.0, %v6904
    %v6906 = vpop.f32.mrb[0].mxu0
    %v6907 = vadd.f32 0.0, %v6906
    %v6908 = vpop.f32.mrb[0].mxu0
    %v6909 = vadd.f32 0.0, %v6908
    %v6910 = vpop.f32.mrb[0].mxu0
    %v6911 = vadd.f32 0.0, %v6910
    %6912 = vdwg.mxu0
    %6913 = vmatprep.subr.bf16.mxu0 %v6523
    %6914 = vmatpush1.bf16.msra.mxu0 %v6522
    %6915 = vmatprep.subr.bf16.mxu0 %v6527
    %6916 = vmatpush1.bf16.msra.mxu0 %v6526
    %6917 = vmatprep.subr.bf16.mxu0 %v6531
    %6918 = vmatpush1.bf16.msra.mxu0 %v6530
    %6919 = vmatprep.subr.bf16.mxu0 %v6535
    %6920 = vmatpush1.bf16.msra.mxu0 %v6534
    %6921 = vmatprep.subr.bf16.mxu0 %v6539
    %6922 = vmatpush1.bf16.msra.mxu0 %v6538
    %6923 = vmatprep.subr.bf16.mxu0 %v6543
    %6924 = vmatpush1.bf16.msra.mxu0 %v6542
    %6925 = vmatprep.subr.bf16.mxu0 %v6547
    %6926 = vmatpush1.bf16.msra.mxu0 %v6546
    %6927 = vmatprep.subr.bf16.mxu0 %v6551
    %6928 = vmatpush1.bf16.msra.mxu0 %v6550
    %6929 = vmatprep.subr.bf16.mxu0 0
    %6930 = vmatpush1.bf16.msra.mxu0 0
    %6931 = vmatprep.subr.bf16.mxu0 0
    %6932 = vmatpush1.bf16.msra.mxu0 0
    %6933 = vmatprep.subr.bf16.mxu0 0
    %6934 = vmatpush1.bf16.msra.mxu0 0
    %6935 = vmatprep.subr.bf16.mxu0 0
    %6936 = vmatpush1.bf16.msra.mxu0 0
    %6937 = vmatprep.subr.bf16.mxu0 0
    %6938 = vmatpush1.bf16.msra.mxu0 0
    %6939 = vmatprep.subr.bf16.mxu0 0
    %6940 = vmatpush1.bf16.msra.mxu0 0
    %6941 = vmatprep.subr.bf16.mxu0 0
    %6942 = vmatpush1.bf16.msra.mxu0 0
    %6943 = vmatprep.subr.bf16.mxu0 0
    %6944 = vmatpush1.bf16.msra.mxu0 0
    %6945 = vmatprep.mubr.bf16.mxu0 0
    %6946 = vmatmul.mubr.bf16.gmra.mrb[0].mxu0 %v6869
    %v6947 = vpop.f32.mrb[0].mxu0
    %v6948 = vadd.f32 0.0, %v6947
    %v6949 = vpop.f32.mrb[0].mxu0
    %v6950 = vadd.f32 0.0, %v6949
    %v6951 = vpop.f32.mrb[0].mxu0
    %v6952 = vadd.f32 0.0, %v6951
    %v6953 = vpop.f32.mrb[0].mxu0
    %v6954 = vadd.f32 0.0, %v6953
    %6955 = vdwg.mxu0
    %v6956 = vadd.f32 %v6187, %v6905
    %v6957 = vadd.f32 %v6189, %v6907
    %v6958 = vadd.f32 %v6260, %v6948
    %v6959 = vadd.f32 %v6262, %v6950
    %v6960 = vadd.f32 %v6191, %v6909
    %v6961 = vadd.f32 %v6193, %v6911
    %v6962 = vadd.f32 %v6264, %v6952
    %v6963 = vadd.f32 %v6266, %v6954
    %v6964 = vsub.f32 0.0, %v6956
    %v6965 = vsub.f32 0.0, %v6957
    %v6966 = vsub.f32 0.0, %v6958
    %v6967 = vsub.f32 0.0, %v6960
    %v6968 = vsub.f32 0.0, %v6961
    %v6969 = vsub.f32 0.0, %v6962
    %v6970 = vmul.f32 %v6964, 1.442695
    %v6971 = vpow.pop %v6970
    %v6972 = vmul.f32 %v6965, 1.442695
    %v6973 = vpow.pop %v6972
    %v6974 = vmul.f32 %v6966, 1.442695
    %v6975 = vpow.pop %v6974
    %v6976 = vmul.f32 %v6967, 1.442695
    %v6977 = vpow.pop %v6976
    %v6978 = vmul.f32 %v6968, 1.442695
    %v6979 = vpow.pop %v6978
    %v6980 = vmul.f32 %v6969, 1.442695
    %v6981 = vpow.pop %v6980
    %v6982 = vadd.f32 %v6971, 1.0
    %v6983 = vadd.f32 %v6973, 1.0
    %v6984 = vadd.f32 %v6975, 1.0
    %v6985 = vadd.f32 %v6977, 1.0
    %v6986 = vadd.f32 %v6979, 1.0
    %v6987 = vadd.f32 %v6981, 1.0
    %v6988 = vrcp.pop %v6982
    %v6989 = vmul.f32 1.0, %v6988
    %v6990 = vrcp.pop %v6983
    %v6991 = vmul.f32 1.0, %v6990
    %v6992 = vrcp.pop %v6984
    %v6993 = vmul.f32 1.0, %v6992
    %v6994 = vrcp.pop %v6985
    %v6995 = vmul.f32 1.0, %v6994
    %v6996 = vrcp.pop %v6986
    %v6997 = vmul.f32 1.0, %v6996
    %v6998 = vrcp.pop %v6987
    %v6999 = vmul.f32 1.0, %v6998
    %v7000 = vtanh.pop %v6959
    %v7001 = vtanh.pop %v6963
    %v7002 = vmul.f32 %v6991, %v6863
    %v7003 = vmul.f32 %v6997, %v6864
    %v7004 = vmul.f32 %v6989, %v7000
    %v7005 = vmul.f32 %v6995, %v7001
    %v7006 = vadd.f32 %v7002, %v7004
    %v7007 = vadd.f32 %v7003, %v7005
    %v7008 = vtanh.pop %v7006
    %v7009 = vtanh.pop %v7007
    %v7010 = vmul.f32 %v6993, %v7008
    %v7011 = vmul.f32 %v6999, %v7009
    %v7012 = vpack.c.bf16 %v7011, %v7010
    %7013 = vmatprep.subr.bf16.mxu0 %v6521
    %7014 = vmatpush1.bf16.msra.mxu0 %v6520
    %7015 = vmatprep.subr.bf16.mxu0 %v6525
    %7016 = vmatpush1.bf16.msra.mxu0 %v6524
    %7017 = vmatprep.subr.bf16.mxu0 %v6529
    %7018 = vmatpush1.bf16.msra.mxu0 %v6528
    %7019 = vmatprep.subr.bf16.mxu0 %v6533
    %7020 = vmatpush1.bf16.msra.mxu0 %v6532
    %7021 = vmatprep.subr.bf16.mxu0 %v6537
    %7022 = vmatpush1.bf16.msra.mxu0 %v6536
    %7023 = vmatprep.subr.bf16.mxu0 %v6541
    %7024 = vmatpush1.bf16.msra.mxu0 %v6540
    %7025 = vmatprep.subr.bf16.mxu0 %v6545
    %7026 = vmatpush1.bf16.msra.mxu0 %v6544
    %7027 = vmatprep.subr.bf16.mxu0 %v6549
    %7028 = vmatpush1.bf16.msra.mxu0 %v6548
    %7029 = vmatprep.subr.bf16.mxu0 0
    %7030 = vmatpush1.bf16.msra.mxu0 0
    %7031 = vmatprep.subr.bf16.mxu0 0
    %7032 = vmatpush1.bf16.msra.mxu0 0
    %7033 = vmatprep.subr.bf16.mxu0 0
    %7034 = vmatpush1.bf16.msra.mxu0 0
    %7035 = vmatprep.subr.bf16.mxu0 0
    %7036 = vmatpush1.bf16.msra.mxu0 0
    %7037 = vmatprep.subr.bf16.mxu0 0
    %7038 = vmatpush1.bf16.msra.mxu0 0
    %7039 = vmatprep.subr.bf16.mxu0 0
    %7040 = vmatpush1.bf16.msra.mxu0 0
    %7041 = vmatprep.subr.bf16.mxu0 0
    %7042 = vmatpush1.bf16.msra.mxu0 0
    %7043 = vmatprep.subr.bf16.mxu0 0
    %7044 = vmatpush1.bf16.msra.mxu0 0
    %7045 = vmatprep.mubr.bf16.mxu0 0
    %7046 = vmatmul.mubr.bf16.gmra.mrb[0].mxu0 %v7012
    %v7047 = vpop.f32.mrb[0].mxu0
    %v7048 = vadd.f32 0.0, %v7047
    %v7049 = vpop.f32.mrb[0].mxu0
    %v7050 = vadd.f32 0.0, %v7049
    %v7051 = vpop.f32.mrb[0].mxu0
    %v7052 = vadd.f32 0.0, %v7051
    %v7053 = vpop.f32.mrb[0].mxu0
    %v7054 = vadd.f32 0.0, %v7053
    %7055 = vdwg.mxu0
    %7056 = vmatprep.subr.bf16.mxu0 %v6523
    %7057 = vmatpush1.bf16.msra.mxu0 %v6522
    %7058 = vmatprep.subr.bf16.mxu0 %v6527
    %7059 = vmatpush1.bf16.msra.mxu0 %v6526
    %7060 = vmatprep.subr.bf16.mxu0 %v6531
    %7061 = vmatpush1.bf16.msra.mxu0 %v6530
    %7062 = vmatprep.subr.bf16.mxu0 %v6535
    %7063 = vmatpush1.bf16.msra.mxu0 %v6534
    %7064 = vmatprep.subr.bf16.mxu0 %v6539
    %7065 = vmatpush1.bf16.msra.mxu0 %v6538
    %7066 = vmatprep.subr.bf16.mxu0 %v6543
    %7067 = vmatpush1.bf16.msra.mxu0 %v6542
    %7068 = vmatprep.subr.bf16.mxu0 %v6547
    %7069 = vmatpush1.bf16.msra.mxu0 %v6546
    %7070 = vmatprep.subr.bf16.mxu0 %v6551
    %7071 = vmatpush1.bf16.msra.mxu0 %v6550
    %7072 = vmatprep.subr.bf16.mxu0 0
    %7073 = vmatpush1.bf16.msra.mxu0 0
    %7074 = vmatprep.subr.bf16.mxu0 0
    %7075 = vmatpush1.bf16.msra.mxu0 0
    %7076 = vmatprep.subr.bf16.mxu0 0
    %7077 = vmatpush1.bf16.msra.mxu0 0
    %7078 = vmatprep.subr.bf16.mxu0 0
    %7079 = vmatpush1.bf16.msra.mxu0 0
    %7080 = vmatprep.subr.bf16.mxu0 0
    %7081 = vmatpush1.bf16.msra.mxu0 0
    %7082 = vmatprep.subr.bf16.mxu0 0
    %7083 = vmatpush1.bf16.msra.mxu0 0
    %7084 = vmatprep.subr.bf16.mxu0 0
    %7085 = vmatpush1.bf16.msra.mxu0 0
    %7086 = vmatprep.subr.bf16.mxu0 0
    %7087 = vmatpush1.bf16.msra.mxu0 0
    %7088 = vmatprep.mubr.bf16.mxu0 0
    %7089 = vmatmul.mubr.bf16.gmra.mrb[0].mxu0 %v7012
    %v7090 = vpop.f32.mrb[0].mxu0
    %v7091 = vadd.f32 0.0, %v7090
    %v7092 = vpop.f32.mrb[0].mxu0
    %v7093 = vadd.f32 0.0, %v7092
    %v7094 = vpop.f32.mrb[0].mxu0
    %v7095 = vadd.f32 0.0, %v7094
    %v7096 = vpop.f32.mrb[0].mxu0
    %v7097 = vadd.f32 0.0, %v7096
    %7098 = vdwg.mxu0
    %v7099 = vadd.f32 %v6197, %v7048
    %v7100 = vadd.f32 %v6199, %v7050
    %v7101 = vadd.f32 %v6270, %v7091
    %v7102 = vadd.f32 %v6272, %v7093
    %v7103 = vadd.f32 %v6201, %v7052
    %v7104 = vadd.f32 %v6203, %v7054
    %v7105 = vadd.f32 %v6274, %v7095
    %v7106 = vadd.f32 %v6276, %v7097
    %v7107 = vsub.f32 0.0, %v7099
    %v7108 = vsub.f32 0.0, %v7100
    %v7109 = vsub.f32 0.0, %v7101
    %v7110 = vsub.f32 0.0, %v7103
    %v7111 = vsub.f32 0.0, %v7104
    %v7112 = vsub.f32 0.0, %v7105
    %v7113 = vmul.f32 %v7107, 1.442695
    %v7114 = vpow.pop %v7113
    %v7115 = vmul.f32 %v7108, 1.442695
    %v7116 = vpow.pop %v7115
    %v7117 = vmul.f32 %v7109, 1.442695
    %v7118 = vpow.pop %v7117
    %v7119 = vmul.f32 %v7110, 1.442695
    %v7120 = vpow.pop %v7119
    %v7121 = vmul.f32 %v7111, 1.442695
    %v7122 = vpow.pop %v7121
    %v7123 = vmul.f32 %v7112, 1.442695
    %v7124 = vpow.pop %v7123
    %v7125 = vadd.f32 %v7114, 1.0
    %v7126 = vadd.f32 %v7116, 1.0
    %v7127 = vadd.f32 %v7118, 1.0
    %v7128 = vadd.f32 %v7120, 1.0
    %v7129 = vadd.f32 %v7122, 1.0
    %v7130 = vadd.f32 %v7124, 1.0
    %v7131 = vrcp.pop %v7125
    %v7132 = vmul.f32 1.0, %v7131
    %v7133 = vrcp.pop %v7126
    %v7134 = vmul.f32 1.0, %v7133
    %v7135 = vrcp.pop %v7127
    %v7136 = vmul.f32 1.0, %v7135
    %v7137 = vrcp.pop %v7128
    %v7138 = vmul.f32 1.0, %v7137
    %v7139 = vrcp.pop %v7129
    %v7140 = vmul.f32 1.0, %v7139
    %v7141 = vrcp.pop %v7130
    %v7142 = vmul.f32 1.0, %v7141
    %v7143 = vtanh.pop %v7102
    %v7144 = vtanh.pop %v7106
    %v7145 = vmul.f32 %v7134, %v7006
    %v7146 = vmul.f32 %v7140, %v7007
    %v7147 = vmul.f32 %v7132, %v7143
    %v7148 = vmul.f32 %v7138, %v7144
    %v7149 = vadd.f32 %v7145, %v7147
    %v7150 = vadd.f32 %v7146, %v7148
    %v7151 = vtanh.pop %v7149
    %v7152 = vtanh.pop %v7150
    %v7153 = vmul.f32 %v7136, %v7151
    %v7154 = vmul.f32 %v7142, %v7152
    %v7187 = vunpack.c.l.b16 %v3826
    %v7188 = vunpack.c.h.b16 %v3826
    %v7189 = vunpack.c.l.b16 %v3827
    %v7190 = vunpack.c.h.b16 %v3827
    %v7191 = vunpack.c.l.b16 %v3828
    %v7192 = vunpack.c.h.b16 %v3828
    %v7193 = vunpack.c.l.b16 %v3829
    %v7194 = vunpack.c.h.b16 %v3829
    %v7195 = vunpack.c.l.b16 %v3830
    %v7196 = vunpack.c.h.b16 %v3830
    %v7197 = vunpack.c.l.b16 %v3831
    %v7198 = vunpack.c.h.b16 %v3831
    %v7199 = vunpack.c.l.b16 %v3832
    %v7200 = vunpack.c.h.b16 %v3832
    %v7201 = vunpack.c.l.b16 %v3833
    %v7202 = vunpack.c.h.b16 %v3833
    %v7203 = vunpack.c.l.b16 %v3834
    %v7204 = vunpack.c.h.b16 %v3834
    %v7205 = vunpack.c.l.b16 %v3835
    %v7206 = vunpack.c.h.b16 %v3835
    %v7207 = vunpack.c.l.b16 %v3836
    %v7208 = vunpack.c.h.b16 %v3836
    %v7209 = vunpack.c.l.b16 %v3837
    %v7210 = vunpack.c.h.b16 %v3837
    %v7211 = vunpack.c.l.b16 %v3838
    %v7212 = vunpack.c.h.b16 %v3838
    %v7213 = vunpack.c.l.b16 %v3839
    %v7214 = vunpack.c.h.b16 %v3839
    %v7215 = vunpack.c.l.b16 %v3840
    %v7216 = vunpack.c.h.b16 %v3840
    %v7217 = vunpack.c.l.b16 %v3841
    %v7218 = vunpack.c.h.b16 %v3841
    %v7219 = vunpack.c.l.b16 %v3842
    %v7220 = vunpack.c.h.b16 %v3842
    %v7221 = vunpack.c.l.b16 %v3843
    %v7222 = vunpack.c.h.b16 %v3843
    %v7223 = vunpack.c.l.b16 %v3844
    %v7224 = vunpack.c.h.b16 %v3844
    %v7225 = vunpack.c.l.b16 %v3845
    %v7226 = vunpack.c.h.b16 %v3845
    %v7227 = vunpack.c.l.b16 %v3846
    %v7228 = vunpack.c.h.b16 %v3846
    %v7229 = vunpack.c.l.b16 %v3847
    %v7230 = vunpack.c.h.b16 %v3847
    %v7231 = vunpack.c.l.b16 %v3848
    %v7232 = vunpack.c.h.b16 %v3848
    %v7233 = vunpack.c.l.b16 %v3849
    %v7234 = vunpack.c.h.b16 %v3849
    %v7235 = vunpack.c.l.b16 %v3850
    %v7236 = vunpack.c.h.b16 %v3850
    %v7237 = vunpack.c.l.b16 %v3851
    %v7238 = vunpack.c.h.b16 %v3851
    %v7239 = vunpack.c.l.b16 %v3852
    %v7240 = vunpack.c.h.b16 %v3852
    %v7241 = vunpack.c.l.b16 %v3853
    %v7242 = vunpack.c.h.b16 %v3853
    %v7243 = vunpack.c.l.b16 %v3854
    %v7244 = vunpack.c.h.b16 %v3854
    %v7245 = vunpack.c.l.b16 %v3855
    %v7246 = vunpack.c.h.b16 %v3855
    %v7247 = vunpack.c.l.b16 %v3856
    %v7248 = vunpack.c.h.b16 %v3856
    %v7249 = vunpack.c.l.b16 %v3857
    %v7250 = vunpack.c.h.b16 %v3857
    %v7251 = vpack.c.b16 %v7191, %v7187
    %v7252 = vpack.c.b16 %v7192, %v7188
    %v7253 = vpack.c.b16 %v7193, %v7189
    %v7254 = vpack.c.b16 %v7194, %v7190
    %v7255 = vpack.c.b16 %v7199, %v7195
    %v7256 = vpack.c.b16 %v7200, %v7196
    %v7257 = vpack.c.b16 %v7201, %v7197
    %v7258 = vpack.c.b16 %v7202, %v7198
    %v7259 = vpack.c.b16 %v7207, %v7203
    %v7260 = vpack.c.b16 %v7208, %v7204
    %v7261 = vpack.c.b16 %v7209, %v7205
    %v7262 = vpack.c.b16 %v7210, %v7206
    %v7263 = vpack.c.b16 %v7215, %v7211
    %v7264 = vpack.c.b16 %v7216, %v7212
    %v7265 = vpack.c.b16 %v7217, %v7213
    %v7266 = vpack.c.b16 %v7218, %v7214
    %v7267 = vpack.c.b16 %v7223, %v7219
    %v7268 = vpack.c.b16 %v7224, %v7220
    %v7269 = vpack.c.b16 %v7225, %v7221
    %v7270 = vpack.c.b16 %v7226, %v7222
    %v7271 = vpack.c.b16 %v7231, %v7227
    %v7272 = vpack.c.b16 %v7232, %v7228
    %v7273 = vpack.c.b16 %v7233, %v7229
    %v7274 = vpack.c.b16 %v7234, %v7230
    %v7275 = vpack.c.b16 %v7239, %v7235
    %v7276 = vpack.c.b16 %v7240, %v7236
    %v7277 = vpack.c.b16 %v7241, %v7237
    %v7278 = vpack.c.b16 %v7242, %v7238
    %v7279 = vpack.c.b16 %v7247, %v7243
    %v7280 = vpack.c.b16 %v7248, %v7244
    %v7281 = vpack.c.b16 %v7249, %v7245
    %v7282 = vpack.c.b16 %v7250, %v7246
    %7315 = vmatprep.subr.bf16.mxu0 %v7252
    %7316 = vmatpush1.bf16.msra.mxu0 %v7251
    %7317 = vmatprep.subr.bf16.mxu0 %v7256
    %7318 = vmatpush1.bf16.msra.mxu0 %v7255
    %7319 = vmatprep.subr.bf16.mxu0 %v7260
    %7320 = vmatpush1.bf16.msra.mxu0 %v7259
    %7321 = vmatprep.subr.bf16.mxu0 %v7264
    %7322 = vmatpush1.bf16.msra.mxu0 %v7263
    %7323 = vmatprep.subr.bf16.mxu0 %v7268
    %7324 = vmatpush1.bf16.msra.mxu0 %v7267
    %7325 = vmatprep.subr.bf16.mxu0 %v7272
    %7326 = vmatpush1.bf16.msra.mxu0 %v7271
    %7327 = vmatprep.subr.bf16.mxu0 %v7276
    %7328 = vmatpush1.bf16.msra.mxu0 %v7275
    %7329 = vmatprep.subr.bf16.mxu0 %v7280
    %7330 = vmatpush1.bf16.msra.mxu0 %v7279
    %7331 = vmatprep.subr.bf16.mxu0 0
    %7332 = vmatpush1.bf16.msra.mxu0 0
    %7333 = vmatprep.subr.bf16.mxu0 0
    %7334 = vmatpush1.bf16.msra.mxu0 0
    %7335 = vmatprep.subr.bf16.mxu0 0
    %7336 = vmatpush1.bf16.msra.mxu0 0
    %7337 = vmatprep.subr.bf16.mxu0 0
    %7338 = vmatpush1.bf16.msra.mxu0 0
    %7339 = vmatprep.subr.bf16.mxu0 0
    %7340 = vmatpush1.bf16.msra.mxu0 0
    %7341 = vmatprep.subr.bf16.mxu0 0
    %7342 = vmatpush1.bf16.msra.mxu0 0
    %7343 = vmatprep.subr.bf16.mxu0 0
    %7344 = vmatpush1.bf16.msra.mxu0 0
    %7345 = vmatprep.subr.bf16.mxu0 0
    %7346 = vmatpush1.bf16.msra.mxu0 0
    %7347 = vmatprep.mubr.bf16.mxu0 0
    %7348 = vmatmul.mubr.bf16.gmra.mrb[0].mxu0 0
    %v7349 = vpop.f32.mrb[0].mxu0
    %v7350 = vadd.f32 0.0, %v7349
    %v7351 = vpop.f32.mrb[0].mxu0
    %v7352 = vadd.f32 0.0, %v7351
    %v7353 = vpop.f32.mrb[0].mxu0
    %v7354 = vadd.f32 0.0, %v7353
    %v7355 = vpop.f32.mrb[0].mxu0
    %v7356 = vadd.f32 0.0, %v7355
    %7357 = vdwg.mxu0
    %7358 = vmatprep.subr.bf16.mxu0 %v7254
    %7359 = vmatpush1.bf16.msra.mxu0 %v7253
    %7360 = vmatprep.subr.bf16.mxu0 %v7258
    %7361 = vmatpush1.bf16.msra.mxu0 %v7257
    %7362 = vmatprep.subr.bf16.mxu0 %v7262
    %7363 = vmatpush1.bf16.msra.mxu0 %v7261
    %7364 = vmatprep.subr.bf16.mxu0 %v7266
    %7365 = vmatpush1.bf16.msra.mxu0 %v7265
    %7366 = vmatprep.subr.bf16.mxu0 %v7270
    %7367 = vmatpush1.bf16.msra.mxu0 %v7269
    %7368 = vmatprep.subr.bf16.mxu0 %v7274
    %7369 = vmatpush1.bf16.msra.mxu0 %v7273
    %7370 = vmatprep.subr.bf16.mxu0 %v7278
    %7371 = vmatpush1.bf16.msra.mxu0 %v7277
    %7372 = vmatprep.subr.bf16.mxu0 %v7282
    %7373 = vmatpush1.bf16.msra.mxu0 %v7281
    %7374 = vmatprep.subr.bf16.mxu0 0
    %7375 = vmatpush1.bf16.msra.mxu0 0
    %7376 = vmatprep.subr.bf16.mxu0 0
    %7377 = vmatpush1.bf16.msra.mxu0 0
    %7378 = vmatprep.subr.bf16.mxu0 0
    %7379 = vmatpush1.bf16.msra.mxu0 0
    %7380 = vmatprep.subr.bf16.mxu0 0
    %7381 = vmatpush1.bf16.msra.mxu0 0
    %7382 = vmatprep.subr.bf16.mxu0 0
    %7383 = vmatpush1.bf16.msra.mxu0 0
    %7384 = vmatprep.subr.bf16.mxu0 0
    %7385 = vmatpush1.bf16.msra.mxu0 0
    %7386 = vmatprep.subr.bf16.mxu0 0
    %7387 = vmatpush1.bf16.msra.mxu0 0
    %7388 = vmatprep.subr.bf16.mxu0 0
    %7389 = vmatpush1.bf16.msra.mxu0 0
    %7390 = vmatprep.mubr.bf16.mxu0 0
    %7391 = vmatmul.mubr.bf16.gmra.mrb[0].mxu0 0
    %v7392 = vpop.f32.mrb[0].mxu0
    %v7393 = vadd.f32 0.0, %v7392
    %v7394 = vpop.f32.mrb[0].mxu0
    %v7395 = vadd.f32 0.0, %v7394
    %v7396 = vpop.f32.mrb[0].mxu0
    %v7397 = vadd.f32 0.0, %v7396
    %v7398 = vpop.f32.mrb[0].mxu0
    %v7399 = vadd.f32 0.0, %v7398
    %7400 = vdwg.mxu0
    %v7401 = vadd.f32 %v6343, %v7350
    %v7402 = vadd.f32 %v6345, %v7352
    %v7403 = vadd.f32 %v6416, %v7393
    %v7404 = vadd.f32 %v6418, %v7395
    %v7405 = vadd.f32 %v6347, %v7354
    %v7406 = vadd.f32 %v6349, %v7356
    %v7407 = vadd.f32 %v6420, %v7397
    %v7408 = vadd.f32 %v6422, %v7399
    %v7409 = vsub.f32 0.0, %v7401
    %v7410 = vsub.f32 0.0, %v7402
    %v7411 = vsub.f32 0.0, %v7403
    %v7412 = vsub.f32 0.0, %v7405
    %v7413 = vsub.f32 0.0, %v7406
    %v7414 = vsub.f32 0.0, %v7407
    %v7415 = vmul.f32 %v7409, 1.442695
    %v7416 = vpow.pop %v7415
    %v7417 = vmul.f32 %v7410, 1.442695
    %v7418 = vpow.pop %v7417
    %v7419 = vmul.f32 %v7411, 1.442695
    %v7420 = vpow.pop %v7419
    %v7421 = vmul.f32 %v7412, 1.442695
    %v7422 = vpow.pop %v7421
    %v7423 = vmul.f32 %v7413, 1.442695
    %v7424 = vpow.pop %v7423
    %v7425 = vmul.f32 %v7414, 1.442695
    %v7426 = vpow.pop %v7425
    %v7427 = vadd.f32 %v7416, 1.0
    %v7428 = vadd.f32 %v7418, 1.0
    %v7429 = vadd.f32 %v7420, 1.0
    %v7430 = vadd.f32 %v7422, 1.0
    %v7431 = vadd.f32 %v7424, 1.0
    %v7432 = vadd.f32 %v7426, 1.0
    %v7433 = vrcp.pop %v7427
    %v7434 = vmul.f32 1.0, %v7433
    %v7435 = vrcp.pop %v7428
    %v7436 = vmul.f32 1.0, %v7435
    %v7437 = vrcp.pop %v7429
    %v7438 = vmul.f32 1.0, %v7437
    %v7439 = vrcp.pop %v7430
    %v7440 = vmul.f32 1.0, %v7439
    %v7441 = vrcp.pop %v7431
    %v7442 = vmul.f32 1.0, %v7441
    %v7443 = vrcp.pop %v7432
    %v7444 = vmul.f32 1.0, %v7443
    %v7445 = vtanh.pop %v7404
    %v7446 = vtanh.pop %v7408
    %v7447 = vmul.f32 %v7436, 0.0
    %v7448 = vmul.f32 %v7442, 0.0
    %v7449 = vmul.f32 %v7434, %v7445
    %v7450 = vmul.f32 %v7440, %v7446
    %v7451 = vadd.f32 %v7447, %v7449
    %v7452 = vadd.f32 %v7448, %v7450
    %v7453 = vtanh.pop %v7451
    %v7454 = vtanh.pop %v7452
    %v7455 = vmul.f32 %v7438, %v7453
    %v7456 = vmul.f32 %v7444, %v7454
    %v7457 = vpack.c.bf16 %v7456, %v7455
    %7458 = vmatprep.subr.bf16.mxu0 %v7252
    %7459 = vmatpush1.bf16.msra.mxu0 %v7251
    %7460 = vmatprep.subr.bf16.mxu0 %v7256
    %7461 = vmatpush1.bf16.msra.mxu0 %v7255
    %7462 = vmatprep.subr.bf16.mxu0 %v7260
    %7463 = vmatpush1.bf16.msra.mxu0 %v7259
    %7464 = vmatprep.subr.bf16.mxu0 %v7264
    %7465 = vmatpush1.bf16.msra.mxu0 %v7263
    %7466 = vmatprep.subr.bf16.mxu0 %v7268
    %7467 = vmatpush1.bf16.msra.mxu0 %v7267
    %7468 = vmatprep.subr.bf16.mxu0 %v7272
    %7469 = vmatpush1.bf16.msra.mxu0 %v7271
    %7470 = vmatprep.subr.bf16.mxu0 %v7276
    %7471 = vmatpush1.bf16.msra.mxu0 %v7275
    %7472 = vmatprep.subr.bf16.mxu0 %v7280
    %7473 = vmatpush1.bf16.msra.mxu0 %v7279
    %7474 = vmatprep.subr.bf16.mxu0 0
    %7475 = vmatpush1.bf16.msra.mxu0 0
    %7476 = vmatprep.subr.bf16.mxu0 0
    %7477 = vmatpush1.bf16.msra.mxu0 0
    %7478 = vmatprep.subr.bf16.mxu0 0
    %7479 = vmatpush1.bf16.msra.mxu0 0
    %7480 = vmatprep.subr.bf16.mxu0 0
    %7481 = vmatpush1.bf16.msra.mxu0 0
    %7482 = vmatprep.subr.bf16.mxu0 0
    %7483 = vmatpush1.bf16.msra.mxu0 0
    %7484 = vmatprep.subr.bf16.mxu0 0
    %7485 = vmatpush1.bf16.msra.mxu0 0
    %7486 = vmatprep.subr.bf16.mxu0 0
    %7487 = vmatpush1.bf16.msra.mxu0 0
    %7488 = vmatprep.subr.bf16.mxu0 0
    %7489 = vmatpush1.bf16.msra.mxu0 0
    %7490 = vmatprep.mubr.bf16.mxu0 0
    %7491 = vmatmul.mubr.bf16.gmra.mrb[0].mxu0 %v7457
    %v7492 = vpop.f32.mrb[0].mxu0
    %v7493 = vadd.f32 0.0, %v7492
    %v7494 = vpop.f32.mrb[0].mxu0
    %v7495 = vadd.f32 0.0, %v7494
    %v7496 = vpop.f32.mrb[0].mxu0
    %v7497 = vadd.f32 0.0, %v7496
    %v7498 = vpop.f32.mrb[0].mxu0
    %v7499 = vadd.f32 0.0, %v7498
    %7500 = vdwg.mxu0
    %7501 = vmatprep.subr.bf16.mxu0 %v7254
    %7502 = vmatpush1.bf16.msra.mxu0 %v7253
    %7503 = vmatprep.subr.bf16.mxu0 %v7258
    %7504 = vmatpush1.bf16.msra.mxu0 %v7257
    %7505 = vmatprep.subr.bf16.mxu0 %v7262
    %7506 = vmatpush1.bf16.msra.mxu0 %v7261
    %7507 = vmatprep.subr.bf16.mxu0 %v7266
    %7508 = vmatpush1.bf16.msra.mxu0 %v7265
    %7509 = vmatprep.subr.bf16.mxu0 %v7270
    %7510 = vmatpush1.bf16.msra.mxu0 %v7269
    %7511 = vmatprep.subr.bf16.mxu0 %v7274
    %7512 = vmatpush1.bf16.msra.mxu0 %v7273
    %7513 = vmatprep.subr.bf16.mxu0 %v7278
    %7514 = vmatpush1.bf16.msra.mxu0 %v7277
    %7515 = vmatprep.subr.bf16.mxu0 %v7282
    %7516 = vmatpush1.bf16.msra.mxu0 %v7281
    %7517 = vmatprep.subr.bf16.mxu0 0
    %7518 = vmatpush1.bf16.msra.mxu0 0
    %7519 = vmatprep.subr.bf16.mxu0 0
    %7520 = vmatpush1.bf16.msra.mxu0 0
    %7521 = vmatprep.subr.bf16.mxu0 0
    %7522 = vmatpush1.bf16.msra.mxu0 0
    %7523 = vmatprep.subr.bf16.mxu0 0
    %7524 = vmatpush1.bf16.msra.mxu0 0
    %7525 = vmatprep.subr.bf16.mxu0 0
    %7526 = vmatpush1.bf16.msra.mxu0 0
    %7527 = vmatprep.subr.bf16.mxu0 0
    %7528 = vmatpush1.bf16.msra.mxu0 0
    %7529 = vmatprep.subr.bf16.mxu0 0
    %7530 = vmatpush1.bf16.msra.mxu0 0
    %7531 = vmatprep.subr.bf16.mxu0 0
    %7532 = vmatpush1.bf16.msra.mxu0 0
    %7533 = vmatprep.mubr.bf16.mxu0 0
    %7534 = vmatmul.mubr.bf16.gmra.mrb[0].mxu0 %v7457
    %v7535 = vpop.f32.mrb[0].mxu0
    %v7536 = vadd.f32 0.0, %v7535
    %v7537 = vpop.f32.mrb[0].mxu0
    %v7538 = vadd.f32 0.0, %v7537
    %v7539 = vpop.f32.mrb[0].mxu0
    %v7540 = vadd.f32 0.0, %v7539
    %v7541 = vpop.f32.mrb[0].mxu0
    %v7542 = vadd.f32 0.0, %v7541
    %7543 = vdwg.mxu0
    %v7544 = vadd.f32 %v6333, %v7493
    %v7545 = vadd.f32 %v6335, %v7495
    %v7546 = vadd.f32 %v6406, %v7536
    %v7547 = vadd.f32 %v6408, %v7538
    %v7548 = vadd.f32 %v6337, %v7497
    %v7549 = vadd.f32 %v6339, %v7499
    %v7550 = vadd.f32 %v6410, %v7540
    %v7551 = vadd.f32 %v6412, %v7542
    %v7552 = vsub.f32 0.0, %v7544
    %v7553 = vsub.f32 0.0, %v7545
    %v7554 = vsub.f32 0.0, %v7546
    %v7555 = vsub.f32 0.0, %v7548
    %v7556 = vsub.f32 0.0, %v7549
    %v7557 = vsub.f32 0.0, %v7550
    %v7558 = vmul.f32 %v7552, 1.442695
    %v7559 = vpow.pop %v7558
    %v7560 = vmul.f32 %v7553, 1.442695
    %v7561 = vpow.pop %v7560
    %v7562 = vmul.f32 %v7554, 1.442695
    %v7563 = vpow.pop %v7562
    %v7564 = vmul.f32 %v7555, 1.442695
    %v7565 = vpow.pop %v7564
    %v7566 = vmul.f32 %v7556, 1.442695
    %v7567 = vpow.pop %v7566
    %v7568 = vmul.f32 %v7557, 1.442695
    %v7569 = vpow.pop %v7568
    %v7570 = vadd.f32 %v7559, 1.0
    %v7571 = vadd.f32 %v7561, 1.0
    %v7572 = vadd.f32 %v7563, 1.0
    %v7573 = vadd.f32 %v7565, 1.0
    %v7574 = vadd.f32 %v7567, 1.0
    %v7575 = vadd.f32 %v7569, 1.0
    %v7576 = vrcp.pop %v7570
    %v7577 = vmul.f32 1.0, %v7576
    %v7578 = vrcp.pop %v7571
    %v7579 = vmul.f32 1.0, %v7578
    %v7580 = vrcp.pop %v7572
    %v7581 = vmul.f32 1.0, %v7580
    %v7582 = vrcp.pop %v7573
    %v7583 = vmul.f32 1.0, %v7582
    %v7584 = vrcp.pop %v7574
    %v7585 = vmul.f32 1.0, %v7584
    %v7586 = vrcp.pop %v7575
    %v7587 = vmul.f32 1.0, %v7586
    %v7588 = vtanh.pop %v7547
    %v7589 = vtanh.pop %v7551
    %v7590 = vmul.f32 %v7579, %v7451
    %v7591 = vmul.f32 %v7585, %v7452
    %v7592 = vmul.f32 %v7577, %v7588
    %v7593 = vmul.f32 %v7583, %v7589
    %v7594 = vadd.f32 %v7590, %v7592
    %v7595 = vadd.f32 %v7591, %v7593
    %v7596 = vtanh.pop %v7594
    %v7597 = vtanh.pop %v7595
    %v7598 = vmul.f32 %v7581, %v7596
    %v7599 = vmul.f32 %v7587, %v7597
    %v7600 = vpack.c.bf16 %v7599, %v7598
    %7601 = vmatprep.subr.bf16.mxu0 %v7252
    %7602 = vmatpush1.bf16.msra.mxu0 %v7251
    %7603 = vmatprep.subr.bf16.mxu0 %v7256
    %7604 = vmatpush1.bf16.msra.mxu0 %v7255
    %7605 = vmatprep.subr.bf16.mxu0 %v7260
    %7606 = vmatpush1.bf16.msra.mxu0 %v7259
    %7607 = vmatprep.subr.bf16.mxu0 %v7264
    %7608 = vmatpush1.bf16.msra.mxu0 %v7263
    %7609 = vmatprep.subr.bf16.mxu0 %v7268
    %7610 = vmatpush1.bf16.msra.mxu0 %v7267
    %7611 = vmatprep.subr.bf16.mxu0 %v7272
    %7612 = vmatpush1.bf16.msra.mxu0 %v7271
    %7613 = vmatprep.subr.bf16.mxu0 %v7276
    %7614 = vmatpush1.bf16.msra.mxu0 %v7275
    %7615 = vmatprep.subr.bf16.mxu0 %v7280
    %7616 = vmatpush1.bf16.msra.mxu0 %v7279
    %7617 = vmatprep.subr.bf16.mxu0 0
    %7618 = vmatpush1.bf16.msra.mxu0 0
    %7619 = vmatprep.subr.bf16.mxu0 0
    %7620 = vmatpush1.bf16.msra.mxu0 0
    %7621 = vmatprep.subr.bf16.mxu0 0
    %7622 = vmatpush1.bf16.msra.mxu0 0
    %7623 = vmatprep.subr.bf16.mxu0 0
    %7624 = vmatpush1.bf16.msra.mxu0 0
    %7625 = vmatprep.subr.bf16.mxu0 0
    %7626 = vmatpush1.bf16.msra.mxu0 0
    %7627 = vmatprep.subr.bf16.mxu0 0
    %7628 = vmatpush1.bf16.msra.mxu0 0
    %7629 = vmatprep.subr.bf16.mxu0 0
    %7630 = vmatpush1.bf16.msra.mxu0 0
    %7631 = vmatprep.subr.bf16.mxu0 0
    %7632 = vmatpush1.bf16.msra.mxu0 0
    %7633 = vmatprep.mubr.bf16.mxu0 0
    %7634 = vmatmul.mubr.bf16.gmra.mrb[0].mxu0 %v7600
    %v7635 = vpop.f32.mrb[0].mxu0
    %v7636 = vadd.f32 0.0, %v7635
    %v7637 = vpop.f32.mrb[0].mxu0
    %v7638 = vadd.f32 0.0, %v7637
    %v7639 = vpop.f32.mrb[0].mxu0
    %v7640 = vadd.f32 0.0, %v7639
    %v7641 = vpop.f32.mrb[0].mxu0
    %v7642 = vadd.f32 0.0, %v7641
    %7643 = vdwg.mxu0
    %7644 = vmatprep.subr.bf16.mxu0 %v7254
    %7645 = vmatpush1.bf16.msra.mxu0 %v7253
    %7646 = vmatprep.subr.bf16.mxu0 %v7258
    %7647 = vmatpush1.bf16.msra.mxu0 %v7257
    %7648 = vmatprep.subr.bf16.mxu0 %v7262
    %7649 = vmatpush1.bf16.msra.mxu0 %v7261
    %7650 = vmatprep.subr.bf16.mxu0 %v7266
    %7651 = vmatpush1.bf16.msra.mxu0 %v7265
    %7652 = vmatprep.subr.bf16.mxu0 %v7270
    %7653 = vmatpush1.bf16.msra.mxu0 %v7269
    %7654 = vmatprep.subr.bf16.mxu0 %v7274
    %7655 = vmatpush1.bf16.msra.mxu0 %v7273
    %7656 = vmatprep.subr.bf16.mxu0 %v7278
    %7657 = vmatpush1.bf16.msra.mxu0 %v7277
    %7658 = vmatprep.subr.bf16.mxu0 %v7282
    %7659 = vmatpush1.bf16.msra.mxu0 %v7281
    %7660 = vmatprep.subr.bf16.mxu0 0
    %7661 = vmatpush1.bf16.msra.mxu0 0
    %7662 = vmatprep.subr.bf16.mxu0 0
    %7663 = vmatpush1.bf16.msra.mxu0 0
    %7664 = vmatprep.subr.bf16.mxu0 0
    %7665 = vmatpush1.bf16.msra.mxu0 0
    %7666 = vmatprep.subr.bf16.mxu0 0
    %7667 = vmatpush1.bf16.msra.mxu0 0
    %7668 = vmatprep.subr.bf16.mxu0 0
    %7669 = vmatpush1.bf16.msra.mxu0 0
    %7670 = vmatprep.subr.bf16.mxu0 0
    %7671 = vmatpush1.bf16.msra.mxu0 0
    %7672 = vmatprep.subr.bf16.mxu0 0
    %7673 = vmatpush1.bf16.msra.mxu0 0
    %7674 = vmatprep.subr.bf16.mxu0 0
    %7675 = vmatpush1.bf16.msra.mxu0 0
    %7676 = vmatprep.mubr.bf16.mxu0 0
    %7677 = vmatmul.mubr.bf16.gmra.mrb[0].mxu0 %v7600
    %v7678 = vpop.f32.mrb[0].mxu0
    %v7679 = vadd.f32 0.0, %v7678
    %v7680 = vpop.f32.mrb[0].mxu0
    %v7681 = vadd.f32 0.0, %v7680
    %v7682 = vpop.f32.mrb[0].mxu0
    %v7683 = vadd.f32 0.0, %v7682
    %v7684 = vpop.f32.mrb[0].mxu0
    %v7685 = vadd.f32 0.0, %v7684
    %7686 = vdwg.mxu0
    %v7687 = vadd.f32 %v6323, %v7636
    %v7688 = vadd.f32 %v6325, %v7638
    %v7689 = vadd.f32 %v6396, %v7679
    %v7690 = vadd.f32 %v6398, %v7681
    %v7691 = vadd.f32 %v6327, %v7640
    %v7692 = vadd.f32 %v6329, %v7642
    %v7693 = vadd.f32 %v6400, %v7683
    %v7694 = vadd.f32 %v6402, %v7685
    %v7695 = vsub.f32 0.0, %v7687
    %v7696 = vsub.f32 0.0, %v7688
    %v7697 = vsub.f32 0.0, %v7689
    %v7698 = vsub.f32 0.0, %v7691
    %v7699 = vsub.f32 0.0, %v7692
    %v7700 = vsub.f32 0.0, %v7693
    %v7701 = vmul.f32 %v7695, 1.442695
    %v7702 = vpow.pop %v7701
    %v7703 = vmul.f32 %v7696, 1.442695
    %v7704 = vpow.pop %v7703
    %v7705 = vmul.f32 %v7697, 1.442695
    %v7706 = vpow.pop %v7705
    %v7707 = vmul.f32 %v7698, 1.442695
    %v7708 = vpow.pop %v7707
    %v7709 = vmul.f32 %v7699, 1.442695
    %v7710 = vpow.pop %v7709
    %v7711 = vmul.f32 %v7700, 1.442695
    %v7712 = vpow.pop %v7711
    %v7713 = vadd.f32 %v7702, 1.0
    %v7714 = vadd.f32 %v7704, 1.0
    %v7715 = vadd.f32 %v7706, 1.0
    %v7716 = vadd.f32 %v7708, 1.0
    %v7717 = vadd.f32 %v7710, 1.0
    %v7718 = vadd.f32 %v7712, 1.0
    %v7719 = vrcp.pop %v7713
    %v7720 = vmul.f32 1.0, %v7719
    %v7721 = vrcp.pop %v7714
    %v7722 = vmul.f32 1.0, %v7721
    %v7723 = vrcp.pop %v7715
    %v7724 = vmul.f32 1.0, %v7723
    %v7725 = vrcp.pop %v7716
    %v7726 = vmul.f32 1.0, %v7725
    %v7727 = vrcp.pop %v7717
    %v7728 = vmul.f32 1.0, %v7727
    %v7729 = vrcp.pop %v7718
    %v7730 = vmul.f32 1.0, %v7729
    %v7731 = vtanh.pop %v7690
    %v7732 = vtanh.pop %v7694
    %v7733 = vmul.f32 %v7722, %v7594
    %v7734 = vmul.f32 %v7728, %v7595
    %v7735 = vmul.f32 %v7720, %v7731
    %v7736 = vmul.f32 %v7726, %v7732
    %v7737 = vadd.f32 %v7733, %v7735
    %v7738 = vadd.f32 %v7734, %v7736
    %v7739 = vtanh.pop %v7737
    %v7740 = vtanh.pop %v7738
    %v7741 = vmul.f32 %v7724, %v7739
    %v7742 = vmul.f32 %v7730, %v7740
    %v7743 = vpack.c.bf16 %v7742, %v7741
    %7744 = vmatprep.subr.bf16.mxu0 %v7252
    %7745 = vmatpush1.bf16.msra.mxu0 %v7251
    %7746 = vmatprep.subr.bf16.mxu0 %v7256
    %7747 = vmatpush1.bf16.msra.mxu0 %v7255
    %7748 = vmatprep.subr.bf16.mxu0 %v7260
    %7749 = vmatpush1.bf16.msra.mxu0 %v7259
    %7750 = vmatprep.subr.bf16.mxu0 %v7264
    %7751 = vmatpush1.bf16.msra.mxu0 %v7263
    %7752 = vmatprep.subr.bf16.mxu0 %v7268
    %7753 = vmatpush1.bf16.msra.mxu0 %v7267
    %7754 = vmatprep.subr.bf16.mxu0 %v7272
    %7755 = vmatpush1.bf16.msra.mxu0 %v7271
    %7756 = vmatprep.subr.bf16.mxu0 %v7276
    %7757 = vmatpush1.bf16.msra.mxu0 %v7275
    %7758 = vmatprep.subr.bf16.mxu0 %v7280
    %7759 = vmatpush1.bf16.msra.mxu0 %v7279
    %7760 = vmatprep.subr.bf16.mxu0 0
    %7761 = vmatpush1.bf16.msra.mxu0 0
    %7762 = vmatprep.subr.bf16.mxu0 0
    %7763 = vmatpush1.bf16.msra.mxu0 0
    %7764 = vmatprep.subr.bf16.mxu0 0
    %7765 = vmatpush1.bf16.msra.mxu0 0
    %7766 = vmatprep.subr.bf16.mxu0 0
    %7767 = vmatpush1.bf16.msra.mxu0 0
    %7768 = vmatprep.subr.bf16.mxu0 0
    %7769 = vmatpush1.bf16.msra.mxu0 0
    %7770 = vmatprep.subr.bf16.mxu0 0
    %7771 = vmatpush1.bf16.msra.mxu0 0
    %7772 = vmatprep.subr.bf16.mxu0 0
    %7773 = vmatpush1.bf16.msra.mxu0 0
    %7774 = vmatprep.subr.bf16.mxu0 0
    %7775 = vmatpush1.bf16.msra.mxu0 0
    %7776 = vmatprep.mubr.bf16.mxu0 0
    %7777 = vmatmul.mubr.bf16.gmra.mrb[0].mxu0 %v7743
    %v7778 = vpop.f32.mrb[0].mxu0
    %v7779 = vadd.f32 0.0, %v7778
    %v7780 = vpop.f32.mrb[0].mxu0
    %v7781 = vadd.f32 0.0, %v7780
    %v7782 = vpop.f32.mrb[0].mxu0
    %v7783 = vadd.f32 0.0, %v7782
    %v7784 = vpop.f32.mrb[0].mxu0
    %v7785 = vadd.f32 0.0, %v7784
    %7786 = vdwg.mxu0
    %7787 = vmatprep.subr.bf16.mxu0 %v7254
    %7788 = vmatpush1.bf16.msra.mxu0 %v7253
    %7789 = vmatprep.subr.bf16.mxu0 %v7258
    %7790 = vmatpush1.bf16.msra.mxu0 %v7257
    %7791 = vmatprep.subr.bf16.mxu0 %v7262
    %7792 = vmatpush1.bf16.msra.mxu0 %v7261
    %7793 = vmatprep.subr.bf16.mxu0 %v7266
    %7794 = vmatpush1.bf16.msra.mxu0 %v7265
    %7795 = vmatprep.subr.bf16.mxu0 %v7270
    %7796 = vmatpush1.bf16.msra.mxu0 %v7269
    %7797 = vmatprep.subr.bf16.mxu0 %v7274
    %7798 = vmatpush1.bf16.msra.mxu0 %v7273
    %7799 = vmatprep.subr.bf16.mxu0 %v7278
    %7800 = vmatpush1.bf16.msra.mxu0 %v7277
    %7801 = vmatprep.subr.bf16.mxu0 %v7282
    %7802 = vmatpush1.bf16.msra.mxu0 %v7281
    %7803 = vmatprep.subr.bf16.mxu0 0
    %7804 = vmatpush1.bf16.msra.mxu0 0
    %7805 = vmatprep.subr.bf16.mxu0 0
    %7806 = vmatpush1.bf16.msra.mxu0 0
    %7807 = vmatprep.subr.bf16.mxu0 0
    %7808 = vmatpush1.bf16.msra.mxu0 0
    %7809 = vmatprep.subr.bf16.mxu0 0
    %7810 = vmatpush1.bf16.msra.mxu0 0
    %7811 = vmatprep.subr.bf16.mxu0 0
    %7812 = vmatpush1.bf16.msra.mxu0 0
    %7813 = vmatprep.subr.bf16.mxu0 0
    %7814 = vmatpush1.bf16.msra.mxu0 0
    %7815 = vmatprep.subr.bf16.mxu0 0
    %7816 = vmatpush1.bf16.msra.mxu0 0
    %7817 = vmatprep.subr.bf16.mxu0 0
    %7818 = vmatpush1.bf16.msra.mxu0 0
    %7819 = vmatprep.mubr.bf16.mxu0 0
    %7820 = vmatmul.mubr.bf16.gmra.mrb[0].mxu0 %v7743
    %v7821 = vpop.f32.mrb[0].mxu0
    %v7822 = vadd.f32 0.0, %v7821
    %v7823 = vpop.f32.mrb[0].mxu0
    %v7824 = vadd.f32 0.0, %v7823
    %v7825 = vpop.f32.mrb[0].mxu0
    %v7826 = vadd.f32 0.0, %v7825
    %v7827 = vpop.f32.mrb[0].mxu0
    %v7828 = vadd.f32 0.0, %v7827
    %7829 = vdwg.mxu0
    %v7830 = vadd.f32 %v6313, %v7779
    %v7831 = vadd.f32 %v6315, %v7781
    %v7832 = vadd.f32 %v6386, %v7822
    %v7833 = vadd.f32 %v6388, %v7824
    %v7834 = vadd.f32 %v6317, %v7783
    %v7835 = vadd.f32 %v6319, %v7785
    %v7836 = vadd.f32 %v6390, %v7826
    %v7837 = vadd.f32 %v6392, %v7828
    %v7838 = vsub.f32 0.0, %v7830
    %v7839 = vsub.f32 0.0, %v7831
    %v7840 = vsub.f32 0.0, %v7832
    %v7841 = vsub.f32 0.0, %v7834
    %v7842 = vsub.f32 0.0, %v7835
    %v7843 = vsub.f32 0.0, %v7836
    %v7844 = vmul.f32 %v7838, 1.442695
    %v7845 = vpow.pop %v7844
    %v7846 = vmul.f32 %v7839, 1.442695
    %v7847 = vpow.pop %v7846
    %v7848 = vmul.f32 %v7840, 1.442695
    %v7849 = vpow.pop %v7848
    %v7850 = vmul.f32 %v7841, 1.442695
    %v7851 = vpow.pop %v7850
    %v7852 = vmul.f32 %v7842, 1.442695
    %v7853 = vpow.pop %v7852
    %v7854 = vmul.f32 %v7843, 1.442695
    %v7855 = vpow.pop %v7854
    %v7856 = vadd.f32 %v7845, 1.0
    %v7857 = vadd.f32 %v7847, 1.0
    %v7858 = vadd.f32 %v7849, 1.0
    %v7859 = vadd.f32 %v7851, 1.0
    %v7860 = vadd.f32 %v7853, 1.0
    %v7861 = vadd.f32 %v7855, 1.0
    %v7862 = vrcp.pop %v7856
    %v7863 = vmul.f32 1.0, %v7862
    %v7864 = vrcp.pop %v7857
    %v7865 = vmul.f32 1.0, %v7864
    %v7866 = vrcp.pop %v7858
    %v7867 = vmul.f32 1.0, %v7866
    %v7868 = vrcp.pop %v7859
    %v7869 = vmul.f32 1.0, %v7868
    %v7870 = vrcp.pop %v7860
    %v7871 = vmul.f32 1.0, %v7870
    %v7872 = vrcp.pop %v7861
    %v7873 = vmul.f32 1.0, %v7872
    %v7874 = vtanh.pop %v7833
    %v7875 = vtanh.pop %v7837
    %v7876 = vmul.f32 %v7865, %v7737
    %v7877 = vmul.f32 %v7871, %v7738
    %v7878 = vmul.f32 %v7863, %v7874
    %v7879 = vmul.f32 %v7869, %v7875
    %v7880 = vadd.f32 %v7876, %v7878
    %v7881 = vadd.f32 %v7877, %v7879
    %v7882 = vtanh.pop %v7880
    %v7883 = vtanh.pop %v7881
    %v7884 = vmul.f32 %v7867, %v7882
    %v7885 = vmul.f32 %v7873, %v7883
    %v7886 = vld [vmem:[#allocation26] sm:$0xff]
    %v7887 = vld [vmem:[#allocation26 + $0x8] sm:$0xff]
    %v7888 = vld [vmem:[#allocation26 + $0x10] sm:$0xff]
    %v7889 = vld [vmem:[#allocation26 + $0x18] sm:$0xff]
    %v7890 = vld [vmem:[#allocation26 + $0x20] sm:$0xff]
    %v7891 = vld [vmem:[#allocation26 + $0x28] sm:$0xff]
    %v7892 = vld [vmem:[#allocation26 + $0x30] sm:$0xff]
    %v7893 = vld [vmem:[#allocation26 + $0x38] sm:$0xff]
    %v7894 = vld [vmem:[#allocation26 + $0x40] sm:$0xff]
    %v7895 = vld [vmem:[#allocation26 + $0x48] sm:$0xff]
    %v7896 = vld [vmem:[#allocation26 + $0x50] sm:$0xff]
    %v7897 = vld [vmem:[#allocation26 + $0x58] sm:$0xff]
    %v7898 = vld [vmem:[#allocation26 + $0x60] sm:$0xff]
    %v7899 = vld [vmem:[#allocation26 + $0x68] sm:$0xff]
    %v7900 = vld [vmem:[#allocation26 + $0x70] sm:$0xff]
    %v7901 = vld [vmem:[#allocation26 + $0x78] sm:$0xff]
    %v7902 = vld [vmem:[#allocation26 + $0x80] sm:$0xff]
    %v7903 = vld [vmem:[#allocation26 + $0x88] sm:$0xff]
    %v7904 = vld [vmem:[#allocation26 + $0x90] sm:$0xff]
    %v7905 = vld [vmem:[#allocation26 + $0x98] sm:$0xff]
    %v7906 = vld [vmem:[#allocation26 + $0xa0] sm:$0xff]
    %v7907 = vld [vmem:[#allocation26 + $0xa8] sm:$0xff]
    %v7908 = vld [vmem:[#allocation26 + $0xb0] sm:$0xff]
    %v7909 = vld [vmem:[#allocation26 + $0xb8] sm:$0xff]
    %v7910 = vld [vmem:[#allocation26 + $0xc0] sm:$0xff]
    %v7911 = vld [vmem:[#allocation26 + $0xc8] sm:$0xff]
    %v7912 = vld [vmem:[#allocation26 + $0xd0] sm:$0xff]
    %v7913 = vld [vmem:[#allocation26 + $0xd8] sm:$0xff]
    %v7914 = vld [vmem:[#allocation26 + $0xe0] sm:$0xff]
    %v7915 = vld [vmem:[#allocation26 + $0xe8] sm:$0xff]
    %v7916 = vld [vmem:[#allocation26 + $0xf0] sm:$0xff]
    %v7917 = vld [vmem:[#allocation26 + $0xf8] sm:$0xff]
    %v7918 = vld [vmem:[#allocation26 + $0x100] sm:$0xff]
    %v7919 = vld [vmem:[#allocation26 + $0x108] sm:$0xff]
    %v7920 = vld [vmem:[#allocation26 + $0x110] sm:$0xff]
    %v7921 = vld [vmem:[#allocation26 + $0x118] sm:$0xff]
    %v7922 = vld [vmem:[#allocation26 + $0x120] sm:$0xff]
    %v7923 = vld [vmem:[#allocation26 + $0x128] sm:$0xff]
    %v7924 = vld [vmem:[#allocation26 + $0x130] sm:$0xff]
    %v7925 = vld [vmem:[#allocation26 + $0x138] sm:$0xff]
    %v7926 = vld [vmem:[#allocation26 + $0x140] sm:$0xff]
    %v7927 = vld [vmem:[#allocation26 + $0x148] sm:$0xff]
    %v7928 = vld [vmem:[#allocation26 + $0x150] sm:$0xff]
    %v7929 = vld [vmem:[#allocation26 + $0x158] sm:$0xff]
    %v7930 = vld [vmem:[#allocation26 + $0x160] sm:$0xff]
    %v7931 = vld [vmem:[#allocation26 + $0x168] sm:$0xff]
    %v7932 = vld [vmem:[#allocation26 + $0x170] sm:$0xff]
    %v7933 = vld [vmem:[#allocation26 + $0x178] sm:$0xff]
    %v7934 = vpack.c.bf16 %v7154, %v7153
    %v7935 = vpack.c.bf16 %v7885, %v7884
    %v7952 = vunpack.c.l.b16 %v7902
    %v7953 = vunpack.c.h.b16 %v7902
    %v7954 = vunpack.c.l.b16 %v7903
    %v7955 = vunpack.c.h.b16 %v7903
    %v7956 = vunpack.c.l.b16 %v7904
    %v7957 = vunpack.c.h.b16 %v7904
    %v7958 = vunpack.c.l.b16 %v7905
    %v7959 = vunpack.c.h.b16 %v7905
    %v7960 = vunpack.c.l.b16 %v7906
    %v7961 = vunpack.c.h.b16 %v7906
    %v7962 = vunpack.c.l.b16 %v7907
    %v7963 = vunpack.c.h.b16 %v7907
    %v7964 = vunpack.c.l.b16 %v7908
    %v7965 = vunpack.c.h.b16 %v7908
    %v7966 = vunpack.c.l.b16 %v7909
    %v7967 = vunpack.c.h.b16 %v7909
    %v7968 = vunpack.c.l.b16 %v7910
    %v7969 = vunpack.c.h.b16 %v7910
    %v7970 = vunpack.c.l.b16 %v7911
    %v7971 = vunpack.c.h.b16 %v7911
    %v7972 = vunpack.c.l.b16 %v7912
    %v7973 = vunpack.c.h.b16 %v7912
    %v7974 = vunpack.c.l.b16 %v7913
    %v7975 = vunpack.c.h.b16 %v7913
    %v7976 = vunpack.c.l.b16 %v7914
    %v7977 = vunpack.c.h.b16 %v7914
    %v7978 = vunpack.c.l.b16 %v7915
    %v7979 = vunpack.c.h.b16 %v7915
    %v7980 = vunpack.c.l.b16 %v7916
    %v7981 = vunpack.c.h.b16 %v7916
    %v7982 = vunpack.c.l.b16 %v7917
    %v7983 = vunpack.c.h.b16 %v7917
    %v7984 = vpack.c.b16 %v7954, %v7952
    %v7985 = vpack.c.b16 %v7955, %v7953
    %v7986 = vpack.c.b16 %v7958, %v7956
    %v7987 = vpack.c.b16 %v7959, %v7957
    %v7988 = vpack.c.b16 %v7962, %v7960
    %v7989 = vpack.c.b16 %v7963, %v7961
    %v7990 = vpack.c.b16 %v7966, %v7964
    %v7991 = vpack.c.b16 %v7967, %v7965
    %v7992 = vpack.c.b16 %v7970, %v7968
    %v7993 = vpack.c.b16 %v7971, %v7969
    %v7994 = vpack.c.b16 %v7974, %v7972
    %v7995 = vpack.c.b16 %v7975, %v7973
    %v7996 = vpack.c.b16 %v7978, %v7976
    %v7997 = vpack.c.b16 %v7979, %v7977
    %v7998 = vpack.c.b16 %v7982, %v7980
    %v7999 = vpack.c.b16 %v7983, %v7981
    %8016 = vmatprep.subr.bf16.mxu0 %v7985
    %8017 = vmatpush1.bf16.msra.mxu0 %v7984
    %8018 = vmatprep.subr.bf16.mxu0 %v7987
    %8019 = vmatpush1.bf16.msra.mxu0 %v7986
    %8020 = vmatprep.subr.bf16.mxu0 %v7989
    %8021 = vmatpush1.bf16.msra.mxu0 %v7988
    %8022 = vmatprep.subr.bf16.mxu0 %v7991
    %8023 = vmatpush1.bf16.msra.mxu0 %v7990
    %8024 = vmatprep.subr.bf16.mxu0 %v7993
    %8025 = vmatpush1.bf16.msra.mxu0 %v7992
    %8026 = vmatprep.subr.bf16.mxu0 %v7995
    %8027 = vmatpush1.bf16.msra.mxu0 %v7994
    %8028 = vmatprep.subr.bf16.mxu0 %v7997
    %8029 = vmatpush1.bf16.msra.mxu0 %v7996
    %8030 = vmatprep.subr.bf16.mxu0 %v7999
    %8031 = vmatpush1.bf16.msra.mxu0 %v7998
    %8032 = vmatprep.subr.bf16.mxu0 0
    %8033 = vmatpush1.bf16.msra.mxu0 0
    %8034 = vmatprep.subr.bf16.mxu0 0
    %8035 = vmatpush1.bf16.msra.mxu0 0
    %8036 = vmatprep.subr.bf16.mxu0 0
    %8037 = vmatpush1.bf16.msra.mxu0 0
    %8038 = vmatprep.subr.bf16.mxu0 0
    %8039 = vmatpush1.bf16.msra.mxu0 0
    %8040 = vmatprep.subr.bf16.mxu0 0
    %8041 = vmatpush1.bf16.msra.mxu0 0
    %8042 = vmatprep.subr.bf16.mxu0 0
    %8043 = vmatpush1.bf16.msra.mxu0 0
    %8044 = vmatprep.subr.bf16.mxu0 0
    %8045 = vmatpush1.bf16.msra.mxu0 0
    %8046 = vmatprep.subr.bf16.mxu0 0
    %8047 = vmatpush1.bf16.msra.mxu0 0
    %8048 = vmatprep.mubr.bf16.mxu0 0
    %8049 = vmatmul.mubr.bf16.gmra.mrb[0].mxu0 %v7935
    %v8050 = vpop.f32.mrb[0].mxu0
    %v8051 = vadd.f32 0.0, %v8050
    %v8052 = vpop.f32.mrb[0].mxu0
    %v8053 = vadd.f32 0.0, %v8052
    %v8054 = vpop.f32.mrb[0].mxu0
    %v8055 = vadd.f32 0.0, %v8054
    %v8056 = vpop.f32.mrb[0].mxu0
    %v8057 = vadd.f32 0.0, %v8056
    %8058 = vdwg.mxu0
    %v8075 = vunpack.c.l.b16 %v7886
    %v8076 = vunpack.c.h.b16 %v7886
    %v8077 = vunpack.c.l.b16 %v7887
    %v8078 = vunpack.c.h.b16 %v7887
    %v8079 = vunpack.c.l.b16 %v7888
    %v8080 = vunpack.c.h.b16 %v7888
    %v8081 = vunpack.c.l.b16 %v7889
    %v8082 = vunpack.c.h.b16 %v7889
    %v8083 = vunpack.c.l.b16 %v7890
    %v8084 = vunpack.c.h.b16 %v7890
    %v8085 = vunpack.c.l.b16 %v7891
    %v8086 = vunpack.c.h.b16 %v7891
    %v8087 = vunpack.c.l.b16 %v7892
    %v8088 = vunpack.c.h.b16 %v7892
    %v8089 = vunpack.c.l.b16 %v7893
    %v8090 = vunpack.c.h.b16 %v7893
    %v8091 = vunpack.c.l.b16 %v7894
    %v8092 = vunpack.c.h.b16 %v7894
    %v8093 = vunpack.c.l.b16 %v7895
    %v8094 = vunpack.c.h.b16 %v7895
    %v8095 = vunpack.c.l.b16 %v7896
    %v8096 = vunpack.c.h.b16 %v7896
    %v8097 = vunpack.c.l.b16 %v7897
    %v8098 = vunpack.c.h.b16 %v7897
    %v8099 = vunpack.c.l.b16 %v7898
    %v8100 = vunpack.c.h.b16 %v7898
    %v8101 = vunpack.c.l.b16 %v7899
    %v8102 = vunpack.c.h.b16 %v7899
    %v8103 = vunpack.c.l.b16 %v7900
    %v8104 = vunpack.c.h.b16 %v7900
    %v8105 = vunpack.c.l.b16 %v7901
    %v8106 = vunpack.c.h.b16 %v7901
    %v8107 = vpack.c.b16 %v8077, %v8075
    %v8108 = vpack.c.b16 %v8078, %v8076
    %v8109 = vpack.c.b16 %v8081, %v8079
    %v8110 = vpack.c.b16 %v8082, %v8080
    %v8111 = vpack.c.b16 %v8085, %v8083
    %v8112 = vpack.c.b16 %v8086, %v8084
    %v8113 = vpack.c.b16 %v8089, %v8087
    %v8114 = vpack.c.b16 %v8090, %v8088
    %v8115 = vpack.c.b16 %v8093, %v8091
    %v8116 = vpack.c.b16 %v8094, %v8092
    %v8117 = vpack.c.b16 %v8097, %v8095
    %v8118 = vpack.c.b16 %v8098, %v8096
    %v8119 = vpack.c.b16 %v8101, %v8099
    %v8120 = vpack.c.b16 %v8102, %v8100
    %v8121 = vpack.c.b16 %v8105, %v8103
    %v8122 = vpack.c.b16 %v8106, %v8104
    %8139 = vmatprep.subr.bf16.mxu0 %v8108
    %8140 = vmatpush1.bf16.msra.mxu0 %v8107
    %8141 = vmatprep.subr.bf16.mxu0 %v8110
    %8142 = vmatpush1.bf16.msra.mxu0 %v8109
    %8143 = vmatprep.subr.bf16.mxu0 %v8112
    %8144 = vmatpush1.bf16.msra.mxu0 %v8111
    %8145 = vmatprep.subr.bf16.mxu0 %v8114
    %8146 = vmatpush1.bf16.msra.mxu0 %v8113
    %8147 = vmatprep.subr.bf16.mxu0 %v8116
    %8148 = vmatpush1.bf16.msra.mxu0 %v8115
    %8149 = vmatprep.subr.bf16.mxu0 %v8118
    %8150 = vmatpush1.bf16.msra.mxu0 %v8117
    %8151 = vmatprep.subr.bf16.mxu0 %v8120
    %8152 = vmatpush1.bf16.msra.mxu0 %v8119
    %8153 = vmatprep.subr.bf16.mxu0 %v8122
    %8154 = vmatpush1.bf16.msra.mxu0 %v8121
    %8155 = vmatprep.subr.bf16.mxu0 0
    %8156 = vmatpush1.bf16.msra.mxu0 0
    %8157 = vmatprep.subr.bf16.mxu0 0
    %8158 = vmatpush1.bf16.msra.mxu0 0
    %8159 = vmatprep.subr.bf16.mxu0 0
    %8160 = vmatpush1.bf16.msra.mxu0 0
    %8161 = vmatprep.subr.bf16.mxu0 0
    %8162 = vmatpush1.bf16.msra.mxu0 0
    %8163 = vmatprep.subr.bf16.mxu0 0
    %8164 = vmatpush1.bf16.msra.mxu0 0
    %8165 = vmatprep.subr.bf16.mxu0 0
    %8166 = vmatpush1.bf16.msra.mxu0 0
    %8167 = vmatprep.subr.bf16.mxu0 0
    %8168 = vmatpush1.bf16.msra.mxu0 0
    %8169 = vmatprep.subr.bf16.mxu0 0
    %8170 = vmatpush1.bf16.msra.mxu0 0
    %8171 = vmatprep.mubr.bf16.mxu0 0
    %8172 = vmatmul.mubr.bf16.gmra.mrb[0].mxu0 %v7934
    %v8173 = vpop.f32.mrb[0].mxu0
    %v8174 = vadd.f32 %v8051, %v8173
    %v8175 = vpop.f32.mrb[0].mxu0
    %v8176 = vadd.f32 %v8053, %v8175
    %v8177 = vpop.f32.mrb[0].mxu0
    %v8178 = vadd.f32 %v8055, %v8177
    %v8179 = vpop.f32.mrb[0].mxu0
    %v8180 = vadd.f32 %v8057, %v8179
    %8181 = vdwg.mxu0
    %v8182 = vpack.c.bf16 %v1287, %v1284
    %v8199 = vunpack.c.l.b16 %v7918
    %v8200 = vunpack.c.h.b16 %v7918
    %v8201 = vunpack.c.l.b16 %v7919
    %v8202 = vunpack.c.h.b16 %v7919
    %v8203 = vunpack.c.l.b16 %v7920
    %v8204 = vunpack.c.h.b16 %v7920
    %v8205 = vunpack.c.l.b16 %v7921
    %v8206 = vunpack.c.h.b16 %v7921
    %v8207 = vunpack.c.l.b16 %v7922
    %v8208 = vunpack.c.h.b16 %v7922
    %v8209 = vunpack.c.l.b16 %v7923
    %v8210 = vunpack.c.h.b16 %v7923
    %v8211 = vunpack.c.l.b16 %v7924
    %v8212 = vunpack.c.h.b16 %v7924
    %v8213 = vunpack.c.l.b16 %v7925
    %v8214 = vunpack.c.h.b16 %v7925
    %v8215 = vunpack.c.l.b16 %v7926
    %v8216 = vunpack.c.h.b16 %v7926
    %v8217 = vunpack.c.l.b16 %v7927
    %v8218 = vunpack.c.h.b16 %v7927
    %v8219 = vunpack.c.l.b16 %v7928
    %v8220 = vunpack.c.h.b16 %v7928
    %v8221 = vunpack.c.l.b16 %v7929
    %v8222 = vunpack.c.h.b16 %v7929
    %v8223 = vunpack.c.l.b16 %v7930
    %v8224 = vunpack.c.h.b16 %v7930
    %v8225 = vunpack.c.l.b16 %v7931
    %v8226 = vunpack.c.h.b16 %v7931
    %v8227 = vunpack.c.l.b16 %v7932
    %v8228 = vunpack.c.h.b16 %v7932
    %v8229 = vunpack.c.l.b16 %v7933
    %v8230 = vunpack.c.h.b16 %v7933
    %v8231 = vpack.c.b16 %v8201, %v8199
    %v8232 = vpack.c.b16 %v8202, %v8200
    %v8233 = vpack.c.b16 %v8205, %v8203
    %v8234 = vpack.c.b16 %v8206, %v8204
    %v8235 = vpack.c.b16 %v8209, %v8207
    %v8236 = vpack.c.b16 %v8210, %v8208
    %v8237 = vpack.c.b16 %v8213, %v8211
    %v8238 = vpack.c.b16 %v8214, %v8212
    %v8239 = vpack.c.b16 %v8217, %v8215
    %v8240 = vpack.c.b16 %v8218, %v8216
    %v8241 = vpack.c.b16 %v8221, %v8219
    %v8242 = vpack.c.b16 %v8222, %v8220
    %v8243 = vpack.c.b16 %v8225, %v8223
    %v8244 = vpack.c.b16 %v8226, %v8224
    %v8245 = vpack.c.b16 %v8229, %v8227
    %v8246 = vpack.c.b16 %v8230, %v8228
    %8263 = vmatprep.subr.bf16.mxu0 %v8232
    %8264 = vmatpush1.bf16.msra.mxu0 %v8231
    %8265 = vmatprep.subr.bf16.mxu0 %v8234
    %8266 = vmatpush1.bf16.msra.mxu0 %v8233
    %8267 = vmatprep.subr.bf16.mxu0 %v8236
    %8268 = vmatpush1.bf16.msra.mxu0 %v8235
    %8269 = vmatprep.subr.bf16.mxu0 %v8238
    %8270 = vmatpush1.bf16.msra.mxu0 %v8237
    %8271 = vmatprep.subr.bf16.mxu0 %v8240
    %8272 = vmatpush1.bf16.msra.mxu0 %v8239
    %8273 = vmatprep.subr.bf16.mxu0 %v8242
    %8274 = vmatpush1.bf16.msra.mxu0 %v8241
    %8275 = vmatprep.subr.bf16.mxu0 %v8244
    %8276 = vmatpush1.bf16.msra.mxu0 %v8243
    %8277 = vmatprep.subr.bf16.mxu0 %v8246
    %8278 = vmatpush1.bf16.msra.mxu0 %v8245
    %8279 = vmatprep.subr.bf16.mxu0 0
    %8280 = vmatpush1.bf16.msra.mxu0 0
    %8281 = vmatprep.subr.bf16.mxu0 0
    %8282 = vmatpush1.bf16.msra.mxu0 0
    %8283 = vmatprep.subr.bf16.mxu0 0
    %8284 = vmatpush1.bf16.msra.mxu0 0
    %8285 = vmatprep.subr.bf16.mxu0 0
    %8286 = vmatpush1.bf16.msra.mxu0 0
    %8287 = vmatprep.subr.bf16.mxu0 0
    %8288 = vmatpush1.bf16.msra.mxu0 0
    %8289 = vmatprep.subr.bf16.mxu0 0
    %8290 = vmatpush1.bf16.msra.mxu0 0
    %8291 = vmatprep.subr.bf16.mxu0 0
    %8292 = vmatpush1.bf16.msra.mxu0 0
    %8293 = vmatprep.subr.bf16.mxu0 0
    %8294 = vmatpush1.bf16.msra.mxu0 0
    %8295 = vmatprep.mubr.bf16.mxu0 0
    %8296 = vmatmul.mubr.bf16.gmra.mrb[0].mxu0 %v8182
    %v8297 = vpop.f32.mrb[0].mxu0
    %v8298 = vadd.f32 0.0, %v8297
    %v8299 = vpop.f32.mrb[0].mxu0
    %v8300 = vadd.f32 0.0, %v8299
    %v8301 = vpop.f32.mrb[0].mxu0
    %v8302 = vadd.f32 0.0, %v8301
    %v8303 = vpop.f32.mrb[0].mxu0
    %v8304 = vadd.f32 0.0, %v8303
    %8305 = vdwg.mxu0
    %v8306 = vadd.f32 %v8174, %v8298
    %v8307 = vadd.f32 %v8176, %v8300
    %v8308 = vadd.f32 %v8178, %v8302
    %v8309 = vadd.f32 %v8180, %v8304
    %v8310 = vld [vmem:[#allocation27] sm:$0x3]
    %v8312 = vlaneseq
    %v8313 = vshrl.u32 %v8312, 7
    %v8314 = vsub.s32 0, %v8313
    %v8315 = vrot.slane %v8310, %v8314
    %v8316 = vlaneseq
    %v8317 = vshrl.u32 %v8316, 7
    %v8318 = vsub.s32 1, %v8317
    %v8319 = vrot.slane %v8310, %v8318
    %v8322 = vadd.f32 %v8306, %v8315
    %v8323 = vadd.f32 %v8307, %v8319
    %v8324 = vadd.f32 %v8308, %v8315
    %v8325 = vadd.f32 %v8309, %v8319
    %v8326 = vmax.f32 %v8322, 0.0
    %v8327 = vmax.f32 %v8323, 0.0
    %v8328 = vmax.f32 %v8324, 0.0
    %v8329 = vmax.f32 %v8325, 0.0
    %v8330 = vpack.c.bf16 %v8328, %v8326
    %v8331 = vpack.c.bf16 %v8329, %v8327
    %v8332 = vld [vmem:[%s19] sm:$0xf]
    %v8333 = vld [vmem:[%s19 + $0x4] sm:$0xf]
    %v8334 = vld [vmem:[%s19 + $0x8] sm:$0xf]
    %v8335 = vld [vmem:[%s19 + $0xc] sm:$0xf]
    %v8336 = vld [vmem:[%s19 + $0x10] sm:$0xf]
    %v8337 = vld [vmem:[%s19 + $0x14] sm:$0xf]
    %v8338 = vld [vmem:[%s19 + $0x18] sm:$0xf]
    %v8339 = vld [vmem:[%s19 + $0x1c] sm:$0xf]
    %v8340 = vld [vmem:[%s19 + $0x20] sm:$0xf]
    %v8341 = vld [vmem:[%s19 + $0x24] sm:$0xf]
    %v8342 = vld [vmem:[%s19 + $0x28] sm:$0xf]
    %v8343 = vld [vmem:[%s19 + $0x2c] sm:$0xf]
    %v8344 = vld [vmem:[%s19 + $0x30] sm:$0xf]
    %v8345 = vld [vmem:[%s19 + $0x34] sm:$0xf]
    %v8346 = vld [vmem:[%s19 + $0x38] sm:$0xf]
    %v8347 = vld [vmem:[%s19 + $0x3c] sm:$0xf]
    %v8348 = vld [vmem:[%s19 + $0x40] sm:$0xf]
    %v8349 = vld [vmem:[%s19 + $0x44] sm:$0xf]
    %v8350 = vld [vmem:[%s19 + $0x48] sm:$0xf]
    %v8351 = vld [vmem:[%s19 + $0x4c] sm:$0xf]
    %v8352 = vld [vmem:[%s19 + $0x50] sm:$0xf]
    %v8353 = vld [vmem:[%s19 + $0x54] sm:$0xf]
    %v8354 = vld [vmem:[%s19 + $0x58] sm:$0xf]
    %v8355 = vld [vmem:[%s19 + $0x5c] sm:$0xf]
    %v8356 = vld [vmem:[%s19 + $0x60] sm:$0xf]
    %v8357 = vld [vmem:[%s19 + $0x64] sm:$0xf]
    %v8358 = vld [vmem:[%s19 + $0x68] sm:$0xf]
    %v8359 = vld [vmem:[%s19 + $0x6c] sm:$0xf]
    %v8360 = vld [vmem:[%s19 + $0x70] sm:$0xf]
    %v8361 = vld [vmem:[%s19 + $0x74] sm:$0xf]
    %v8362 = vld [vmem:[%s19 + $0x78] sm:$0xf]
    %v8363 = vld [vmem:[%s19 + $0x7c] sm:$0xf]
    %v8364 = vld [vmem:[%s20] sm:$0x1]
    %v8366 = vlaneseq
    %v8367 = vshrl.u32 %v8366, 7
    %v8368 = vsub.s32 0, %v8367
    %v8369 = vrot.slane %v8364, %v8368
    %v8403 = vunpack.c.l.b16 %v8332
    %v8404 = vunpack.c.l.b16 %v8333
    %v8405 = vunpack.c.l.b16 %v8334
    %v8406 = vunpack.c.l.b16 %v8335
    %v8407 = vunpack.c.l.b16 %v8336
    %v8408 = vunpack.c.l.b16 %v8337
    %v8409 = vunpack.c.l.b16 %v8338
    %v8410 = vunpack.c.l.b16 %v8339
    %v8411 = vunpack.c.l.b16 %v8340
    %v8412 = vunpack.c.l.b16 %v8341
    %v8413 = vunpack.c.l.b16 %v8342
    %v8414 = vunpack.c.l.b16 %v8343
    %v8415 = vunpack.c.l.b16 %v8344
    %v8416 = vunpack.c.l.b16 %v8345
    %v8417 = vunpack.c.l.b16 %v8346
    %v8418 = vunpack.c.l.b16 %v8347
    %v8419 = vunpack.c.l.b16 %v8348
    %v8420 = vunpack.c.l.b16 %v8349
    %v8421 = vunpack.c.l.b16 %v8350
    %v8422 = vunpack.c.l.b16 %v8351
    %v8423 = vunpack.c.l.b16 %v8352
    %v8424 = vunpack.c.l.b16 %v8353
    %v8425 = vunpack.c.l.b16 %v8354
    %v8426 = vunpack.c.l.b16 %v8355
    %v8427 = vunpack.c.l.b16 %v8356
    %v8428 = vunpack.c.l.b16 %v8357
    %v8429 = vunpack.c.l.b16 %v8358
    %v8430 = vunpack.c.l.b16 %v8359
    %v8431 = vunpack.c.l.b16 %v8360
    %v8432 = vunpack.c.l.b16 %v8361
    %v8433 = vunpack.c.l.b16 %v8362
    %v8434 = vunpack.c.l.b16 %v8363
    %v8435 = vpack.c.b16 %v8404, %v8403
    %v8436 = vpack.c.b16 %v8406, %v8405
    %v8437 = vpack.c.b16 %v8408, %v8407
    %v8438 = vpack.c.b16 %v8410, %v8409
    %v8439 = vpack.c.b16 %v8412, %v8411
    %v8440 = vpack.c.b16 %v8414, %v8413
    %v8441 = vpack.c.b16 %v8416, %v8415
    %v8442 = vpack.c.b16 %v8418, %v8417
    %v8443 = vpack.c.b16 %v8420, %v8419
    %v8444 = vpack.c.b16 %v8422, %v8421
    %v8445 = vpack.c.b16 %v8424, %v8423
    %v8446 = vpack.c.b16 %v8426, %v8425
    %v8447 = vpack.c.b16 %v8428, %v8427
    %v8448 = vpack.c.b16 %v8430, %v8429
    %v8449 = vpack.c.b16 %v8432, %v8431
    %v8450 = vpack.c.b16 %v8434, %v8433
    %8467 = vmatprep.subr.bf16.mxu0 0
    %8468 = vmatpush1.bf16.msra.mxu0 %v8435
    %8469 = vmatprep.subr.bf16.mxu0 0
    %8470 = vmatpush1.bf16.msra.mxu0 %v8436
    %8471 = vmatprep.subr.bf16.mxu0 0
    %8472 = vmatpush1.bf16.msra.mxu0 %v8437
    %8473 = vmatprep.subr.bf16.mxu0 0
    %8474 = vmatpush1.bf16.msra.mxu0 %v8438
    %8475 = vmatprep.subr.bf16.mxu0 0
    %8476 = vmatpush1.bf16.msra.mxu0 %v8439
    %8477 = vmatprep.subr.bf16.mxu0 0
    %8478 = vmatpush1.bf16.msra.mxu0 %v8440
    %8479 = vmatprep.subr.bf16.mxu0 0
    %8480 = vmatpush1.bf16.msra.mxu0 %v8441
    %8481 = vmatprep.subr.bf16.mxu0 0
    %8482 = vmatpush1.bf16.msra.mxu0 %v8442
    %8483 = vmatprep.subr.bf16.mxu0 0
    %8484 = vmatpush1.bf16.msra.mxu0 %v8443
    %8485 = vmatprep.subr.bf16.mxu0 0
    %8486 = vmatpush1.bf16.msra.mxu0 %v8444
    %8487 = vmatprep.subr.bf16.mxu0 0
    %8488 = vmatpush1.bf16.msra.mxu0 %v8445
    %8489 = vmatprep.subr.bf16.mxu0 0
    %8490 = vmatpush1.bf16.msra.mxu0 %v8446
    %8491 = vmatprep.subr.bf16.mxu0 0
    %8492 = vmatpush1.bf16.msra.mxu0 %v8447
    %8493 = vmatprep.subr.bf16.mxu0 0
    %8494 = vmatpush1.bf16.msra.mxu0 %v8448
    %8495 = vmatprep.subr.bf16.mxu0 0
    %8496 = vmatpush1.bf16.msra.mxu0 %v8449
    %8497 = vmatprep.subr.bf16.mxu0 0
    %8498 = vmatpush1.bf16.msra.mxu0 %v8450
    %8499 = vmatprep.mubr.bf16.mxu0 %v8331
    %8500 = vmatmul.mubr.bf16.gmra.mrb[0].mxu0 %v8330
    %v8501 = vpop.f32.mrb[0].mxu0
    %v8502 = vadd.f32 %v8369, %v8501
    %v8503 = vpop.f32.mrb[0].mxu0
    %v8504 = vpop.f32.mrb[0].mxu0
    %v8505 = vadd.f32 %v8369, %v8504
    %v8506 = vpop.f32.mrb[0].mxu0
    %8507 = vdwg.mxu0
    %8508 = vst [vmem:[#allocation29] sm:$0xff] %v8502
    %8509 = vst [vmem:[#allocation29 + $0x8] sm:$0xff] %v8505
    // Predicated region
    $region150: #{tpu_custom_call.1} parent=1 // pred_check
      _
    $region151: #{tpu_custom_call.1} parent=1 // pred_check_branch
      %8511 = sbr.rel (0) target = $region153
    $region152: #{tpu_custom_call.1} parent=1 // pred_region
      %s8513 = ssub.s32 256, 256
      %8514 = vsyncadd [#allocation5], %s8513
      %s8515 = sshll.u32 [#allocation29], 4
      %s8516 = int_to_ptr.vmem [resolvable:$true] %s8515
      %8521 = dma.vmem_to_hbm [thread:$0]  %s8516, 256, %s21, [#allocation5], 128, 128, 8
    $region153: #{tpu_custom_call.1} parent=1 // pred_fallthru
      _
    // Predicated region
    $region154: #{tpu_custom_call.1} parent=1 // pred_check
      _
    $region155: #{tpu_custom_call.1} parent=1 // pred_check_branch
      %8523 = sbr.rel (0) target = $region157
    $region156: #{tpu_custom_call.1} parent=1 // pred_region
      %s8525 = ssub.s32 256, 256
      %8526 = vsyncadd [#allocation31], %s8525
      %s8527 = sshll.u32 [#allocation30], 4
      %s8528 = int_to_ptr.vmem [resolvable:$true] %s8527
      %8533 = dma.vmem_to_hbm [thread:$0]  %s8528, 256, %s22, [#allocation31], 128, 128, 8
    $region157: #{tpu_custom_call.1} parent=1 // pred_fallthru
      _
    // Predicated region
    $region158: #{tpu_custom_call.1} parent=1 // pred_check
      _
    $region159: #{tpu_custom_call.1} parent=1 // pred_check_branch
      %8535 = sbr.rel (0) target = $region161
    $region160: #{tpu_custom_call.1} parent=1 // pred_region
      %8536 = dma.done [#allocation5], 256
    $region161: #{tpu_custom_call.1} parent=1 // pred_fallthru
      _
    // Predicated region
    $region162: #{tpu_custom_call.1} parent=1 // pred_check
      _
    $region163: #{tpu_custom_call.1} parent=1 // pred_check_branch
      %8538 = sbr.rel (0) target = $region165
    $region164: #{tpu_custom_call.1} parent=1 // pred_region
      %8539 = dma.done [#allocation31], 256
    $region165: #{tpu_custom_call.1} parent=1 // pred_fallthru
      _
    %8540 = vsyncpa [#allocation4], 1
    %8541 = vsyncpa [#allocation7], 1
    %8542 = vsyncpa [#allocation10], 1
    %8543 = vsyncpa [#allocation13], 1
    %8544 = vsyncpa [#allocation16], 1
    %8545 = vsyncpa [#allocation19], 1
    %8546 = vsyncpa [#allocation22], 1
    %8547 = vsyncpa [#allocation25], 1
    %8548 = vsyncpa [#allocation28], 1
    %8549 = vsyncpa [#allocation5], 1
    %8550 = vsyncpa [#allocation31], 1

</llo_original>
